<compile_context>
chip_gen: v7x
topology: tpu7x:2x2x1
jax: 0.10.0
libtpu: 0.0.40
codegen_flags: <defaults>
</compile_context>

<pallas_src>
import numpy as np
import jax
import jax.numpy as jnp
from jax.experimental import pallas as pl
from jax.experimental.pallas import tpu as pltpu

EPS = 1e-5      # PyTorch BatchNorm default eps
LANE = 128      # channel / output lane padding (keep 128 for v5e; K is >=256 anyway)


def _round_up(x, m):
    return (x + m - 1) // m * m


# ----------------------------- in-kernel math helpers -----------------------------

def _erf(x):
    # Abramowitz & Stegun 7.1.26 polynomial erf (max abs err ~1.5e-7), built from
    # Mosaic-supported elementwise ops; exact reciprocal for accuracy.
    a1, a2, a3, a4, a5 = (0.254829592, -0.284496736, 1.421413741,
                          -1.453152027, 1.061405429)
    pp = 0.3275911
    sgn = jnp.where(x >= 0.0, 1.0, -1.0)
    ax = jnp.abs(x)
    t = pl.reciprocal(1.0 + pp * ax)
    poly = ((((a5 * t + a4) * t + a3) * t + a2) * t + a1) * t
    return sgn * (1.0 - poly * jnp.exp(-ax * ax))


def _gelu_exact(x):
    # nn.GELU() default (approximate='none'): 0.5*x*(1+erf(x/sqrt(2)))
    return 0.5 * x * (1.0 + _erf(x * 0.7071067811865476))


# ----------------------------- fused Pallas kernel -----------------------------

def _make_kernel(geoms, bt):
    """Ref order:
         x, [w_l, shift_l]*L, sfc, fsh, wfc, fcb, out,
         [im2col_l]*L, [act_l]*(L-1), fc_in
       Whole batch is processed in one grid step; activations stay in VMEM."""
    num_layers = len(geoms)

    def kernel(*refs):
        x_ref = refs[0]
        pos = 1
        w_refs, s_refs = [], []
        for _ in range(num_layers):
            w_refs.append(refs[pos]); s_refs.append(refs[pos + 1]); pos += 2
        sfc_ref, fsh_ref, wfc_ref, fcb_ref = refs[pos:pos + 4]; pos += 4
        out_ref = refs[pos]; pos += 1
        col_refs = list(refs[pos:pos + num_layers]); pos += num_layers
        act_refs = list(refs[pos:pos + num_layers - 1]); pos += num_layers - 1
        fc_ref = refs[pos]

        src = x_ref                                   # (Bt*Hp*Wp, ICp) f32, channel-last
        for l, g in enumerate(geoms):
            k, st, hp, wp = g["k"], g["stride"], g["hp"], g["wp"]
            oh, ow, icp, ocp, m_out = g["oh"], g["ow"], g["icp"], g["ocp"], g["m_out"]
            col = col_refs[l]
            # ---- im2col: static strided-sublane slices (no gather matmuls) ----
            for b in range(bt):
                for a in range(oh):
                    dst = b * m_out + a * ow
                    for i in range(k):
                        row0 = b * hp * wp + (st * a + i) * wp
                        for j in range(k):
                            c0 = (i * k + j) * icp
                            col[dst:dst + ow, c0:c0 + icp] = src[
                                pl.ds(row0 + j, ow, st), :]
            # ---- one MXU contraction per layer; conv-bias + BN2d folded on host ----
            y = jnp.dot(col[...].astype(jnp.bfloat16), w_refs[l][...],
                        preferred_element_type=jnp.float32)
            y = _gelu_exact(y + s_refs[l][...])       # (Bt*M_out, OCp) f32
            if l + 1 < num_layers:
                nxt, gn = act_refs[l], geoms[l + 1]
                if gn["pad"] == 0:
                    nxt[...] = y                      # rows already (b, a, bb)
                else:
                    # next layer is a padded conv: zero the halo, write interior
                    nxt[...] = jnp.zeros(nxt.shape, nxt.dtype)
                    nhp, nwp, pd = gn["hp"], gn["wp"], gn["pad"]
                    for b in range(bt):
                        for a in range(oh):
                            srow = b * m_out + a * ow
                            drow = b * nhp * nwp + (a + pd) * nwp + pd
                            nxt[drow:drow + ow, :] = y[srow:srow + ow, :]
                src = nxt
            else:
                # final_fc = BatchNorm1d(eval) -> Dropout1d -> ReLU -> Linear.
                # TODO(synk): nn.Dropout1d(0.5) is training-time noise; identity (eval).
                z = jnp.maximum(y * sfc_ref[...] + fsh_ref[...], 0.0)
                for b in range(bt):
                    for p in range(m_out):
                        r = b * m_out + p
                        fc_ref[b:b + 1, p * ocp:(p + 1) * ocp] = z[r:r + 1, :]

        # ---- head: single K = m_last*OCp matmul ----
        acc = jnp.dot(fc_ref[...].astype(jnp.bfloat16), wfc_ref[...],
                      preferred_element_type=jnp.float32)
        out_ref[...] = acc + fcb_ref[...]

    return kernel


# ----------------------------- host-side operand building -----------------------------

def build_layer_configs(in_channels, out_channels, kernel_size, num_layers):
    cfgs = []
    oc = out_channels
    for i in range(num_layers):
        if i == 0:
            cfgs.append((in_channels, oc, kernel_size, 2, 0))
        elif i % 3 == 2:
            cfgs.append((oc, 2 * oc, kernel_size, 2, 1))
            oc *= 2
        else:
            cfgs.append((oc, oc, kernel_size, 2, 0))
    return cfgs


def build_forward(cfgs, conv_params, fc_params, in_shape, out_vec):
    """Precompute padded / BN-folded operands and return a jitted forward(x) that
    runs the whole network in one fused pallas_call."""
    C, H, W = in_shape
    c0p = _round_up(C, LANE)
    assert cfgs[0][4] == 0, "layer 0 of this module is always unpadded"

    # per-layer geometry (hp/wp include the halo for that layer's own padding)
    geoms = []
    h, w, icp = H, W, c0p
    for (ic, oc, k, stride, pad) in cfgs:
        oh = (h + 2 * pad - k) // stride + 1
        ow = (w + 2 * pad - k) // stride + 1
        ocp = _round_up(oc, LANE)
        geoms.append(dict(k=k, stride=stride, pad=pad, hp=h + 2 * pad, wp=w + 2 * pad,
                          oh=oh, ow=ow, icp=icp, ocp=ocp, m_out=oh * ow, ic=ic, oc=oc))
        h, w, icp = oh, ow, ocp
    g_last = geoms[-1]
    m_last, ocp_last, oc_last = g_last["m_out"], g_last["ocp"], g_last["oc"]
    npad = _round_up(out_vec, LANE)

    # conv weights with BatchNorm2d(eval) folded: one (KK*ICp, OCp) bf16 matrix per
    # layer (taps folded into the contraction) + a (1, OCp) f32 shift.
    w_ops, s_ops = [], []
    for lp, g in zip(conv_params, geoms):
        ic, oc, k, icp, ocp = g["ic"], g["oc"], g["k"], g["icp"], g["ocp"]
        s = np.asarray(lp["gamma"]) / np.sqrt(np.asarray(lp["var"]) + EPS)
        wt = (np.asarray(lp["w"]) * s[:, None, None, None]).transpose(2, 3, 1, 0)
        w_pad = np.zeros((k * k, icp, ocp), np.float32)
        w_pad[:, :ic, :oc] = wt.reshape(k * k, ic, oc)
        shift = np.zeros((1, ocp), np.float32)
        shift[0, :oc] = (np.asarray(lp["beta"])
                         + (np.asarray(lp["b"]) - np.asarray(lp["mean"])) * s)
        w_ops.append(jnp.asarray(w_pad.reshape(k * k * icp, ocp), jnp.bfloat16))
        s_ops.append(jnp.asarray(shift))

    # final_fc: BN1d(eval) scale/shift per (spatial, channel); Linear weight rows
    # permuted so the PyTorch NCHW flatten (f = c*HW + p) matches the kernel's
    # (p, c) lane layout, then flattened to one (m_last*OCp, Npad) matrix.
    s = np.asarray(fc_params["gamma"]) / np.sqrt(np.asarray(fc_params["var"]) + EPS)
    sh = np.asarray(fc_params["beta"]) - np.asarray(fc_params["mean"]) * s
    sfc = np.zeros((m_last, ocp_last), np.float32)
    fsh = np.zeros((m_last, ocp_last), np.float32)
    sfc[:, :oc_last] = s.reshape(oc_last, m_last).T
    fsh[:, :oc_last] = sh.reshape(oc_last, m_last).T
    wfc = np.zeros((m_last, ocp_last, npad), np.float32)
    wfc[:, :oc_last, :out_vec] = (np.asarray(fc_params["w"])
                                  .reshape(oc_last, m_last, out_vec)
                                  .transpose(1, 0, 2))
    wfc_op = jnp.asarray(wfc.reshape(m_last * ocp_last, npad), jnp.bfloat16)
    fcb = np.zeros((1, npad), np.float32)
    fcb[0, :out_vec] = np.asarray(fc_params["b"])
    fcb_op = jnp.asarray(fcb)

    def forward(x):
        B = x.shape[0]                    # static under jit
        bt = B                            # whole batch folded into matmul M; single
        # grid step at these sizes (tile batch in multiples of 8 for large B).
        kernel = _make_kernel(geoms, bt)

        # one NCHW -> channel-last relayout + zero lane padding on the host
        x_cl = jnp.transpose(x.astype(jnp.float32), (0, 2, 3, 1)).reshape(B * H * W, C)
        x_cl = jnp.pad(x_cl, ((0, 0), (0, c0p - C)))

        operands = [x_cl]
        specs = [pl.BlockSpec((bt * H * W, c0p), lambda i: (0, 0))]
        for wop, sop in zip(w_ops, s_ops):
            operands += [wop, sop]
            specs += [pl.BlockSpec(wop.shape, lambda i: (0, 0)),
                      pl.BlockSpec(sop.shape, lambda i: (0, 0))]
        sfc_t = jnp.asarray(np.tile(sfc, (bt, 1)))
        fsh_t = jnp.asarray(np.tile(fsh, (bt, 1)))
        operands += [sfc_t, fsh_t, wfc_op, fcb_op]
        specs += [pl.BlockSpec(sfc_t.shape, lambda i: (0, 0)),
                  pl.BlockSpec(fsh_t.shape, lambda i: (0, 0)),
                  pl.BlockSpec(wfc_op.shape, lambda i: (0, 0)),
                  pl.BlockSpec(fcb_op.shape, lambda i: (0, 0))]

        scratch = [pltpu.VMEM((bt * g["m_out"], g["k"] * g["k"] * g["icp"]),
                              jnp.float32) for g in geoms]                # im2col
        scratch += [pltpu.VMEM((bt * g["hp"] * g["wp"], g["icp"]), jnp.float32)
                    for g in geoms[1:]]                                   # activations
        scratch += [pltpu.VMEM((bt, m_last * ocp_last), jnp.float32)]     # fc input

        flops = (sum(2 * bt * g["m_out"] * g["k"] * g["k"] * g["icp"] * g["ocp"]
                     for g in geoms) + 2 * bt * m_last * ocp_last * npad)
        trans = sum(bt * g["m_out"] * g["ocp"] for g in geoms)
        weight_bytes = sum(int(np.prod(o.shape)) * o.dtype.itemsize for o in operands)
        cost = pl.CostEstimate(flops=int(flops), transcendentals=int(trans),
                               bytes_accessed=int(weight_bytes + bt * npad * 4))

        out = pl.pallas_call(
            kernel,
            out_shape=jax.ShapeDtypeStruct((bt, npad), jnp.float32),
            grid=(1,),
            in_specs=specs,
            out_specs=pl.BlockSpec((bt, npad), lambda i: (0, 0)),
            scratch_shapes=scratch,
            compiler_params=pltpu.CompilerParams(
                dimension_semantics=("arbitrary",)),
            cost_estimate=cost,
        )(*operands)
        return out[:, :out_vec]

    return jax.jit(forward)


# ----------------------------- parameter init & reference -----------------------------

def init_conv_layer(key, ic, oc, k):
    kw_, kb_, kg_, kbt, km, kv = jax.random.split(key, 6)
    return dict(
        w=0.1 * jax.random.normal(kw_, (oc, ic, k, k), jnp.float32),   # OIHW
        b=0.05 * jax.random.normal(kb_, (oc,), jnp.float32),
        gamma=1.0 + 0.1 * jax.random.normal(kg_, (oc,), jnp.float32),
        beta=0.1 * jax.random.normal(kbt, (oc,), jnp.float32),
        mean=0.1 * jax.random.normal(km, (oc,), jnp.float32),
        var=0.5 + jax.random.uniform(kv, (oc,), jnp.float32),
    )


def init_fc(key, out_dim, out_vec):
    kg_, kbt, km, kv, kw_, kb_ = jax.random.split(key, 6)
    return dict(
        gamma=1.0 + 0.1 * jax.random.normal(kg_, (out_dim,), jnp.float32),
        beta=0.1 * jax.random.normal(kbt, (out_dim,), jnp.float32),
        mean=0.1 * jax.random.normal(km, (out_dim,), jnp.float32),
        var=0.5 + jax.random.uniform(kv, (out_dim,), jnp.float32),
        w=0.1 * jax.random.normal(kw_, (out_dim, out_vec), jnp.float32),
        b=0.05 * jax.random.normal(kb_, (out_vec,), jnp.float32),
    )


def reference_forward(x, conv_params, cfgs, fc_params, bf16_matmul=False):
    """Pure-JAX (XLA) reference of the same eval-mode forward.  With
    bf16_matmul=True, matmul/conv operands are rounded to bf16 (values only,
    math in f32) to precision-match the kernel's MXU inputs."""
    def q(a):
        return a.astype(jnp.bfloat16).astype(jnp.float32) if bf16_matmul else a

    out = x
    for lp, (_, oc, k, stride, pad) in zip(conv_params, cfgs):
        s = lp["gamma"] / jnp.sqrt(lp["var"] + EPS)
        w_fold = lp["w"] * s[:, None, None, None]
        shift = lp["beta"] + (lp["b"] - lp["mean"]) * s
        z = jax.lax.conv_general_dilated(
            q(out), q(w_fold), (stride, stride), [(pad, pad), (pad, pad)],
            dimension_numbers=("NCHW", "OIHW", "NCHW"))
        z = z + shift[None, :, None, None]
        out = jax.nn.gelu(z, approximate=False)
    flat = out.reshape(x.shape[0], -1)
    s = fc_params["gamma"] / jnp.sqrt(fc_params["var"] + EPS)
    y = flat * s[None, :] + (fc_params["beta"] - fc_params["mean"] * s)[None, :]
    y = jnp.maximum(y, 0.0)
    return q(y) @ q(fc_params["w"]) + fc_params["b"][None, :]


# ----------------------------- main -----------------------------

if __name__ == "__main__":
    # Small shapes consistent with the module: in_shape=(4,16,16), out_channels=8,
    # kernel_size=3, num_layers=2, out_vector_size=32, batch=2.
    B, C, H, W = 2, 4, 16, 16
    out_channels, kernel_size, num_layers, out_vector_size = 8, 3, 2, 32

    cfgs = build_layer_configs(C, out_channels, kernel_size, num_layers)

    # Spatial sizes after the conv stack -> out_dim (mirrors the torch dummy pass).
    h, w, oc_last = H, W, C
    for (_, oc, k, s_, p_) in cfgs:
        h = (h + 2 * p_ - k) // s_ + 1
        w = (w + 2 * p_ - k) // s_ + 1
        oc_last = oc
    out_dim = oc_last * h * w

    root = jax.random.PRNGKey(0)
    kx, kfc, *klayers = jax.random.split(root, 2 + num_layers)
    x = jax.random.normal(kx, (B, C, H, W), jnp.float32)
    conv_params = [init_conv_layer(kl, ic, oc, kk)
                   for kl, (ic, oc, kk, _, _) in zip(klayers, cfgs)]
    fc_params = init_fc(kfc, out_dim, out_vector_size)

    fwd = build_forward(cfgs, conv_params, fc_params, (C, H, W), out_vector_size)
    out = jax.block_until_ready(fwd(x))
    assert out.shape == (B, out_vector_size), out.shape

    # Tight check vs a precision-matched (bf16 matmul operand) reference.
    ref_bits = reference_forward(x, conv_params, cfgs, fc_params, bf16_matmul=True)
    if not jnp.allclose(out, ref_bits, atol=1e-2, rtol=1e-2):
        raise AssertionError(
            f"Pallas mismatch vs bf16-matched reference, max abs diff "
            f"{float(jnp.max(jnp.abs(out - ref_bits)))}")
    # Loose check vs the pure-f32 module reference (gap = bf16 MXU operands).
    ref_f32 = reference_forward(x, conv_params, cfgs, fc_params, bf16_matmul=False)
    if not jnp.allclose(out, ref_f32, atol=5e-2, rtol=5e-2):
        raise AssertionError(
            f"Pallas mismatch vs f32 reference, max abs diff "
            f"{float(jnp.max(jnp.abs(out - ref_f32)))}")

    print("KERNEL_OK")
</pallas_src>

<mosaic_0001>
module attributes {stable_mosaic.version = 11 : i64} {
  func.func @kernel(%arg0: i32, %arg1: memref<512x128xf32, #tpu.memory_space<vmem>>, %arg2: memref<1152x128xbf16, #tpu.memory_space<vmem>>, %arg3: memref<1x128xf32, #tpu.memory_space<vmem>>, %arg4: memref<1152x128xbf16, #tpu.memory_space<vmem>>, %arg5: memref<1x128xf32, #tpu.memory_space<vmem>>, %arg6: memref<18x128xf32, #tpu.memory_space<vmem>>, %arg7: memref<18x128xf32, #tpu.memory_space<vmem>>, %arg8: memref<1152x128xbf16, #tpu.memory_space<vmem>>, %arg9: memref<1x128xf32, #tpu.memory_space<vmem>>, %arg10: memref<2x128xf32, #tpu.memory_space<vmem>>, %arg11: memref<98x1152xf32, #tpu.memory_space<vmem>>, %arg12: memref<18x1152xf32, #tpu.memory_space<vmem>>, %arg13: memref<98x128xf32, #tpu.memory_space<vmem>>, %arg14: memref<2x1152xf32, #tpu.memory_space<vmem>>) attributes {dimension_semantics = [#tpu.dimension_semantics<arbitrary>], iteration_bounds = array<i64: 1>, scalar_prefetch = 0 : i64, scratch_operands = 4 : i64, tpu.core_type = #tpu.core_type<tc>, window_params = [{pipeline_mode = #tpu.pipeline_mode<synchronous>, transform_indices = @transform_0, window_bounds = array<i64: 512, 128>}, {pipeline_mode = #tpu.pipeline_mode<synchronous>, transform_indices = @transform_1, window_bounds = array<i64: 1152, 128>}, {pipeline_mode = #tpu.pipeline_mode<synchronous>, transform_indices = @transform_2, window_bounds = array<i64: 1, 128>}, {pipeline_mode = #tpu.pipeline_mode<synchronous>, transform_indices = @transform_3, window_bounds = array<i64: 1152, 128>}, {pipeline_mode = #tpu.pipeline_mode<synchronous>, transform_indices = @transform_4, window_bounds = array<i64: 1, 128>}, {pipeline_mode = #tpu.pipeline_mode<synchronous>, transform_indices = @transform_5, window_bounds = array<i64: 18, 128>}, {pipeline_mode = #tpu.pipeline_mode<synchronous>, transform_indices = @transform_6, window_bounds = array<i64: 18, 128>}, {pipeline_mode = #tpu.pipeline_mode<synchronous>, transform_indices = @transform_7, window_bounds = array<i64: 1152, 128>}, {pipeline_mode = #tpu.pipeline_mode<synchronous>, transform_indices = @transform_8, window_bounds = array<i64: 1, 128>}, {pipeline_mode = #tpu.pipeline_mode<synchronous>, transform_indices = @transform_9, window_bounds = array<i64: 2, 128>}]} {
    %c0 = arith.constant 0 : index
    %c0_0 = arith.constant 0 : index
    %0 = tpu.strided_load %arg1[%c0, %c0_0] {strides = array<i32: 2, 1>} : memref<512x128xf32, #tpu.memory_space<vmem>>, vector<7x128xf32>
    %c0_1 = arith.constant 0 : index
    %c0_2 = arith.constant 0 : index
    %1 = vector.load %arg11[%c0_1, %c0_2] : memref<98x1152xf32, #tpu.memory_space<vmem>>, vector<7x128xf32>
    tpu.vector_store %arg11[%c0_1, %c0_2], %0 {strides = array<i32>} : memref<98x1152xf32, #tpu.memory_space<vmem>>, vector<7x128xf32>,
    %c1 = arith.constant 1 : index
    %c0_3 = arith.constant 0 : index
    %2 = tpu.strided_load %arg1[%c1, %c0_3] {strides = array<i32: 2, 1>} : memref<512x128xf32, #tpu.memory_space<vmem>>, vector<7x128xf32>
    %c0_4 = arith.constant 0 : index
    %c128 = arith.constant 128 : index
    %3 = vector.load %arg11[%c0_4, %c128] : memref<98x1152xf32, #tpu.memory_space<vmem>>, vector<7x128xf32>
    tpu.vector_store %arg11[%c0_4, %c128], %2 {strides = array<i32>} : memref<98x1152xf32, #tpu.memory_space<vmem>>, vector<7x128xf32>,
    %c2 = arith.constant 2 : index
    %c0_5 = arith.constant 0 : index
    %4 = tpu.strided_load %arg1[%c2, %c0_5] {strides = array<i32: 2, 1>} : memref<512x128xf32, #tpu.memory_space<vmem>>, vector<7x128xf32>
    %c0_6 = arith.constant 0 : index
    %c256 = arith.constant 256 : index
    %5 = vector.load %arg11[%c0_6, %c256] : memref<98x1152xf32, #tpu.memory_space<vmem>>, vector<7x128xf32>
    tpu.vector_store %arg11[%c0_6, %c256], %4 {strides = array<i32>} : memref<98x1152xf32, #tpu.memory_space<vmem>>, vector<7x128xf32>,
    %c16 = arith.constant 16 : index
    %c0_7 = arith.constant 0 : index
    %6 = tpu.strided_load %arg1[%c16, %c0_7] {strides = array<i32: 2, 1>} : memref<512x128xf32, #tpu.memory_space<vmem>>, vector<7x128xf32>
    %c0_8 = arith.constant 0 : index
    %c384 = arith.constant 384 : index
    %7 = vector.load %arg11[%c0_8, %c384] : memref<98x1152xf32, #tpu.memory_space<vmem>>, vector<7x128xf32>
    tpu.vector_store %arg11[%c0_8, %c384], %6 {strides = array<i32>} : memref<98x1152xf32, #tpu.memory_space<vmem>>, vector<7x128xf32>,
    %c17 = arith.constant 17 : index
    %c0_9 = arith.constant 0 : index
    %8 = tpu.strided_load %arg1[%c17, %c0_9] {strides = array<i32: 2, 1>} : memref<512x128xf32, #tpu.memory_space<vmem>>, vector<7x128xf32>
    %c0_10 = arith.constant 0 : index
    %c512 = arith.constant 512 : index
    %9 = vector.load %arg11[%c0_10, %c512] : memref<98x1152xf32, #tpu.memory_space<vmem>>, vector<7x128xf32>
    tpu.vector_store %arg11[%c0_10, %c512], %8 {strides = array<i32>} : memref<98x1152xf32, #tpu.memory_space<vmem>>, vector<7x128xf32>,
    %c18 = arith.constant 18 : index
    %c0_11 = arith.constant 0 : index
    %10 = tpu.strided_load %arg1[%c18, %c0_11] {strides = array<i32: 2, 1>} : memref<512x128xf32, #tpu.memory_space<vmem>>, vector<7x128xf32>
    %c0_12 = arith.constant 0 : index
    %c640 = arith.constant 640 : index
    %11 = vector.load %arg11[%c0_12, %c640] : memref<98x1152xf32, #tpu.memory_space<vmem>>, vector<7x128xf32>
    tpu.vector_store %arg11[%c0_12, %c640], %10 {strides = array<i32>} : memref<98x1152xf32, #tpu.memory_space<vmem>>, vector<7x128xf32>,
    %c32 = arith.constant 32 : index
    %c0_13 = arith.constant 0 : index
    %12 = tpu.strided_load %arg1[%c32, %c0_13] {strides = array<i32: 2, 1>} : memref<512x128xf32, #tpu.memory_space<vmem>>, vector<7x128xf32>
    %c0_14 = arith.constant 0 : index
    %c768 = arith.constant 768 : index
    %13 = vector.load %arg11[%c0_14, %c768] : memref<98x1152xf32, #tpu.memory_space<vmem>>, vector<7x128xf32>
    tpu.vector_store %arg11[%c0_14, %c768], %12 {strides = array<i32>} : memref<98x1152xf32, #tpu.memory_space<vmem>>, vector<7x128xf32>,
    %c33 = arith.constant 33 : index
    %c0_15 = arith.constant 0 : index
    %14 = tpu.strided_load %arg1[%c33, %c0_15] {strides = array<i32: 2, 1>} : memref<512x128xf32, #tpu.memory_space<vmem>>, vector<7x128xf32>
    %c0_16 = arith.constant 0 : index
    %c896 = arith.constant 896 : index
    %15 = vector.load %arg11[%c0_16, %c896] : memref<98x1152xf32, #tpu.memory_space<vmem>>, vector<7x128xf32>
    tpu.vector_store %arg11[%c0_16, %c896], %14 {strides = array<i32>} : memref<98x1152xf32, #tpu.memory_space<vmem>>, vector<7x128xf32>,
    %c34 = arith.constant 34 : index
    %c0_17 = arith.constant 0 : index
    %16 = tpu.strided_load %arg1[%c34, %c0_17] {strides = array<i32: 2, 1>} : memref<512x128xf32, #tpu.memory_space<vmem>>, vector<7x128xf32>
    %c0_18 = arith.constant 0 : index
    %c1024 = arith.constant 1024 : index
    %17 = vector.load %arg11[%c0_18, %c1024] : memref<98x1152xf32, #tpu.memory_space<vmem>>, vector<7x128xf32>
    tpu.vector_store %arg11[%c0_18, %c1024], %16 {strides = array<i32>} : memref<98x1152xf32, #tpu.memory_space<vmem>>, vector<7x128xf32>,
    %c32_19 = arith.constant 32 : index
    %c0_20 = arith.constant 0 : index
    %18 = tpu.strided_load %arg1[%c32_19, %c0_20] {strides = array<i32: 2, 1>} : memref<512x128xf32, #tpu.memory_space<vmem>>, vector<7x128xf32>
    %c7 = arith.constant 7 : index
    %c0_21 = arith.constant 0 : index
    %19 = vector.load %arg11[%c7, %c0_21] : memref<98x1152xf32, #tpu.memory_space<vmem>>, vector<7x128xf32>
    tpu.vector_store %arg11[%c7, %c0_21], %18 {strides = array<i32>} : memref<98x1152xf32, #tpu.memory_space<vmem>>, vector<7x128xf32>,
    %c33_22 = arith.constant 33 : index
    %c0_23 = arith.constant 0 : index
    %20 = tpu.strided_load %arg1[%c33_22, %c0_23] {strides = array<i32: 2, 1>} : memref<512x128xf32, #tpu.memory_space<vmem>>, vector<7x128xf32>
    %c7_24 = arith.constant 7 : index
    %c128_25 = arith.constant 128 : index
    %21 = vector.load %arg11[%c7_24, %c128_25] : memref<98x1152xf32, #tpu.memory_space<vmem>>, vector<7x128xf32>
    tpu.vector_store %arg11[%c7_24, %c128_25], %20 {strides = array<i32>} : memref<98x1152xf32, #tpu.memory_space<vmem>>, vector<7x128xf32>,
    %c34_26 = arith.constant 34 : index
    %c0_27 = arith.constant 0 : index
    %22 = tpu.strided_load %arg1[%c34_26, %c0_27] {strides = array<i32: 2, 1>} : memref<512x128xf32, #tpu.memory_space<vmem>>, vector<7x128xf32>
    %c7_28 = arith.constant 7 : index
    %c256_29 = arith.constant 256 : index
    %23 = vector.load %arg11[%c7_28, %c256_29] : memref<98x1152xf32, #tpu.memory_space<vmem>>, vector<7x128xf32>
    tpu.vector_store %arg11[%c7_28, %c256_29], %22 {strides = array<i32>} : memref<98x1152xf32, #tpu.memory_space<vmem>>, vector<7x128xf32>,
    %c48 = arith.constant 48 : index
    %c0_30 = arith.constant 0 : index
    %24 = tpu.strided_load %arg1[%c48, %c0_30] {strides = array<i32: 2, 1>} : memref<512x128xf32, #tpu.memory_space<vmem>>, vector<7x128xf32>
    %c7_31 = arith.constant 7 : index
    %c384_32 = arith.constant 384 : index
    %25 = vector.load %arg11[%c7_31, %c384_32] : memref<98x1152xf32, #tpu.memory_space<vmem>>, vector<7x128xf32>
    tpu.vector_store %arg11[%c7_31, %c384_32], %24 {strides = array<i32>} : memref<98x1152xf32, #tpu.memory_space<vmem>>, vector<7x128xf32>,
    %c49 = arith.constant 49 : index
    %c0_33 = arith.constant 0 : index
    %26 = tpu.strided_load %arg1[%c49, %c0_33] {strides = array<i32: 2, 1>} : memref<512x128xf32, #tpu.memory_space<vmem>>, vector<7x128xf32>
    %c7_34 = arith.constant 7 : index
    %c512_35 = arith.constant 512 : index
    %27 = vector.load %arg11[%c7_34, %c512_35] : memref<98x1152xf32, #tpu.memory_space<vmem>>, vector<7x128xf32>
    tpu.vector_store %arg11[%c7_34, %c512_35], %26 {strides = array<i32>} : memref<98x1152xf32, #tpu.memory_space<vmem>>, vector<7x128xf32>,
    %c50 = arith.constant 50 : index
    %c0_36 = arith.constant 0 : index
    %28 = tpu.strided_load %arg1[%c50, %c0_36] {strides = array<i32: 2, 1>} : memref<512x128xf32, #tpu.memory_space<vmem>>, vector<7x128xf32>
    %c7_37 = arith.constant 7 : index
    %c640_38 = arith.constant 640 : index
    %29 = vector.load %arg11[%c7_37, %c640_38] : memref<98x1152xf32, #tpu.memory_space<vmem>>, vector<7x128xf32>
    tpu.vector_store %arg11[%c7_37, %c640_38], %28 {strides = array<i32>} : memref<98x1152xf32, #tpu.memory_space<vmem>>, vector<7x128xf32>,
    %c64 = arith.constant 64 : index
    %c0_39 = arith.constant 0 : index
    %30 = tpu.strided_load %arg1[%c64, %c0_39] {strides = array<i32: 2, 1>} : memref<512x128xf32, #tpu.memory_space<vmem>>, vector<7x128xf32>
    %c7_40 = arith.constant 7 : index
    %c768_41 = arith.constant 768 : index
    %31 = vector.load %arg11[%c7_40, %c768_41] : memref<98x1152xf32, #tpu.memory_space<vmem>>, vector<7x128xf32>
    tpu.vector_store %arg11[%c7_40, %c768_41], %30 {strides = array<i32>} : memref<98x1152xf32, #tpu.memory_space<vmem>>, vector<7x128xf32>,
    %c65 = arith.constant 65 : index
    %c0_42 = arith.constant 0 : index
    %32 = tpu.strided_load %arg1[%c65, %c0_42] {strides = array<i32: 2, 1>} : memref<512x128xf32, #tpu.memory_space<vmem>>, vector<7x128xf32>
    %c7_43 = arith.constant 7 : index
    %c896_44 = arith.constant 896 : index
    %33 = vector.load %arg11[%c7_43, %c896_44] : memref<98x1152xf32, #tpu.memory_space<vmem>>, vector<7x128xf32>
    tpu.vector_store %arg11[%c7_43, %c896_44], %32 {strides = array<i32>} : memref<98x1152xf32, #tpu.memory_space<vmem>>, vector<7x128xf32>,
    %c66 = arith.constant 66 : index
    %c0_45 = arith.constant 0 : index
    %34 = tpu.strided_load %arg1[%c66, %c0_45] {strides = array<i32: 2, 1>} : memref<512x128xf32, #tpu.memory_space<vmem>>, vector<7x128xf32>
    %c7_46 = arith.constant 7 : index
    %c1024_47 = arith.constant 1024 : index
    %35 = vector.load %arg11[%c7_46, %c1024_47] : memref<98x1152xf32, #tpu.memory_space<vmem>>, vector<7x128xf32>
    tpu.vector_store %arg11[%c7_46, %c1024_47], %34 {strides = array<i32>} : memref<98x1152xf32, #tpu.memory_space<vmem>>, vector<7x128xf32>,
    %c64_48 = arith.constant 64 : index
    %c0_49 = arith.constant 0 : index
    %36 = tpu.strided_load %arg1[%c64_48, %c0_49] {strides = array<i32: 2, 1>} : memref<512x128xf32, #tpu.memory_space<vmem>>, vector<7x128xf32>
    %c14 = arith.constant 14 : index
    %c0_50 = arith.constant 0 : index
    %37 = vector.load %arg11[%c14, %c0_50] : memref<98x1152xf32, #tpu.memory_space<vmem>>, vector<7x128xf32>
    tpu.vector_store %arg11[%c14, %c0_50], %36 {strides = array<i32>} : memref<98x1152xf32, #tpu.memory_space<vmem>>, vector<7x128xf32>,
    %c65_51 = arith.constant 65 : index
    %c0_52 = arith.constant 0 : index
    %38 = tpu.strided_load %arg1[%c65_51, %c0_52] {strides = array<i32: 2, 1>} : memref<512x128xf32, #tpu.memory_space<vmem>>, vector<7x128xf32>
    %c14_53 = arith.constant 14 : index
    %c128_54 = arith.constant 128 : index
    %39 = vector.load %arg11[%c14_53, %c128_54] : memref<98x1152xf32, #tpu.memory_space<vmem>>, vector<7x128xf32>
    tpu.vector_store %arg11[%c14_53, %c128_54], %38 {strides = array<i32>} : memref<98x1152xf32, #tpu.memory_space<vmem>>, vector<7x128xf32>,
    %c66_55 = arith.constant 66 : index
    %c0_56 = arith.constant 0 : index
    %40 = tpu.strided_load %arg1[%c66_55, %c0_56] {strides = array<i32: 2, 1>} : memref<512x128xf32, #tpu.memory_space<vmem>>, vector<7x128xf32>
    %c14_57 = arith.constant 14 : index
    %c256_58 = arith.constant 256 : index
    %41 = vector.load %arg11[%c14_57, %c256_58] : memref<98x1152xf32, #tpu.memory_space<vmem>>, vector<7x128xf32>
    tpu.vector_store %arg11[%c14_57, %c256_58], %40 {strides = array<i32>} : memref<98x1152xf32, #tpu.memory_space<vmem>>, vector<7x128xf32>,
    %c80 = arith.constant 80 : index
    %c0_59 = arith.constant 0 : index
    %42 = tpu.strided_load %arg1[%c80, %c0_59] {strides = array<i32: 2, 1>} : memref<512x128xf32, #tpu.memory_space<vmem>>, vector<7x128xf32>
    %c14_60 = arith.constant 14 : index
    %c384_61 = arith.constant 384 : index
    %43 = vector.load %arg11[%c14_60, %c384_61] : memref<98x1152xf32, #tpu.memory_space<vmem>>, vector<7x128xf32>
    tpu.vector_store %arg11[%c14_60, %c384_61], %42 {strides = array<i32>} : memref<98x1152xf32, #tpu.memory_space<vmem>>, vector<7x128xf32>,
    %c81 = arith.constant 81 : index
    %c0_62 = arith.constant 0 : index
    %44 = tpu.strided_load %arg1[%c81, %c0_62] {strides = array<i32: 2, 1>} : memref<512x128xf32, #tpu.memory_space<vmem>>, vector<7x128xf32>
    %c14_63 = arith.constant 14 : index
    %c512_64 = arith.constant 512 : index
    %45 = vector.load %arg11[%c14_63, %c512_64] : memref<98x1152xf32, #tpu.memory_space<vmem>>, vector<7x128xf32>
    tpu.vector_store %arg11[%c14_63, %c512_64], %44 {strides = array<i32>} : memref<98x1152xf32, #tpu.memory_space<vmem>>, vector<7x128xf32>,
    %c82 = arith.constant 82 : index
    %c0_65 = arith.constant 0 : index
    %46 = tpu.strided_load %arg1[%c82, %c0_65] {strides = array<i32: 2, 1>} : memref<512x128xf32, #tpu.memory_space<vmem>>, vector<7x128xf32>
    %c14_66 = arith.constant 14 : index
    %c640_67 = arith.constant 640 : index
    %47 = vector.load %arg11[%c14_66, %c640_67] : memref<98x1152xf32, #tpu.memory_space<vmem>>, vector<7x128xf32>
    tpu.vector_store %arg11[%c14_66, %c640_67], %46 {strides = array<i32>} : memref<98x1152xf32, #tpu.memory_space<vmem>>, vector<7x128xf32>,
    %c96 = arith.constant 96 : index
    %c0_68 = arith.constant 0 : index
    %48 = tpu.strided_load %arg1[%c96, %c0_68] {strides = array<i32: 2, 1>} : memref<512x128xf32, #tpu.memory_space<vmem>>, vector<7x128xf32>
    %c14_69 = arith.constant 14 : index
    %c768_70 = arith.constant 768 : index
    %49 = vector.load %arg11[%c14_69, %c768_70] : memref<98x1152xf32, #tpu.memory_space<vmem>>, vector<7x128xf32>
    tpu.vector_store %arg11[%c14_69, %c768_70], %48 {strides = array<i32>} : memref<98x1152xf32, #tpu.memory_space<vmem>>, vector<7x128xf32>,
    %c97 = arith.constant 97 : index
    %c0_71 = arith.constant 0 : index
    %50 = tpu.strided_load %arg1[%c97, %c0_71] {strides = array<i32: 2, 1>} : memref<512x128xf32, #tpu.memory_space<vmem>>, vector<7x128xf32>
    %c14_72 = arith.constant 14 : index
    %c896_73 = arith.constant 896 : index
    %51 = vector.load %arg11[%c14_72, %c896_73] : memref<98x1152xf32, #tpu.memory_space<vmem>>, vector<7x128xf32>
    tpu.vector_store %arg11[%c14_72, %c896_73], %50 {strides = array<i32>} : memref<98x1152xf32, #tpu.memory_space<vmem>>, vector<7x128xf32>,
    %c98 = arith.constant 98 : index
    %c0_74 = arith.constant 0 : index
    %52 = tpu.strided_load %arg1[%c98, %c0_74] {strides = array<i32: 2, 1>} : memref<512x128xf32, #tpu.memory_space<vmem>>, vector<7x128xf32>
    %c14_75 = arith.constant 14 : index
    %c1024_76 = arith.constant 1024 : index
    %53 = vector.load %arg11[%c14_75, %c1024_76] : memref<98x1152xf32, #tpu.memory_space<vmem>>, vector<7x128xf32>
    tpu.vector_store %arg11[%c14_75, %c1024_76], %52 {strides = array<i32>} : memref<98x1152xf32, #tpu.memory_space<vmem>>, vector<7x128xf32>,
    %c96_77 = arith.constant 96 : index
    %c0_78 = arith.constant 0 : index
    %54 = tpu.strided_load %arg1[%c96_77, %c0_78] {strides = array<i32: 2, 1>} : memref<512x128xf32, #tpu.memory_space<vmem>>, vector<7x128xf32>
    %c21 = arith.constant 21 : index
    %c0_79 = arith.constant 0 : index
    %55 = vector.load %arg11[%c21, %c0_79] : memref<98x1152xf32, #tpu.memory_space<vmem>>, vector<7x128xf32>
    tpu.vector_store %arg11[%c21, %c0_79], %54 {strides = array<i32>} : memref<98x1152xf32, #tpu.memory_space<vmem>>, vector<7x128xf32>,
    %c97_80 = arith.constant 97 : index
    %c0_81 = arith.constant 0 : index
    %56 = tpu.strided_load %arg1[%c97_80, %c0_81] {strides = array<i32: 2, 1>} : memref<512x128xf32, #tpu.memory_space<vmem>>, vector<7x128xf32>
    %c21_82 = arith.constant 21 : index
    %c128_83 = arith.constant 128 : index
    %57 = vector.load %arg11[%c21_82, %c128_83] : memref<98x1152xf32, #tpu.memory_space<vmem>>, vector<7x128xf32>
    tpu.vector_store %arg11[%c21_82, %c128_83], %56 {strides = array<i32>} : memref<98x1152xf32, #tpu.memory_space<vmem>>, vector<7x128xf32>,
    %c98_84 = arith.constant 98 : index
    %c0_85 = arith.constant 0 : index
    %58 = tpu.strided_load %arg1[%c98_84, %c0_85] {strides = array<i32: 2, 1>} : memref<512x128xf32, #tpu.memory_space<vmem>>, vector<7x128xf32>
    %c21_86 = arith.constant 21 : index
    %c256_87 = arith.constant 256 : index
    %59 = vector.load %arg11[%c21_86, %c256_87] : memref<98x1152xf32, #tpu.memory_space<vmem>>, vector<7x128xf32>
    tpu.vector_store %arg11[%c21_86, %c256_87], %58 {strides = array<i32>} : memref<98x1152xf32, #tpu.memory_space<vmem>>, vector<7x128xf32>,
    %c112 = arith.constant 112 : index
    %c0_88 = arith.constant 0 : index
    %60 = tpu.strided_load %arg1[%c112, %c0_88] {strides = array<i32: 2, 1>} : memref<512x128xf32, #tpu.memory_space<vmem>>, vector<7x128xf32>
    %c21_89 = arith.constant 21 : index
    %c384_90 = arith.constant 384 : index
    %61 = vector.load %arg11[%c21_89, %c384_90] : memref<98x1152xf32, #tpu.memory_space<vmem>>, vector<7x128xf32>
    tpu.vector_store %arg11[%c21_89, %c384_90], %60 {strides = array<i32>} : memref<98x1152xf32, #tpu.memory_space<vmem>>, vector<7x128xf32>,
    %c113 = arith.constant 113 : index
    %c0_91 = arith.constant 0 : index
    %62 = tpu.strided_load %arg1[%c113, %c0_91] {strides = array<i32: 2, 1>} : memref<512x128xf32, #tpu.memory_space<vmem>>, vector<7x128xf32>
    %c21_92 = arith.constant 21 : index
    %c512_93 = arith.constant 512 : index
    %63 = vector.load %arg11[%c21_92, %c512_93] : memref<98x1152xf32, #tpu.memory_space<vmem>>, vector<7x128xf32>
    tpu.vector_store %arg11[%c21_92, %c512_93], %62 {strides = array<i32>} : memref<98x1152xf32, #tpu.memory_space<vmem>>, vector<7x128xf32>,
    %c114 = arith.constant 114 : index
    %c0_94 = arith.constant 0 : index
    %64 = tpu.strided_load %arg1[%c114, %c0_94] {strides = array<i32: 2, 1>} : memref<512x128xf32, #tpu.memory_space<vmem>>, vector<7x128xf32>
    %c21_95 = arith.constant 21 : index
    %c640_96 = arith.constant 640 : index
    %65 = vector.load %arg11[%c21_95, %c640_96] : memref<98x1152xf32, #tpu.memory_space<vmem>>, vector<7x128xf32>
    tpu.vector_store %arg11[%c21_95, %c640_96], %64 {strides = array<i32>} : memref<98x1152xf32, #tpu.memory_space<vmem>>, vector<7x128xf32>,
    %c128_97 = arith.constant 128 : index
    %c0_98 = arith.constant 0 : index
    %66 = tpu.strided_load %arg1[%c128_97, %c0_98] {strides = array<i32: 2, 1>} : memref<512x128xf32, #tpu.memory_space<vmem>>, vector<7x128xf32>
    %c21_99 = arith.constant 21 : index
    %c768_100 = arith.constant 768 : index
    %67 = vector.load %arg11[%c21_99, %c768_100] : memref<98x1152xf32, #tpu.memory_space<vmem>>, vector<7x128xf32>
    tpu.vector_store %arg11[%c21_99, %c768_100], %66 {strides = array<i32>} : memref<98x1152xf32, #tpu.memory_space<vmem>>, vector<7x128xf32>,
    %c129 = arith.constant 129 : index
    %c0_101 = arith.constant 0 : index
    %68 = tpu.strided_load %arg1[%c129, %c0_101] {strides = array<i32: 2, 1>} : memref<512x128xf32, #tpu.memory_space<vmem>>, vector<7x128xf32>
    %c21_102 = arith.constant 21 : index
    %c896_103 = arith.constant 896 : index
    %69 = vector.load %arg11[%c21_102, %c896_103] : memref<98x1152xf32, #tpu.memory_space<vmem>>, vector<7x128xf32>
    tpu.vector_store %arg11[%c21_102, %c896_103], %68 {strides = array<i32>} : memref<98x1152xf32, #tpu.memory_space<vmem>>, vector<7x128xf32>,
    %c130 = arith.constant 130 : index
    %c0_104 = arith.constant 0 : index
    %70 = tpu.strided_load %arg1[%c130, %c0_104] {strides = array<i32: 2, 1>} : memref<512x128xf32, #tpu.memory_space<vmem>>, vector<7x128xf32>
    %c21_105 = arith.constant 21 : index
    %c1024_106 = arith.constant 1024 : index
    %71 = vector.load %arg11[%c21_105, %c1024_106] : memref<98x1152xf32, #tpu.memory_space<vmem>>, vector<7x128xf32>
    tpu.vector_store %arg11[%c21_105, %c1024_106], %70 {strides = array<i32>} : memref<98x1152xf32, #tpu.memory_space<vmem>>, vector<7x128xf32>,
    %c128_107 = arith.constant 128 : index
    %c0_108 = arith.constant 0 : index
    %72 = tpu.strided_load %arg1[%c128_107, %c0_108] {strides = array<i32: 2, 1>} : memref<512x128xf32, #tpu.memory_space<vmem>>, vector<7x128xf32>
    %c28 = arith.constant 28 : index
    %c0_109 = arith.constant 0 : index
    %73 = vector.load %arg11[%c28, %c0_109] : memref<98x1152xf32, #tpu.memory_space<vmem>>, vector<7x128xf32>
    tpu.vector_store %arg11[%c28, %c0_109], %72 {strides = array<i32>} : memref<98x1152xf32, #tpu.memory_space<vmem>>, vector<7x128xf32>,
    %c129_110 = arith.constant 129 : index
    %c0_111 = arith.constant 0 : index
    %74 = tpu.strided_load %arg1[%c129_110, %c0_111] {strides = array<i32: 2, 1>} : memref<512x128xf32, #tpu.memory_space<vmem>>, vector<7x128xf32>
    %c28_112 = arith.constant 28 : index
    %c128_113 = arith.constant 128 : index
    %75 = vector.load %arg11[%c28_112, %c128_113] : memref<98x1152xf32, #tpu.memory_space<vmem>>, vector<7x128xf32>
    tpu.vector_store %arg11[%c28_112, %c128_113], %74 {strides = array<i32>} : memref<98x1152xf32, #tpu.memory_space<vmem>>, vector<7x128xf32>,
    %c130_114 = arith.constant 130 : index
    %c0_115 = arith.constant 0 : index
    %76 = tpu.strided_load %arg1[%c130_114, %c0_115] {strides = array<i32: 2, 1>} : memref<512x128xf32, #tpu.memory_space<vmem>>, vector<7x128xf32>
    %c28_116 = arith.constant 28 : index
    %c256_117 = arith.constant 256 : index
    %77 = vector.load %arg11[%c28_116, %c256_117] : memref<98x1152xf32, #tpu.memory_space<vmem>>, vector<7x128xf32>
    tpu.vector_store %arg11[%c28_116, %c256_117], %76 {strides = array<i32>} : memref<98x1152xf32, #tpu.memory_space<vmem>>, vector<7x128xf32>,
    %c144 = arith.constant 144 : index
    %c0_118 = arith.constant 0 : index
    %78 = tpu.strided_load %arg1[%c144, %c0_118] {strides = array<i32: 2, 1>} : memref<512x128xf32, #tpu.memory_space<vmem>>, vector<7x128xf32>
    %c28_119 = arith.constant 28 : index
    %c384_120 = arith.constant 384 : index
    %79 = vector.load %arg11[%c28_119, %c384_120] : memref<98x1152xf32, #tpu.memory_space<vmem>>, vector<7x128xf32>
    tpu.vector_store %arg11[%c28_119, %c384_120], %78 {strides = array<i32>} : memref<98x1152xf32, #tpu.memory_space<vmem>>, vector<7x128xf32>,
    %c145 = arith.constant 145 : index
    %c0_121 = arith.constant 0 : index
    %80 = tpu.strided_load %arg1[%c145, %c0_121] {strides = array<i32: 2, 1>} : memref<512x128xf32, #tpu.memory_space<vmem>>, vector<7x128xf32>
    %c28_122 = arith.constant 28 : index
    %c512_123 = arith.constant 512 : index
    %81 = vector.load %arg11[%c28_122, %c512_123] : memref<98x1152xf32, #tpu.memory_space<vmem>>, vector<7x128xf32>
    tpu.vector_store %arg11[%c28_122, %c512_123], %80 {strides = array<i32>} : memref<98x1152xf32, #tpu.memory_space<vmem>>, vector<7x128xf32>,
    %c146 = arith.constant 146 : index
    %c0_124 = arith.constant 0 : index
    %82 = tpu.strided_load %arg1[%c146, %c0_124] {strides = array<i32: 2, 1>} : memref<512x128xf32, #tpu.memory_space<vmem>>, vector<7x128xf32>
    %c28_125 = arith.constant 28 : index
    %c640_126 = arith.constant 640 : index
    %83 = vector.load %arg11[%c28_125, %c640_126] : memref<98x1152xf32, #tpu.memory_space<vmem>>, vector<7x128xf32>
    tpu.vector_store %arg11[%c28_125, %c640_126], %82 {strides = array<i32>} : memref<98x1152xf32, #tpu.memory_space<vmem>>, vector<7x128xf32>,
    %c160 = arith.constant 160 : index
    %c0_127 = arith.constant 0 : index
    %84 = tpu.strided_load %arg1[%c160, %c0_127] {strides = array<i32: 2, 1>} : memref<512x128xf32, #tpu.memory_space<vmem>>, vector<7x128xf32>
    %c28_128 = arith.constant 28 : index
    %c768_129 = arith.constant 768 : index
    %85 = vector.load %arg11[%c28_128, %c768_129] : memref<98x1152xf32, #tpu.memory_space<vmem>>, vector<7x128xf32>
    tpu.vector_store %arg11[%c28_128, %c768_129], %84 {strides = array<i32>} : memref<98x1152xf32, #tpu.memory_space<vmem>>, vector<7x128xf32>,
    %c161 = arith.constant 161 : index
    %c0_130 = arith.constant 0 : index
    %86 = tpu.strided_load %arg1[%c161, %c0_130] {strides = array<i32: 2, 1>} : memref<512x128xf32, #tpu.memory_space<vmem>>, vector<7x128xf32>
    %c28_131 = arith.constant 28 : index
    %c896_132 = arith.constant 896 : index
    %87 = vector.load %arg11[%c28_131, %c896_132] : memref<98x1152xf32, #tpu.memory_space<vmem>>, vector<7x128xf32>
    tpu.vector_store %arg11[%c28_131, %c896_132], %86 {strides = array<i32>} : memref<98x1152xf32, #tpu.memory_space<vmem>>, vector<7x128xf32>,
    %c162 = arith.constant 162 : index
    %c0_133 = arith.constant 0 : index
    %88 = tpu.strided_load %arg1[%c162, %c0_133] {strides = array<i32: 2, 1>} : memref<512x128xf32, #tpu.memory_space<vmem>>, vector<7x128xf32>
    %c28_134 = arith.constant 28 : index
    %c1024_135 = arith.constant 1024 : index
    %89 = vector.load %arg11[%c28_134, %c1024_135] : memref<98x1152xf32, #tpu.memory_space<vmem>>, vector<7x128xf32>
    tpu.vector_store %arg11[%c28_134, %c1024_135], %88 {strides = array<i32>} : memref<98x1152xf32, #tpu.memory_space<vmem>>, vector<7x128xf32>,
    %c160_136 = arith.constant 160 : index
    %c0_137 = arith.constant 0 : index
    %90 = tpu.strided_load %arg1[%c160_136, %c0_137] {strides = array<i32: 2, 1>} : memref<512x128xf32, #tpu.memory_space<vmem>>, vector<7x128xf32>
    %c35 = arith.constant 35 : index
    %c0_138 = arith.constant 0 : index
    %91 = vector.load %arg11[%c35, %c0_138] : memref<98x1152xf32, #tpu.memory_space<vmem>>, vector<7x128xf32>
    tpu.vector_store %arg11[%c35, %c0_138], %90 {strides = array<i32>} : memref<98x1152xf32, #tpu.memory_space<vmem>>, vector<7x128xf32>,
    %c161_139 = arith.constant 161 : index
    %c0_140 = arith.constant 0 : index
    %92 = tpu.strided_load %arg1[%c161_139, %c0_140] {strides = array<i32: 2, 1>} : memref<512x128xf32, #tpu.memory_space<vmem>>, vector<7x128xf32>
    %c35_141 = arith.constant 35 : index
    %c128_142 = arith.constant 128 : index
    %93 = vector.load %arg11[%c35_141, %c128_142] : memref<98x1152xf32, #tpu.memory_space<vmem>>, vector<7x128xf32>
    tpu.vector_store %arg11[%c35_141, %c128_142], %92 {strides = array<i32>} : memref<98x1152xf32, #tpu.memory_space<vmem>>, vector<7x128xf32>,
    %c162_143 = arith.constant 162 : index
    %c0_144 = arith.constant 0 : index
    %94 = tpu.strided_load %arg1[%c162_143, %c0_144] {strides = array<i32: 2, 1>} : memref<512x128xf32, #tpu.memory_space<vmem>>, vector<7x128xf32>
    %c35_145 = arith.constant 35 : index
    %c256_146 = arith.constant 256 : index
    %95 = vector.load %arg11[%c35_145, %c256_146] : memref<98x1152xf32, #tpu.memory_space<vmem>>, vector<7x128xf32>
    tpu.vector_store %arg11[%c35_145, %c256_146], %94 {strides = array<i32>} : memref<98x1152xf32, #tpu.memory_space<vmem>>, vector<7x128xf32>,
    %c176 = arith.constant 176 : index
    %c0_147 = arith.constant 0 : index
    %96 = tpu.strided_load %arg1[%c176, %c0_147] {strides = array<i32: 2, 1>} : memref<512x128xf32, #tpu.memory_space<vmem>>, vector<7x128xf32>
    %c35_148 = arith.constant 35 : index
    %c384_149 = arith.constant 384 : index
    %97 = vector.load %arg11[%c35_148, %c384_149] : memref<98x1152xf32, #tpu.memory_space<vmem>>, vector<7x128xf32>
    tpu.vector_store %arg11[%c35_148, %c384_149], %96 {strides = array<i32>} : memref<98x1152xf32, #tpu.memory_space<vmem>>, vector<7x128xf32>,
    %c177 = arith.constant 177 : index
    %c0_150 = arith.constant 0 : index
    %98 = tpu.strided_load %arg1[%c177, %c0_150] {strides = array<i32: 2, 1>} : memref<512x128xf32, #tpu.memory_space<vmem>>, vector<7x128xf32>
    %c35_151 = arith.constant 35 : index
    %c512_152 = arith.constant 512 : index
    %99 = vector.load %arg11[%c35_151, %c512_152] : memref<98x1152xf32, #tpu.memory_space<vmem>>, vector<7x128xf32>
    tpu.vector_store %arg11[%c35_151, %c512_152], %98 {strides = array<i32>} : memref<98x1152xf32, #tpu.memory_space<vmem>>, vector<7x128xf32>,
    %c178 = arith.constant 178 : index
    %c0_153 = arith.constant 0 : index
    %100 = tpu.strided_load %arg1[%c178, %c0_153] {strides = array<i32: 2, 1>} : memref<512x128xf32, #tpu.memory_space<vmem>>, vector<7x128xf32>
    %c35_154 = arith.constant 35 : index
    %c640_155 = arith.constant 640 : index
    %101 = vector.load %arg11[%c35_154, %c640_155] : memref<98x1152xf32, #tpu.memory_space<vmem>>, vector<7x128xf32>
    tpu.vector_store %arg11[%c35_154, %c640_155], %100 {strides = array<i32>} : memref<98x1152xf32, #tpu.memory_space<vmem>>, vector<7x128xf32>,
    %c192 = arith.constant 192 : index
    %c0_156 = arith.constant 0 : index
    %102 = tpu.strided_load %arg1[%c192, %c0_156] {strides = array<i32: 2, 1>} : memref<512x128xf32, #tpu.memory_space<vmem>>, vector<7x128xf32>
    %c35_157 = arith.constant 35 : index
    %c768_158 = arith.constant 768 : index
    %103 = vector.load %arg11[%c35_157, %c768_158] : memref<98x1152xf32, #tpu.memory_space<vmem>>, vector<7x128xf32>
    tpu.vector_store %arg11[%c35_157, %c768_158], %102 {strides = array<i32>} : memref<98x1152xf32, #tpu.memory_space<vmem>>, vector<7x128xf32>,
    %c193 = arith.constant 193 : index
    %c0_159 = arith.constant 0 : index
    %104 = tpu.strided_load %arg1[%c193, %c0_159] {strides = array<i32: 2, 1>} : memref<512x128xf32, #tpu.memory_space<vmem>>, vector<7x128xf32>
    %c35_160 = arith.constant 35 : index
    %c896_161 = arith.constant 896 : index
    %105 = vector.load %arg11[%c35_160, %c896_161] : memref<98x1152xf32, #tpu.memory_space<vmem>>, vector<7x128xf32>
    tpu.vector_store %arg11[%c35_160, %c896_161], %104 {strides = array<i32>} : memref<98x1152xf32, #tpu.memory_space<vmem>>, vector<7x128xf32>,
    %c194 = arith.constant 194 : index
    %c0_162 = arith.constant 0 : index
    %106 = tpu.strided_load %arg1[%c194, %c0_162] {strides = array<i32: 2, 1>} : memref<512x128xf32, #tpu.memory_space<vmem>>, vector<7x128xf32>
    %c35_163 = arith.constant 35 : index
    %c1024_164 = arith.constant 1024 : index
    %107 = vector.load %arg11[%c35_163, %c1024_164] : memref<98x1152xf32, #tpu.memory_space<vmem>>, vector<7x128xf32>
    tpu.vector_store %arg11[%c35_163, %c1024_164], %106 {strides = array<i32>} : memref<98x1152xf32, #tpu.memory_space<vmem>>, vector<7x128xf32>,
    %c192_165 = arith.constant 192 : index
    %c0_166 = arith.constant 0 : index
    %108 = tpu.strided_load %arg1[%c192_165, %c0_166] {strides = array<i32: 2, 1>} : memref<512x128xf32, #tpu.memory_space<vmem>>, vector<7x128xf32>
    %c42 = arith.constant 42 : index
    %c0_167 = arith.constant 0 : index
    %109 = vector.load %arg11[%c42, %c0_167] : memref<98x1152xf32, #tpu.memory_space<vmem>>, vector<7x128xf32>
    tpu.vector_store %arg11[%c42, %c0_167], %108 {strides = array<i32>} : memref<98x1152xf32, #tpu.memory_space<vmem>>, vector<7x128xf32>,
    %c193_168 = arith.constant 193 : index
    %c0_169 = arith.constant 0 : index
    %110 = tpu.strided_load %arg1[%c193_168, %c0_169] {strides = array<i32: 2, 1>} : memref<512x128xf32, #tpu.memory_space<vmem>>, vector<7x128xf32>
    %c42_170 = arith.constant 42 : index
    %c128_171 = arith.constant 128 : index
    %111 = vector.load %arg11[%c42_170, %c128_171] : memref<98x1152xf32, #tpu.memory_space<vmem>>, vector<7x128xf32>
    tpu.vector_store %arg11[%c42_170, %c128_171], %110 {strides = array<i32>} : memref<98x1152xf32, #tpu.memory_space<vmem>>, vector<7x128xf32>,
    %c194_172 = arith.constant 194 : index
    %c0_173 = arith.constant 0 : index
    %112 = tpu.strided_load %arg1[%c194_172, %c0_173] {strides = array<i32: 2, 1>} : memref<512x128xf32, #tpu.memory_space<vmem>>, vector<7x128xf32>
    %c42_174 = arith.constant 42 : index
    %c256_175 = arith.constant 256 : index
    %113 = vector.load %arg11[%c42_174, %c256_175] : memref<98x1152xf32, #tpu.memory_space<vmem>>, vector<7x128xf32>
    tpu.vector_store %arg11[%c42_174, %c256_175], %112 {strides = array<i32>} : memref<98x1152xf32, #tpu.memory_space<vmem>>, vector<7x128xf32>,
    %c208 = arith.constant 208 : index
    %c0_176 = arith.constant 0 : index
    %114 = tpu.strided_load %arg1[%c208, %c0_176] {strides = array<i32: 2, 1>} : memref<512x128xf32, #tpu.memory_space<vmem>>, vector<7x128xf32>
    %c42_177 = arith.constant 42 : index
    %c384_178 = arith.constant 384 : index
    %115 = vector.load %arg11[%c42_177, %c384_178] : memref<98x1152xf32, #tpu.memory_space<vmem>>, vector<7x128xf32>
    tpu.vector_store %arg11[%c42_177, %c384_178], %114 {strides = array<i32>} : memref<98x1152xf32, #tpu.memory_space<vmem>>, vector<7x128xf32>,
    %c209 = arith.constant 209 : index
    %c0_179 = arith.constant 0 : index
    %116 = tpu.strided_load %arg1[%c209, %c0_179] {strides = array<i32: 2, 1>} : memref<512x128xf32, #tpu.memory_space<vmem>>, vector<7x128xf32>
    %c42_180 = arith.constant 42 : index
    %c512_181 = arith.constant 512 : index
    %117 = vector.load %arg11[%c42_180, %c512_181] : memref<98x1152xf32, #tpu.memory_space<vmem>>, vector<7x128xf32>
    tpu.vector_store %arg11[%c42_180, %c512_181], %116 {strides = array<i32>} : memref<98x1152xf32, #tpu.memory_space<vmem>>, vector<7x128xf32>,
    %c210 = arith.constant 210 : index
    %c0_182 = arith.constant 0 : index
    %118 = tpu.strided_load %arg1[%c210, %c0_182] {strides = array<i32: 2, 1>} : memref<512x128xf32, #tpu.memory_space<vmem>>, vector<7x128xf32>
    %c42_183 = arith.constant 42 : index
    %c640_184 = arith.constant 640 : index
    %119 = vector.load %arg11[%c42_183, %c640_184] : memref<98x1152xf32, #tpu.memory_space<vmem>>, vector<7x128xf32>
    tpu.vector_store %arg11[%c42_183, %c640_184], %118 {strides = array<i32>} : memref<98x1152xf32, #tpu.memory_space<vmem>>, vector<7x128xf32>,
    %c224 = arith.constant 224 : index
    %c0_185 = arith.constant 0 : index
    %120 = tpu.strided_load %arg1[%c224, %c0_185] {strides = array<i32: 2, 1>} : memref<512x128xf32, #tpu.memory_space<vmem>>, vector<7x128xf32>
    %c42_186 = arith.constant 42 : index
    %c768_187 = arith.constant 768 : index
    %121 = vector.load %arg11[%c42_186, %c768_187] : memref<98x1152xf32, #tpu.memory_space<vmem>>, vector<7x128xf32>
    tpu.vector_store %arg11[%c42_186, %c768_187], %120 {strides = array<i32>} : memref<98x1152xf32, #tpu.memory_space<vmem>>, vector<7x128xf32>,
    %c225 = arith.constant 225 : index
    %c0_188 = arith.constant 0 : index
    %122 = tpu.strided_load %arg1[%c225, %c0_188] {strides = array<i32: 2, 1>} : memref<512x128xf32, #tpu.memory_space<vmem>>, vector<7x128xf32>
    %c42_189 = arith.constant 42 : index
    %c896_190 = arith.constant 896 : index
    %123 = vector.load %arg11[%c42_189, %c896_190] : memref<98x1152xf32, #tpu.memory_space<vmem>>, vector<7x128xf32>
    tpu.vector_store %arg11[%c42_189, %c896_190], %122 {strides = array<i32>} : memref<98x1152xf32, #tpu.memory_space<vmem>>, vector<7x128xf32>,
    %c226 = arith.constant 226 : index
    %c0_191 = arith.constant 0 : index
    %124 = tpu.strided_load %arg1[%c226, %c0_191] {strides = array<i32: 2, 1>} : memref<512x128xf32, #tpu.memory_space<vmem>>, vector<7x128xf32>
    %c42_192 = arith.constant 42 : index
    %c1024_193 = arith.constant 1024 : index
    %125 = vector.load %arg11[%c42_192, %c1024_193] : memref<98x1152xf32, #tpu.memory_space<vmem>>, vector<7x128xf32>
    tpu.vector_store %arg11[%c42_192, %c1024_193], %124 {strides = array<i32>} : memref<98x1152xf32, #tpu.memory_space<vmem>>, vector<7x128xf32>,
    %c256_194 = arith.constant 256 : index
    %c0_195 = arith.constant 0 : index
    %126 = tpu.strided_load %arg1[%c256_194, %c0_195] {strides = array<i32: 2, 1>} : memref<512x128xf32, #tpu.memory_space<vmem>>, vector<7x128xf32>
    %c49_196 = arith.constant 49 : index
    %c0_197 = arith.constant 0 : index
    %127 = vector.load %arg11[%c49_196, %c0_197] : memref<98x1152xf32, #tpu.memory_space<vmem>>, vector<7x128xf32>
    tpu.vector_store %arg11[%c49_196, %c0_197], %126 {strides = array<i32>} : memref<98x1152xf32, #tpu.memory_space<vmem>>, vector<7x128xf32>,
    %c257 = arith.constant 257 : index
    %c0_198 = arith.constant 0 : index
    %128 = tpu.strided_load %arg1[%c257, %c0_198] {strides = array<i32: 2, 1>} : memref<512x128xf32, #tpu.memory_space<vmem>>, vector<7x128xf32>
    %c49_199 = arith.constant 49 : index
    %c128_200 = arith.constant 128 : index
    %129 = vector.load %arg11[%c49_199, %c128_200] : memref<98x1152xf32, #tpu.memory_space<vmem>>, vector<7x128xf32>
    tpu.vector_store %arg11[%c49_199, %c128_200], %128 {strides = array<i32>} : memref<98x1152xf32, #tpu.memory_space<vmem>>, vector<7x128xf32>,
    %c258 = arith.constant 258 : index
    %c0_201 = arith.constant 0 : index
    %130 = tpu.strided_load %arg1[%c258, %c0_201] {strides = array<i32: 2, 1>} : memref<512x128xf32, #tpu.memory_space<vmem>>, vector<7x128xf32>
    %c49_202 = arith.constant 49 : index
    %c256_203 = arith.constant 256 : index
    %131 = vector.load %arg11[%c49_202, %c256_203] : memref<98x1152xf32, #tpu.memory_space<vmem>>, vector<7x128xf32>
    tpu.vector_store %arg11[%c49_202, %c256_203], %130 {strides = array<i32>} : memref<98x1152xf32, #tpu.memory_space<vmem>>, vector<7x128xf32>,
    %c272 = arith.constant 272 : index
    %c0_204 = arith.constant 0 : index
    %132 = tpu.strided_load %arg1[%c272, %c0_204] {strides = array<i32: 2, 1>} : memref<512x128xf32, #tpu.memory_space<vmem>>, vector<7x128xf32>
    %c49_205 = arith.constant 49 : index
    %c384_206 = arith.constant 384 : index
    %133 = vector.load %arg11[%c49_205, %c384_206] : memref<98x1152xf32, #tpu.memory_space<vmem>>, vector<7x128xf32>
    tpu.vector_store %arg11[%c49_205, %c384_206], %132 {strides = array<i32>} : memref<98x1152xf32, #tpu.memory_space<vmem>>, vector<7x128xf32>,
    %c273 = arith.constant 273 : index
    %c0_207 = arith.constant 0 : index
    %134 = tpu.strided_load %arg1[%c273, %c0_207] {strides = array<i32: 2, 1>} : memref<512x128xf32, #tpu.memory_space<vmem>>, vector<7x128xf32>
    %c49_208 = arith.constant 49 : index
    %c512_209 = arith.constant 512 : index
    %135 = vector.load %arg11[%c49_208, %c512_209] : memref<98x1152xf32, #tpu.memory_space<vmem>>, vector<7x128xf32>
    tpu.vector_store %arg11[%c49_208, %c512_209], %134 {strides = array<i32>} : memref<98x1152xf32, #tpu.memory_space<vmem>>, vector<7x128xf32>,
    %c274 = arith.constant 274 : index
    %c0_210 = arith.constant 0 : index
    %136 = tpu.strided_load %arg1[%c274, %c0_210] {strides = array<i32: 2, 1>} : memref<512x128xf32, #tpu.memory_space<vmem>>, vector<7x128xf32>
    %c49_211 = arith.constant 49 : index
    %c640_212 = arith.constant 640 : index
    %137 = vector.load %arg11[%c49_211, %c640_212] : memref<98x1152xf32, #tpu.memory_space<vmem>>, vector<7x128xf32>
    tpu.vector_store %arg11[%c49_211, %c640_212], %136 {strides = array<i32>} : memref<98x1152xf32, #tpu.memory_space<vmem>>, vector<7x128xf32>,
    %c288 = arith.constant 288 : index
    %c0_213 = arith.constant 0 : index
    %138 = tpu.strided_load %arg1[%c288, %c0_213] {strides = array<i32: 2, 1>} : memref<512x128xf32, #tpu.memory_space<vmem>>, vector<7x128xf32>
    %c49_214 = arith.constant 49 : index
    %c768_215 = arith.constant 768 : index
    %139 = vector.load %arg11[%c49_214, %c768_215] : memref<98x1152xf32, #tpu.memory_space<vmem>>, vector<7x128xf32>
    tpu.vector_store %arg11[%c49_214, %c768_215], %138 {strides = array<i32>} : memref<98x1152xf32, #tpu.memory_space<vmem>>, vector<7x128xf32>,
    %c289 = arith.constant 289 : index
    %c0_216 = arith.constant 0 : index
    %140 = tpu.strided_load %arg1[%c289, %c0_216] {strides = array<i32: 2, 1>} : memref<512x128xf32, #tpu.memory_space<vmem>>, vector<7x128xf32>
    %c49_217 = arith.constant 49 : index
    %c896_218 = arith.constant 896 : index
    %141 = vector.load %arg11[%c49_217, %c896_218] : memref<98x1152xf32, #tpu.memory_space<vmem>>, vector<7x128xf32>
    tpu.vector_store %arg11[%c49_217, %c896_218], %140 {strides = array<i32>} : memref<98x1152xf32, #tpu.memory_space<vmem>>, vector<7x128xf32>,
    %c290 = arith.constant 290 : index
    %c0_219 = arith.constant 0 : index
    %142 = tpu.strided_load %arg1[%c290, %c0_219] {strides = array<i32: 2, 1>} : memref<512x128xf32, #tpu.memory_space<vmem>>, vector<7x128xf32>
    %c49_220 = arith.constant 49 : index
    %c1024_221 = arith.constant 1024 : index
    %143 = vector.load %arg11[%c49_220, %c1024_221] : memref<98x1152xf32, #tpu.memory_space<vmem>>, vector<7x128xf32>
    tpu.vector_store %arg11[%c49_220, %c1024_221], %142 {strides = array<i32>} : memref<98x1152xf32, #tpu.memory_space<vmem>>, vector<7x128xf32>,
    %c288_222 = arith.constant 288 : index
    %c0_223 = arith.constant 0 : index
    %144 = tpu.strided_load %arg1[%c288_222, %c0_223] {strides = array<i32: 2, 1>} : memref<512x128xf32, #tpu.memory_space<vmem>>, vector<7x128xf32>
    %c56 = arith.constant 56 : index
    %c0_224 = arith.constant 0 : index
    %145 = vector.load %arg11[%c56, %c0_224] : memref<98x1152xf32, #tpu.memory_space<vmem>>, vector<7x128xf32>
    tpu.vector_store %arg11[%c56, %c0_224], %144 {strides = array<i32>} : memref<98x1152xf32, #tpu.memory_space<vmem>>, vector<7x128xf32>,
    %c289_225 = arith.constant 289 : index
    %c0_226 = arith.constant 0 : index
    %146 = tpu.strided_load %arg1[%c289_225, %c0_226] {strides = array<i32: 2, 1>} : memref<512x128xf32, #tpu.memory_space<vmem>>, vector<7x128xf32>
    %c56_227 = arith.constant 56 : index
    %c128_228 = arith.constant 128 : index
    %147 = vector.load %arg11[%c56_227, %c128_228] : memref<98x1152xf32, #tpu.memory_space<vmem>>, vector<7x128xf32>
    tpu.vector_store %arg11[%c56_227, %c128_228], %146 {strides = array<i32>} : memref<98x1152xf32, #tpu.memory_space<vmem>>, vector<7x128xf32>,
    %c290_229 = arith.constant 290 : index
    %c0_230 = arith.constant 0 : index
    %148 = tpu.strided_load %arg1[%c290_229, %c0_230] {strides = array<i32: 2, 1>} : memref<512x128xf32, #tpu.memory_space<vmem>>, vector<7x128xf32>
    %c56_231 = arith.constant 56 : index
    %c256_232 = arith.constant 256 : index
    %149 = vector.load %arg11[%c56_231, %c256_232] : memref<98x1152xf32, #tpu.memory_space<vmem>>, vector<7x128xf32>
    tpu.vector_store %arg11[%c56_231, %c256_232], %148 {strides = array<i32>} : memref<98x1152xf32, #tpu.memory_space<vmem>>, vector<7x128xf32>,
    %c304 = arith.constant 304 : index
    %c0_233 = arith.constant 0 : index
    %150 = tpu.strided_load %arg1[%c304, %c0_233] {strides = array<i32: 2, 1>} : memref<512x128xf32, #tpu.memory_space<vmem>>, vector<7x128xf32>
    %c56_234 = arith.constant 56 : index
    %c384_235 = arith.constant 384 : index
    %151 = vector.load %arg11[%c56_234, %c384_235] : memref<98x1152xf32, #tpu.memory_space<vmem>>, vector<7x128xf32>
    tpu.vector_store %arg11[%c56_234, %c384_235], %150 {strides = array<i32>} : memref<98x1152xf32, #tpu.memory_space<vmem>>, vector<7x128xf32>,
    %c305 = arith.constant 305 : index
    %c0_236 = arith.constant 0 : index
    %152 = tpu.strided_load %arg1[%c305, %c0_236] {strides = array<i32: 2, 1>} : memref<512x128xf32, #tpu.memory_space<vmem>>, vector<7x128xf32>
    %c56_237 = arith.constant 56 : index
    %c512_238 = arith.constant 512 : index
    %153 = vector.load %arg11[%c56_237, %c512_238] : memref<98x1152xf32, #tpu.memory_space<vmem>>, vector<7x128xf32>
    tpu.vector_store %arg11[%c56_237, %c512_238], %152 {strides = array<i32>} : memref<98x1152xf32, #tpu.memory_space<vmem>>, vector<7x128xf32>,
    %c306 = arith.constant 306 : index
    %c0_239 = arith.constant 0 : index
    %154 = tpu.strided_load %arg1[%c306, %c0_239] {strides = array<i32: 2, 1>} : memref<512x128xf32, #tpu.memory_space<vmem>>, vector<7x128xf32>
    %c56_240 = arith.constant 56 : index
    %c640_241 = arith.constant 640 : index
    %155 = vector.load %arg11[%c56_240, %c640_241] : memref<98x1152xf32, #tpu.memory_space<vmem>>, vector<7x128xf32>
    tpu.vector_store %arg11[%c56_240, %c640_241], %154 {strides = array<i32>} : memref<98x1152xf32, #tpu.memory_space<vmem>>, vector<7x128xf32>,
    %c320 = arith.constant 320 : index
    %c0_242 = arith.constant 0 : index
    %156 = tpu.strided_load %arg1[%c320, %c0_242] {strides = array<i32: 2, 1>} : memref<512x128xf32, #tpu.memory_space<vmem>>, vector<7x128xf32>
    %c56_243 = arith.constant 56 : index
    %c768_244 = arith.constant 768 : index
    %157 = vector.load %arg11[%c56_243, %c768_244] : memref<98x1152xf32, #tpu.memory_space<vmem>>, vector<7x128xf32>
    tpu.vector_store %arg11[%c56_243, %c768_244], %156 {strides = array<i32>} : memref<98x1152xf32, #tpu.memory_space<vmem>>, vector<7x128xf32>,
    %c321 = arith.constant 321 : index
    %c0_245 = arith.constant 0 : index
    %158 = tpu.strided_load %arg1[%c321, %c0_245] {strides = array<i32: 2, 1>} : memref<512x128xf32, #tpu.memory_space<vmem>>, vector<7x128xf32>
    %c56_246 = arith.constant 56 : index
    %c896_247 = arith.constant 896 : index
    %159 = vector.load %arg11[%c56_246, %c896_247] : memref<98x1152xf32, #tpu.memory_space<vmem>>, vector<7x128xf32>
    tpu.vector_store %arg11[%c56_246, %c896_247], %158 {strides = array<i32>} : memref<98x1152xf32, #tpu.memory_space<vmem>>, vector<7x128xf32>,
    %c322 = arith.constant 322 : index
    %c0_248 = arith.constant 0 : index
    %160 = tpu.strided_load %arg1[%c322, %c0_248] {strides = array<i32: 2, 1>} : memref<512x128xf32, #tpu.memory_space<vmem>>, vector<7x128xf32>
    %c56_249 = arith.constant 56 : index
    %c1024_250 = arith.constant 1024 : index
    %161 = vector.load %arg11[%c56_249, %c1024_250] : memref<98x1152xf32, #tpu.memory_space<vmem>>, vector<7x128xf32>
    tpu.vector_store %arg11[%c56_249, %c1024_250], %160 {strides = array<i32>} : memref<98x1152xf32, #tpu.memory_space<vmem>>, vector<7x128xf32>,
    %c320_251 = arith.constant 320 : index
    %c0_252 = arith.constant 0 : index
    %162 = tpu.strided_load %arg1[%c320_251, %c0_252] {strides = array<i32: 2, 1>} : memref<512x128xf32, #tpu.memory_space<vmem>>, vector<7x128xf32>
    %c63 = arith.constant 63 : index
    %c0_253 = arith.constant 0 : index
    %163 = vector.load %arg11[%c63, %c0_253] : memref<98x1152xf32, #tpu.memory_space<vmem>>, vector<7x128xf32>
    tpu.vector_store %arg11[%c63, %c0_253], %162 {strides = array<i32>} : memref<98x1152xf32, #tpu.memory_space<vmem>>, vector<7x128xf32>,
    %c321_254 = arith.constant 321 : index
    %c0_255 = arith.constant 0 : index
    %164 = tpu.strided_load %arg1[%c321_254, %c0_255] {strides = array<i32: 2, 1>} : memref<512x128xf32, #tpu.memory_space<vmem>>, vector<7x128xf32>
    %c63_256 = arith.constant 63 : index
    %c128_257 = arith.constant 128 : index
    %165 = vector.load %arg11[%c63_256, %c128_257] : memref<98x1152xf32, #tpu.memory_space<vmem>>, vector<7x128xf32>
    tpu.vector_store %arg11[%c63_256, %c128_257], %164 {strides = array<i32>} : memref<98x1152xf32, #tpu.memory_space<vmem>>, vector<7x128xf32>,
    %c322_258 = arith.constant 322 : index
    %c0_259 = arith.constant 0 : index
    %166 = tpu.strided_load %arg1[%c322_258, %c0_259] {strides = array<i32: 2, 1>} : memref<512x128xf32, #tpu.memory_space<vmem>>, vector<7x128xf32>
    %c63_260 = arith.constant 63 : index
    %c256_261 = arith.constant 256 : index
    %167 = vector.load %arg11[%c63_260, %c256_261] : memref<98x1152xf32, #tpu.memory_space<vmem>>, vector<7x128xf32>
    tpu.vector_store %arg11[%c63_260, %c256_261], %166 {strides = array<i32>} : memref<98x1152xf32, #tpu.memory_space<vmem>>, vector<7x128xf32>,
    %c336 = arith.constant 336 : index
    %c0_262 = arith.constant 0 : index
    %168 = tpu.strided_load %arg1[%c336, %c0_262] {strides = array<i32: 2, 1>} : memref<512x128xf32, #tpu.memory_space<vmem>>, vector<7x128xf32>
    %c63_263 = arith.constant 63 : index
    %c384_264 = arith.constant 384 : index
    %169 = vector.load %arg11[%c63_263, %c384_264] : memref<98x1152xf32, #tpu.memory_space<vmem>>, vector<7x128xf32>
    tpu.vector_store %arg11[%c63_263, %c384_264], %168 {strides = array<i32>} : memref<98x1152xf32, #tpu.memory_space<vmem>>, vector<7x128xf32>,
    %c337 = arith.constant 337 : index
    %c0_265 = arith.constant 0 : index
    %170 = tpu.strided_load %arg1[%c337, %c0_265] {strides = array<i32: 2, 1>} : memref<512x128xf32, #tpu.memory_space<vmem>>, vector<7x128xf32>
    %c63_266 = arith.constant 63 : index
    %c512_267 = arith.constant 512 : index
    %171 = vector.load %arg11[%c63_266, %c512_267] : memref<98x1152xf32, #tpu.memory_space<vmem>>, vector<7x128xf32>
    tpu.vector_store %arg11[%c63_266, %c512_267], %170 {strides = array<i32>} : memref<98x1152xf32, #tpu.memory_space<vmem>>, vector<7x128xf32>,
    %c338 = arith.constant 338 : index
    %c0_268 = arith.constant 0 : index
    %172 = tpu.strided_load %arg1[%c338, %c0_268] {strides = array<i32: 2, 1>} : memref<512x128xf32, #tpu.memory_space<vmem>>, vector<7x128xf32>
    %c63_269 = arith.constant 63 : index
    %c640_270 = arith.constant 640 : index
    %173 = vector.load %arg11[%c63_269, %c640_270] : memref<98x1152xf32, #tpu.memory_space<vmem>>, vector<7x128xf32>
    tpu.vector_store %arg11[%c63_269, %c640_270], %172 {strides = array<i32>} : memref<98x1152xf32, #tpu.memory_space<vmem>>, vector<7x128xf32>,
    %c352 = arith.constant 352 : index
    %c0_271 = arith.constant 0 : index
    %174 = tpu.strided_load %arg1[%c352, %c0_271] {strides = array<i32: 2, 1>} : memref<512x128xf32, #tpu.memory_space<vmem>>, vector<7x128xf32>
    %c63_272 = arith.constant 63 : index
    %c768_273 = arith.constant 768 : index
    %175 = vector.load %arg11[%c63_272, %c768_273] : memref<98x1152xf32, #tpu.memory_space<vmem>>, vector<7x128xf32>
    tpu.vector_store %arg11[%c63_272, %c768_273], %174 {strides = array<i32>} : memref<98x1152xf32, #tpu.memory_space<vmem>>, vector<7x128xf32>,
    %c353 = arith.constant 353 : index
    %c0_274 = arith.constant 0 : index
    %176 = tpu.strided_load %arg1[%c353, %c0_274] {strides = array<i32: 2, 1>} : memref<512x128xf32, #tpu.memory_space<vmem>>, vector<7x128xf32>
    %c63_275 = arith.constant 63 : index
    %c896_276 = arith.constant 896 : index
    %177 = vector.load %arg11[%c63_275, %c896_276] : memref<98x1152xf32, #tpu.memory_space<vmem>>, vector<7x128xf32>
    tpu.vector_store %arg11[%c63_275, %c896_276], %176 {strides = array<i32>} : memref<98x1152xf32, #tpu.memory_space<vmem>>, vector<7x128xf32>,
    %c354 = arith.constant 354 : index
    %c0_277 = arith.constant 0 : index
    %178 = tpu.strided_load %arg1[%c354, %c0_277] {strides = array<i32: 2, 1>} : memref<512x128xf32, #tpu.memory_space<vmem>>, vector<7x128xf32>
    %c63_278 = arith.constant 63 : index
    %c1024_279 = arith.constant 1024 : index
    %179 = vector.load %arg11[%c63_278, %c1024_279] : memref<98x1152xf32, #tpu.memory_space<vmem>>, vector<7x128xf32>
    tpu.vector_store %arg11[%c63_278, %c1024_279], %178 {strides = array<i32>} : memref<98x1152xf32, #tpu.memory_space<vmem>>, vector<7x128xf32>,
    %c352_280 = arith.constant 352 : index
    %c0_281 = arith.constant 0 : index
    %180 = tpu.strided_load %arg1[%c352_280, %c0_281] {strides = array<i32: 2, 1>} : memref<512x128xf32, #tpu.memory_space<vmem>>, vector<7x128xf32>
    %c70 = arith.constant 70 : index
    %c0_282 = arith.constant 0 : index
    %181 = vector.load %arg11[%c70, %c0_282] : memref<98x1152xf32, #tpu.memory_space<vmem>>, vector<7x128xf32>
    tpu.vector_store %arg11[%c70, %c0_282], %180 {strides = array<i32>} : memref<98x1152xf32, #tpu.memory_space<vmem>>, vector<7x128xf32>,
    %c353_283 = arith.constant 353 : index
    %c0_284 = arith.constant 0 : index
    %182 = tpu.strided_load %arg1[%c353_283, %c0_284] {strides = array<i32: 2, 1>} : memref<512x128xf32, #tpu.memory_space<vmem>>, vector<7x128xf32>
    %c70_285 = arith.constant 70 : index
    %c128_286 = arith.constant 128 : index
    %183 = vector.load %arg11[%c70_285, %c128_286] : memref<98x1152xf32, #tpu.memory_space<vmem>>, vector<7x128xf32>
    tpu.vector_store %arg11[%c70_285, %c128_286], %182 {strides = array<i32>} : memref<98x1152xf32, #tpu.memory_space<vmem>>, vector<7x128xf32>,
    %c354_287 = arith.constant 354 : index
    %c0_288 = arith.constant 0 : index
    %184 = tpu.strided_load %arg1[%c354_287, %c0_288] {strides = array<i32: 2, 1>} : memref<512x128xf32, #tpu.memory_space<vmem>>, vector<7x128xf32>
    %c70_289 = arith.constant 70 : index
    %c256_290 = arith.constant 256 : index
    %185 = vector.load %arg11[%c70_289, %c256_290] : memref<98x1152xf32, #tpu.memory_space<vmem>>, vector<7x128xf32>
    tpu.vector_store %arg11[%c70_289, %c256_290], %184 {strides = array<i32>} : memref<98x1152xf32, #tpu.memory_space<vmem>>, vector<7x128xf32>,
    %c368 = arith.constant 368 : index
    %c0_291 = arith.constant 0 : index
    %186 = tpu.strided_load %arg1[%c368, %c0_291] {strides = array<i32: 2, 1>} : memref<512x128xf32, #tpu.memory_space<vmem>>, vector<7x128xf32>
    %c70_292 = arith.constant 70 : index
    %c384_293 = arith.constant 384 : index
    %187 = vector.load %arg11[%c70_292, %c384_293] : memref<98x1152xf32, #tpu.memory_space<vmem>>, vector<7x128xf32>
    tpu.vector_store %arg11[%c70_292, %c384_293], %186 {strides = array<i32>} : memref<98x1152xf32, #tpu.memory_space<vmem>>, vector<7x128xf32>,
    %c369 = arith.constant 369 : index
    %c0_294 = arith.constant 0 : index
    %188 = tpu.strided_load %arg1[%c369, %c0_294] {strides = array<i32: 2, 1>} : memref<512x128xf32, #tpu.memory_space<vmem>>, vector<7x128xf32>
    %c70_295 = arith.constant 70 : index
    %c512_296 = arith.constant 512 : index
    %189 = vector.load %arg11[%c70_295, %c512_296] : memref<98x1152xf32, #tpu.memory_space<vmem>>, vector<7x128xf32>
    tpu.vector_store %arg11[%c70_295, %c512_296], %188 {strides = array<i32>} : memref<98x1152xf32, #tpu.memory_space<vmem>>, vector<7x128xf32>,
    %c370 = arith.constant 370 : index
    %c0_297 = arith.constant 0 : index
    %190 = tpu.strided_load %arg1[%c370, %c0_297] {strides = array<i32: 2, 1>} : memref<512x128xf32, #tpu.memory_space<vmem>>, vector<7x128xf32>
    %c70_298 = arith.constant 70 : index
    %c640_299 = arith.constant 640 : index
    %191 = vector.load %arg11[%c70_298, %c640_299] : memref<98x1152xf32, #tpu.memory_space<vmem>>, vector<7x128xf32>
    tpu.vector_store %arg11[%c70_298, %c640_299], %190 {strides = array<i32>} : memref<98x1152xf32, #tpu.memory_space<vmem>>, vector<7x128xf32>,
    %c384_300 = arith.constant 384 : index
    %c0_301 = arith.constant 0 : index
    %192 = tpu.strided_load %arg1[%c384_300, %c0_301] {strides = array<i32: 2, 1>} : memref<512x128xf32, #tpu.memory_space<vmem>>, vector<7x128xf32>
    %c70_302 = arith.constant 70 : index
    %c768_303 = arith.constant 768 : index
    %193 = vector.load %arg11[%c70_302, %c768_303] : memref<98x1152xf32, #tpu.memory_space<vmem>>, vector<7x128xf32>
    tpu.vector_store %arg11[%c70_302, %c768_303], %192 {strides = array<i32>} : memref<98x1152xf32, #tpu.memory_space<vmem>>, vector<7x128xf32>,
    %c385 = arith.constant 385 : index
    %c0_304 = arith.constant 0 : index
    %194 = tpu.strided_load %arg1[%c385, %c0_304] {strides = array<i32: 2, 1>} : memref<512x128xf32, #tpu.memory_space<vmem>>, vector<7x128xf32>
    %c70_305 = arith.constant 70 : index
    %c896_306 = arith.constant 896 : index
    %195 = vector.load %arg11[%c70_305, %c896_306] : memref<98x1152xf32, #tpu.memory_space<vmem>>, vector<7x128xf32>
    tpu.vector_store %arg11[%c70_305, %c896_306], %194 {strides = array<i32>} : memref<98x1152xf32, #tpu.memory_space<vmem>>, vector<7x128xf32>,
    %c386 = arith.constant 386 : index
    %c0_307 = arith.constant 0 : index
    %196 = tpu.strided_load %arg1[%c386, %c0_307] {strides = array<i32: 2, 1>} : memref<512x128xf32, #tpu.memory_space<vmem>>, vector<7x128xf32>
    %c70_308 = arith.constant 70 : index
    %c1024_309 = arith.constant 1024 : index
    %197 = vector.load %arg11[%c70_308, %c1024_309] : memref<98x1152xf32, #tpu.memory_space<vmem>>, vector<7x128xf32>
    tpu.vector_store %arg11[%c70_308, %c1024_309], %196 {strides = array<i32>} : memref<98x1152xf32, #tpu.memory_space<vmem>>, vector<7x128xf32>,
    %c384_310 = arith.constant 384 : index
    %c0_311 = arith.constant 0 : index
    %198 = tpu.strided_load %arg1[%c384_310, %c0_311] {strides = array<i32: 2, 1>} : memref<512x128xf32, #tpu.memory_space<vmem>>, vector<7x128xf32>
    %c77 = arith.constant 77 : index
    %c0_312 = arith.constant 0 : index
    %199 = vector.load %arg11[%c77, %c0_312] : memref<98x1152xf32, #tpu.memory_space<vmem>>, vector<7x128xf32>
    tpu.vector_store %arg11[%c77, %c0_312], %198 {strides = array<i32>} : memref<98x1152xf32, #tpu.memory_space<vmem>>, vector<7x128xf32>,
    %c385_313 = arith.constant 385 : index
    %c0_314 = arith.constant 0 : index
    %200 = tpu.strided_load %arg1[%c385_313, %c0_314] {strides = array<i32: 2, 1>} : memref<512x128xf32, #tpu.memory_space<vmem>>, vector<7x128xf32>
    %c77_315 = arith.constant 77 : index
    %c128_316 = arith.constant 128 : index
    %201 = vector.load %arg11[%c77_315, %c128_316] : memref<98x1152xf32, #tpu.memory_space<vmem>>, vector<7x128xf32>
    tpu.vector_store %arg11[%c77_315, %c128_316], %200 {strides = array<i32>} : memref<98x1152xf32, #tpu.memory_space<vmem>>, vector<7x128xf32>,
    %c386_317 = arith.constant 386 : index
    %c0_318 = arith.constant 0 : index
    %202 = tpu.strided_load %arg1[%c386_317, %c0_318] {strides = array<i32: 2, 1>} : memref<512x128xf32, #tpu.memory_space<vmem>>, vector<7x128xf32>
    %c77_319 = arith.constant 77 : index
    %c256_320 = arith.constant 256 : index
    %203 = vector.load %arg11[%c77_319, %c256_320] : memref<98x1152xf32, #tpu.memory_space<vmem>>, vector<7x128xf32>
    tpu.vector_store %arg11[%c77_319, %c256_320], %202 {strides = array<i32>} : memref<98x1152xf32, #tpu.memory_space<vmem>>, vector<7x128xf32>,
    %c400 = arith.constant 400 : index
    %c0_321 = arith.constant 0 : index
    %204 = tpu.strided_load %arg1[%c400, %c0_321] {strides = array<i32: 2, 1>} : memref<512x128xf32, #tpu.memory_space<vmem>>, vector<7x128xf32>
    %c77_322 = arith.constant 77 : index
    %c384_323 = arith.constant 384 : index
    %205 = vector.load %arg11[%c77_322, %c384_323] : memref<98x1152xf32, #tpu.memory_space<vmem>>, vector<7x128xf32>
    tpu.vector_store %arg11[%c77_322, %c384_323], %204 {strides = array<i32>} : memref<98x1152xf32, #tpu.memory_space<vmem>>, vector<7x128xf32>,
    %c401 = arith.constant 401 : index
    %c0_324 = arith.constant 0 : index
    %206 = tpu.strided_load %arg1[%c401, %c0_324] {strides = array<i32: 2, 1>} : memref<512x128xf32, #tpu.memory_space<vmem>>, vector<7x128xf32>
    %c77_325 = arith.constant 77 : index
    %c512_326 = arith.constant 512 : index
    %207 = vector.load %arg11[%c77_325, %c512_326] : memref<98x1152xf32, #tpu.memory_space<vmem>>, vector<7x128xf32>
    tpu.vector_store %arg11[%c77_325, %c512_326], %206 {strides = array<i32>} : memref<98x1152xf32, #tpu.memory_space<vmem>>, vector<7x128xf32>,
    %c402 = arith.constant 402 : index
    %c0_327 = arith.constant 0 : index
    %208 = tpu.strided_load %arg1[%c402, %c0_327] {strides = array<i32: 2, 1>} : memref<512x128xf32, #tpu.memory_space<vmem>>, vector<7x128xf32>
    %c77_328 = arith.constant 77 : index
    %c640_329 = arith.constant 640 : index
    %209 = vector.load %arg11[%c77_328, %c640_329] : memref<98x1152xf32, #tpu.memory_space<vmem>>, vector<7x128xf32>
    tpu.vector_store %arg11[%c77_328, %c640_329], %208 {strides = array<i32>} : memref<98x1152xf32, #tpu.memory_space<vmem>>, vector<7x128xf32>,
    %c416 = arith.constant 416 : index
    %c0_330 = arith.constant 0 : index
    %210 = tpu.strided_load %arg1[%c416, %c0_330] {strides = array<i32: 2, 1>} : memref<512x128xf32, #tpu.memory_space<vmem>>, vector<7x128xf32>
    %c77_331 = arith.constant 77 : index
    %c768_332 = arith.constant 768 : index
    %211 = vector.load %arg11[%c77_331, %c768_332] : memref<98x1152xf32, #tpu.memory_space<vmem>>, vector<7x128xf32>
    tpu.vector_store %arg11[%c77_331, %c768_332], %210 {strides = array<i32>} : memref<98x1152xf32, #tpu.memory_space<vmem>>, vector<7x128xf32>,
    %c417 = arith.constant 417 : index
    %c0_333 = arith.constant 0 : index
    %212 = tpu.strided_load %arg1[%c417, %c0_333] {strides = array<i32: 2, 1>} : memref<512x128xf32, #tpu.memory_space<vmem>>, vector<7x128xf32>
    %c77_334 = arith.constant 77 : index
    %c896_335 = arith.constant 896 : index
    %213 = vector.load %arg11[%c77_334, %c896_335] : memref<98x1152xf32, #tpu.memory_space<vmem>>, vector<7x128xf32>
    tpu.vector_store %arg11[%c77_334, %c896_335], %212 {strides = array<i32>} : memref<98x1152xf32, #tpu.memory_space<vmem>>, vector<7x128xf32>,
    %c418 = arith.constant 418 : index
    %c0_336 = arith.constant 0 : index
    %214 = tpu.strided_load %arg1[%c418, %c0_336] {strides = array<i32: 2, 1>} : memref<512x128xf32, #tpu.memory_space<vmem>>, vector<7x128xf32>
    %c77_337 = arith.constant 77 : index
    %c1024_338 = arith.constant 1024 : index
    %215 = vector.load %arg11[%c77_337, %c1024_338] : memref<98x1152xf32, #tpu.memory_space<vmem>>, vector<7x128xf32>
    tpu.vector_store %arg11[%c77_337, %c1024_338], %214 {strides = array<i32>} : memref<98x1152xf32, #tpu.memory_space<vmem>>, vector<7x128xf32>,
    %c416_339 = arith.constant 416 : index
    %c0_340 = arith.constant 0 : index
    %216 = tpu.strided_load %arg1[%c416_339, %c0_340] {strides = array<i32: 2, 1>} : memref<512x128xf32, #tpu.memory_space<vmem>>, vector<7x128xf32>
    %c84 = arith.constant 84 : index
    %c0_341 = arith.constant 0 : index
    %217 = vector.load %arg11[%c84, %c0_341] : memref<98x1152xf32, #tpu.memory_space<vmem>>, vector<7x128xf32>
    tpu.vector_store %arg11[%c84, %c0_341], %216 {strides = array<i32>} : memref<98x1152xf32, #tpu.memory_space<vmem>>, vector<7x128xf32>,
    %c417_342 = arith.constant 417 : index
    %c0_343 = arith.constant 0 : index
    %218 = tpu.strided_load %arg1[%c417_342, %c0_343] {strides = array<i32: 2, 1>} : memref<512x128xf32, #tpu.memory_space<vmem>>, vector<7x128xf32>
    %c84_344 = arith.constant 84 : index
    %c128_345 = arith.constant 128 : index
    %219 = vector.load %arg11[%c84_344, %c128_345] : memref<98x1152xf32, #tpu.memory_space<vmem>>, vector<7x128xf32>
    tpu.vector_store %arg11[%c84_344, %c128_345], %218 {strides = array<i32>} : memref<98x1152xf32, #tpu.memory_space<vmem>>, vector<7x128xf32>,
    %c418_346 = arith.constant 418 : index
    %c0_347 = arith.constant 0 : index
    %220 = tpu.strided_load %arg1[%c418_346, %c0_347] {strides = array<i32: 2, 1>} : memref<512x128xf32, #tpu.memory_space<vmem>>, vector<7x128xf32>
    %c84_348 = arith.constant 84 : index
    %c256_349 = arith.constant 256 : index
    %221 = vector.load %arg11[%c84_348, %c256_349] : memref<98x1152xf32, #tpu.memory_space<vmem>>, vector<7x128xf32>
    tpu.vector_store %arg11[%c84_348, %c256_349], %220 {strides = array<i32>} : memref<98x1152xf32, #tpu.memory_space<vmem>>, vector<7x128xf32>,
    %c432 = arith.constant 432 : index
    %c0_350 = arith.constant 0 : index
    %222 = tpu.strided_load %arg1[%c432, %c0_350] {strides = array<i32: 2, 1>} : memref<512x128xf32, #tpu.memory_space<vmem>>, vector<7x128xf32>
    %c84_351 = arith.constant 84 : index
    %c384_352 = arith.constant 384 : index
    %223 = vector.load %arg11[%c84_351, %c384_352] : memref<98x1152xf32, #tpu.memory_space<vmem>>, vector<7x128xf32>
    tpu.vector_store %arg11[%c84_351, %c384_352], %222 {strides = array<i32>} : memref<98x1152xf32, #tpu.memory_space<vmem>>, vector<7x128xf32>,
    %c433 = arith.constant 433 : index
    %c0_353 = arith.constant 0 : index
    %224 = tpu.strided_load %arg1[%c433, %c0_353] {strides = array<i32: 2, 1>} : memref<512x128xf32, #tpu.memory_space<vmem>>, vector<7x128xf32>
    %c84_354 = arith.constant 84 : index
    %c512_355 = arith.constant 512 : index
    %225 = vector.load %arg11[%c84_354, %c512_355] : memref<98x1152xf32, #tpu.memory_space<vmem>>, vector<7x128xf32>
    tpu.vector_store %arg11[%c84_354, %c512_355], %224 {strides = array<i32>} : memref<98x1152xf32, #tpu.memory_space<vmem>>, vector<7x128xf32>,
    %c434 = arith.constant 434 : index
    %c0_356 = arith.constant 0 : index
    %226 = tpu.strided_load %arg1[%c434, %c0_356] {strides = array<i32: 2, 1>} : memref<512x128xf32, #tpu.memory_space<vmem>>, vector<7x128xf32>
    %c84_357 = arith.constant 84 : index
    %c640_358 = arith.constant 640 : index
    %227 = vector.load %arg11[%c84_357, %c640_358] : memref<98x1152xf32, #tpu.memory_space<vmem>>, vector<7x128xf32>
    tpu.vector_store %arg11[%c84_357, %c640_358], %226 {strides = array<i32>} : memref<98x1152xf32, #tpu.memory_space<vmem>>, vector<7x128xf32>,
    %c448 = arith.constant 448 : index
    %c0_359 = arith.constant 0 : index
    %228 = tpu.strided_load %arg1[%c448, %c0_359] {strides = array<i32: 2, 1>} : memref<512x128xf32, #tpu.memory_space<vmem>>, vector<7x128xf32>
    %c84_360 = arith.constant 84 : index
    %c768_361 = arith.constant 768 : index
    %229 = vector.load %arg11[%c84_360, %c768_361] : memref<98x1152xf32, #tpu.memory_space<vmem>>, vector<7x128xf32>
    tpu.vector_store %arg11[%c84_360, %c768_361], %228 {strides = array<i32>} : memref<98x1152xf32, #tpu.memory_space<vmem>>, vector<7x128xf32>,
    %c449 = arith.constant 449 : index
    %c0_362 = arith.constant 0 : index
    %230 = tpu.strided_load %arg1[%c449, %c0_362] {strides = array<i32: 2, 1>} : memref<512x128xf32, #tpu.memory_space<vmem>>, vector<7x128xf32>
    %c84_363 = arith.constant 84 : index
    %c896_364 = arith.constant 896 : index
    %231 = vector.load %arg11[%c84_363, %c896_364] : memref<98x1152xf32, #tpu.memory_space<vmem>>, vector<7x128xf32>
    tpu.vector_store %arg11[%c84_363, %c896_364], %230 {strides = array<i32>} : memref<98x1152xf32, #tpu.memory_space<vmem>>, vector<7x128xf32>,
    %c450 = arith.constant 450 : index
    %c0_365 = arith.constant 0 : index
    %232 = tpu.strided_load %arg1[%c450, %c0_365] {strides = array<i32: 2, 1>} : memref<512x128xf32, #tpu.memory_space<vmem>>, vector<7x128xf32>
    %c84_366 = arith.constant 84 : index
    %c1024_367 = arith.constant 1024 : index
    %233 = vector.load %arg11[%c84_366, %c1024_367] : memref<98x1152xf32, #tpu.memory_space<vmem>>, vector<7x128xf32>
    tpu.vector_store %arg11[%c84_366, %c1024_367], %232 {strides = array<i32>} : memref<98x1152xf32, #tpu.memory_space<vmem>>, vector<7x128xf32>,
    %c448_368 = arith.constant 448 : index
    %c0_369 = arith.constant 0 : index
    %234 = tpu.strided_load %arg1[%c448_368, %c0_369] {strides = array<i32: 2, 1>} : memref<512x128xf32, #tpu.memory_space<vmem>>, vector<7x128xf32>
    %c91 = arith.constant 91 : index
    %c0_370 = arith.constant 0 : index
    %235 = vector.load %arg11[%c91, %c0_370] : memref<98x1152xf32, #tpu.memory_space<vmem>>, vector<7x128xf32>
    tpu.vector_store %arg11[%c91, %c0_370], %234 {strides = array<i32>} : memref<98x1152xf32, #tpu.memory_space<vmem>>, vector<7x128xf32>,
    %c449_371 = arith.constant 449 : index
    %c0_372 = arith.constant 0 : index
    %236 = tpu.strided_load %arg1[%c449_371, %c0_372] {strides = array<i32: 2, 1>} : memref<512x128xf32, #tpu.memory_space<vmem>>, vector<7x128xf32>
    %c91_373 = arith.constant 91 : index
    %c128_374 = arith.constant 128 : index
    %237 = vector.load %arg11[%c91_373, %c128_374] : memref<98x1152xf32, #tpu.memory_space<vmem>>, vector<7x128xf32>
    tpu.vector_store %arg11[%c91_373, %c128_374], %236 {strides = array<i32>} : memref<98x1152xf32, #tpu.memory_space<vmem>>, vector<7x128xf32>,
    %c450_375 = arith.constant 450 : index
    %c0_376 = arith.constant 0 : index
    %238 = tpu.strided_load %arg1[%c450_375, %c0_376] {strides = array<i32: 2, 1>} : memref<512x128xf32, #tpu.memory_space<vmem>>, vector<7x128xf32>
    %c91_377 = arith.constant 91 : index
    %c256_378 = arith.constant 256 : index
    %239 = vector.load %arg11[%c91_377, %c256_378] : memref<98x1152xf32, #tpu.memory_space<vmem>>, vector<7x128xf32>
    tpu.vector_store %arg11[%c91_377, %c256_378], %238 {strides = array<i32>} : memref<98x1152xf32, #tpu.memory_space<vmem>>, vector<7x128xf32>,
    %c464 = arith.constant 464 : index
    %c0_379 = arith.constant 0 : index
    %240 = tpu.strided_load %arg1[%c464, %c0_379] {strides = array<i32: 2, 1>} : memref<512x128xf32, #tpu.memory_space<vmem>>, vector<7x128xf32>
    %c91_380 = arith.constant 91 : index
    %c384_381 = arith.constant 384 : index
    %241 = vector.load %arg11[%c91_380, %c384_381] : memref<98x1152xf32, #tpu.memory_space<vmem>>, vector<7x128xf32>
    tpu.vector_store %arg11[%c91_380, %c384_381], %240 {strides = array<i32>} : memref<98x1152xf32, #tpu.memory_space<vmem>>, vector<7x128xf32>,
    %c465 = arith.constant 465 : index
    %c0_382 = arith.constant 0 : index
    %242 = tpu.strided_load %arg1[%c465, %c0_382] {strides = array<i32: 2, 1>} : memref<512x128xf32, #tpu.memory_space<vmem>>, vector<7x128xf32>
    %c91_383 = arith.constant 91 : index
    %c512_384 = arith.constant 512 : index
    %243 = vector.load %arg11[%c91_383, %c512_384] : memref<98x1152xf32, #tpu.memory_space<vmem>>, vector<7x128xf32>
    tpu.vector_store %arg11[%c91_383, %c512_384], %242 {strides = array<i32>} : memref<98x1152xf32, #tpu.memory_space<vmem>>, vector<7x128xf32>,
    %c466 = arith.constant 466 : index
    %c0_385 = arith.constant 0 : index
    %244 = tpu.strided_load %arg1[%c466, %c0_385] {strides = array<i32: 2, 1>} : memref<512x128xf32, #tpu.memory_space<vmem>>, vector<7x128xf32>
    %c91_386 = arith.constant 91 : index
    %c640_387 = arith.constant 640 : index
    %245 = vector.load %arg11[%c91_386, %c640_387] : memref<98x1152xf32, #tpu.memory_space<vmem>>, vector<7x128xf32>
    tpu.vector_store %arg11[%c91_386, %c640_387], %244 {strides = array<i32>} : memref<98x1152xf32, #tpu.memory_space<vmem>>, vector<7x128xf32>,
    %c480 = arith.constant 480 : index
    %c0_388 = arith.constant 0 : index
    %246 = tpu.strided_load %arg1[%c480, %c0_388] {strides = array<i32: 2, 1>} : memref<512x128xf32, #tpu.memory_space<vmem>>, vector<7x128xf32>
    %c91_389 = arith.constant 91 : index
    %c768_390 = arith.constant 768 : index
    %247 = vector.load %arg11[%c91_389, %c768_390] : memref<98x1152xf32, #tpu.memory_space<vmem>>, vector<7x128xf32>
    tpu.vector_store %arg11[%c91_389, %c768_390], %246 {strides = array<i32>} : memref<98x1152xf32, #tpu.memory_space<vmem>>, vector<7x128xf32>,
    %c481 = arith.constant 481 : index
    %c0_391 = arith.constant 0 : index
    %248 = tpu.strided_load %arg1[%c481, %c0_391] {strides = array<i32: 2, 1>} : memref<512x128xf32, #tpu.memory_space<vmem>>, vector<7x128xf32>
    %c91_392 = arith.constant 91 : index
    %c896_393 = arith.constant 896 : index
    %249 = vector.load %arg11[%c91_392, %c896_393] : memref<98x1152xf32, #tpu.memory_space<vmem>>, vector<7x128xf32>
    tpu.vector_store %arg11[%c91_392, %c896_393], %248 {strides = array<i32>} : memref<98x1152xf32, #tpu.memory_space<vmem>>, vector<7x128xf32>,
    %c482 = arith.constant 482 : index
    %c0_394 = arith.constant 0 : index
    %250 = tpu.strided_load %arg1[%c482, %c0_394] {strides = array<i32: 2, 1>} : memref<512x128xf32, #tpu.memory_space<vmem>>, vector<7x128xf32>
    %c91_395 = arith.constant 91 : index
    %c1024_396 = arith.constant 1024 : index
    %251 = vector.load %arg11[%c91_395, %c1024_396] : memref<98x1152xf32, #tpu.memory_space<vmem>>, vector<7x128xf32>
    tpu.vector_store %arg11[%c91_395, %c1024_396], %250 {strides = array<i32>} : memref<98x1152xf32, #tpu.memory_space<vmem>>, vector<7x128xf32>,
    %c0_397 = arith.constant 0 : index
    %c0_398 = arith.constant 0 : index
    %252 = vector.load %arg11[%c0_397, %c0_398] : memref<98x1152xf32, #tpu.memory_space<vmem>>, vector<98x1152xf32>
    %253 = arith.truncf %252 : vector<98x1152xf32> to vector<98x1152xbf16>
    %c0_399 = arith.constant 0 : index
    %c0_400 = arith.constant 0 : index
    %254 = vector.load %arg2[%c0_399, %c0_400] : memref<1152x128xbf16, #tpu.memory_space<vmem>>, vector<1152x128xbf16>
    %cst = arith.constant dense<0.000000e+00> : vector<98x128xf32>
    %255 = tpu.matmul %253, %254, %cst {dimension_numbers = #tpu.dot_dimension_numbers<[1], [0], [0], [1], [0, 0, 1, 1], [], []>} : vector<98x1152xbf16>, vector<1152x128xbf16>, vector<98x128xf32> -> vector<98x128xf32>
    %c0_401 = arith.constant 0 : index
    %c0_402 = arith.constant 0 : index
    %256 = vector.load %arg3[%c0_401, %c0_402] : memref<1x128xf32, #tpu.memory_space<vmem>>, vector<1x128xf32>
    %257 = vector.broadcast %256 : vector<1x128xf32> to vector<98x128xf32>
    %258 = arith.addf %255, %257 : vector<98x128xf32>
    %cst_403 = arith.constant 5.000000e-01 : f32
    %259 = vector.broadcast %cst_403 : f32 to vector<98x128xf32>
    %260 = arith.mulf %259, %258 : vector<98x128xf32>
    %cst_404 = arith.constant 0.707106769 : f32
    %261 = vector.broadcast %cst_404 : f32 to vector<98x128xf32>
    %262 = arith.mulf %258, %261 : vector<98x128xf32>
    %cst_405 = arith.constant 0.000000e+00 : f32
    %263 = vector.broadcast %cst_405 : f32 to vector<98x128xf32>
    %264 = arith.cmpf oge, %262, %263 : vector<98x128xf32>
    %cst_406 = arith.constant 1.000000e+00 : f32
    %cst_407 = arith.constant -1.000000e+00 : f32
    %265 = vector.broadcast %cst_406 : f32 to vector<98x128xf32>
    %266 = vector.broadcast %cst_407 : f32 to vector<98x128xf32>
    %267 = arith.select %264, %265, %266 : vector<98x128xi1>, vector<98x128xf32>
    %268 = math.absf %262 : vector<98x128xf32>
    %cst_408 = arith.constant 0.327591091 : f32
    %269 = vector.broadcast %cst_408 : f32 to vector<98x128xf32>
    %270 = arith.mulf %269, %268 : vector<98x128xf32>
    %cst_409 = arith.constant 1.000000e+00 : f32
    %271 = vector.broadcast %cst_409 : f32 to vector<98x128xf32>
    %272 = arith.addf %271, %270 : vector<98x128xf32>
    %273 = tpu.reciprocal %272 : vector<98x128xf32> -> vector<98x128xf32>
    %cst_410 = arith.constant 1.06140542 : f32
    %274 = vector.broadcast %cst_410 : f32 to vector<98x128xf32>
    %275 = arith.mulf %274, %273 : vector<98x128xf32>
    %cst_411 = arith.constant -1.45315206 : f32
    %276 = vector.broadcast %cst_411 : f32 to vector<98x128xf32>
    %277 = arith.addf %275, %276 : vector<98x128xf32>
    %278 = arith.mulf %277, %273 : vector<98x128xf32>
    %cst_412 = arith.constant 1.42141378 : f32
    %279 = vector.broadcast %cst_412 : f32 to vector<98x128xf32>
    %280 = arith.addf %278, %279 : vector<98x128xf32>
    %281 = arith.mulf %280, %273 : vector<98x128xf32>
    %cst_413 = arith.constant -0.284496725 : f32
    %282 = vector.broadcast %cst_413 : f32 to vector<98x128xf32>
    %283 = arith.addf %281, %282 : vector<98x128xf32>
    %284 = arith.mulf %283, %273 : vector<98x128xf32>
    %cst_414 = arith.constant 0.254829586 : f32
    %285 = vector.broadcast %cst_414 : f32 to vector<98x128xf32>
    %286 = arith.addf %284, %285 : vector<98x128xf32>
    %287 = arith.mulf %286, %273 : vector<98x128xf32>
    %cst_415 = arith.constant 0.000000e+00 : f32
    %288 = vector.broadcast %cst_415 : f32 to vector<98x128xf32>
    %289 = arith.subf %288, %268 : vector<98x128xf32>
    %290 = arith.mulf %289, %268 : vector<98x128xf32>
    %291 = math.exp %290 : vector<98x128xf32>
    %292 = arith.mulf %287, %291 : vector<98x128xf32>
    %cst_416 = arith.constant 1.000000e+00 : f32
    %293 = vector.broadcast %cst_416 : f32 to vector<98x128xf32>
    %294 = arith.subf %293, %292 : vector<98x128xf32>
    %295 = arith.mulf %267, %294 : vector<98x128xf32>
    %cst_417 = arith.constant 1.000000e+00 : f32
    %296 = vector.broadcast %cst_417 : f32 to vector<98x128xf32>
    %297 = arith.addf %296, %295 : vector<98x128xf32>
    %298 = arith.mulf %260, %297 : vector<98x128xf32>
    %c0_418 = arith.constant 0 : index
    %c0_419 = arith.constant 0 : index
    %299 = vector.load %arg13[%c0_418, %c0_419] : memref<98x128xf32, #tpu.memory_space<vmem>>, vector<98x128xf32>
    tpu.vector_store %arg13[%c0_418, %c0_419], %298 {strides = array<i32>} : memref<98x128xf32, #tpu.memory_space<vmem>>, vector<98x128xf32>,
    %c0_420 = arith.constant 0 : index
    %c0_421 = arith.constant 0 : index
    %300 = tpu.strided_load %arg13[%c0_420, %c0_421] {strides = array<i32: 2, 1>} : memref<98x128xf32, #tpu.memory_space<vmem>>, vector<3x128xf32>
    %c0_422 = arith.constant 0 : index
    %c0_423 = arith.constant 0 : index
    %301 = vector.load %arg12[%c0_422, %c0_423] : memref<18x1152xf32, #tpu.memory_space<vmem>>, vector<3x128xf32>
    tpu.vector_store %arg12[%c0_422, %c0_423], %300 {strides = array<i32>} : memref<18x1152xf32, #tpu.memory_space<vmem>>, vector<3x128xf32>,
    %c1_424 = arith.constant 1 : index
    %c0_425 = arith.constant 0 : index
    %302 = tpu.strided_load %arg13[%c1_424, %c0_425] {strides = array<i32: 2, 1>} : memref<98x128xf32, #tpu.memory_space<vmem>>, vector<3x128xf32>
    %c0_426 = arith.constant 0 : index
    %c128_427 = arith.constant 128 : index
    %303 = vector.load %arg12[%c0_426, %c128_427] : memref<18x1152xf32, #tpu.memory_space<vmem>>, vector<3x128xf32>
    tpu.vector_store %arg12[%c0_426, %c128_427], %302 {strides = array<i32>} : memref<18x1152xf32, #tpu.memory_space<vmem>>, vector<3x128xf32>,
    %c2_428 = arith.constant 2 : index
    %c0_429 = arith.constant 0 : index
    %304 = tpu.strided_load %arg13[%c2_428, %c0_429] {strides = array<i32: 2, 1>} : memref<98x128xf32, #tpu.memory_space<vmem>>, vector<3x128xf32>
    %c0_430 = arith.constant 0 : index
    %c256_431 = arith.constant 256 : index
    %305 = vector.load %arg12[%c0_430, %c256_431] : memref<18x1152xf32, #tpu.memory_space<vmem>>, vector<3x128xf32>
    tpu.vector_store %arg12[%c0_430, %c256_431], %304 {strides = array<i32>} : memref<18x1152xf32, #tpu.memory_space<vmem>>, vector<3x128xf32>,
    %c7_432 = arith.constant 7 : index
    %c0_433 = arith.constant 0 : index
    %306 = tpu.strided_load %arg13[%c7_432, %c0_433] {strides = array<i32: 2, 1>} : memref<98x128xf32, #tpu.memory_space<vmem>>, vector<3x128xf32>
    %c0_434 = arith.constant 0 : index
    %c384_435 = arith.constant 384 : index
    %307 = vector.load %arg12[%c0_434, %c384_435] : memref<18x1152xf32, #tpu.memory_space<vmem>>, vector<3x128xf32>
    tpu.vector_store %arg12[%c0_434, %c384_435], %306 {strides = array<i32>} : memref<18x1152xf32, #tpu.memory_space<vmem>>, vector<3x128xf32>,
    %c8 = arith.constant 8 : index
    %c0_436 = arith.constant 0 : index
    %308 = tpu.strided_load %arg13[%c8, %c0_436] {strides = array<i32: 2, 1>} : memref<98x128xf32, #tpu.memory_space<vmem>>, vector<3x128xf32>
    %c0_437 = arith.constant 0 : index
    %c512_438 = arith.constant 512 : index
    %309 = vector.load %arg12[%c0_437, %c512_438] : memref<18x1152xf32, #tpu.memory_space<vmem>>, vector<3x128xf32>
    tpu.vector_store %arg12[%c0_437, %c512_438], %308 {strides = array<i32>} : memref<18x1152xf32, #tpu.memory_space<vmem>>, vector<3x128xf32>,
    %c9 = arith.constant 9 : index
    %c0_439 = arith.constant 0 : index
    %310 = tpu.strided_load %arg13[%c9, %c0_439] {strides = array<i32: 2, 1>} : memref<98x128xf32, #tpu.memory_space<vmem>>, vector<3x128xf32>
    %c0_440 = arith.constant 0 : index
    %c640_441 = arith.constant 640 : index
    %311 = vector.load %arg12[%c0_440, %c640_441] : memref<18x1152xf32, #tpu.memory_space<vmem>>, vector<3x128xf32>
    tpu.vector_store %arg12[%c0_440, %c640_441], %310 {strides = array<i32>} : memref<18x1152xf32, #tpu.memory_space<vmem>>, vector<3x128xf32>,
    %c14_442 = arith.constant 14 : index
    %c0_443 = arith.constant 0 : index
    %312 = tpu.strided_load %arg13[%c14_442, %c0_443] {strides = array<i32: 2, 1>} : memref<98x128xf32, #tpu.memory_space<vmem>>, vector<3x128xf32>
    %c0_444 = arith.constant 0 : index
    %c768_445 = arith.constant 768 : index
    %313 = vector.load %arg12[%c0_444, %c768_445] : memref<18x1152xf32, #tpu.memory_space<vmem>>, vector<3x128xf32>
    tpu.vector_store %arg12[%c0_444, %c768_445], %312 {strides = array<i32>} : memref<18x1152xf32, #tpu.memory_space<vmem>>, vector<3x128xf32>,
    %c15 = arith.constant 15 : index
    %c0_446 = arith.constant 0 : index
    %314 = tpu.strided_load %arg13[%c15, %c0_446] {strides = array<i32: 2, 1>} : memref<98x128xf32, #tpu.memory_space<vmem>>, vector<3x128xf32>
    %c0_447 = arith.constant 0 : index
    %c896_448 = arith.constant 896 : index
    %315 = vector.load %arg12[%c0_447, %c896_448] : memref<18x1152xf32, #tpu.memory_space<vmem>>, vector<3x128xf32>
    tpu.vector_store %arg12[%c0_447, %c896_448], %314 {strides = array<i32>} : memref<18x1152xf32, #tpu.memory_space<vmem>>, vector<3x128xf32>,
    %c16_449 = arith.constant 16 : index
    %c0_450 = arith.constant 0 : index
    %316 = tpu.strided_load %arg13[%c16_449, %c0_450] {strides = array<i32: 2, 1>} : memref<98x128xf32, #tpu.memory_space<vmem>>, vector<3x128xf32>
    %c0_451 = arith.constant 0 : index
    %c1024_452 = arith.constant 1024 : index
    %317 = vector.load %arg12[%c0_451, %c1024_452] : memref<18x1152xf32, #tpu.memory_space<vmem>>, vector<3x128xf32>
    tpu.vector_store %arg12[%c0_451, %c1024_452], %316 {strides = array<i32>} : memref<18x1152xf32, #tpu.memory_space<vmem>>, vector<3x128xf32>,
    %c14_453 = arith.constant 14 : index
    %c0_454 = arith.constant 0 : index
    %318 = tpu.strided_load %arg13[%c14_453, %c0_454] {strides = array<i32: 2, 1>} : memref<98x128xf32, #tpu.memory_space<vmem>>, vector<3x128xf32>
    %c3 = arith.constant 3 : index
    %c0_455 = arith.constant 0 : index
    %319 = vector.load %arg12[%c3, %c0_455] : memref<18x1152xf32, #tpu.memory_space<vmem>>, vector<3x128xf32>
    tpu.vector_store %arg12[%c3, %c0_455], %318 {strides = array<i32>} : memref<18x1152xf32, #tpu.memory_space<vmem>>, vector<3x128xf32>,
    %c15_456 = arith.constant 15 : index
    %c0_457 = arith.constant 0 : index
    %320 = tpu.strided_load %arg13[%c15_456, %c0_457] {strides = array<i32: 2, 1>} : memref<98x128xf32, #tpu.memory_space<vmem>>, vector<3x128xf32>
    %c3_458 = arith.constant 3 : index
    %c128_459 = arith.constant 128 : index
    %321 = vector.load %arg12[%c3_458, %c128_459] : memref<18x1152xf32, #tpu.memory_space<vmem>>, vector<3x128xf32>
    tpu.vector_store %arg12[%c3_458, %c128_459], %320 {strides = array<i32>} : memref<18x1152xf32, #tpu.memory_space<vmem>>, vector<3x128xf32>,
    %c16_460 = arith.constant 16 : index
    %c0_461 = arith.constant 0 : index
    %322 = tpu.strided_load %arg13[%c16_460, %c0_461] {strides = array<i32: 2, 1>} : memref<98x128xf32, #tpu.memory_space<vmem>>, vector<3x128xf32>
    %c3_462 = arith.constant 3 : index
    %c256_463 = arith.constant 256 : index
    %323 = vector.load %arg12[%c3_462, %c256_463] : memref<18x1152xf32, #tpu.memory_space<vmem>>, vector<3x128xf32>
    tpu.vector_store %arg12[%c3_462, %c256_463], %322 {strides = array<i32>} : memref<18x1152xf32, #tpu.memory_space<vmem>>, vector<3x128xf32>,
    %c21_464 = arith.constant 21 : index
    %c0_465 = arith.constant 0 : index
    %324 = tpu.strided_load %arg13[%c21_464, %c0_465] {strides = array<i32: 2, 1>} : memref<98x128xf32, #tpu.memory_space<vmem>>, vector<3x128xf32>
    %c3_466 = arith.constant 3 : index
    %c384_467 = arith.constant 384 : index
    %325 = vector.load %arg12[%c3_466, %c384_467] : memref<18x1152xf32, #tpu.memory_space<vmem>>, vector<3x128xf32>
    tpu.vector_store %arg12[%c3_466, %c384_467], %324 {strides = array<i32>} : memref<18x1152xf32, #tpu.memory_space<vmem>>, vector<3x128xf32>,
    %c22 = arith.constant 22 : index
    %c0_468 = arith.constant 0 : index
    %326 = tpu.strided_load %arg13[%c22, %c0_468] {strides = array<i32: 2, 1>} : memref<98x128xf32, #tpu.memory_space<vmem>>, vector<3x128xf32>
    %c3_469 = arith.constant 3 : index
    %c512_470 = arith.constant 512 : index
    %327 = vector.load %arg12[%c3_469, %c512_470] : memref<18x1152xf32, #tpu.memory_space<vmem>>, vector<3x128xf32>
    tpu.vector_store %arg12[%c3_469, %c512_470], %326 {strides = array<i32>} : memref<18x1152xf32, #tpu.memory_space<vmem>>, vector<3x128xf32>,
    %c23 = arith.constant 23 : index
    %c0_471 = arith.constant 0 : index
    %328 = tpu.strided_load %arg13[%c23, %c0_471] {strides = array<i32: 2, 1>} : memref<98x128xf32, #tpu.memory_space<vmem>>, vector<3x128xf32>
    %c3_472 = arith.constant 3 : index
    %c640_473 = arith.constant 640 : index
    %329 = vector.load %arg12[%c3_472, %c640_473] : memref<18x1152xf32, #tpu.memory_space<vmem>>, vector<3x128xf32>
    tpu.vector_store %arg12[%c3_472, %c640_473], %328 {strides = array<i32>} : memref<18x1152xf32, #tpu.memory_space<vmem>>, vector<3x128xf32>,
    %c28_474 = arith.constant 28 : index
    %c0_475 = arith.constant 0 : index
    %330 = tpu.strided_load %arg13[%c28_474, %c0_475] {strides = array<i32: 2, 1>} : memref<98x128xf32, #tpu.memory_space<vmem>>, vector<3x128xf32>
    %c3_476 = arith.constant 3 : index
    %c768_477 = arith.constant 768 : index
    %331 = vector.load %arg12[%c3_476, %c768_477] : memref<18x1152xf32, #tpu.memory_space<vmem>>, vector<3x128xf32>
    tpu.vector_store %arg12[%c3_476, %c768_477], %330 {strides = array<i32>} : memref<18x1152xf32, #tpu.memory_space<vmem>>, vector<3x128xf32>,
    %c29 = arith.constant 29 : index
    %c0_478 = arith.constant 0 : index
    %332 = tpu.strided_load %arg13[%c29, %c0_478] {strides = array<i32: 2, 1>} : memref<98x128xf32, #tpu.memory_space<vmem>>, vector<3x128xf32>
    %c3_479 = arith.constant 3 : index
    %c896_480 = arith.constant 896 : index
    %333 = vector.load %arg12[%c3_479, %c896_480] : memref<18x1152xf32, #tpu.memory_space<vmem>>, vector<3x128xf32>
    tpu.vector_store %arg12[%c3_479, %c896_480], %332 {strides = array<i32>} : memref<18x1152xf32, #tpu.memory_space<vmem>>, vector<3x128xf32>,
    %c30 = arith.constant 30 : index
    %c0_481 = arith.constant 0 : index
    %334 = tpu.strided_load %arg13[%c30, %c0_481] {strides = array<i32: 2, 1>} : memref<98x128xf32, #tpu.memory_space<vmem>>, vector<3x128xf32>
    %c3_482 = arith.constant 3 : index
    %c1024_483 = arith.constant 1024 : index
    %335 = vector.load %arg12[%c3_482, %c1024_483] : memref<18x1152xf32, #tpu.memory_space<vmem>>, vector<3x128xf32>
    tpu.vector_store %arg12[%c3_482, %c1024_483], %334 {strides = array<i32>} : memref<18x1152xf32, #tpu.memory_space<vmem>>, vector<3x128xf32>,
    %c28_484 = arith.constant 28 : index
    %c0_485 = arith.constant 0 : index
    %336 = tpu.strided_load %arg13[%c28_484, %c0_485] {strides = array<i32: 2, 1>} : memref<98x128xf32, #tpu.memory_space<vmem>>, vector<3x128xf32>
    %c6 = arith.constant 6 : index
    %c0_486 = arith.constant 0 : index
    %337 = vector.load %arg12[%c6, %c0_486] : memref<18x1152xf32, #tpu.memory_space<vmem>>, vector<3x128xf32>
    tpu.vector_store %arg12[%c6, %c0_486], %336 {strides = array<i32>} : memref<18x1152xf32, #tpu.memory_space<vmem>>, vector<3x128xf32>,
    %c29_487 = arith.constant 29 : index
    %c0_488 = arith.constant 0 : index
    %338 = tpu.strided_load %arg13[%c29_487, %c0_488] {strides = array<i32: 2, 1>} : memref<98x128xf32, #tpu.memory_space<vmem>>, vector<3x128xf32>
    %c6_489 = arith.constant 6 : index
    %c128_490 = arith.constant 128 : index
    %339 = vector.load %arg12[%c6_489, %c128_490] : memref<18x1152xf32, #tpu.memory_space<vmem>>, vector<3x128xf32>
    tpu.vector_store %arg12[%c6_489, %c128_490], %338 {strides = array<i32>} : memref<18x1152xf32, #tpu.memory_space<vmem>>, vector<3x128xf32>,
    %c30_491 = arith.constant 30 : index
    %c0_492 = arith.constant 0 : index
    %340 = tpu.strided_load %arg13[%c30_491, %c0_492] {strides = array<i32: 2, 1>} : memref<98x128xf32, #tpu.memory_space<vmem>>, vector<3x128xf32>
    %c6_493 = arith.constant 6 : index
    %c256_494 = arith.constant 256 : index
    %341 = vector.load %arg12[%c6_493, %c256_494] : memref<18x1152xf32, #tpu.memory_space<vmem>>, vector<3x128xf32>
    tpu.vector_store %arg12[%c6_493, %c256_494], %340 {strides = array<i32>} : memref<18x1152xf32, #tpu.memory_space<vmem>>, vector<3x128xf32>,
    %c35_495 = arith.constant 35 : index
    %c0_496 = arith.constant 0 : index
    %342 = tpu.strided_load %arg13[%c35_495, %c0_496] {strides = array<i32: 2, 1>} : memref<98x128xf32, #tpu.memory_space<vmem>>, vector<3x128xf32>
    %c6_497 = arith.constant 6 : index
    %c384_498 = arith.constant 384 : index
    %343 = vector.load %arg12[%c6_497, %c384_498] : memref<18x1152xf32, #tpu.memory_space<vmem>>, vector<3x128xf32>
    tpu.vector_store %arg12[%c6_497, %c384_498], %342 {strides = array<i32>} : memref<18x1152xf32, #tpu.memory_space<vmem>>, vector<3x128xf32>,
    %c36 = arith.constant 36 : index
    %c0_499 = arith.constant 0 : index
    %344 = tpu.strided_load %arg13[%c36, %c0_499] {strides = array<i32: 2, 1>} : memref<98x128xf32, #tpu.memory_space<vmem>>, vector<3x128xf32>
    %c6_500 = arith.constant 6 : index
    %c512_501 = arith.constant 512 : index
    %345 = vector.load %arg12[%c6_500, %c512_501] : memref<18x1152xf32, #tpu.memory_space<vmem>>, vector<3x128xf32>
    tpu.vector_store %arg12[%c6_500, %c512_501], %344 {strides = array<i32>} : memref<18x1152xf32, #tpu.memory_space<vmem>>, vector<3x128xf32>,
    %c37 = arith.constant 37 : index
    %c0_502 = arith.constant 0 : index
    %346 = tpu.strided_load %arg13[%c37, %c0_502] {strides = array<i32: 2, 1>} : memref<98x128xf32, #tpu.memory_space<vmem>>, vector<3x128xf32>
    %c6_503 = arith.constant 6 : index
    %c640_504 = arith.constant 640 : index
    %347 = vector.load %arg12[%c6_503, %c640_504] : memref<18x1152xf32, #tpu.memory_space<vmem>>, vector<3x128xf32>
    tpu.vector_store %arg12[%c6_503, %c640_504], %346 {strides = array<i32>} : memref<18x1152xf32, #tpu.memory_space<vmem>>, vector<3x128xf32>,
    %c42_505 = arith.constant 42 : index
    %c0_506 = arith.constant 0 : index
    %348 = tpu.strided_load %arg13[%c42_505, %c0_506] {strides = array<i32: 2, 1>} : memref<98x128xf32, #tpu.memory_space<vmem>>, vector<3x128xf32>
    %c6_507 = arith.constant 6 : index
    %c768_508 = arith.constant 768 : index
    %349 = vector.load %arg12[%c6_507, %c768_508] : memref<18x1152xf32, #tpu.memory_space<vmem>>, vector<3x128xf32>
    tpu.vector_store %arg12[%c6_507, %c768_508], %348 {strides = array<i32>} : memref<18x1152xf32, #tpu.memory_space<vmem>>, vector<3x128xf32>,
    %c43 = arith.constant 43 : index
    %c0_509 = arith.constant 0 : index
    %350 = tpu.strided_load %arg13[%c43, %c0_509] {strides = array<i32: 2, 1>} : memref<98x128xf32, #tpu.memory_space<vmem>>, vector<3x128xf32>
    %c6_510 = arith.constant 6 : index
    %c896_511 = arith.constant 896 : index
    %351 = vector.load %arg12[%c6_510, %c896_511] : memref<18x1152xf32, #tpu.memory_space<vmem>>, vector<3x128xf32>
    tpu.vector_store %arg12[%c6_510, %c896_511], %350 {strides = array<i32>} : memref<18x1152xf32, #tpu.memory_space<vmem>>, vector<3x128xf32>,
    %c44 = arith.constant 44 : index
    %c0_512 = arith.constant 0 : index
    %352 = tpu.strided_load %arg13[%c44, %c0_512] {strides = array<i32: 2, 1>} : memref<98x128xf32, #tpu.memory_space<vmem>>, vector<3x128xf32>
    %c6_513 = arith.constant 6 : index
    %c1024_514 = arith.constant 1024 : index
    %353 = vector.load %arg12[%c6_513, %c1024_514] : memref<18x1152xf32, #tpu.memory_space<vmem>>, vector<3x128xf32>
    tpu.vector_store %arg12[%c6_513, %c1024_514], %352 {strides = array<i32>} : memref<18x1152xf32, #tpu.memory_space<vmem>>, vector<3x128xf32>,
    %c49_515 = arith.constant 49 : index
    %c0_516 = arith.constant 0 : index
    %354 = tpu.strided_load %arg13[%c49_515, %c0_516] {strides = array<i32: 2, 1>} : memref<98x128xf32, #tpu.memory_space<vmem>>, vector<3x128xf32>
    %c9_517 = arith.constant 9 : index
    %c0_518 = arith.constant 0 : index
    %355 = vector.load %arg12[%c9_517, %c0_518] : memref<18x1152xf32, #tpu.memory_space<vmem>>, vector<3x128xf32>
    tpu.vector_store %arg12[%c9_517, %c0_518], %354 {strides = array<i32>} : memref<18x1152xf32, #tpu.memory_space<vmem>>, vector<3x128xf32>,
    %c50_519 = arith.constant 50 : index
    %c0_520 = arith.constant 0 : index
    %356 = tpu.strided_load %arg13[%c50_519, %c0_520] {strides = array<i32: 2, 1>} : memref<98x128xf32, #tpu.memory_space<vmem>>, vector<3x128xf32>
    %c9_521 = arith.constant 9 : index
    %c128_522 = arith.constant 128 : index
    %357 = vector.load %arg12[%c9_521, %c128_522] : memref<18x1152xf32, #tpu.memory_space<vmem>>, vector<3x128xf32>
    tpu.vector_store %arg12[%c9_521, %c128_522], %356 {strides = array<i32>} : memref<18x1152xf32, #tpu.memory_space<vmem>>, vector<3x128xf32>,
    %c51 = arith.constant 51 : index
    %c0_523 = arith.constant 0 : index
    %358 = tpu.strided_load %arg13[%c51, %c0_523] {strides = array<i32: 2, 1>} : memref<98x128xf32, #tpu.memory_space<vmem>>, vector<3x128xf32>
    %c9_524 = arith.constant 9 : index
    %c256_525 = arith.constant 256 : index
    %359 = vector.load %arg12[%c9_524, %c256_525] : memref<18x1152xf32, #tpu.memory_space<vmem>>, vector<3x128xf32>
    tpu.vector_store %arg12[%c9_524, %c256_525], %358 {strides = array<i32>} : memref<18x1152xf32, #tpu.memory_space<vmem>>, vector<3x128xf32>,
    %c56_526 = arith.constant 56 : index
    %c0_527 = arith.constant 0 : index
    %360 = tpu.strided_load %arg13[%c56_526, %c0_527] {strides = array<i32: 2, 1>} : memref<98x128xf32, #tpu.memory_space<vmem>>, vector<3x128xf32>
    %c9_528 = arith.constant 9 : index
    %c384_529 = arith.constant 384 : index
    %361 = vector.load %arg12[%c9_528, %c384_529] : memref<18x1152xf32, #tpu.memory_space<vmem>>, vector<3x128xf32>
    tpu.vector_store %arg12[%c9_528, %c384_529], %360 {strides = array<i32>} : memref<18x1152xf32, #tpu.memory_space<vmem>>, vector<3x128xf32>,
    %c57 = arith.constant 57 : index
    %c0_530 = arith.constant 0 : index
    %362 = tpu.strided_load %arg13[%c57, %c0_530] {strides = array<i32: 2, 1>} : memref<98x128xf32, #tpu.memory_space<vmem>>, vector<3x128xf32>
    %c9_531 = arith.constant 9 : index
    %c512_532 = arith.constant 512 : index
    %363 = vector.load %arg12[%c9_531, %c512_532] : memref<18x1152xf32, #tpu.memory_space<vmem>>, vector<3x128xf32>
    tpu.vector_store %arg12[%c9_531, %c512_532], %362 {strides = array<i32>} : memref<18x1152xf32, #tpu.memory_space<vmem>>, vector<3x128xf32>,
    %c58 = arith.constant 58 : index
    %c0_533 = arith.constant 0 : index
    %364 = tpu.strided_load %arg13[%c58, %c0_533] {strides = array<i32: 2, 1>} : memref<98x128xf32, #tpu.memory_space<vmem>>, vector<3x128xf32>
    %c9_534 = arith.constant 9 : index
    %c640_535 = arith.constant 640 : index
    %365 = vector.load %arg12[%c9_534, %c640_535] : memref<18x1152xf32, #tpu.memory_space<vmem>>, vector<3x128xf32>
    tpu.vector_store %arg12[%c9_534, %c640_535], %364 {strides = array<i32>} : memref<18x1152xf32, #tpu.memory_space<vmem>>, vector<3x128xf32>,
    %c63_536 = arith.constant 63 : index
    %c0_537 = arith.constant 0 : index
    %366 = tpu.strided_load %arg13[%c63_536, %c0_537] {strides = array<i32: 2, 1>} : memref<98x128xf32, #tpu.memory_space<vmem>>, vector<3x128xf32>
    %c9_538 = arith.constant 9 : index
    %c768_539 = arith.constant 768 : index
    %367 = vector.load %arg12[%c9_538, %c768_539] : memref<18x1152xf32, #tpu.memory_space<vmem>>, vector<3x128xf32>
    tpu.vector_store %arg12[%c9_538, %c768_539], %366 {strides = array<i32>} : memref<18x1152xf32, #tpu.memory_space<vmem>>, vector<3x128xf32>,
    %c64_540 = arith.constant 64 : index
    %c0_541 = arith.constant 0 : index
    %368 = tpu.strided_load %arg13[%c64_540, %c0_541] {strides = array<i32: 2, 1>} : memref<98x128xf32, #tpu.memory_space<vmem>>, vector<3x128xf32>
    %c9_542 = arith.constant 9 : index
    %c896_543 = arith.constant 896 : index
    %369 = vector.load %arg12[%c9_542, %c896_543] : memref<18x1152xf32, #tpu.memory_space<vmem>>, vector<3x128xf32>
    tpu.vector_store %arg12[%c9_542, %c896_543], %368 {strides = array<i32>} : memref<18x1152xf32, #tpu.memory_space<vmem>>, vector<3x128xf32>,
    %c65_544 = arith.constant 65 : index
    %c0_545 = arith.constant 0 : index
    %370 = tpu.strided_load %arg13[%c65_544, %c0_545] {strides = array<i32: 2, 1>} : memref<98x128xf32, #tpu.memory_space<vmem>>, vector<3x128xf32>
    %c9_546 = arith.constant 9 : index
    %c1024_547 = arith.constant 1024 : index
    %371 = vector.load %arg12[%c9_546, %c1024_547] : memref<18x1152xf32, #tpu.memory_space<vmem>>, vector<3x128xf32>
    tpu.vector_store %arg12[%c9_546, %c1024_547], %370 {strides = array<i32>} : memref<18x1152xf32, #tpu.memory_space<vmem>>, vector<3x128xf32>,
    %c63_548 = arith.constant 63 : index
    %c0_549 = arith.constant 0 : index
    %372 = tpu.strided_load %arg13[%c63_548, %c0_549] {strides = array<i32: 2, 1>} : memref<98x128xf32, #tpu.memory_space<vmem>>, vector<3x128xf32>
    %c12 = arith.constant 12 : index
    %c0_550 = arith.constant 0 : index
    %373 = vector.load %arg12[%c12, %c0_550] : memref<18x1152xf32, #tpu.memory_space<vmem>>, vector<3x128xf32>
    tpu.vector_store %arg12[%c12, %c0_550], %372 {strides = array<i32>} : memref<18x1152xf32, #tpu.memory_space<vmem>>, vector<3x128xf32>,
    %c64_551 = arith.constant 64 : index
    %c0_552 = arith.constant 0 : index
    %374 = tpu.strided_load %arg13[%c64_551, %c0_552] {strides = array<i32: 2, 1>} : memref<98x128xf32, #tpu.memory_space<vmem>>, vector<3x128xf32>
    %c12_553 = arith.constant 12 : index
    %c128_554 = arith.constant 128 : index
    %375 = vector.load %arg12[%c12_553, %c128_554] : memref<18x1152xf32, #tpu.memory_space<vmem>>, vector<3x128xf32>
    tpu.vector_store %arg12[%c12_553, %c128_554], %374 {strides = array<i32>} : memref<18x1152xf32, #tpu.memory_space<vmem>>, vector<3x128xf32>,
    %c65_555 = arith.constant 65 : index
    %c0_556 = arith.constant 0 : index
    %376 = tpu.strided_load %arg13[%c65_555, %c0_556] {strides = array<i32: 2, 1>} : memref<98x128xf32, #tpu.memory_space<vmem>>, vector<3x128xf32>
    %c12_557 = arith.constant 12 : index
    %c256_558 = arith.constant 256 : index
    %377 = vector.load %arg12[%c12_557, %c256_558] : memref<18x1152xf32, #tpu.memory_space<vmem>>, vector<3x128xf32>
    tpu.vector_store %arg12[%c12_557, %c256_558], %376 {strides = array<i32>} : memref<18x1152xf32, #tpu.memory_space<vmem>>, vector<3x128xf32>,
    %c70_559 = arith.constant 70 : index
    %c0_560 = arith.constant 0 : index
    %378 = tpu.strided_load %arg13[%c70_559, %c0_560] {strides = array<i32: 2, 1>} : memref<98x128xf32, #tpu.memory_space<vmem>>, vector<3x128xf32>
    %c12_561 = arith.constant 12 : index
    %c384_562 = arith.constant 384 : index
    %379 = vector.load %arg12[%c12_561, %c384_562] : memref<18x1152xf32, #tpu.memory_space<vmem>>, vector<3x128xf32>
    tpu.vector_store %arg12[%c12_561, %c384_562], %378 {strides = array<i32>} : memref<18x1152xf32, #tpu.memory_space<vmem>>, vector<3x128xf32>,
    %c71 = arith.constant 71 : index
    %c0_563 = arith.constant 0 : index
    %380 = tpu.strided_load %arg13[%c71, %c0_563] {strides = array<i32: 2, 1>} : memref<98x128xf32, #tpu.memory_space<vmem>>, vector<3x128xf32>
    %c12_564 = arith.constant 12 : index
    %c512_565 = arith.constant 512 : index
    %381 = vector.load %arg12[%c12_564, %c512_565] : memref<18x1152xf32, #tpu.memory_space<vmem>>, vector<3x128xf32>
    tpu.vector_store %arg12[%c12_564, %c512_565], %380 {strides = array<i32>} : memref<18x1152xf32, #tpu.memory_space<vmem>>, vector<3x128xf32>,
    %c72 = arith.constant 72 : index
    %c0_566 = arith.constant 0 : index
    %382 = tpu.strided_load %arg13[%c72, %c0_566] {strides = array<i32: 2, 1>} : memref<98x128xf32, #tpu.memory_space<vmem>>, vector<3x128xf32>
    %c12_567 = arith.constant 12 : index
    %c640_568 = arith.constant 640 : index
    %383 = vector.load %arg12[%c12_567, %c640_568] : memref<18x1152xf32, #tpu.memory_space<vmem>>, vector<3x128xf32>
    tpu.vector_store %arg12[%c12_567, %c640_568], %382 {strides = array<i32>} : memref<18x1152xf32, #tpu.memory_space<vmem>>, vector<3x128xf32>,
    %c77_569 = arith.constant 77 : index
    %c0_570 = arith.constant 0 : index
    %384 = tpu.strided_load %arg13[%c77_569, %c0_570] {strides = array<i32: 2, 1>} : memref<98x128xf32, #tpu.memory_space<vmem>>, vector<3x128xf32>
    %c12_571 = arith.constant 12 : index
    %c768_572 = arith.constant 768 : index
    %385 = vector.load %arg12[%c12_571, %c768_572] : memref<18x1152xf32, #tpu.memory_space<vmem>>, vector<3x128xf32>
    tpu.vector_store %arg12[%c12_571, %c768_572], %384 {strides = array<i32>} : memref<18x1152xf32, #tpu.memory_space<vmem>>, vector<3x128xf32>,
    %c78 = arith.constant 78 : index
    %c0_573 = arith.constant 0 : index
    %386 = tpu.strided_load %arg13[%c78, %c0_573] {strides = array<i32: 2, 1>} : memref<98x128xf32, #tpu.memory_space<vmem>>, vector<3x128xf32>
    %c12_574 = arith.constant 12 : index
    %c896_575 = arith.constant 896 : index
    %387 = vector.load %arg12[%c12_574, %c896_575] : memref<18x1152xf32, #tpu.memory_space<vmem>>, vector<3x128xf32>
    tpu.vector_store %arg12[%c12_574, %c896_575], %386 {strides = array<i32>} : memref<18x1152xf32, #tpu.memory_space<vmem>>, vector<3x128xf32>,
    %c79 = arith.constant 79 : index
    %c0_576 = arith.constant 0 : index
    %388 = tpu.strided_load %arg13[%c79, %c0_576] {strides = array<i32: 2, 1>} : memref<98x128xf32, #tpu.memory_space<vmem>>, vector<3x128xf32>
    %c12_577 = arith.constant 12 : index
    %c1024_578 = arith.constant 1024 : index
    %389 = vector.load %arg12[%c12_577, %c1024_578] : memref<18x1152xf32, #tpu.memory_space<vmem>>, vector<3x128xf32>
    tpu.vector_store %arg12[%c12_577, %c1024_578], %388 {strides = array<i32>} : memref<18x1152xf32, #tpu.memory_space<vmem>>, vector<3x128xf32>,
    %c77_579 = arith.constant 77 : index
    %c0_580 = arith.constant 0 : index
    %390 = tpu.strided_load %arg13[%c77_579, %c0_580] {strides = array<i32: 2, 1>} : memref<98x128xf32, #tpu.memory_space<vmem>>, vector<3x128xf32>
    %c15_581 = arith.constant 15 : index
    %c0_582 = arith.constant 0 : index
    %391 = vector.load %arg12[%c15_581, %c0_582] : memref<18x1152xf32, #tpu.memory_space<vmem>>, vector<3x128xf32>
    tpu.vector_store %arg12[%c15_581, %c0_582], %390 {strides = array<i32>} : memref<18x1152xf32, #tpu.memory_space<vmem>>, vector<3x128xf32>,
    %c78_583 = arith.constant 78 : index
    %c0_584 = arith.constant 0 : index
    %392 = tpu.strided_load %arg13[%c78_583, %c0_584] {strides = array<i32: 2, 1>} : memref<98x128xf32, #tpu.memory_space<vmem>>, vector<3x128xf32>
    %c15_585 = arith.constant 15 : index
    %c128_586 = arith.constant 128 : index
    %393 = vector.load %arg12[%c15_585, %c128_586] : memref<18x1152xf32, #tpu.memory_space<vmem>>, vector<3x128xf32>
    tpu.vector_store %arg12[%c15_585, %c128_586], %392 {strides = array<i32>} : memref<18x1152xf32, #tpu.memory_space<vmem>>, vector<3x128xf32>,
    %c79_587 = arith.constant 79 : index
    %c0_588 = arith.constant 0 : index
    %394 = tpu.strided_load %arg13[%c79_587, %c0_588] {strides = array<i32: 2, 1>} : memref<98x128xf32, #tpu.memory_space<vmem>>, vector<3x128xf32>
    %c15_589 = arith.constant 15 : index
    %c256_590 = arith.constant 256 : index
    %395 = vector.load %arg12[%c15_589, %c256_590] : memref<18x1152xf32, #tpu.memory_space<vmem>>, vector<3x128xf32>
    tpu.vector_store %arg12[%c15_589, %c256_590], %394 {strides = array<i32>} : memref<18x1152xf32, #tpu.memory_space<vmem>>, vector<3x128xf32>,
    %c84_591 = arith.constant 84 : index
    %c0_592 = arith.constant 0 : index
    %396 = tpu.strided_load %arg13[%c84_591, %c0_592] {strides = array<i32: 2, 1>} : memref<98x128xf32, #tpu.memory_space<vmem>>, vector<3x128xf32>
    %c15_593 = arith.constant 15 : index
    %c384_594 = arith.constant 384 : index
    %397 = vector.load %arg12[%c15_593, %c384_594] : memref<18x1152xf32, #tpu.memory_space<vmem>>, vector<3x128xf32>
    tpu.vector_store %arg12[%c15_593, %c384_594], %396 {strides = array<i32>} : memref<18x1152xf32, #tpu.memory_space<vmem>>, vector<3x128xf32>,
    %c85 = arith.constant 85 : index
    %c0_595 = arith.constant 0 : index
    %398 = tpu.strided_load %arg13[%c85, %c0_595] {strides = array<i32: 2, 1>} : memref<98x128xf32, #tpu.memory_space<vmem>>, vector<3x128xf32>
    %c15_596 = arith.constant 15 : index
    %c512_597 = arith.constant 512 : index
    %399 = vector.load %arg12[%c15_596, %c512_597] : memref<18x1152xf32, #tpu.memory_space<vmem>>, vector<3x128xf32>
    tpu.vector_store %arg12[%c15_596, %c512_597], %398 {strides = array<i32>} : memref<18x1152xf32, #tpu.memory_space<vmem>>, vector<3x128xf32>,
    %c86 = arith.constant 86 : index
    %c0_598 = arith.constant 0 : index
    %400 = tpu.strided_load %arg13[%c86, %c0_598] {strides = array<i32: 2, 1>} : memref<98x128xf32, #tpu.memory_space<vmem>>, vector<3x128xf32>
    %c15_599 = arith.constant 15 : index
    %c640_600 = arith.constant 640 : index
    %401 = vector.load %arg12[%c15_599, %c640_600] : memref<18x1152xf32, #tpu.memory_space<vmem>>, vector<3x128xf32>
    tpu.vector_store %arg12[%c15_599, %c640_600], %400 {strides = array<i32>} : memref<18x1152xf32, #tpu.memory_space<vmem>>, vector<3x128xf32>,
    %c91_601 = arith.constant 91 : index
    %c0_602 = arith.constant 0 : index
    %402 = tpu.strided_load %arg13[%c91_601, %c0_602] {strides = array<i32: 2, 1>} : memref<98x128xf32, #tpu.memory_space<vmem>>, vector<3x128xf32>
    %c15_603 = arith.constant 15 : index
    %c768_604 = arith.constant 768 : index
    %403 = vector.load %arg12[%c15_603, %c768_604] : memref<18x1152xf32, #tpu.memory_space<vmem>>, vector<3x128xf32>
    tpu.vector_store %arg12[%c15_603, %c768_604], %402 {strides = array<i32>} : memref<18x1152xf32, #tpu.memory_space<vmem>>, vector<3x128xf32>,
    %c92 = arith.constant 92 : index
    %c0_605 = arith.constant 0 : index
    %404 = tpu.strided_load %arg13[%c92, %c0_605] {strides = array<i32: 2, 1>} : memref<98x128xf32, #tpu.memory_space<vmem>>, vector<3x128xf32>
    %c15_606 = arith.constant 15 : index
    %c896_607 = arith.constant 896 : index
    %405 = vector.load %arg12[%c15_606, %c896_607] : memref<18x1152xf32, #tpu.memory_space<vmem>>, vector<3x128xf32>
    tpu.vector_store %arg12[%c15_606, %c896_607], %404 {strides = array<i32>} : memref<18x1152xf32, #tpu.memory_space<vmem>>, vector<3x128xf32>,
    %c93 = arith.constant 93 : index
    %c0_608 = arith.constant 0 : index
    %406 = tpu.strided_load %arg13[%c93, %c0_608] {strides = array<i32: 2, 1>} : memref<98x128xf32, #tpu.memory_space<vmem>>, vector<3x128xf32>
    %c15_609 = arith.constant 15 : index
    %c1024_610 = arith.constant 1024 : index
    %407 = vector.load %arg12[%c15_609, %c1024_610] : memref<18x1152xf32, #tpu.memory_space<vmem>>, vector<3x128xf32>
    tpu.vector_store %arg12[%c15_609, %c1024_610], %406 {strides = array<i32>} : memref<18x1152xf32, #tpu.memory_space<vmem>>, vector<3x128xf32>,
    %c0_611 = arith.constant 0 : index
    %c0_612 = arith.constant 0 : index
    %408 = vector.load %arg12[%c0_611, %c0_612] : memref<18x1152xf32, #tpu.memory_space<vmem>>, vector<18x1152xf32>
    %409 = arith.truncf %408 : vector<18x1152xf32> to vector<18x1152xbf16>
    %c0_613 = arith.constant 0 : index
    %c0_614 = arith.constant 0 : index
    %410 = vector.load %arg4[%c0_613, %c0_614] : memref<1152x128xbf16, #tpu.memory_space<vmem>>, vector<1152x128xbf16>
    %cst_615 = arith.constant dense<0.000000e+00> : vector<18x128xf32>
    %411 = tpu.matmul %409, %410, %cst_615 {dimension_numbers = #tpu.dot_dimension_numbers<[1], [0], [0], [1], [0, 0, 1, 1], [], []>} : vector<18x1152xbf16>, vector<1152x128xbf16>, vector<18x128xf32> -> vector<18x128xf32>
    %c0_616 = arith.constant 0 : index
    %c0_617 = arith.constant 0 : index
    %412 = vector.load %arg5[%c0_616, %c0_617] : memref<1x128xf32, #tpu.memory_space<vmem>>, vector<1x128xf32>
    %413 = vector.broadcast %412 : vector<1x128xf32> to vector<18x128xf32>
    %414 = arith.addf %411, %413 : vector<18x128xf32>
    %cst_618 = arith.constant 5.000000e-01 : f32
    %415 = vector.broadcast %cst_618 : f32 to vector<18x128xf32>
    %416 = arith.mulf %415, %414 : vector<18x128xf32>
    %cst_619 = arith.constant 0.707106769 : f32
    %417 = vector.broadcast %cst_619 : f32 to vector<18x128xf32>
    %418 = arith.mulf %414, %417 : vector<18x128xf32>
    %cst_620 = arith.constant 0.000000e+00 : f32
    %419 = vector.broadcast %cst_620 : f32 to vector<18x128xf32>
    %420 = arith.cmpf oge, %418, %419 : vector<18x128xf32>
    %cst_621 = arith.constant 1.000000e+00 : f32
    %cst_622 = arith.constant -1.000000e+00 : f32
    %421 = vector.broadcast %cst_621 : f32 to vector<18x128xf32>
    %422 = vector.broadcast %cst_622 : f32 to vector<18x128xf32>
    %423 = arith.select %420, %421, %422 : vector<18x128xi1>, vector<18x128xf32>
    %424 = math.absf %418 : vector<18x128xf32>
    %cst_623 = arith.constant 0.327591091 : f32
    %425 = vector.broadcast %cst_623 : f32 to vector<18x128xf32>
    %426 = arith.mulf %425, %424 : vector<18x128xf32>
    %cst_624 = arith.constant 1.000000e+00 : f32
    %427 = vector.broadcast %cst_624 : f32 to vector<18x128xf32>
    %428 = arith.addf %427, %426 : vector<18x128xf32>
    %429 = tpu.reciprocal %428 : vector<18x128xf32> -> vector<18x128xf32>
    %cst_625 = arith.constant 1.06140542 : f32
    %430 = vector.broadcast %cst_625 : f32 to vector<18x128xf32>
    %431 = arith.mulf %430, %429 : vector<18x128xf32>
    %cst_626 = arith.constant -1.45315206 : f32
    %432 = vector.broadcast %cst_626 : f32 to vector<18x128xf32>
    %433 = arith.addf %431, %432 : vector<18x128xf32>
    %434 = arith.mulf %433, %429 : vector<18x128xf32>
    %cst_627 = arith.constant 1.42141378 : f32
    %435 = vector.broadcast %cst_627 : f32 to vector<18x128xf32>
    %436 = arith.addf %434, %435 : vector<18x128xf32>
    %437 = arith.mulf %436, %429 : vector<18x128xf32>
    %cst_628 = arith.constant -0.284496725 : f32
    %438 = vector.broadcast %cst_628 : f32 to vector<18x128xf32>
    %439 = arith.addf %437, %438 : vector<18x128xf32>
    %440 = arith.mulf %439, %429 : vector<18x128xf32>
    %cst_629 = arith.constant 0.254829586 : f32
    %441 = vector.broadcast %cst_629 : f32 to vector<18x128xf32>
    %442 = arith.addf %440, %441 : vector<18x128xf32>
    %443 = arith.mulf %442, %429 : vector<18x128xf32>
    %cst_630 = arith.constant 0.000000e+00 : f32
    %444 = vector.broadcast %cst_630 : f32 to vector<18x128xf32>
    %445 = arith.subf %444, %424 : vector<18x128xf32>
    %446 = arith.mulf %445, %424 : vector<18x128xf32>
    %447 = math.exp %446 : vector<18x128xf32>
    %448 = arith.mulf %443, %447 : vector<18x128xf32>
    %cst_631 = arith.constant 1.000000e+00 : f32
    %449 = vector.broadcast %cst_631 : f32 to vector<18x128xf32>
    %450 = arith.subf %449, %448 : vector<18x128xf32>
    %451 = arith.mulf %423, %450 : vector<18x128xf32>
    %cst_632 = arith.constant 1.000000e+00 : f32
    %452 = vector.broadcast %cst_632 : f32 to vector<18x128xf32>
    %453 = arith.addf %452, %451 : vector<18x128xf32>
    %454 = arith.mulf %416, %453 : vector<18x128xf32>
    %c0_633 = arith.constant 0 : index
    %c0_634 = arith.constant 0 : index
    %455 = vector.load %arg6[%c0_633, %c0_634] : memref<18x128xf32, #tpu.memory_space<vmem>>, vector<18x128xf32>
    %456 = arith.mulf %454, %455 : vector<18x128xf32>
    %c0_635 = arith.constant 0 : index
    %c0_636 = arith.constant 0 : index
    %457 = vector.load %arg7[%c0_635, %c0_636] : memref<18x128xf32, #tpu.memory_space<vmem>>, vector<18x128xf32>
    %458 = arith.addf %456, %457 : vector<18x128xf32>
    %cst_637 = arith.constant 0.000000e+00 : f32
    %459 = vector.broadcast %cst_637 : f32 to vector<18x128xf32>
    %460 = arith.maximumf %458, %459 : vector<18x128xf32>
    %461 = vector.extract_strided_slice %460 {offsets = [0, 0], sizes = [1, 128], strides = [1, 1]} : vector<18x128xf32> to vector<1x128xf32>
    %c0_638 = arith.constant 0 : index
    %c0_639 = arith.constant 0 : index
    %462 = vector.load %arg14[%c0_638, %c0_639] : memref<2x1152xf32, #tpu.memory_space<vmem>>, vector<1x128xf32>
    tpu.vector_store %arg14[%c0_638, %c0_639], %461 {strides = array<i32>} : memref<2x1152xf32, #tpu.memory_space<vmem>>, vector<1x128xf32>,
    %463 = vector.extract_strided_slice %460 {offsets = [1, 0], sizes = [1, 128], strides = [1, 1]} : vector<18x128xf32> to vector<1x128xf32>
    %c0_640 = arith.constant 0 : index
    %c128_641 = arith.constant 128 : index
    %464 = vector.load %arg14[%c0_640, %c128_641] : memref<2x1152xf32, #tpu.memory_space<vmem>>, vector<1x128xf32>
    tpu.vector_store %arg14[%c0_640, %c128_641], %463 {strides = array<i32>} : memref<2x1152xf32, #tpu.memory_space<vmem>>, vector<1x128xf32>,
    %465 = vector.extract_strided_slice %460 {offsets = [2, 0], sizes = [1, 128], strides = [1, 1]} : vector<18x128xf32> to vector<1x128xf32>
    %c0_642 = arith.constant 0 : index
    %c256_643 = arith.constant 256 : index
    %466 = vector.load %arg14[%c0_642, %c256_643] : memref<2x1152xf32, #tpu.memory_space<vmem>>, vector<1x128xf32>
    tpu.vector_store %arg14[%c0_642, %c256_643], %465 {strides = array<i32>} : memref<2x1152xf32, #tpu.memory_space<vmem>>, vector<1x128xf32>,
    %467 = vector.extract_strided_slice %460 {offsets = [3, 0], sizes = [1, 128], strides = [1, 1]} : vector<18x128xf32> to vector<1x128xf32>
    %c0_644 = arith.constant 0 : index
    %c384_645 = arith.constant 384 : index
    %468 = vector.load %arg14[%c0_644, %c384_645] : memref<2x1152xf32, #tpu.memory_space<vmem>>, vector<1x128xf32>
    tpu.vector_store %arg14[%c0_644, %c384_645], %467 {strides = array<i32>} : memref<2x1152xf32, #tpu.memory_space<vmem>>, vector<1x128xf32>,
    %469 = vector.extract_strided_slice %460 {offsets = [4, 0], sizes = [1, 128], strides = [1, 1]} : vector<18x128xf32> to vector<1x128xf32>
    %c0_646 = arith.constant 0 : index
    %c512_647 = arith.constant 512 : index
    %470 = vector.load %arg14[%c0_646, %c512_647] : memref<2x1152xf32, #tpu.memory_space<vmem>>, vector<1x128xf32>
    tpu.vector_store %arg14[%c0_646, %c512_647], %469 {strides = array<i32>} : memref<2x1152xf32, #tpu.memory_space<vmem>>, vector<1x128xf32>,
    %471 = vector.extract_strided_slice %460 {offsets = [5, 0], sizes = [1, 128], strides = [1, 1]} : vector<18x128xf32> to vector<1x128xf32>
    %c0_648 = arith.constant 0 : index
    %c640_649 = arith.constant 640 : index
    %472 = vector.load %arg14[%c0_648, %c640_649] : memref<2x1152xf32, #tpu.memory_space<vmem>>, vector<1x128xf32>
    tpu.vector_store %arg14[%c0_648, %c640_649], %471 {strides = array<i32>} : memref<2x1152xf32, #tpu.memory_space<vmem>>, vector<1x128xf32>,
    %473 = vector.extract_strided_slice %460 {offsets = [6, 0], sizes = [1, 128], strides = [1, 1]} : vector<18x128xf32> to vector<1x128xf32>
    %c0_650 = arith.constant 0 : index
    %c768_651 = arith.constant 768 : index
    %474 = vector.load %arg14[%c0_650, %c768_651] : memref<2x1152xf32, #tpu.memory_space<vmem>>, vector<1x128xf32>
    tpu.vector_store %arg14[%c0_650, %c768_651], %473 {strides = array<i32>} : memref<2x1152xf32, #tpu.memory_space<vmem>>, vector<1x128xf32>,
    %475 = vector.extract_strided_slice %460 {offsets = [7, 0], sizes = [1, 128], strides = [1, 1]} : vector<18x128xf32> to vector<1x128xf32>
    %c0_652 = arith.constant 0 : index
    %c896_653 = arith.constant 896 : index
    %476 = vector.load %arg14[%c0_652, %c896_653] : memref<2x1152xf32, #tpu.memory_space<vmem>>, vector<1x128xf32>
    tpu.vector_store %arg14[%c0_652, %c896_653], %475 {strides = array<i32>} : memref<2x1152xf32, #tpu.memory_space<vmem>>, vector<1x128xf32>,
    %477 = vector.extract_strided_slice %460 {offsets = [8, 0], sizes = [1, 128], strides = [1, 1]} : vector<18x128xf32> to vector<1x128xf32>
    %c0_654 = arith.constant 0 : index
    %c1024_655 = arith.constant 1024 : index
    %478 = vector.load %arg14[%c0_654, %c1024_655] : memref<2x1152xf32, #tpu.memory_space<vmem>>, vector<1x128xf32>
    tpu.vector_store %arg14[%c0_654, %c1024_655], %477 {strides = array<i32>} : memref<2x1152xf32, #tpu.memory_space<vmem>>, vector<1x128xf32>,
    %479 = vector.extract_strided_slice %460 {offsets = [9, 0], sizes = [1, 128], strides = [1, 1]} : vector<18x128xf32> to vector<1x128xf32>
    %c1_656 = arith.constant 1 : index
    %c0_657 = arith.constant 0 : index
    %480 = vector.load %arg14[%c1_656, %c0_657] : memref<2x1152xf32, #tpu.memory_space<vmem>>, vector<1x128xf32>
    tpu.vector_store %arg14[%c1_656, %c0_657], %479 {strides = array<i32>} : memref<2x1152xf32, #tpu.memory_space<vmem>>, vector<1x128xf32>,
    %481 = vector.extract_strided_slice %460 {offsets = [10, 0], sizes = [1, 128], strides = [1, 1]} : vector<18x128xf32> to vector<1x128xf32>
    %c1_658 = arith.constant 1 : index
    %c128_659 = arith.constant 128 : index
    %482 = vector.load %arg14[%c1_658, %c128_659] : memref<2x1152xf32, #tpu.memory_space<vmem>>, vector<1x128xf32>
    tpu.vector_store %arg14[%c1_658, %c128_659], %481 {strides = array<i32>} : memref<2x1152xf32, #tpu.memory_space<vmem>>, vector<1x128xf32>,
    %483 = vector.extract_strided_slice %460 {offsets = [11, 0], sizes = [1, 128], strides = [1, 1]} : vector<18x128xf32> to vector<1x128xf32>
    %c1_660 = arith.constant 1 : index
    %c256_661 = arith.constant 256 : index
    %484 = vector.load %arg14[%c1_660, %c256_661] : memref<2x1152xf32, #tpu.memory_space<vmem>>, vector<1x128xf32>
    tpu.vector_store %arg14[%c1_660, %c256_661], %483 {strides = array<i32>} : memref<2x1152xf32, #tpu.memory_space<vmem>>, vector<1x128xf32>,
    %485 = vector.extract_strided_slice %460 {offsets = [12, 0], sizes = [1, 128], strides = [1, 1]} : vector<18x128xf32> to vector<1x128xf32>
    %c1_662 = arith.constant 1 : index
    %c384_663 = arith.constant 384 : index
    %486 = vector.load %arg14[%c1_662, %c384_663] : memref<2x1152xf32, #tpu.memory_space<vmem>>, vector<1x128xf32>
    tpu.vector_store %arg14[%c1_662, %c384_663], %485 {strides = array<i32>} : memref<2x1152xf32, #tpu.memory_space<vmem>>, vector<1x128xf32>,
    %487 = vector.extract_strided_slice %460 {offsets = [13, 0], sizes = [1, 128], strides = [1, 1]} : vector<18x128xf32> to vector<1x128xf32>
    %c1_664 = arith.constant 1 : index
    %c512_665 = arith.constant 512 : index
    %488 = vector.load %arg14[%c1_664, %c512_665] : memref<2x1152xf32, #tpu.memory_space<vmem>>, vector<1x128xf32>
    tpu.vector_store %arg14[%c1_664, %c512_665], %487 {strides = array<i32>} : memref<2x1152xf32, #tpu.memory_space<vmem>>, vector<1x128xf32>,
    %489 = vector.extract_strided_slice %460 {offsets = [14, 0], sizes = [1, 128], strides = [1, 1]} : vector<18x128xf32> to vector<1x128xf32>
    %c1_666 = arith.constant 1 : index
    %c640_667 = arith.constant 640 : index
    %490 = vector.load %arg14[%c1_666, %c640_667] : memref<2x1152xf32, #tpu.memory_space<vmem>>, vector<1x128xf32>
    tpu.vector_store %arg14[%c1_666, %c640_667], %489 {strides = array<i32>} : memref<2x1152xf32, #tpu.memory_space<vmem>>, vector<1x128xf32>,
    %491 = vector.extract_strided_slice %460 {offsets = [15, 0], sizes = [1, 128], strides = [1, 1]} : vector<18x128xf32> to vector<1x128xf32>
    %c1_668 = arith.constant 1 : index
    %c768_669 = arith.constant 768 : index
    %492 = vector.load %arg14[%c1_668, %c768_669] : memref<2x1152xf32, #tpu.memory_space<vmem>>, vector<1x128xf32>
    tpu.vector_store %arg14[%c1_668, %c768_669], %491 {strides = array<i32>} : memref<2x1152xf32, #tpu.memory_space<vmem>>, vector<1x128xf32>,
    %493 = vector.extract_strided_slice %460 {offsets = [16, 0], sizes = [1, 128], strides = [1, 1]} : vector<18x128xf32> to vector<1x128xf32>
    %c1_670 = arith.constant 1 : index
    %c896_671 = arith.constant 896 : index
    %494 = vector.load %arg14[%c1_670, %c896_671] : memref<2x1152xf32, #tpu.memory_space<vmem>>, vector<1x128xf32>
    tpu.vector_store %arg14[%c1_670, %c896_671], %493 {strides = array<i32>} : memref<2x1152xf32, #tpu.memory_space<vmem>>, vector<1x128xf32>,
    %495 = vector.extract_strided_slice %460 {offsets = [17, 0], sizes = [1, 128], strides = [1, 1]} : vector<18x128xf32> to vector<1x128xf32>
    %c1_672 = arith.constant 1 : index
    %c1024_673 = arith.constant 1024 : index
    %496 = vector.load %arg14[%c1_672, %c1024_673] : memref<2x1152xf32, #tpu.memory_space<vmem>>, vector<1x128xf32>
    tpu.vector_store %arg14[%c1_672, %c1024_673], %495 {strides = array<i32>} : memref<2x1152xf32, #tpu.memory_space<vmem>>, vector<1x128xf32>,
    %c0_674 = arith.constant 0 : index
    %c0_675 = arith.constant 0 : index
    %497 = vector.load %arg14[%c0_674, %c0_675] : memref<2x1152xf32, #tpu.memory_space<vmem>>, vector<2x1152xf32>
    %498 = arith.truncf %497 : vector<2x1152xf32> to vector<2x1152xbf16>
    %c0_676 = arith.constant 0 : index
    %c0_677 = arith.constant 0 : index
    %499 = vector.load %arg8[%c0_676, %c0_677] : memref<1152x128xbf16, #tpu.memory_space<vmem>>, vector<1152x128xbf16>
    %cst_678 = arith.constant dense<0.000000e+00> : vector<2x128xf32>
    %500 = tpu.matmul %498, %499, %cst_678 {dimension_numbers = #tpu.dot_dimension_numbers<[1], [0], [0], [1], [0, 0, 1, 1], [], []>} : vector<2x1152xbf16>, vector<1152x128xbf16>, vector<2x128xf32> -> vector<2x128xf32>
    %c0_679 = arith.constant 0 : index
    %c0_680 = arith.constant 0 : index
    %501 = vector.load %arg9[%c0_679, %c0_680] : memref<1x128xf32, #tpu.memory_space<vmem>>, vector<1x128xf32>
    %502 = vector.broadcast %501 : vector<1x128xf32> to vector<2x128xf32>
    %503 = arith.addf %500, %502 : vector<2x128xf32>
    %c0_681 = arith.constant 0 : index
    %c0_682 = arith.constant 0 : index
    %504 = vector.load %arg10[%c0_681, %c0_682] : memref<2x128xf32, #tpu.memory_space<vmem>>, vector<2x128xf32>
    tpu.vector_store %arg10[%c0_681, %c0_682], %503 {strides = array<i32>} : memref<2x128xf32, #tpu.memory_space<vmem>>, vector<2x128xf32>,
    return
  }
  func.func @transform_0(%arg0: i32) -> (i32, i32) {
    %c0_i32 = arith.constant 0 : i32
    %c0_i32_0 = arith.constant 0 : i32
    %c0_i32_1 = arith.constant 0 : i32
    return %c0_i32, %c0_i32_0 : i32, i32
  }
  func.func @transform_1(%arg0: i32) -> (i32, i32) {
    %c0_i32 = arith.constant 0 : i32
    %c0_i32_0 = arith.constant 0 : i32
    %c0_i32_1 = arith.constant 0 : i32
    return %c0_i32, %c0_i32_0 : i32, i32
  }
  func.func @transform_2(%arg0: i32) -> (i32, i32) {
    %c0_i32 = arith.constant 0 : i32
    %c0_i32_0 = arith.constant 0 : i32
    %c0_i32_1 = arith.constant 0 : i32
    return %c0_i32, %c0_i32_0 : i32, i32
  }
  func.func @transform_3(%arg0: i32) -> (i32, i32) {
    %c0_i32 = arith.constant 0 : i32
    %c0_i32_0 = arith.constant 0 : i32
    %c0_i32_1 = arith.constant 0 : i32
    return %c0_i32, %c0_i32_0 : i32, i32
  }
  func.func @transform_4(%arg0: i32) -> (i32, i32) {
    %c0_i32 = arith.constant 0 : i32
    %c0_i32_0 = arith.constant 0 : i32
    %c0_i32_1 = arith.constant 0 : i32
    return %c0_i32, %c0_i32_0 : i32, i32
  }
  func.func @transform_5(%arg0: i32) -> (i32, i32) {
    %c0_i32 = arith.constant 0 : i32
    %c0_i32_0 = arith.constant 0 : i32
    %c0_i32_1 = arith.constant 0 : i32
    return %c0_i32, %c0_i32_0 : i32, i32
  }
  func.func @transform_6(%arg0: i32) -> (i32, i32) {
    %c0_i32 = arith.constant 0 : i32
    %c0_i32_0 = arith.constant 0 : i32
    %c0_i32_1 = arith.constant 0 : i32
    return %c0_i32, %c0_i32_0 : i32, i32
  }
  func.func @transform_7(%arg0: i32) -> (i32, i32) {
    %c0_i32 = arith.constant 0 : i32
    %c0_i32_0 = arith.constant 0 : i32
    %c0_i32_1 = arith.constant 0 : i32
    return %c0_i32, %c0_i32_0 : i32, i32
  }
  func.func @transform_8(%arg0: i32) -> (i32, i32) {
    %c0_i32 = arith.constant 0 : i32
    %c0_i32_0 = arith.constant 0 : i32
    %c0_i32_1 = arith.constant 0 : i32
    return %c0_i32, %c0_i32_0 : i32, i32
  }
  func.func @transform_9(%arg0: i32) -> (i32, i32) {
    %c0_i32 = arith.constant 0 : i32
    %c0_i32_0 = arith.constant 0 : i32
    %c0_i32_1 = arith.constant 0 : i32
    return %c0_i32, %c0_i32_0 : i32, i32
  }
}

</mosaic_0001>

<llo_original>
// kernel: forward.1
$region0: #{forward.1}
  #allocation0 [shape = 'u32[]', space=smem, size = 0x4, offset = 0x4, fixed_abs, tag = 'smem constant byte address 0x4 - core index']
  #allocation1 [shape = 'u32[144,128]{1,0:T(1,128)}', space=vmem, size = 0x12000, scoped, tag = 'internal scratch']
  #allocation2 [shape = 'f32[98,1152]{1,0:T(8,128)}', space=vmem, size = 0x75000, scoped, tag = 'scratch operand']
  #allocation3 [shape = 'f32[18,1152]{1,0:T(8,128)}', space=vmem, size = 0x1b000, scoped, tag = 'scratch operand']
  #allocation4 [shape = 'f32[98,128]{1,0:T(8,128)}', space=vmem, size = 0xd000, scoped, tag = 'scratch operand']
  #allocation5 [shape = 'f32[2,1152]{1,0:T(2,128)}', space=vmem, size = 0x2400, scoped, tag = 'scratch operand']
  %s0 = inlined_call_operand.vmem [shape: f32[512,128], index: 0, kind: input, shape index: {}]
  %s1 = inlined_call_operand.hbm [shape: bf16[1152,128], index: 1, kind: input, shape index: {}]
  %s2 = inlined_call_operand.vmem [shape: f32[1,128], index: 2, kind: input, shape index: {}]
  %s3 = inlined_call_operand.vmem [shape: bf16[1152,128], index: 3, kind: input, shape index: {}]
  %s4 = inlined_call_operand.vmem [shape: f32[1,128], index: 4, kind: input, shape index: {}]
  %s5 = inlined_call_operand.vmem [shape: f32[18,128], index: 5, kind: input, shape index: {}]
  %s6 = inlined_call_operand.vmem [shape: f32[18,128], index: 6, kind: input, shape index: {}]
  %s7 = inlined_call_operand.vmem [shape: bf16[1152,128], index: 7, kind: input, shape index: {}]
  %s8 = inlined_call_operand.vmem [shape: f32[1,128], index: 8, kind: input, shape index: {}]
  %s9 = inlined_call_operand.hbm [shape: f32[2,128], index: 9, kind: output, shape index: {}]
  %s10 = sld [smem:[#allocation0]]
  $region50: #{forward.1} parent=0
    _
  %s12 = ssub.s32 1, %s10
  %s13 = scalar_select 0, %s12, %s10
  $region1: #{forward.1} parent=0
    #allocation6 [shape = 'u8[294912]{0}', space=vmem, size = 0x48000, scoped, tag = 'input window, operand 1, single buffered']
    #allocation7 [shape = 's32[1]{0}', space=sflag, size = 0x4, scoped, tag = 'scoped memory for forward.1']
    #allocation8 [shape = 's32[1]{0}', space=sflag, size = 0x4, scoped, tag = 'scoped memory for forward.1']
    #allocation9 [shape = 'u8[1024]{0}', space=vmem, size = 0x400, scoped, tag = 'output window, operand 0, single buffered']
    %14 = vsyncpa [#allocation7], 0
    %15 = vsyncpa [#allocation8], 0
    // Predicated region
    $region2: #{forward.1} parent=1 // pred_check
      _
    $region3: #{forward.1} parent=1 // pred_check_branch
      %17 = sbr.rel (0) target = $region5
    $region4: #{forward.1} parent=1 // pred_region
      _
    $region5: #{forward.1} parent=1 // pred_fallthru
      _
    // Predicated region
    $region6: #{forward.1} parent=1 // pred_check
      _
    $region7: #{forward.1} parent=1 // pred_check_branch
      %19 = sbr.rel (0) target = $region9
    $region8: #{forward.1} parent=1 // pred_region
      %s21 = ssub.s32 9216, 9216
      %22 = vsyncadd [#allocation7], %s21
      %s23 = sshll.u32 [#allocation6], 4
      %s24 = int_to_ptr.vmem [resolvable:$true] %s23
      %29 = dma.hbm_to_vmem [thread:$0]  %s1, 9216, %s24, [#allocation7], 64, 64, 4
    $region9: #{forward.1} parent=1 // pred_fallthru
      _
    // Predicated region
    $region10: #{forward.1} parent=1 // pred_check
      _
    $region11: #{forward.1} parent=1 // pred_check_branch
      %31 = sbr.rel (0) target = $region13
    $region12: #{forward.1} parent=1 // pred_region
      _
    $region13: #{forward.1} parent=1 // pred_fallthru
      _
    // Predicated region
    $region14: #{forward.1} parent=1 // pred_check
      _
    $region15: #{forward.1} parent=1 // pred_check_branch
      %33 = sbr.rel (0) target = $region17
    $region16: #{forward.1} parent=1 // pred_region
      _
    $region17: #{forward.1} parent=1 // pred_fallthru
      _
    // Predicated region
    $region18: #{forward.1} parent=1 // pred_check
      _
    $region19: #{forward.1} parent=1 // pred_check_branch
      %35 = sbr.rel (0) target = $region21
    $region20: #{forward.1} parent=1 // pred_region
      _
    $region21: #{forward.1} parent=1 // pred_fallthru
      _
    // Predicated region
    $region22: #{forward.1} parent=1 // pred_check
      _
    $region23: #{forward.1} parent=1 // pred_check_branch
      %37 = sbr.rel (0) target = $region25
    $region24: #{forward.1} parent=1 // pred_region
      _
    $region25: #{forward.1} parent=1 // pred_fallthru
      _
    // Predicated region
    $region26: #{forward.1} parent=1 // pred_check
      _
    $region27: #{forward.1} parent=1 // pred_check_branch
      %39 = sbr.rel (0) target = $region29
    $region28: #{forward.1} parent=1 // pred_region
      _
    $region29: #{forward.1} parent=1 // pred_fallthru
      _
    // Predicated region
    $region30: #{forward.1} parent=1 // pred_check
      _
    $region31: #{forward.1} parent=1 // pred_check_branch
      %41 = sbr.rel (0) target = $region33
    $region32: #{forward.1} parent=1 // pred_region
      _
    $region33: #{forward.1} parent=1 // pred_fallthru
      _
    // Predicated region
    $region34: #{forward.1} parent=1 // pred_check
      _
    $region35: #{forward.1} parent=1 // pred_check_branch
      %43 = sbr.rel (0) target = $region37
    $region36: #{forward.1} parent=1 // pred_region
      _
    $region37: #{forward.1} parent=1 // pred_fallthru
      _
    // Predicated region
    $region38: #{forward.1} parent=1 // pred_check
      _
    $region39: #{forward.1} parent=1 // pred_check_branch
      %45 = sbr.rel (0) target = $region41
    $region40: #{forward.1} parent=1 // pred_region
      %46 = dma.done [#allocation7], 9216
    $region41: #{forward.1} parent=1 // pred_fallthru
      _
    %v48 = vld [vmem:[%s0] ss:$2 sm:$0x7f]
    %49 = vst [vmem:[#allocation2] sm:$0x7f] %v48
    %s50 = scalar_lea.vmem %s0, 1
    %v51 = vld [vmem:[%s50] ss:$2 sm:$0x7f]
    %52 = vst [vmem:[#allocation2 + $0x8] sm:$0x7f] %v51
    %s53 = scalar_lea.vmem %s0, 2
    %v54 = vld [vmem:[%s53] ss:$2 sm:$0x7f]
    %55 = vst [vmem:[#allocation2 + $0x10] sm:$0x7f] %v54
    %s56 = scalar_lea.vmem %s0, 16
    %v57 = vld [vmem:[%s56] ss:$2 sm:$0x7f]
    %58 = vst [vmem:[#allocation2 + $0x18] sm:$0x7f] %v57
    %s59 = scalar_lea.vmem %s0, 17
    %v60 = vld [vmem:[%s59] ss:$2 sm:$0x7f]
    %61 = vst [vmem:[#allocation2 + $0x20] sm:$0x7f] %v60
    %s62 = scalar_lea.vmem %s0, 18
    %v63 = vld [vmem:[%s62] ss:$2 sm:$0x7f]
    %64 = vst [vmem:[#allocation2 + $0x28] sm:$0x7f] %v63
    %s65 = scalar_lea.vmem %s0, 32
    %v66 = vld [vmem:[%s65] ss:$2 sm:$0x7f]
    %67 = vst [vmem:[#allocation2 + $0x30] sm:$0x7f] %v66
    %s68 = scalar_lea.vmem %s0, 33
    %v69 = vld [vmem:[%s68] ss:$2 sm:$0x7f]
    %70 = vst [vmem:[#allocation2 + $0x38] sm:$0x7f] %v69
    %s71 = scalar_lea.vmem %s0, 34
    %v72 = vld [vmem:[%s71] ss:$2 sm:$0x7f]
    %73 = vst [vmem:[#allocation2 + $0x40] sm:$0x7f] %v72
    %v74 = vld [vmem:[%s65] ss:$2 sm:$0x7f]
    %v76 = vrot.slane %v74, 1
    %78 = vst [vmem:[#allocation2] sm:$0x80] %v76
    %79 = vst [vmem:[#allocation2 + $0x48] sm:$0x3f] %v76
    %v80 = vld [vmem:[%s68] ss:$2 sm:$0x7f]
    %v82 = vrot.slane %v80, 1
    %84 = vst [vmem:[#allocation2 + $0x8] sm:$0x80] %v82
    %85 = vst [vmem:[#allocation2 + $0x50] sm:$0x3f] %v82
    %v86 = vld [vmem:[%s71] ss:$2 sm:$0x7f]
    %v88 = vrot.slane %v86, 1
    %90 = vst [vmem:[#allocation2 + $0x10] sm:$0x80] %v88
    %91 = vst [vmem:[#allocation2 + $0x58] sm:$0x3f] %v88
    %s92 = scalar_lea.vmem %s0, 48
    %v93 = vld [vmem:[%s92] ss:$2 sm:$0x7f]
    %v95 = vrot.slane %v93, 1
    %97 = vst [vmem:[#allocation2 + $0x18] sm:$0x80] %v95
    %98 = vst [vmem:[#allocation2 + $0x60] sm:$0x3f] %v95
    %s99 = scalar_lea.vmem %s0, 49
    %v100 = vld [vmem:[%s99] ss:$2 sm:$0x7f]
    %v102 = vrot.slane %v100, 1
    %104 = vst [vmem:[#allocation2 + $0x20] sm:$0x80] %v102
    %105 = vst [vmem:[#allocation2 + $0x68] sm:$0x3f] %v102
    %s106 = scalar_lea.vmem %s0, 50
    %v107 = vld [vmem:[%s106] ss:$2 sm:$0x7f]
    %v109 = vrot.slane %v107, 1
    %111 = vst [vmem:[#allocation2 + $0x28] sm:$0x80] %v109
    %112 = vst [vmem:[#allocation2 + $0x70] sm:$0x3f] %v109
    %s113 = scalar_lea.vmem %s0, 64
    %v114 = vld [vmem:[%s113] ss:$2 sm:$0x7f]
    %v116 = vrot.slane %v114, 1
    %118 = vst [vmem:[#allocation2 + $0x30] sm:$0x80] %v116
    %119 = vst [vmem:[#allocation2 + $0x78] sm:$0x3f] %v116
    %s120 = scalar_lea.vmem %s0, 65
    %v121 = vld [vmem:[%s120] ss:$2 sm:$0x7f]
    %v123 = vrot.slane %v121, 1
    %125 = vst [vmem:[#allocation2 + $0x38] sm:$0x80] %v123
    %126 = vst [vmem:[#allocation2 + $0x80] sm:$0x3f] %v123
    %s127 = scalar_lea.vmem %s0, 66
    %v128 = vld [vmem:[%s127] ss:$2 sm:$0x7f]
    %v130 = vrot.slane %v128, 1
    %132 = vst [vmem:[#allocation2 + $0x40] sm:$0x80] %v130
    %133 = vst [vmem:[#allocation2 + $0x88] sm:$0x3f] %v130
    %v134 = vld [vmem:[%s113] ss:$2 sm:$0x7f]
    %v136 = vrot.slane %v134, 2
    %138 = vst [vmem:[#allocation2 + $0x48] sm:$0xc0] %v136
    %139 = vst [vmem:[#allocation2 + $0x90] sm:$0x1f] %v136
    %v140 = vld [vmem:[%s120] ss:$2 sm:$0x7f]
    %v142 = vrot.slane %v140, 2
    %144 = vst [vmem:[#allocation2 + $0x50] sm:$0xc0] %v142
    %145 = vst [vmem:[#allocation2 + $0x98] sm:$0x1f] %v142
    %v146 = vld [vmem:[%s127] ss:$2 sm:$0x7f]
    %v148 = vrot.slane %v146, 2
    %150 = vst [vmem:[#allocation2 + $0x58] sm:$0xc0] %v148
    %151 = vst [vmem:[#allocation2 + $0xa0] sm:$0x1f] %v148
    %s152 = scalar_lea.vmem %s0, 80
    %v153 = vld [vmem:[%s152] ss:$2 sm:$0x7f]
    %v155 = vrot.slane %v153, 2
    %157 = vst [vmem:[#allocation2 + $0x60] sm:$0xc0] %v155
    %158 = vst [vmem:[#allocation2 + $0xa8] sm:$0x1f] %v155
    %s159 = scalar_lea.vmem %s0, 81
    %v160 = vld [vmem:[%s159] ss:$2 sm:$0x7f]
    %v162 = vrot.slane %v160, 2
    %164 = vst [vmem:[#allocation2 + $0x68] sm:$0xc0] %v162
    %165 = vst [vmem:[#allocation2 + $0xb0] sm:$0x1f] %v162
    %s166 = scalar_lea.vmem %s0, 82
    %v167 = vld [vmem:[%s166] ss:$2 sm:$0x7f]
    %v169 = vrot.slane %v167, 2
    %171 = vst [vmem:[#allocation2 + $0x70] sm:$0xc0] %v169
    %172 = vst [vmem:[#allocation2 + $0xb8] sm:$0x1f] %v169
    %s173 = scalar_lea.vmem %s0, 96
    %v174 = vld [vmem:[%s173] ss:$2 sm:$0x7f]
    %v176 = vrot.slane %v174, 2
    %178 = vst [vmem:[#allocation2 + $0x78] sm:$0xc0] %v176
    %179 = vst [vmem:[#allocation2 + $0xc0] sm:$0x1f] %v176
    %s180 = scalar_lea.vmem %s0, 97
    %v181 = vld [vmem:[%s180] ss:$2 sm:$0x7f]
    %v183 = vrot.slane %v181, 2
    %185 = vst [vmem:[#allocation2 + $0x80] sm:$0xc0] %v183
    %186 = vst [vmem:[#allocation2 + $0xc8] sm:$0x1f] %v183
    %s187 = scalar_lea.vmem %s0, 98
    %v188 = vld [vmem:[%s187] ss:$2 sm:$0x7f]
    %v190 = vrot.slane %v188, 2
    %192 = vst [vmem:[#allocation2 + $0x88] sm:$0xc0] %v190
    %193 = vst [vmem:[#allocation2 + $0xd0] sm:$0x1f] %v190
    %v194 = vld [vmem:[%s173] ss:$2 sm:$0x7f]
    %v196 = vrot.slane %v194, 3
    %198 = vst [vmem:[#allocation2 + $0x90] sm:$0xe0] %v196
    %199 = vst [vmem:[#allocation2 + $0xd8] sm:$0xf] %v196
    %v200 = vld [vmem:[%s180] ss:$2 sm:$0x7f]
    %v202 = vrot.slane %v200, 3
    %204 = vst [vmem:[#allocation2 + $0x98] sm:$0xe0] %v202
    %205 = vst [vmem:[#allocation2 + $0xe0] sm:$0xf] %v202
    %v206 = vld [vmem:[%s187] ss:$2 sm:$0x7f]
    %v208 = vrot.slane %v206, 3
    %210 = vst [vmem:[#allocation2 + $0xa0] sm:$0xe0] %v208
    %211 = vst [vmem:[#allocation2 + $0xe8] sm:$0xf] %v208
    %s212 = scalar_lea.vmem %s0, 112
    %v213 = vld [vmem:[%s212] ss:$2 sm:$0x7f]
    %v215 = vrot.slane %v213, 3
    %217 = vst [vmem:[#allocation2 + $0xa8] sm:$0xe0] %v215
    %218 = vst [vmem:[#allocation2 + $0xf0] sm:$0xf] %v215
    %s219 = scalar_lea.vmem %s0, 113
    %v220 = vld [vmem:[%s219] ss:$2 sm:$0x7f]
    %v222 = vrot.slane %v220, 3
    %224 = vst [vmem:[#allocation2 + $0xb0] sm:$0xe0] %v222
    %225 = vst [vmem:[#allocation2 + $0xf8] sm:$0xf] %v222
    %s226 = scalar_lea.vmem %s0, 114
    %v227 = vld [vmem:[%s226] ss:$2 sm:$0x7f]
    %v229 = vrot.slane %v227, 3
    %231 = vst [vmem:[#allocation2 + $0xb8] sm:$0xe0] %v229
    %232 = vst [vmem:[#allocation2 + $0x100] sm:$0xf] %v229
    %s233 = scalar_lea.vmem %s0, 128
    %v234 = vld [vmem:[%s233] ss:$2 sm:$0x7f]
    %v236 = vrot.slane %v234, 3
    %238 = vst [vmem:[#allocation2 + $0xc0] sm:$0xe0] %v236
    %239 = vst [vmem:[#allocation2 + $0x108] sm:$0xf] %v236
    %s240 = scalar_lea.vmem %s0, 129
    %v241 = vld [vmem:[%s240] ss:$2 sm:$0x7f]
    %v243 = vrot.slane %v241, 3
    %245 = vst [vmem:[#allocation2 + $0xc8] sm:$0xe0] %v243
    %246 = vst [vmem:[#allocation2 + $0x110] sm:$0xf] %v243
    %s247 = scalar_lea.vmem %s0, 130
    %v248 = vld [vmem:[%s247] ss:$2 sm:$0x7f]
    %v250 = vrot.slane %v248, 3
    %252 = vst [vmem:[#allocation2 + $0xd0] sm:$0xe0] %v250
    %253 = vst [vmem:[#allocation2 + $0x118] sm:$0xf] %v250
    %v254 = vld [vmem:[%s233] ss:$2 sm:$0x7f]
    %v256 = vrot.slane %v254, 4
    %258 = vst [vmem:[#allocation2 + $0xd8] sm:$0xf0] %v256
    %259 = vst [vmem:[#allocation2 + $0x120] sm:$0x7] %v256
    %v260 = vld [vmem:[%s240] ss:$2 sm:$0x7f]
    %v262 = vrot.slane %v260, 4
    %264 = vst [vmem:[#allocation2 + $0xe0] sm:$0xf0] %v262
    %265 = vst [vmem:[#allocation2 + $0x128] sm:$0x7] %v262
    %v266 = vld [vmem:[%s247] ss:$2 sm:$0x7f]
    %v268 = vrot.slane %v266, 4
    %270 = vst [vmem:[#allocation2 + $0xe8] sm:$0xf0] %v268
    %271 = vst [vmem:[#allocation2 + $0x130] sm:$0x7] %v268
    %s272 = scalar_lea.vmem %s0, 144
    %v273 = vld [vmem:[%s272] ss:$2 sm:$0x7f]
    %v275 = vrot.slane %v273, 4
    %277 = vst [vmem:[#allocation2 + $0xf0] sm:$0xf0] %v275
    %278 = vst [vmem:[#allocation2 + $0x138] sm:$0x7] %v275
    %s279 = scalar_lea.vmem %s0, 145
    %v280 = vld [vmem:[%s279] ss:$2 sm:$0x7f]
    %v282 = vrot.slane %v280, 4
    %284 = vst [vmem:[#allocation2 + $0xf8] sm:$0xf0] %v282
    %285 = vst [vmem:[#allocation2 + $0x140] sm:$0x7] %v282
    %s286 = scalar_lea.vmem %s0, 146
    %v287 = vld [vmem:[%s286] ss:$2 sm:$0x7f]
    %v289 = vrot.slane %v287, 4
    %291 = vst [vmem:[#allocation2 + $0x100] sm:$0xf0] %v289
    %292 = vst [vmem:[#allocation2 + $0x148] sm:$0x7] %v289
    %s293 = scalar_lea.vmem %s0, 160
    %v294 = vld [vmem:[%s293] ss:$2 sm:$0x7f]
    %v296 = vrot.slane %v294, 4
    %298 = vst [vmem:[#allocation2 + $0x108] sm:$0xf0] %v296
    %299 = vst [vmem:[#allocation2 + $0x150] sm:$0x7] %v296
    %s300 = scalar_lea.vmem %s0, 161
    %v301 = vld [vmem:[%s300] ss:$2 sm:$0x7f]
    %v303 = vrot.slane %v301, 4
    %305 = vst [vmem:[#allocation2 + $0x110] sm:$0xf0] %v303
    %306 = vst [vmem:[#allocation2 + $0x158] sm:$0x7] %v303
    %s307 = scalar_lea.vmem %s0, 162
    %v308 = vld [vmem:[%s307] ss:$2 sm:$0x7f]
    %v310 = vrot.slane %v308, 4
    %312 = vst [vmem:[#allocation2 + $0x118] sm:$0xf0] %v310
    %313 = vst [vmem:[#allocation2 + $0x160] sm:$0x7] %v310
    %v314 = vld [vmem:[%s293] ss:$2 sm:$0x7f]
    %v316 = vrot.slane %v314, 5
    %318 = vst [vmem:[#allocation2 + $0x120] sm:$0xf8] %v316
    %319 = vst [vmem:[#allocation2 + $0x168] sm:$0x3] %v316
    %v320 = vld [vmem:[%s300] ss:$2 sm:$0x7f]
    %v322 = vrot.slane %v320, 5
    %324 = vst [vmem:[#allocation2 + $0x128] sm:$0xf8] %v322
    %325 = vst [vmem:[#allocation2 + $0x170] sm:$0x3] %v322
    %v326 = vld [vmem:[%s307] ss:$2 sm:$0x7f]
    %v328 = vrot.slane %v326, 5
    %330 = vst [vmem:[#allocation2 + $0x130] sm:$0xf8] %v328
    %331 = vst [vmem:[#allocation2 + $0x178] sm:$0x3] %v328
    %s332 = scalar_lea.vmem %s0, 176
    %v333 = vld [vmem:[%s332] ss:$2 sm:$0x7f]
    %v335 = vrot.slane %v333, 5
    %337 = vst [vmem:[#allocation2 + $0x138] sm:$0xf8] %v335
    %338 = vst [vmem:[#allocation2 + $0x180] sm:$0x3] %v335
    %s339 = scalar_lea.vmem %s0, 177
    %v340 = vld [vmem:[%s339] ss:$2 sm:$0x7f]
    %v342 = vrot.slane %v340, 5
    %344 = vst [vmem:[#allocation2 + $0x140] sm:$0xf8] %v342
    %345 = vst [vmem:[#allocation2 + $0x188] sm:$0x3] %v342
    %s346 = scalar_lea.vmem %s0, 178
    %v347 = vld [vmem:[%s346] ss:$2 sm:$0x7f]
    %v349 = vrot.slane %v347, 5
    %351 = vst [vmem:[#allocation2 + $0x148] sm:$0xf8] %v349
    %352 = vst [vmem:[#allocation2 + $0x190] sm:$0x3] %v349
    %s353 = scalar_lea.vmem %s0, 192
    %v354 = vld [vmem:[%s353] ss:$2 sm:$0x7f]
    %v356 = vrot.slane %v354, 5
    %358 = vst [vmem:[#allocation2 + $0x150] sm:$0xf8] %v356
    %359 = vst [vmem:[#allocation2 + $0x198] sm:$0x3] %v356
    %s360 = scalar_lea.vmem %s0, 193
    %v361 = vld [vmem:[%s360] ss:$2 sm:$0x7f]
    %v363 = vrot.slane %v361, 5
    %365 = vst [vmem:[#allocation2 + $0x158] sm:$0xf8] %v363
    %366 = vst [vmem:[#allocation2 + $0x1a0] sm:$0x3] %v363
    %s367 = scalar_lea.vmem %s0, 194
    %v368 = vld [vmem:[%s367] ss:$2 sm:$0x7f]
    %v370 = vrot.slane %v368, 5
    %372 = vst [vmem:[#allocation2 + $0x160] sm:$0xf8] %v370
    %373 = vst [vmem:[#allocation2 + $0x1a8] sm:$0x3] %v370
    %v374 = vld [vmem:[%s353] ss:$2 sm:$0x7f]
    %v376 = vrot.slane %v374, 6
    %378 = vst [vmem:[#allocation2 + $0x168] sm:$0xfc] %v376
    %379 = vst [vmem:[#allocation2 + $0x1b0] sm:$0x1] %v376
    %v380 = vld [vmem:[%s360] ss:$2 sm:$0x7f]
    %v382 = vrot.slane %v380, 6
    %384 = vst [vmem:[#allocation2 + $0x170] sm:$0xfc] %v382
    %385 = vst [vmem:[#allocation2 + $0x1b8] sm:$0x1] %v382
    %v386 = vld [vmem:[%s367] ss:$2 sm:$0x7f]
    %v388 = vrot.slane %v386, 6
    %390 = vst [vmem:[#allocation2 + $0x178] sm:$0xfc] %v388
    %391 = vst [vmem:[#allocation2 + $0x1c0] sm:$0x1] %v388
    %s392 = scalar_lea.vmem %s0, 208
    %v393 = vld [vmem:[%s392] ss:$2 sm:$0x7f]
    %v395 = vrot.slane %v393, 6
    %397 = vst [vmem:[#allocation2 + $0x180] sm:$0xfc] %v395
    %398 = vst [vmem:[#allocation2 + $0x1c8] sm:$0x1] %v395
    %s399 = scalar_lea.vmem %s0, 209
    %v400 = vld [vmem:[%s399] ss:$2 sm:$0x7f]
    %v402 = vrot.slane %v400, 6
    %404 = vst [vmem:[#allocation2 + $0x188] sm:$0xfc] %v402
    %405 = vst [vmem:[#allocation2 + $0x1d0] sm:$0x1] %v402
    %s406 = scalar_lea.vmem %s0, 210
    %v407 = vld [vmem:[%s406] ss:$2 sm:$0x7f]
    %v409 = vrot.slane %v407, 6
    %411 = vst [vmem:[#allocation2 + $0x190] sm:$0xfc] %v409
    %412 = vst [vmem:[#allocation2 + $0x1d8] sm:$0x1] %v409
    %s413 = scalar_lea.vmem %s0, 224
    %v414 = vld [vmem:[%s413] ss:$2 sm:$0x7f]
    %v416 = vrot.slane %v414, 6
    %418 = vst [vmem:[#allocation2 + $0x198] sm:$0xfc] %v416
    %419 = vst [vmem:[#allocation2 + $0x1e0] sm:$0x1] %v416
    %s420 = scalar_lea.vmem %s0, 225
    %v421 = vld [vmem:[%s420] ss:$2 sm:$0x7f]
    %v423 = vrot.slane %v421, 6
    %425 = vst [vmem:[#allocation2 + $0x1a0] sm:$0xfc] %v423
    %426 = vst [vmem:[#allocation2 + $0x1e8] sm:$0x1] %v423
    %s427 = scalar_lea.vmem %s0, 226
    %v428 = vld [vmem:[%s427] ss:$2 sm:$0x7f]
    %v430 = vrot.slane %v428, 6
    %432 = vst [vmem:[#allocation2 + $0x1a8] sm:$0xfc] %v430
    %433 = vst [vmem:[#allocation2 + $0x1f0] sm:$0x1] %v430
    %s434 = scalar_lea.vmem %s0, 256
    %v435 = vld [vmem:[%s434] ss:$2 sm:$0x7f]
    %v437 = vrot.slane %v435, 7
    %439 = vst [vmem:[#allocation2 + $0x1b0] sm:$0xfe] %v437
    %s440 = scalar_lea.vmem %s0, 257
    %v441 = vld [vmem:[%s440] ss:$2 sm:$0x7f]
    %v443 = vrot.slane %v441, 7
    %445 = vst [vmem:[#allocation2 + $0x1b8] sm:$0xfe] %v443
    %s446 = scalar_lea.vmem %s0, 258
    %v447 = vld [vmem:[%s446] ss:$2 sm:$0x7f]
    %v449 = vrot.slane %v447, 7
    %451 = vst [vmem:[#allocation2 + $0x1c0] sm:$0xfe] %v449
    %s452 = scalar_lea.vmem %s0, 272
    %v453 = vld [vmem:[%s452] ss:$2 sm:$0x7f]
    %v455 = vrot.slane %v453, 7
    %457 = vst [vmem:[#allocation2 + $0x1c8] sm:$0xfe] %v455
    %s458 = scalar_lea.vmem %s0, 273
    %v459 = vld [vmem:[%s458] ss:$2 sm:$0x7f]
    %v461 = vrot.slane %v459, 7
    %463 = vst [vmem:[#allocation2 + $0x1d0] sm:$0xfe] %v461
    %s464 = scalar_lea.vmem %s0, 274
    %v465 = vld [vmem:[%s464] ss:$2 sm:$0x7f]
    %v467 = vrot.slane %v465, 7
    %469 = vst [vmem:[#allocation2 + $0x1d8] sm:$0xfe] %v467
    %s470 = scalar_lea.vmem %s0, 288
    %v471 = vld [vmem:[%s470] ss:$2 sm:$0x7f]
    %v473 = vrot.slane %v471, 7
    %475 = vst [vmem:[#allocation2 + $0x1e0] sm:$0xfe] %v473
    %s476 = scalar_lea.vmem %s0, 289
    %v477 = vld [vmem:[%s476] ss:$2 sm:$0x7f]
    %v479 = vrot.slane %v477, 7
    %481 = vst [vmem:[#allocation2 + $0x1e8] sm:$0xfe] %v479
    %s482 = scalar_lea.vmem %s0, 290
    %v483 = vld [vmem:[%s482] ss:$2 sm:$0x7f]
    %v485 = vrot.slane %v483, 7
    %487 = vst [vmem:[#allocation2 + $0x1f0] sm:$0xfe] %v485
    %v488 = vld [vmem:[%s470] ss:$2 sm:$0x7f]
    %489 = vst [vmem:[#allocation2 + $0x1f8] sm:$0x7f] %v488
    %v490 = vld [vmem:[%s476] ss:$2 sm:$0x7f]
    %491 = vst [vmem:[#allocation2 + $0x200] sm:$0x7f] %v490
    %v492 = vld [vmem:[%s482] ss:$2 sm:$0x7f]
    %493 = vst [vmem:[#allocation2 + $0x208] sm:$0x7f] %v492
    %s494 = scalar_lea.vmem %s0, 304
    %v495 = vld [vmem:[%s494] ss:$2 sm:$0x7f]
    %496 = vst [vmem:[#allocation2 + $0x210] sm:$0x7f] %v495
    %s497 = scalar_lea.vmem %s0, 305
    %v498 = vld [vmem:[%s497] ss:$2 sm:$0x7f]
    %499 = vst [vmem:[#allocation2 + $0x218] sm:$0x7f] %v498
    %s500 = scalar_lea.vmem %s0, 306
    %v501 = vld [vmem:[%s500] ss:$2 sm:$0x7f]
    %502 = vst [vmem:[#allocation2 + $0x220] sm:$0x7f] %v501
    %s503 = scalar_lea.vmem %s0, 320
    %v504 = vld [vmem:[%s503] ss:$2 sm:$0x7f]
    %505 = vst [vmem:[#allocation2 + $0x228] sm:$0x7f] %v504
    %s506 = scalar_lea.vmem %s0, 321
    %v507 = vld [vmem:[%s506] ss:$2 sm:$0x7f]
    %508 = vst [vmem:[#allocation2 + $0x230] sm:$0x7f] %v507
    %s509 = scalar_lea.vmem %s0, 322
    %v510 = vld [vmem:[%s509] ss:$2 sm:$0x7f]
    %511 = vst [vmem:[#allocation2 + $0x238] sm:$0x7f] %v510
    %v512 = vld [vmem:[%s503] ss:$2 sm:$0x7f]
    %v514 = vrot.slane %v512, 1
    %516 = vst [vmem:[#allocation2 + $0x1f8] sm:$0x80] %v514
    %517 = vst [vmem:[#allocation2 + $0x240] sm:$0x3f] %v514
    %v518 = vld [vmem:[%s506] ss:$2 sm:$0x7f]
    %v520 = vrot.slane %v518, 1
    %522 = vst [vmem:[#allocation2 + $0x200] sm:$0x80] %v520
    %523 = vst [vmem:[#allocation2 + $0x248] sm:$0x3f] %v520
    %v524 = vld [vmem:[%s509] ss:$2 sm:$0x7f]
    %v526 = vrot.slane %v524, 1
    %528 = vst [vmem:[#allocation2 + $0x208] sm:$0x80] %v526
    %529 = vst [vmem:[#allocation2 + $0x250] sm:$0x3f] %v526
    %s530 = scalar_lea.vmem %s0, 336
    %v531 = vld [vmem:[%s530] ss:$2 sm:$0x7f]
    %v533 = vrot.slane %v531, 1
    %535 = vst [vmem:[#allocation2 + $0x210] sm:$0x80] %v533
    %536 = vst [vmem:[#allocation2 + $0x258] sm:$0x3f] %v533
    %s537 = scalar_lea.vmem %s0, 337
    %v538 = vld [vmem:[%s537] ss:$2 sm:$0x7f]
    %v540 = vrot.slane %v538, 1
    %542 = vst [vmem:[#allocation2 + $0x218] sm:$0x80] %v540
    %543 = vst [vmem:[#allocation2 + $0x260] sm:$0x3f] %v540
    %s544 = scalar_lea.vmem %s0, 338
    %v545 = vld [vmem:[%s544] ss:$2 sm:$0x7f]
    %v547 = vrot.slane %v545, 1
    %549 = vst [vmem:[#allocation2 + $0x220] sm:$0x80] %v547
    %550 = vst [vmem:[#allocation2 + $0x268] sm:$0x3f] %v547
    %s551 = scalar_lea.vmem %s0, 352
    %v552 = vld [vmem:[%s551] ss:$2 sm:$0x7f]
    %v554 = vrot.slane %v552, 1
    %556 = vst [vmem:[#allocation2 + $0x228] sm:$0x80] %v554
    %557 = vst [vmem:[#allocation2 + $0x270] sm:$0x3f] %v554
    %s558 = scalar_lea.vmem %s0, 353
    %v559 = vld [vmem:[%s558] ss:$2 sm:$0x7f]
    %v561 = vrot.slane %v559, 1
    %563 = vst [vmem:[#allocation2 + $0x230] sm:$0x80] %v561
    %564 = vst [vmem:[#allocation2 + $0x278] sm:$0x3f] %v561
    %s565 = scalar_lea.vmem %s0, 354
    %v566 = vld [vmem:[%s565] ss:$2 sm:$0x7f]
    %v568 = vrot.slane %v566, 1
    %570 = vst [vmem:[#allocation2 + $0x238] sm:$0x80] %v568
    %571 = vst [vmem:[#allocation2 + $0x280] sm:$0x3f] %v568
    %v572 = vld [vmem:[%s551] ss:$2 sm:$0x7f]
    %v574 = vrot.slane %v572, 2
    %576 = vst [vmem:[#allocation2 + $0x240] sm:$0xc0] %v574
    %577 = vst [vmem:[#allocation2 + $0x288] sm:$0x1f] %v574
    %v578 = vld [vmem:[%s558] ss:$2 sm:$0x7f]
    %v580 = vrot.slane %v578, 2
    %582 = vst [vmem:[#allocation2 + $0x248] sm:$0xc0] %v580
    %583 = vst [vmem:[#allocation2 + $0x290] sm:$0x1f] %v580
    %v584 = vld [vmem:[%s565] ss:$2 sm:$0x7f]
    %v586 = vrot.slane %v584, 2
    %588 = vst [vmem:[#allocation2 + $0x250] sm:$0xc0] %v586
    %589 = vst [vmem:[#allocation2 + $0x298] sm:$0x1f] %v586
    %s590 = scalar_lea.vmem %s0, 368
    %v591 = vld [vmem:[%s590] ss:$2 sm:$0x7f]
    %v593 = vrot.slane %v591, 2
    %595 = vst [vmem:[#allocation2 + $0x258] sm:$0xc0] %v593
    %596 = vst [vmem:[#allocation2 + $0x2a0] sm:$0x1f] %v593
    %s597 = scalar_lea.vmem %s0, 369
    %v598 = vld [vmem:[%s597] ss:$2 sm:$0x7f]
    %v600 = vrot.slane %v598, 2
    %602 = vst [vmem:[#allocation2 + $0x260] sm:$0xc0] %v600
    %603 = vst [vmem:[#allocation2 + $0x2a8] sm:$0x1f] %v600
    %s604 = scalar_lea.vmem %s0, 370
    %v605 = vld [vmem:[%s604] ss:$2 sm:$0x7f]
    %v607 = vrot.slane %v605, 2
    %609 = vst [vmem:[#allocation2 + $0x268] sm:$0xc0] %v607
    %610 = vst [vmem:[#allocation2 + $0x2b0] sm:$0x1f] %v607
    %s611 = scalar_lea.vmem %s0, 384
    %v612 = vld [vmem:[%s611] ss:$2 sm:$0x7f]
    %v614 = vrot.slane %v612, 2
    %616 = vst [vmem:[#allocation2 + $0x270] sm:$0xc0] %v614
    %617 = vst [vmem:[#allocation2 + $0x2b8] sm:$0x1f] %v614
    %s618 = scalar_lea.vmem %s0, 385
    %v619 = vld [vmem:[%s618] ss:$2 sm:$0x7f]
    %v621 = vrot.slane %v619, 2
    %623 = vst [vmem:[#allocation2 + $0x278] sm:$0xc0] %v621
    %624 = vst [vmem:[#allocation2 + $0x2c0] sm:$0x1f] %v621
    %s625 = scalar_lea.vmem %s0, 386
    %v626 = vld [vmem:[%s625] ss:$2 sm:$0x7f]
    %v628 = vrot.slane %v626, 2
    %630 = vst [vmem:[#allocation2 + $0x280] sm:$0xc0] %v628
    %631 = vst [vmem:[#allocation2 + $0x2c8] sm:$0x1f] %v628
    %v632 = vld [vmem:[%s611] ss:$2 sm:$0x7f]
    %v634 = vrot.slane %v632, 3
    %636 = vst [vmem:[#allocation2 + $0x288] sm:$0xe0] %v634
    %637 = vst [vmem:[#allocation2 + $0x2d0] sm:$0xf] %v634
    %v638 = vld [vmem:[%s618] ss:$2 sm:$0x7f]
    %v640 = vrot.slane %v638, 3
    %642 = vst [vmem:[#allocation2 + $0x290] sm:$0xe0] %v640
    %643 = vst [vmem:[#allocation2 + $0x2d8] sm:$0xf] %v640
    %v644 = vld [vmem:[%s625] ss:$2 sm:$0x7f]
    %v646 = vrot.slane %v644, 3
    %648 = vst [vmem:[#allocation2 + $0x298] sm:$0xe0] %v646
    %649 = vst [vmem:[#allocation2 + $0x2e0] sm:$0xf] %v646
    %s650 = scalar_lea.vmem %s0, 400
    %v651 = vld [vmem:[%s650] ss:$2 sm:$0x7f]
    %v653 = vrot.slane %v651, 3
    %655 = vst [vmem:[#allocation2 + $0x2a0] sm:$0xe0] %v653
    %656 = vst [vmem:[#allocation2 + $0x2e8] sm:$0xf] %v653
    %s657 = scalar_lea.vmem %s0, 401
    %v658 = vld [vmem:[%s657] ss:$2 sm:$0x7f]
    %v660 = vrot.slane %v658, 3
    %662 = vst [vmem:[#allocation2 + $0x2a8] sm:$0xe0] %v660
    %663 = vst [vmem:[#allocation2 + $0x2f0] sm:$0xf] %v660
    %s664 = scalar_lea.vmem %s0, 402
    %v665 = vld [vmem:[%s664] ss:$2 sm:$0x7f]
    %v667 = vrot.slane %v665, 3
    %669 = vst [vmem:[#allocation2 + $0x2b0] sm:$0xe0] %v667
    %670 = vst [vmem:[#allocation2 + $0x2f8] sm:$0xf] %v667
    %s671 = scalar_lea.vmem %s0, 416
    %v672 = vld [vmem:[%s671] ss:$2 sm:$0x7f]
    %v674 = vrot.slane %v672, 3
    %676 = vst [vmem:[#allocation2 + $0x2b8] sm:$0xe0] %v674
    %677 = vst [vmem:[#allocation2 + $0x300] sm:$0xf] %v674
    %s678 = scalar_lea.vmem %s0, 417
    %v679 = vld [vmem:[%s678] ss:$2 sm:$0x7f]
    %v681 = vrot.slane %v679, 3
    %683 = vst [vmem:[#allocation2 + $0x2c0] sm:$0xe0] %v681
    %684 = vst [vmem:[#allocation2 + $0x308] sm:$0xf] %v681
    %s685 = scalar_lea.vmem %s0, 418
    %v686 = vld [vmem:[%s685] ss:$2 sm:$0x7f]
    %v688 = vrot.slane %v686, 3
    %690 = vst [vmem:[#allocation2 + $0x2c8] sm:$0xe0] %v688
    %691 = vst [vmem:[#allocation2 + $0x310] sm:$0xf] %v688
    %v692 = vld [vmem:[%s671] ss:$2 sm:$0x7f]
    %v694 = vrot.slane %v692, 4
    %696 = vst [vmem:[#allocation2 + $0x2d0] sm:$0xf0] %v694
    %697 = vst [vmem:[#allocation2 + $0x318] sm:$0x7] %v694
    %v698 = vld [vmem:[%s678] ss:$2 sm:$0x7f]
    %v700 = vrot.slane %v698, 4
    %702 = vst [vmem:[#allocation2 + $0x2d8] sm:$0xf0] %v700
    %703 = vst [vmem:[#allocation2 + $0x320] sm:$0x7] %v700
    %v704 = vld [vmem:[%s685] ss:$2 sm:$0x7f]
    %v706 = vrot.slane %v704, 4
    %708 = vst [vmem:[#allocation2 + $0x2e0] sm:$0xf0] %v706
    %709 = vst [vmem:[#allocation2 + $0x328] sm:$0x7] %v706
    %s710 = scalar_lea.vmem %s0, 432
    %v711 = vld [vmem:[%s710] ss:$2 sm:$0x7f]
    %v713 = vrot.slane %v711, 4
    %715 = vst [vmem:[#allocation2 + $0x2e8] sm:$0xf0] %v713
    %716 = vst [vmem:[#allocation2 + $0x330] sm:$0x7] %v713
    %s717 = scalar_lea.vmem %s0, 433
    %v718 = vld [vmem:[%s717] ss:$2 sm:$0x7f]
    %v720 = vrot.slane %v718, 4
    %722 = vst [vmem:[#allocation2 + $0x2f0] sm:$0xf0] %v720
    %723 = vst [vmem:[#allocation2 + $0x338] sm:$0x7] %v720
    %s724 = scalar_lea.vmem %s0, 434
    %v725 = vld [vmem:[%s724] ss:$2 sm:$0x7f]
    %v727 = vrot.slane %v725, 4
    %729 = vst [vmem:[#allocation2 + $0x2f8] sm:$0xf0] %v727
    %730 = vst [vmem:[#allocation2 + $0x340] sm:$0x7] %v727
    %s731 = scalar_lea.vmem %s0, 448
    %v732 = vld [vmem:[%s731] ss:$2 sm:$0x7f]
    %v734 = vrot.slane %v732, 4
    %736 = vst [vmem:[#allocation2 + $0x300] sm:$0xf0] %v734
    %737 = vst [vmem:[#allocation2 + $0x348] sm:$0x7] %v734
    %s738 = scalar_lea.vmem %s0, 449
    %v739 = vld [vmem:[%s738] ss:$2 sm:$0x7f]
    %v741 = vrot.slane %v739, 4
    %743 = vst [vmem:[#allocation2 + $0x308] sm:$0xf0] %v741
    %744 = vst [vmem:[#allocation2 + $0x350] sm:$0x7] %v741
    %s745 = scalar_lea.vmem %s0, 450
    %v746 = vld [vmem:[%s745] ss:$2 sm:$0x7f]
    %v748 = vrot.slane %v746, 4
    %750 = vst [vmem:[#allocation2 + $0x310] sm:$0xf0] %v748
    %751 = vst [vmem:[#allocation2 + $0x358] sm:$0x7] %v748
    %v752 = vld [vmem:[%s731] ss:$2 sm:$0x7f]
    %v754 = vrot.slane %v752, 5
    %756 = vst [vmem:[#allocation2 + $0x318] sm:$0xf8] %v754
    %757 = vst [vmem:[#allocation2 + $0x360] sm:$0x3] %v754
    %v758 = vld [vmem:[%s738] ss:$2 sm:$0x7f]
    %v760 = vrot.slane %v758, 5
    %762 = vst [vmem:[#allocation2 + $0x320] sm:$0xf8] %v760
    %763 = vst [vmem:[#allocation2 + $0x368] sm:$0x3] %v760
    %v764 = vld [vmem:[%s745] ss:$2 sm:$0x7f]
    %v766 = vrot.slane %v764, 5
    %768 = vst [vmem:[#allocation2 + $0x328] sm:$0xf8] %v766
    %769 = vst [vmem:[#allocation2 + $0x370] sm:$0x3] %v766
    %s770 = scalar_lea.vmem %s0, 464
    %v771 = vld [vmem:[%s770] ss:$2 sm:$0x7f]
    %v773 = vrot.slane %v771, 5
    %775 = vst [vmem:[#allocation2 + $0x330] sm:$0xf8] %v773
    %776 = vst [vmem:[#allocation2 + $0x378] sm:$0x3] %v773
    %s777 = scalar_lea.vmem %s0, 465
    %v778 = vld [vmem:[%s777] ss:$2 sm:$0x7f]
    %v780 = vrot.slane %v778, 5
    %782 = vst [vmem:[#allocation2 + $0x338] sm:$0xf8] %v780
    %783 = vst [vmem:[#allocation2 + $0x380] sm:$0x3] %v780
    %s784 = scalar_lea.vmem %s0, 466
    %v785 = vld [vmem:[%s784] ss:$2 sm:$0x7f]
    %v787 = vrot.slane %v785, 5
    %789 = vst [vmem:[#allocation2 + $0x340] sm:$0xf8] %v787
    %790 = vst [vmem:[#allocation2 + $0x388] sm:$0x3] %v787
    %s791 = scalar_lea.vmem %s0, 480
    %v792 = vld [vmem:[%s791] ss:$2 sm:$0x7f]
    %v794 = vrot.slane %v792, 5
    %796 = vst [vmem:[#allocation2 + $0x348] sm:$0xf8] %v794
    %797 = vst [vmem:[#allocation2 + $0x390] sm:$0x3] %v794
    %s798 = scalar_lea.vmem %s0, 481
    %v799 = vld [vmem:[%s798] ss:$2 sm:$0x7f]
    %v801 = vrot.slane %v799, 5
    %803 = vst [vmem:[#allocation2 + $0x350] sm:$0xf8] %v801
    %804 = vst [vmem:[#allocation2 + $0x398] sm:$0x3] %v801
    %s805 = scalar_lea.vmem %s0, 482
    %v806 = vld [vmem:[%s805] ss:$2 sm:$0x7f]
    %v808 = vrot.slane %v806, 5
    %810 = vst [vmem:[#allocation2 + $0x358] sm:$0xf8] %v808
    %811 = vst [vmem:[#allocation2 + $0x3a0] sm:$0x3] %v808
    %v812 = vld [vmem:[#allocation2] sm:$0xff]
    %v813 = vld [vmem:[#allocation2 + $0x8] sm:$0xff]
    %v814 = vld [vmem:[#allocation2 + $0x10] sm:$0xff]
    %v815 = vld [vmem:[#allocation2 + $0x18] sm:$0xff]
    %v816 = vld [vmem:[#allocation2 + $0x20] sm:$0xff]
    %v817 = vld [vmem:[#allocation2 + $0x28] sm:$0xff]
    %v818 = vld [vmem:[#allocation2 + $0x30] sm:$0xff]
    %v819 = vld [vmem:[#allocation2 + $0x38] sm:$0xff]
    %v820 = vld [vmem:[#allocation2 + $0x40] sm:$0xff]
    %v821 = vld [vmem:[#allocation2 + $0x48] sm:$0xff]
    %v822 = vld [vmem:[#allocation2 + $0x50] sm:$0xff]
    %v823 = vld [vmem:[#allocation2 + $0x58] sm:$0xff]
    %v824 = vld [vmem:[#allocation2 + $0x60] sm:$0xff]
    %v825 = vld [vmem:[#allocation2 + $0x68] sm:$0xff]
    %v826 = vld [vmem:[#allocation2 + $0x70] sm:$0xff]
    %v827 = vld [vmem:[#allocation2 + $0x78] sm:$0xff]
    %v828 = vld [vmem:[#allocation2 + $0x80] sm:$0xff]
    %v829 = vld [vmem:[#allocation2 + $0x88] sm:$0xff]
    %v830 = vld [vmem:[#allocation2 + $0x90] sm:$0xff]
    %v831 = vld [vmem:[#allocation2 + $0x98] sm:$0xff]
    %v832 = vld [vmem:[#allocation2 + $0xa0] sm:$0xff]
    %v833 = vld [vmem:[#allocation2 + $0xa8] sm:$0xff]
    %v834 = vld [vmem:[#allocation2 + $0xb0] sm:$0xff]
    %v835 = vld [vmem:[#allocation2 + $0xb8] sm:$0xff]
    %v836 = vld [vmem:[#allocation2 + $0xc0] sm:$0xff]
    %v837 = vld [vmem:[#allocation2 + $0xc8] sm:$0xff]
    %v838 = vld [vmem:[#allocation2 + $0xd0] sm:$0xff]
    %v839 = vld [vmem:[#allocation2 + $0xd8] sm:$0xff]
    %v840 = vld [vmem:[#allocation2 + $0xe0] sm:$0xff]
    %v841 = vld [vmem:[#allocation2 + $0xe8] sm:$0xff]
    %v842 = vld [vmem:[#allocation2 + $0xf0] sm:$0xff]
    %v843 = vld [vmem:[#allocation2 + $0xf8] sm:$0xff]
    %v844 = vld [vmem:[#allocation2 + $0x100] sm:$0xff]
    %v845 = vld [vmem:[#allocation2 + $0x108] sm:$0xff]
    %v846 = vld [vmem:[#allocation2 + $0x110] sm:$0xff]
    %v847 = vld [vmem:[#allocation2 + $0x118] sm:$0xff]
    %v848 = vld [vmem:[#allocation2 + $0x120] sm:$0xff]
    %v849 = vld [vmem:[#allocation2 + $0x128] sm:$0xff]
    %v850 = vld [vmem:[#allocation2 + $0x130] sm:$0xff]
    %v851 = vld [vmem:[#allocation2 + $0x138] sm:$0xff]
    %v852 = vld [vmem:[#allocation2 + $0x140] sm:$0xff]
    %v853 = vld [vmem:[#allocation2 + $0x148] sm:$0xff]
    %v854 = vld [vmem:[#allocation2 + $0x150] sm:$0xff]
    %v855 = vld [vmem:[#allocation2 + $0x158] sm:$0xff]
    %v856 = vld [vmem:[#allocation2 + $0x160] sm:$0xff]
    %v857 = vld [vmem:[#allocation2 + $0x168] sm:$0xff]
    %v858 = vld [vmem:[#allocation2 + $0x170] sm:$0xff]
    %v859 = vld [vmem:[#allocation2 + $0x178] sm:$0xff]
    %v860 = vld [vmem:[#allocation2 + $0x180] sm:$0xff]
    %v861 = vld [vmem:[#allocation2 + $0x188] sm:$0xff]
    %v862 = vld [vmem:[#allocation2 + $0x190] sm:$0xff]
    %v863 = vld [vmem:[#allocation2 + $0x198] sm:$0xff]
    %v864 = vld [vmem:[#allocation2 + $0x1a0] sm:$0xff]
    %v865 = vld [vmem:[#allocation2 + $0x1a8] sm:$0xff]
    %v866 = vld [vmem:[#allocation2 + $0x1b0] sm:$0xff]
    %v867 = vld [vmem:[#allocation2 + $0x1b8] sm:$0xff]
    %v868 = vld [vmem:[#allocation2 + $0x1c0] sm:$0xff]
    %v869 = vld [vmem:[#allocation2 + $0x1c8] sm:$0xff]
    %v870 = vld [vmem:[#allocation2 + $0x1d0] sm:$0xff]
    %v871 = vld [vmem:[#allocation2 + $0x1d8] sm:$0xff]
    %v872 = vld [vmem:[#allocation2 + $0x1e0] sm:$0xff]
    %v873 = vld [vmem:[#allocation2 + $0x1e8] sm:$0xff]
    %v874 = vld [vmem:[#allocation2 + $0x1f0] sm:$0xff]
    %v875 = vld [vmem:[#allocation2 + $0x1f8] sm:$0xff]
    %v876 = vld [vmem:[#allocation2 + $0x200] sm:$0xff]
    %v877 = vld [vmem:[#allocation2 + $0x208] sm:$0xff]
    %v878 = vld [vmem:[#allocation2 + $0x210] sm:$0xff]
    %v879 = vld [vmem:[#allocation2 + $0x218] sm:$0xff]
    %v880 = vld [vmem:[#allocation2 + $0x220] sm:$0xff]
    %v881 = vld [vmem:[#allocation2 + $0x228] sm:$0xff]
    %v882 = vld [vmem:[#allocation2 + $0x230] sm:$0xff]
    %v883 = vld [vmem:[#allocation2 + $0x238] sm:$0xff]
    %v884 = vld [vmem:[#allocation2 + $0x240] sm:$0xff]
    %v885 = vld [vmem:[#allocation2 + $0x248] sm:$0xff]
    %v886 = vld [vmem:[#allocation2 + $0x250] sm:$0xff]
    %v887 = vld [vmem:[#allocation2 + $0x258] sm:$0xff]
    %v888 = vld [vmem:[#allocation2 + $0x260] sm:$0xff]
    %v889 = vld [vmem:[#allocation2 + $0x268] sm:$0xff]
    %v890 = vld [vmem:[#allocation2 + $0x270] sm:$0xff]
    %v891 = vld [vmem:[#allocation2 + $0x278] sm:$0xff]
    %v892 = vld [vmem:[#allocation2 + $0x280] sm:$0xff]
    %v893 = vld [vmem:[#allocation2 + $0x288] sm:$0xff]
    %v894 = vld [vmem:[#allocation2 + $0x290] sm:$0xff]
    %v895 = vld [vmem:[#allocation2 + $0x298] sm:$0xff]
    %v896 = vld [vmem:[#allocation2 + $0x2a0] sm:$0xff]
    %v897 = vld [vmem:[#allocation2 + $0x2a8] sm:$0xff]
    %v898 = vld [vmem:[#allocation2 + $0x2b0] sm:$0xff]
    %v899 = vld [vmem:[#allocation2 + $0x2b8] sm:$0xff]
    %v900 = vld [vmem:[#allocation2 + $0x2c0] sm:$0xff]
    %v901 = vld [vmem:[#allocation2 + $0x2c8] sm:$0xff]
    %v902 = vld [vmem:[#allocation2 + $0x2d0] sm:$0xff]
    %v903 = vld [vmem:[#allocation2 + $0x2d8] sm:$0xff]
    %v904 = vld [vmem:[#allocation2 + $0x2e0] sm:$0xff]
    %v905 = vld [vmem:[#allocation2 + $0x2e8] sm:$0xff]
    %v906 = vld [vmem:[#allocation2 + $0x2f0] sm:$0xff]
    %v907 = vld [vmem:[#allocation2 + $0x2f8] sm:$0xff]
    %v908 = vld [vmem:[#allocation2 + $0x300] sm:$0xff]
    %v909 = vld [vmem:[#allocation2 + $0x308] sm:$0xff]
    %v910 = vld [vmem:[#allocation2 + $0x310] sm:$0xff]
    %v911 = vld [vmem:[#allocation2 + $0x318] sm:$0xff]
    %v912 = vld [vmem:[#allocation2 + $0x320] sm:$0xff]
    %v913 = vld [vmem:[#allocation2 + $0x328] sm:$0xff]
    %v914 = vld [vmem:[#allocation2 + $0x330] sm:$0xff]
    %v915 = vld [vmem:[#allocation2 + $0x338] sm:$0xff]
    %v916 = vld [vmem:[#allocation2 + $0x340] sm:$0xff]
    %v917 = vld [vmem:[#allocation2 + $0x348] sm:$0xff]
    %v918 = vld [vmem:[#allocation2 + $0x350] sm:$0xff]
    %v919 = vld [vmem:[#allocation2 + $0x358] sm:$0xff]
    %v920 = vld [vmem:[#allocation2 + $0x360] sm:$0x3]
    %v921 = vld [vmem:[#allocation2 + $0x368] sm:$0x3]
    %v922 = vld [vmem:[#allocation2 + $0x370] sm:$0x3]
    %v923 = vld [vmem:[#allocation2 + $0x378] sm:$0x3]
    %v924 = vld [vmem:[#allocation2 + $0x380] sm:$0x3]
    %v925 = vld [vmem:[#allocation2 + $0x388] sm:$0x3]
    %v926 = vld [vmem:[#allocation2 + $0x390] sm:$0x3]
    %v927 = vld [vmem:[#allocation2 + $0x398] sm:$0x3]
    %v928 = vld [vmem:[#allocation2 + $0x3a0] sm:$0x3]
    %v929 = vpack.c.bf16 %v821, %v812
    %v930 = vpack.c.bf16 %v822, %v813
    %v931 = vpack.c.bf16 %v823, %v814
    %v932 = vpack.c.bf16 %v824, %v815
    %v933 = vpack.c.bf16 %v825, %v816
    %v934 = vpack.c.bf16 %v826, %v817
    %v935 = vpack.c.bf16 %v827, %v818
    %v936 = vpack.c.bf16 %v828, %v819
    %v937 = vpack.c.bf16 %v829, %v820
    %v938 = vpack.c.bf16 %v839, %v830
    %v939 = vpack.c.bf16 %v840, %v831
    %v940 = vpack.c.bf16 %v841, %v832
    %v941 = vpack.c.bf16 %v842, %v833
    %v942 = vpack.c.bf16 %v843, %v834
    %v943 = vpack.c.bf16 %v844, %v835
    %v944 = vpack.c.bf16 %v845, %v836
    %v945 = vpack.c.bf16 %v846, %v837
    %v946 = vpack.c.bf16 %v847, %v838
    %v947 = vpack.c.bf16 %v857, %v848
    %v948 = vpack.c.bf16 %v858, %v849
    %v949 = vpack.c.bf16 %v859, %v850
    %v950 = vpack.c.bf16 %v860, %v851
    %v951 = vpack.c.bf16 %v861, %v852
    %v952 = vpack.c.bf16 %v862, %v853
    %v953 = vpack.c.bf16 %v863, %v854
    %v954 = vpack.c.bf16 %v864, %v855
    %v955 = vpack.c.bf16 %v865, %v856
    %v956 = vpack.c.bf16 %v875, %v866
    %v957 = vpack.c.bf16 %v876, %v867
    %v958 = vpack.c.bf16 %v877, %v868
    %v959 = vpack.c.bf16 %v878, %v869
    %v960 = vpack.c.bf16 %v879, %v870
    %v961 = vpack.c.bf16 %v880, %v871
    %v962 = vpack.c.bf16 %v881, %v872
    %v963 = vpack.c.bf16 %v882, %v873
    %v964 = vpack.c.bf16 %v883, %v874
    %v965 = vpack.c.bf16 %v893, %v884
    %v966 = vpack.c.bf16 %v894, %v885
    %v967 = vpack.c.bf16 %v895, %v886
    %v968 = vpack.c.bf16 %v896, %v887
    %v969 = vpack.c.bf16 %v897, %v888
    %v970 = vpack.c.bf16 %v898, %v889
    %v971 = vpack.c.bf16 %v899, %v890
    %v972 = vpack.c.bf16 %v900, %v891
    %v973 = vpack.c.bf16 %v901, %v892
    %v974 = vpack.c.bf16 %v911, %v902
    %v975 = vpack.c.bf16 %v912, %v903
    %v976 = vpack.c.bf16 %v913, %v904
    %v977 = vpack.c.bf16 %v914, %v905
    %v978 = vpack.c.bf16 %v915, %v906
    %v979 = vpack.c.bf16 %v916, %v907
    %v980 = vpack.c.bf16 %v917, %v908
    %v981 = vpack.c.bf16 %v918, %v909
    %v982 = vpack.c.bf16 %v919, %v910
    %v983 = vpack.c.bf16 %v920, %v920
    %v984 = vpack.c.bf16 %v921, %v921
    %v985 = vpack.c.bf16 %v922, %v922
    %v986 = vpack.c.bf16 %v923, %v923
    %v987 = vpack.c.bf16 %v924, %v924
    %v988 = vpack.c.bf16 %v925, %v925
    %v989 = vpack.c.bf16 %v926, %v926
    %v990 = vpack.c.bf16 %v927, %v927
    %v991 = vpack.c.bf16 %v928, %v928
    %v992 = vld [vmem:[#allocation6] sm:$0xf]
    %v993 = vld [vmem:[#allocation6 + $0x4] sm:$0xf]
    %v994 = vld [vmem:[#allocation6 + $0x8] sm:$0xf]
    %v995 = vld [vmem:[#allocation6 + $0xc] sm:$0xf]
    %v996 = vld [vmem:[#allocation6 + $0x10] sm:$0xf]
    %v997 = vld [vmem:[#allocation6 + $0x14] sm:$0xf]
    %v998 = vld [vmem:[#allocation6 + $0x18] sm:$0xf]
    %v999 = vld [vmem:[#allocation6 + $0x1c] sm:$0xf]
    %v1000 = vld [vmem:[#allocation6 + $0x20] sm:$0xf]
    %v1001 = vld [vmem:[#allocation6 + $0x24] sm:$0xf]
    %v1002 = vld [vmem:[#allocation6 + $0x28] sm:$0xf]
    %v1003 = vld [vmem:[#allocation6 + $0x2c] sm:$0xf]
    %v1004 = vld [vmem:[#allocation6 + $0x30] sm:$0xf]
    %v1005 = vld [vmem:[#allocation6 + $0x34] sm:$0xf]
    %v1006 = vld [vmem:[#allocation6 + $0x38] sm:$0xf]
    %v1007 = vld [vmem:[#allocation6 + $0x3c] sm:$0xf]
    %v1008 = vld [vmem:[#allocation6 + $0x40] sm:$0xf]
    %v1009 = vld [vmem:[#allocation6 + $0x44] sm:$0xf]
    %v1010 = vld [vmem:[#allocation6 + $0x48] sm:$0xf]
    %v1011 = vld [vmem:[#allocation6 + $0x4c] sm:$0xf]
    %v1012 = vld [vmem:[#allocation6 + $0x50] sm:$0xf]
    %v1013 = vld [vmem:[#allocation6 + $0x54] sm:$0xf]
    %v1014 = vld [vmem:[#allocation6 + $0x58] sm:$0xf]
    %v1015 = vld [vmem:[#allocation6 + $0x5c] sm:$0xf]
    %v1016 = vld [vmem:[#allocation6 + $0x60] sm:$0xf]
    %v1017 = vld [vmem:[#allocation6 + $0x64] sm:$0xf]
    %v1018 = vld [vmem:[#allocation6 + $0x68] sm:$0xf]
    %v1019 = vld [vmem:[#allocation6 + $0x6c] sm:$0xf]
    %v1020 = vld [vmem:[#allocation6 + $0x70] sm:$0xf]
    %v1021 = vld [vmem:[#allocation6 + $0x74] sm:$0xf]
    %v1022 = vld [vmem:[#allocation6 + $0x78] sm:$0xf]
    %v1023 = vld [vmem:[#allocation6 + $0x7c] sm:$0xf]
    %v1024 = vld [vmem:[#allocation6 + $0x80] sm:$0xf]
    %v1025 = vld [vmem:[#allocation6 + $0x84] sm:$0xf]
    %v1026 = vld [vmem:[#allocation6 + $0x88] sm:$0xf]
    %v1027 = vld [vmem:[#allocation6 + $0x8c] sm:$0xf]
    %v1028 = vld [vmem:[#allocation6 + $0x90] sm:$0xf]
    %v1029 = vld [vmem:[#allocation6 + $0x94] sm:$0xf]
    %v1030 = vld [vmem:[#allocation6 + $0x98] sm:$0xf]
    %v1031 = vld [vmem:[#allocation6 + $0x9c] sm:$0xf]
    %v1032 = vld [vmem:[#allocation6 + $0xa0] sm:$0xf]
    %v1033 = vld [vmem:[#allocation6 + $0xa4] sm:$0xf]
    %v1034 = vld [vmem:[#allocation6 + $0xa8] sm:$0xf]
    %v1035 = vld [vmem:[#allocation6 + $0xac] sm:$0xf]
    %v1036 = vld [vmem:[#allocation6 + $0xb0] sm:$0xf]
    %v1037 = vld [vmem:[#allocation6 + $0xb4] sm:$0xf]
    %v1038 = vld [vmem:[#allocation6 + $0xb8] sm:$0xf]
    %v1039 = vld [vmem:[#allocation6 + $0xbc] sm:$0xf]
    %v1040 = vld [vmem:[#allocation6 + $0xc0] sm:$0xf]
    %v1041 = vld [vmem:[#allocation6 + $0xc4] sm:$0xf]
    %v1042 = vld [vmem:[#allocation6 + $0xc8] sm:$0xf]
    %v1043 = vld [vmem:[#allocation6 + $0xcc] sm:$0xf]
    %v1044 = vld [vmem:[#allocation6 + $0xd0] sm:$0xf]
    %v1045 = vld [vmem:[#allocation6 + $0xd4] sm:$0xf]
    %v1046 = vld [vmem:[#allocation6 + $0xd8] sm:$0xf]
    %v1047 = vld [vmem:[#allocation6 + $0xdc] sm:$0xf]
    %v1048 = vld [vmem:[#allocation6 + $0xe0] sm:$0xf]
    %v1049 = vld [vmem:[#allocation6 + $0xe4] sm:$0xf]
    %v1050 = vld [vmem:[#allocation6 + $0xe8] sm:$0xf]
    %v1051 = vld [vmem:[#allocation6 + $0xec] sm:$0xf]
    %v1052 = vld [vmem:[#allocation6 + $0xf0] sm:$0xf]
    %v1053 = vld [vmem:[#allocation6 + $0xf4] sm:$0xf]
    %v1054 = vld [vmem:[#allocation6 + $0xf8] sm:$0xf]
    %v1055 = vld [vmem:[#allocation6 + $0xfc] sm:$0xf]
    %v1056 = vld [vmem:[#allocation6 + $0x100] sm:$0xf]
    %v1057 = vld [vmem:[#allocation6 + $0x104] sm:$0xf]
    %v1058 = vld [vmem:[#allocation6 + $0x108] sm:$0xf]
    %v1059 = vld [vmem:[#allocation6 + $0x10c] sm:$0xf]
    %v1060 = vld [vmem:[#allocation6 + $0x110] sm:$0xf]
    %v1061 = vld [vmem:[#allocation6 + $0x114] sm:$0xf]
    %v1062 = vld [vmem:[#allocation6 + $0x118] sm:$0xf]
    %v1063 = vld [vmem:[#allocation6 + $0x11c] sm:$0xf]
    %v1064 = vld [vmem:[#allocation6 + $0x120] sm:$0xf]
    %v1065 = vld [vmem:[#allocation6 + $0x124] sm:$0xf]
    %v1066 = vld [vmem:[#allocation6 + $0x128] sm:$0xf]
    %v1067 = vld [vmem:[#allocation6 + $0x12c] sm:$0xf]
    %v1068 = vld [vmem:[#allocation6 + $0x130] sm:$0xf]
    %v1069 = vld [vmem:[#allocation6 + $0x134] sm:$0xf]
    %v1070 = vld [vmem:[#allocation6 + $0x138] sm:$0xf]
    %v1071 = vld [vmem:[#allocation6 + $0x13c] sm:$0xf]
    %v1072 = vld [vmem:[#allocation6 + $0x140] sm:$0xf]
    %v1073 = vld [vmem:[#allocation6 + $0x144] sm:$0xf]
    %v1074 = vld [vmem:[#allocation6 + $0x148] sm:$0xf]
    %v1075 = vld [vmem:[#allocation6 + $0x14c] sm:$0xf]
    %v1076 = vld [vmem:[#allocation6 + $0x150] sm:$0xf]
    %v1077 = vld [vmem:[#allocation6 + $0x154] sm:$0xf]
    %v1078 = vld [vmem:[#allocation6 + $0x158] sm:$0xf]
    %v1079 = vld [vmem:[#allocation6 + $0x15c] sm:$0xf]
    %v1080 = vld [vmem:[#allocation6 + $0x160] sm:$0xf]
    %v1081 = vld [vmem:[#allocation6 + $0x164] sm:$0xf]
    %v1082 = vld [vmem:[#allocation6 + $0x168] sm:$0xf]
    %v1083 = vld [vmem:[#allocation6 + $0x16c] sm:$0xf]
    %v1084 = vld [vmem:[#allocation6 + $0x170] sm:$0xf]
    %v1085 = vld [vmem:[#allocation6 + $0x174] sm:$0xf]
    %v1086 = vld [vmem:[#allocation6 + $0x178] sm:$0xf]
    %v1087 = vld [vmem:[#allocation6 + $0x17c] sm:$0xf]
    %v1088 = vld [vmem:[#allocation6 + $0x180] sm:$0xf]
    %v1089 = vld [vmem:[#allocation6 + $0x184] sm:$0xf]
    %v1090 = vld [vmem:[#allocation6 + $0x188] sm:$0xf]
    %v1091 = vld [vmem:[#allocation6 + $0x18c] sm:$0xf]
    %v1092 = vld [vmem:[#allocation6 + $0x190] sm:$0xf]
    %v1093 = vld [vmem:[#allocation6 + $0x194] sm:$0xf]
    %v1094 = vld [vmem:[#allocation6 + $0x198] sm:$0xf]
    %v1095 = vld [vmem:[#allocation6 + $0x19c] sm:$0xf]
    %v1096 = vld [vmem:[#allocation6 + $0x1a0] sm:$0xf]
    %v1097 = vld [vmem:[#allocation6 + $0x1a4] sm:$0xf]
    %v1098 = vld [vmem:[#allocation6 + $0x1a8] sm:$0xf]
    %v1099 = vld [vmem:[#allocation6 + $0x1ac] sm:$0xf]
    %v1100 = vld [vmem:[#allocation6 + $0x1b0] sm:$0xf]
    %v1101 = vld [vmem:[#allocation6 + $0x1b4] sm:$0xf]
    %v1102 = vld [vmem:[#allocation6 + $0x1b8] sm:$0xf]
    %v1103 = vld [vmem:[#allocation6 + $0x1bc] sm:$0xf]
    %v1104 = vld [vmem:[#allocation6 + $0x1c0] sm:$0xf]
    %v1105 = vld [vmem:[#allocation6 + $0x1c4] sm:$0xf]
    %v1106 = vld [vmem:[#allocation6 + $0x1c8] sm:$0xf]
    %v1107 = vld [vmem:[#allocation6 + $0x1cc] sm:$0xf]
    %v1108 = vld [vmem:[#allocation6 + $0x1d0] sm:$0xf]
    %v1109 = vld [vmem:[#allocation6 + $0x1d4] sm:$0xf]
    %v1110 = vld [vmem:[#allocation6 + $0x1d8] sm:$0xf]
    %v1111 = vld [vmem:[#allocation6 + $0x1dc] sm:$0xf]
    %v1112 = vld [vmem:[#allocation6 + $0x1e0] sm:$0xf]
    %v1113 = vld [vmem:[#allocation6 + $0x1e4] sm:$0xf]
    %v1114 = vld [vmem:[#allocation6 + $0x1e8] sm:$0xf]
    %v1115 = vld [vmem:[#allocation6 + $0x1ec] sm:$0xf]
    %v1116 = vld [vmem:[#allocation6 + $0x1f0] sm:$0xf]
    %v1117 = vld [vmem:[#allocation6 + $0x1f4] sm:$0xf]
    %v1118 = vld [vmem:[#allocation6 + $0x1f8] sm:$0xf]
    %v1119 = vld [vmem:[#allocation6 + $0x1fc] sm:$0xf]
    %v1120 = vld [vmem:[#allocation6 + $0x200] sm:$0xf]
    %v1121 = vld [vmem:[#allocation6 + $0x204] sm:$0xf]
    %v1122 = vld [vmem:[#allocation6 + $0x208] sm:$0xf]
    %v1123 = vld [vmem:[#allocation6 + $0x20c] sm:$0xf]
    %v1124 = vld [vmem:[#allocation6 + $0x210] sm:$0xf]
    %v1125 = vld [vmem:[#allocation6 + $0x214] sm:$0xf]
    %v1126 = vld [vmem:[#allocation6 + $0x218] sm:$0xf]
    %v1127 = vld [vmem:[#allocation6 + $0x21c] sm:$0xf]
    %v1128 = vld [vmem:[#allocation6 + $0x220] sm:$0xf]
    %v1129 = vld [vmem:[#allocation6 + $0x224] sm:$0xf]
    %v1130 = vld [vmem:[#allocation6 + $0x228] sm:$0xf]
    %v1131 = vld [vmem:[#allocation6 + $0x22c] sm:$0xf]
    %v1132 = vld [vmem:[#allocation6 + $0x230] sm:$0xf]
    %v1133 = vld [vmem:[#allocation6 + $0x234] sm:$0xf]
    %v1134 = vld [vmem:[#allocation6 + $0x238] sm:$0xf]
    %v1135 = vld [vmem:[#allocation6 + $0x23c] sm:$0xf]
    %v1136 = vld [vmem:[%s2] sm:$0x1]
    %v1138 = vlaneseq
    %v1139 = vshrl.u32 %v1138, 7
    %v1140 = vsub.s32 0, %v1139
    %v1141 = vrot.slane %v1136, %v1140
    %v1287 = vunpack.c.l.b16 %v992
    %v1288 = vunpack.c.l.b16 %v993
    %v1289 = vunpack.c.l.b16 %v994
    %v1290 = vunpack.c.l.b16 %v995
    %v1291 = vunpack.c.l.b16 %v996
    %v1292 = vunpack.c.l.b16 %v997
    %v1293 = vunpack.c.l.b16 %v998
    %v1294 = vunpack.c.l.b16 %v999
    %v1295 = vunpack.c.l.b16 %v1000
    %v1296 = vunpack.c.l.b16 %v1001
    %v1297 = vunpack.c.l.b16 %v1002
    %v1298 = vunpack.c.l.b16 %v1003
    %v1299 = vunpack.c.l.b16 %v1004
    %v1300 = vunpack.c.l.b16 %v1005
    %v1301 = vunpack.c.l.b16 %v1006
    %v1302 = vunpack.c.l.b16 %v1007
    %v1303 = vunpack.c.l.b16 %v1008
    %v1304 = vunpack.c.l.b16 %v1009
    %v1305 = vunpack.c.l.b16 %v1010
    %v1306 = vunpack.c.l.b16 %v1011
    %v1307 = vunpack.c.l.b16 %v1012
    %v1308 = vunpack.c.l.b16 %v1013
    %v1309 = vunpack.c.l.b16 %v1014
    %v1310 = vunpack.c.l.b16 %v1015
    %v1311 = vunpack.c.l.b16 %v1016
    %v1312 = vunpack.c.l.b16 %v1017
    %v1313 = vunpack.c.l.b16 %v1018
    %v1314 = vunpack.c.l.b16 %v1019
    %v1315 = vunpack.c.l.b16 %v1020
    %v1316 = vunpack.c.l.b16 %v1021
    %v1317 = vunpack.c.l.b16 %v1022
    %v1318 = vunpack.c.l.b16 %v1023
    %v1319 = vunpack.c.l.b16 %v1024
    %v1320 = vunpack.c.l.b16 %v1025
    %v1321 = vunpack.c.l.b16 %v1026
    %v1322 = vunpack.c.l.b16 %v1027
    %v1323 = vunpack.c.l.b16 %v1028
    %v1324 = vunpack.c.l.b16 %v1029
    %v1325 = vunpack.c.l.b16 %v1030
    %v1326 = vunpack.c.l.b16 %v1031
    %v1327 = vunpack.c.l.b16 %v1032
    %v1328 = vunpack.c.l.b16 %v1033
    %v1329 = vunpack.c.l.b16 %v1034
    %v1330 = vunpack.c.l.b16 %v1035
    %v1331 = vunpack.c.l.b16 %v1036
    %v1332 = vunpack.c.l.b16 %v1037
    %v1333 = vunpack.c.l.b16 %v1038
    %v1334 = vunpack.c.l.b16 %v1039
    %v1335 = vunpack.c.l.b16 %v1040
    %v1336 = vunpack.c.l.b16 %v1041
    %v1337 = vunpack.c.l.b16 %v1042
    %v1338 = vunpack.c.l.b16 %v1043
    %v1339 = vunpack.c.l.b16 %v1044
    %v1340 = vunpack.c.l.b16 %v1045
    %v1341 = vunpack.c.l.b16 %v1046
    %v1342 = vunpack.c.l.b16 %v1047
    %v1343 = vunpack.c.l.b16 %v1048
    %v1344 = vunpack.c.l.b16 %v1049
    %v1345 = vunpack.c.l.b16 %v1050
    %v1346 = vunpack.c.l.b16 %v1051
    %v1347 = vunpack.c.l.b16 %v1052
    %v1348 = vunpack.c.l.b16 %v1053
    %v1349 = vunpack.c.l.b16 %v1054
    %v1350 = vunpack.c.l.b16 %v1055
    %v1351 = vunpack.c.l.b16 %v1056
    %v1352 = vunpack.c.l.b16 %v1057
    %v1353 = vunpack.c.l.b16 %v1058
    %v1354 = vunpack.c.l.b16 %v1059
    %v1355 = vunpack.c.l.b16 %v1060
    %v1356 = vunpack.c.l.b16 %v1061
    %v1357 = vunpack.c.l.b16 %v1062
    %v1358 = vunpack.c.l.b16 %v1063
    %v1359 = vunpack.c.l.b16 %v1064
    %v1360 = vunpack.c.l.b16 %v1065
    %v1361 = vunpack.c.l.b16 %v1066
    %v1362 = vunpack.c.l.b16 %v1067
    %v1363 = vunpack.c.l.b16 %v1068
    %v1364 = vunpack.c.l.b16 %v1069
    %v1365 = vunpack.c.l.b16 %v1070
    %v1366 = vunpack.c.l.b16 %v1071
    %v1367 = vunpack.c.l.b16 %v1072
    %v1368 = vunpack.c.l.b16 %v1073
    %v1369 = vunpack.c.l.b16 %v1074
    %v1370 = vunpack.c.l.b16 %v1075
    %v1371 = vunpack.c.l.b16 %v1076
    %v1372 = vunpack.c.l.b16 %v1077
    %v1373 = vunpack.c.l.b16 %v1078
    %v1374 = vunpack.c.l.b16 %v1079
    %v1375 = vunpack.c.l.b16 %v1080
    %v1376 = vunpack.c.l.b16 %v1081
    %v1377 = vunpack.c.l.b16 %v1082
    %v1378 = vunpack.c.l.b16 %v1083
    %v1379 = vunpack.c.l.b16 %v1084
    %v1380 = vunpack.c.l.b16 %v1085
    %v1381 = vunpack.c.l.b16 %v1086
    %v1382 = vunpack.c.l.b16 %v1087
    %v1383 = vunpack.c.l.b16 %v1088
    %v1384 = vunpack.c.l.b16 %v1089
    %v1385 = vunpack.c.l.b16 %v1090
    %v1386 = vunpack.c.l.b16 %v1091
    %v1387 = vunpack.c.l.b16 %v1092
    %v1388 = vunpack.c.l.b16 %v1093
    %v1389 = vunpack.c.l.b16 %v1094
    %v1390 = vunpack.c.l.b16 %v1095
    %v1391 = vunpack.c.l.b16 %v1096
    %v1392 = vunpack.c.l.b16 %v1097
    %v1393 = vunpack.c.l.b16 %v1098
    %v1394 = vunpack.c.l.b16 %v1099
    %v1395 = vunpack.c.l.b16 %v1100
    %v1396 = vunpack.c.l.b16 %v1101
    %v1397 = vunpack.c.l.b16 %v1102
    %v1398 = vunpack.c.l.b16 %v1103
    %v1399 = vunpack.c.l.b16 %v1104
    %v1400 = vunpack.c.l.b16 %v1105
    %v1401 = vunpack.c.l.b16 %v1106
    %v1402 = vunpack.c.l.b16 %v1107
    %v1403 = vunpack.c.l.b16 %v1108
    %v1404 = vunpack.c.l.b16 %v1109
    %v1405 = vunpack.c.l.b16 %v1110
    %v1406 = vunpack.c.l.b16 %v1111
    %v1407 = vunpack.c.l.b16 %v1112
    %v1408 = vunpack.c.l.b16 %v1113
    %v1409 = vunpack.c.l.b16 %v1114
    %v1410 = vunpack.c.l.b16 %v1115
    %v1411 = vunpack.c.l.b16 %v1116
    %v1412 = vunpack.c.l.b16 %v1117
    %v1413 = vunpack.c.l.b16 %v1118
    %v1414 = vunpack.c.l.b16 %v1119
    %v1415 = vunpack.c.l.b16 %v1120
    %v1416 = vunpack.c.l.b16 %v1121
    %v1417 = vunpack.c.l.b16 %v1122
    %v1418 = vunpack.c.l.b16 %v1123
    %v1419 = vunpack.c.l.b16 %v1124
    %v1420 = vunpack.c.l.b16 %v1125
    %v1421 = vunpack.c.l.b16 %v1126
    %v1422 = vunpack.c.l.b16 %v1127
    %v1423 = vunpack.c.l.b16 %v1128
    %v1424 = vunpack.c.l.b16 %v1129
    %v1425 = vunpack.c.l.b16 %v1130
    %v1426 = vunpack.c.l.b16 %v1131
    %v1427 = vunpack.c.l.b16 %v1132
    %v1428 = vunpack.c.l.b16 %v1133
    %v1429 = vunpack.c.l.b16 %v1134
    %v1430 = vunpack.c.l.b16 %v1135
    %v1431 = vpack.c.b16 %v1288, %v1287
    %v1432 = vpack.c.b16 %v1290, %v1289
    %v1433 = vpack.c.b16 %v1292, %v1291
    %v1434 = vpack.c.b16 %v1294, %v1293
    %v1435 = vpack.c.b16 %v1296, %v1295
    %v1436 = vpack.c.b16 %v1298, %v1297
    %v1437 = vpack.c.b16 %v1300, %v1299
    %v1438 = vpack.c.b16 %v1302, %v1301
    %v1439 = vpack.c.b16 %v1304, %v1303
    %v1440 = vpack.c.b16 %v1306, %v1305
    %v1441 = vpack.c.b16 %v1308, %v1307
    %v1442 = vpack.c.b16 %v1310, %v1309
    %v1443 = vpack.c.b16 %v1312, %v1311
    %v1444 = vpack.c.b16 %v1314, %v1313
    %v1445 = vpack.c.b16 %v1316, %v1315
    %v1446 = vpack.c.b16 %v1318, %v1317
    %v1447 = vpack.c.b16 %v1320, %v1319
    %v1448 = vpack.c.b16 %v1322, %v1321
    %v1449 = vpack.c.b16 %v1324, %v1323
    %v1450 = vpack.c.b16 %v1326, %v1325
    %v1451 = vpack.c.b16 %v1328, %v1327
    %v1452 = vpack.c.b16 %v1330, %v1329
    %v1453 = vpack.c.b16 %v1332, %v1331
    %v1454 = vpack.c.b16 %v1334, %v1333
    %v1455 = vpack.c.b16 %v1336, %v1335
    %v1456 = vpack.c.b16 %v1338, %v1337
    %v1457 = vpack.c.b16 %v1340, %v1339
    %v1458 = vpack.c.b16 %v1342, %v1341
    %v1459 = vpack.c.b16 %v1344, %v1343
    %v1460 = vpack.c.b16 %v1346, %v1345
    %v1461 = vpack.c.b16 %v1348, %v1347
    %v1462 = vpack.c.b16 %v1350, %v1349
    %v1463 = vpack.c.b16 %v1352, %v1351
    %v1464 = vpack.c.b16 %v1354, %v1353
    %v1465 = vpack.c.b16 %v1356, %v1355
    %v1466 = vpack.c.b16 %v1358, %v1357
    %v1467 = vpack.c.b16 %v1360, %v1359
    %v1468 = vpack.c.b16 %v1362, %v1361
    %v1469 = vpack.c.b16 %v1364, %v1363
    %v1470 = vpack.c.b16 %v1366, %v1365
    %v1471 = vpack.c.b16 %v1368, %v1367
    %v1472 = vpack.c.b16 %v1370, %v1369
    %v1473 = vpack.c.b16 %v1372, %v1371
    %v1474 = vpack.c.b16 %v1374, %v1373
    %v1475 = vpack.c.b16 %v1376, %v1375
    %v1476 = vpack.c.b16 %v1378, %v1377
    %v1477 = vpack.c.b16 %v1380, %v1379
    %v1478 = vpack.c.b16 %v1382, %v1381
    %v1479 = vpack.c.b16 %v1384, %v1383
    %v1480 = vpack.c.b16 %v1386, %v1385
    %v1481 = vpack.c.b16 %v1388, %v1387
    %v1482 = vpack.c.b16 %v1390, %v1389
    %v1483 = vpack.c.b16 %v1392, %v1391
    %v1484 = vpack.c.b16 %v1394, %v1393
    %v1485 = vpack.c.b16 %v1396, %v1395
    %v1486 = vpack.c.b16 %v1398, %v1397
    %v1487 = vpack.c.b16 %v1400, %v1399
    %v1488 = vpack.c.b16 %v1402, %v1401
    %v1489 = vpack.c.b16 %v1404, %v1403
    %v1490 = vpack.c.b16 %v1406, %v1405
    %v1491 = vpack.c.b16 %v1408, %v1407
    %v1492 = vpack.c.b16 %v1410, %v1409
    %v1493 = vpack.c.b16 %v1412, %v1411
    %v1494 = vpack.c.b16 %v1414, %v1413
    %v1495 = vpack.c.b16 %v1416, %v1415
    %v1496 = vpack.c.b16 %v1418, %v1417
    %v1497 = vpack.c.b16 %v1420, %v1419
    %v1498 = vpack.c.b16 %v1422, %v1421
    %v1499 = vpack.c.b16 %v1424, %v1423
    %v1500 = vpack.c.b16 %v1426, %v1425
    %v1501 = vpack.c.b16 %v1428, %v1427
    %v1502 = vpack.c.b16 %v1430, %v1429
    %1575 = vmatprep.subr.bf16.mxu0 0
    %1576 = vmatpush1.bf16.msra.mxu0 %v1431
    %1577 = vmatprep.subr.bf16.mxu0 0
    %1578 = vmatpush1.bf16.msra.mxu0 %v1432
    %1579 = vmatprep.subr.bf16.mxu0 0
    %1580 = vmatpush1.bf16.msra.mxu0 %v1433
    %1581 = vmatprep.subr.bf16.mxu0 0
    %1582 = vmatpush1.bf16.msra.mxu0 %v1434
    %1583 = vmatprep.subr.bf16.mxu0 0
    %1584 = vmatpush1.bf16.msra.mxu0 %v1435
    %1585 = vmatprep.subr.bf16.mxu0 0
    %1586 = vmatpush1.bf16.msra.mxu0 %v1436
    %1587 = vmatprep.subr.bf16.mxu0 0
    %1588 = vmatpush1.bf16.msra.mxu0 %v1437
    %1589 = vmatprep.subr.bf16.mxu0 0
    %1590 = vmatpush1.bf16.msra.mxu0 %v1438
    %1591 = vmatprep.subr.bf16.mxu0 0
    %1592 = vmatpush1.bf16.msra.mxu0 %v1439
    %1593 = vmatprep.subr.bf16.mxu0 0
    %1594 = vmatpush1.bf16.msra.mxu0 %v1440
    %1595 = vmatprep.subr.bf16.mxu0 0
    %1596 = vmatpush1.bf16.msra.mxu0 %v1441
    %1597 = vmatprep.subr.bf16.mxu0 0
    %1598 = vmatpush1.bf16.msra.mxu0 %v1442
    %1599 = vmatprep.subr.bf16.mxu0 0
    %1600 = vmatpush1.bf16.msra.mxu0 %v1443
    %1601 = vmatprep.subr.bf16.mxu0 0
    %1602 = vmatpush1.bf16.msra.mxu0 %v1444
    %1603 = vmatprep.subr.bf16.mxu0 0
    %1604 = vmatpush1.bf16.msra.mxu0 %v1445
    %1605 = vmatprep.subr.bf16.mxu0 0
    %1606 = vmatpush1.bf16.msra.mxu0 %v1446
    %1607 = vmatprep.mubr.bf16.mxu0 %v930
    %1608 = vmatmul.mubr.bf16.gmra.mrb[0].mxu0 %v929
    %v1609 = vpop.f32.mrb[0].mxu0
    %v1610 = vadd.f32 %v1141, %v1609
    %v1611 = vpop.f32.mrb[0].mxu0
    %v1612 = vpop.f32.mrb[0].mxu0
    %v1613 = vadd.f32 %v1141, %v1612
    %v1614 = vpop.f32.mrb[0].mxu0
    %1615 = vmatprep.mubr.bf16.mxu0 %v939
    %1616 = vmatmul.mubr.bf16.gmra.mrb[0].mxu0 %v938
    %v1617 = vpop.f32.mrb[0].mxu0
    %v1618 = vadd.f32 %v1141, %v1617
    %v1619 = vpop.f32.mrb[0].mxu0
    %v1620 = vpop.f32.mrb[0].mxu0
    %v1621 = vadd.f32 %v1141, %v1620
    %v1622 = vpop.f32.mrb[0].mxu0
    %1623 = vmatprep.mubr.bf16.mxu0 %v948
    %1624 = vmatmul.mubr.bf16.gmra.mrb[0].mxu0 %v947
    %v1625 = vpop.f32.mrb[0].mxu0
    %v1626 = vadd.f32 %v1141, %v1625
    %v1627 = vpop.f32.mrb[0].mxu0
    %v1628 = vpop.f32.mrb[0].mxu0
    %v1629 = vadd.f32 %v1141, %v1628
    %v1630 = vpop.f32.mrb[0].mxu0
    %1631 = vmatprep.mubr.bf16.mxu0 %v957
    %1632 = vmatmul.mubr.bf16.gmra.mrb[0].mxu0 %v956
    %v1633 = vpop.f32.mrb[0].mxu0
    %v1634 = vadd.f32 %v1141, %v1633
    %v1635 = vpop.f32.mrb[0].mxu0
    %v1636 = vpop.f32.mrb[0].mxu0
    %v1637 = vadd.f32 %v1141, %v1636
    %v1638 = vpop.f32.mrb[0].mxu0
    %1639 = vmatprep.mubr.bf16.mxu0 %v966
    %1640 = vmatmul.mubr.bf16.gmra.mrb[0].mxu0 %v965
    %v1641 = vpop.f32.mrb[0].mxu0
    %v1642 = vadd.f32 %v1141, %v1641
    %v1643 = vpop.f32.mrb[0].mxu0
    %v1644 = vpop.f32.mrb[0].mxu0
    %v1645 = vadd.f32 %v1141, %v1644
    %v1646 = vpop.f32.mrb[0].mxu0
    %1647 = vmatprep.mubr.bf16.mxu0 %v975
    %1648 = vmatmul.mubr.bf16.gmra.mrb[0].mxu0 %v974
    %v1649 = vpop.f32.mrb[0].mxu0
    %v1650 = vadd.f32 %v1141, %v1649
    %v1651 = vpop.f32.mrb[0].mxu0
    %v1652 = vpop.f32.mrb[0].mxu0
    %v1653 = vadd.f32 %v1141, %v1652
    %v1654 = vpop.f32.mrb[0].mxu0
    %1655 = vmatprep.mubr.bf16.mxu0 %v984
    %1656 = vmatmul.mubr.bf16.gmra.mrb[0].mxu0 %v983
    %v1657 = vpop.f32.mrb[0].mxu0
    %v1658 = vadd.f32 %v1141, %v1657
    %v1659 = vpop.f32.mrb[0].mxu0
    %v1660 = vpop.f32.mrb[0].mxu0
    %v1661 = vpop.f32.mrb[0].mxu0
    %1662 = vdwg.mxu0
    %1663 = vmatprep.subr.bf16.mxu0 0
    %1664 = vmatpush1.bf16.msra.mxu0 %v1447
    %1665 = vmatprep.subr.bf16.mxu0 0
    %1666 = vmatpush1.bf16.msra.mxu0 %v1448
    %1667 = vmatprep.subr.bf16.mxu0 0
    %1668 = vmatpush1.bf16.msra.mxu0 %v1449
    %1669 = vmatprep.subr.bf16.mxu0 0
    %1670 = vmatpush1.bf16.msra.mxu0 %v1450
    %1671 = vmatprep.subr.bf16.mxu0 0
    %1672 = vmatpush1.bf16.msra.mxu0 %v1451
    %1673 = vmatprep.subr.bf16.mxu0 0
    %1674 = vmatpush1.bf16.msra.mxu0 %v1452
    %1675 = vmatprep.subr.bf16.mxu0 0
    %1676 = vmatpush1.bf16.msra.mxu0 %v1453
    %1677 = vmatprep.subr.bf16.mxu0 0
    %1678 = vmatpush1.bf16.msra.mxu0 %v1454
    %1679 = vmatprep.subr.bf16.mxu0 0
    %1680 = vmatpush1.bf16.msra.mxu0 %v1455
    %1681 = vmatprep.subr.bf16.mxu0 0
    %1682 = vmatpush1.bf16.msra.mxu0 %v1456
    %1683 = vmatprep.subr.bf16.mxu0 0
    %1684 = vmatpush1.bf16.msra.mxu0 %v1457
    %1685 = vmatprep.subr.bf16.mxu0 0
    %1686 = vmatpush1.bf16.msra.mxu0 %v1458
    %1687 = vmatprep.subr.bf16.mxu0 0
    %1688 = vmatpush1.bf16.msra.mxu0 %v1459
    %1689 = vmatprep.subr.bf16.mxu0 0
    %1690 = vmatpush1.bf16.msra.mxu0 %v1460
    %1691 = vmatprep.subr.bf16.mxu0 0
    %1692 = vmatpush1.bf16.msra.mxu0 %v1461
    %1693 = vmatprep.subr.bf16.mxu0 0
    %1694 = vmatpush1.bf16.msra.mxu0 %v1462
    %1695 = vmatprep.mubr.bf16.mxu0 %v932
    %1696 = vmatmul.mubr.bf16.gmra.mrb[0].mxu0 %v931
    %v1697 = vpop.f32.mrb[0].mxu0
    %v1698 = vadd.f32 %v1610, %v1697
    %v1699 = vpop.f32.mrb[0].mxu0
    %v1700 = vpop.f32.mrb[0].mxu0
    %v1701 = vadd.f32 %v1613, %v1700
    %v1702 = vpop.f32.mrb[0].mxu0
    %1703 = vmatprep.mubr.bf16.mxu0 %v941
    %1704 = vmatmul.mubr.bf16.gmra.mrb[0].mxu0 %v940
    %v1705 = vpop.f32.mrb[0].mxu0
    %v1706 = vadd.f32 %v1618, %v1705
    %v1707 = vpop.f32.mrb[0].mxu0
    %v1708 = vpop.f32.mrb[0].mxu0
    %v1709 = vadd.f32 %v1621, %v1708
    %v1710 = vpop.f32.mrb[0].mxu0
    %1711 = vmatprep.mubr.bf16.mxu0 %v950
    %1712 = vmatmul.mubr.bf16.gmra.mrb[0].mxu0 %v949
    %v1713 = vpop.f32.mrb[0].mxu0
    %v1714 = vadd.f32 %v1626, %v1713
    %v1715 = vpop.f32.mrb[0].mxu0
    %v1716 = vpop.f32.mrb[0].mxu0
    %v1717 = vadd.f32 %v1629, %v1716
    %v1718 = vpop.f32.mrb[0].mxu0
    %1719 = vmatprep.mubr.bf16.mxu0 %v959
    %1720 = vmatmul.mubr.bf16.gmra.mrb[0].mxu0 %v958
    %v1721 = vpop.f32.mrb[0].mxu0
    %v1722 = vadd.f32 %v1634, %v1721
    %v1723 = vpop.f32.mrb[0].mxu0
    %v1724 = vpop.f32.mrb[0].mxu0
    %v1725 = vadd.f32 %v1637, %v1724
    %v1726 = vpop.f32.mrb[0].mxu0
    %1727 = vmatprep.mubr.bf16.mxu0 %v968
    %1728 = vmatmul.mubr.bf16.gmra.mrb[0].mxu0 %v967
    %v1729 = vpop.f32.mrb[0].mxu0
    %v1730 = vadd.f32 %v1642, %v1729
    %v1731 = vpop.f32.mrb[0].mxu0
    %v1732 = vpop.f32.mrb[0].mxu0
    %v1733 = vadd.f32 %v1645, %v1732
    %v1734 = vpop.f32.mrb[0].mxu0
    %1735 = vmatprep.mubr.bf16.mxu0 %v977
    %1736 = vmatmul.mubr.bf16.gmra.mrb[0].mxu0 %v976
    %v1737 = vpop.f32.mrb[0].mxu0
    %v1738 = vadd.f32 %v1650, %v1737
    %v1739 = vpop.f32.mrb[0].mxu0
    %v1740 = vpop.f32.mrb[0].mxu0
    %v1741 = vadd.f32 %v1653, %v1740
    %v1742 = vpop.f32.mrb[0].mxu0
    %1743 = vmatprep.mubr.bf16.mxu0 %v986
    %1744 = vmatmul.mubr.bf16.gmra.mrb[0].mxu0 %v985
    %v1745 = vpop.f32.mrb[0].mxu0
    %v1746 = vadd.f32 %v1658, %v1745
    %v1747 = vpop.f32.mrb[0].mxu0
    %v1748 = vpop.f32.mrb[0].mxu0
    %v1749 = vpop.f32.mrb[0].mxu0
    %1750 = vdwg.mxu0
    %1751 = vmatprep.subr.bf16.mxu0 0
    %1752 = vmatpush1.bf16.msra.mxu0 %v1463
    %1753 = vmatprep.subr.bf16.mxu0 0
    %1754 = vmatpush1.bf16.msra.mxu0 %v1464
    %1755 = vmatprep.subr.bf16.mxu0 0
    %1756 = vmatpush1.bf16.msra.mxu0 %v1465
    %1757 = vmatprep.subr.bf16.mxu0 0
    %1758 = vmatpush1.bf16.msra.mxu0 %v1466
    %1759 = vmatprep.subr.bf16.mxu0 0
    %1760 = vmatpush1.bf16.msra.mxu0 %v1467
    %1761 = vmatprep.subr.bf16.mxu0 0
    %1762 = vmatpush1.bf16.msra.mxu0 %v1468
    %1763 = vmatprep.subr.bf16.mxu0 0
    %1764 = vmatpush1.bf16.msra.mxu0 %v1469
    %1765 = vmatprep.subr.bf16.mxu0 0
    %1766 = vmatpush1.bf16.msra.mxu0 %v1470
    %1767 = vmatprep.subr.bf16.mxu0 0
    %1768 = vmatpush1.bf16.msra.mxu0 %v1471
    %1769 = vmatprep.subr.bf16.mxu0 0
    %1770 = vmatpush1.bf16.msra.mxu0 %v1472
    %1771 = vmatprep.subr.bf16.mxu0 0
    %1772 = vmatpush1.bf16.msra.mxu0 %v1473
    %1773 = vmatprep.subr.bf16.mxu0 0
    %1774 = vmatpush1.bf16.msra.mxu0 %v1474
    %1775 = vmatprep.subr.bf16.mxu0 0
    %1776 = vmatpush1.bf16.msra.mxu0 %v1475
    %1777 = vmatprep.subr.bf16.mxu0 0
    %1778 = vmatpush1.bf16.msra.mxu0 %v1476
    %1779 = vmatprep.subr.bf16.mxu0 0
    %1780 = vmatpush1.bf16.msra.mxu0 %v1477
    %1781 = vmatprep.subr.bf16.mxu0 0
    %1782 = vmatpush1.bf16.msra.mxu0 %v1478
    %1783 = vmatprep.mubr.bf16.mxu0 %v934
    %1784 = vmatmul.mubr.bf16.gmra.mrb[0].mxu0 %v933
    %v1785 = vpop.f32.mrb[0].mxu0
    %v1786 = vadd.f32 %v1698, %v1785
    %v1787 = vpop.f32.mrb[0].mxu0
    %v1788 = vpop.f32.mrb[0].mxu0
    %v1789 = vadd.f32 %v1701, %v1788
    %v1790 = vpop.f32.mrb[0].mxu0
    %1791 = vmatprep.mubr.bf16.mxu0 %v943
    %1792 = vmatmul.mubr.bf16.gmra.mrb[0].mxu0 %v942
    %v1793 = vpop.f32.mrb[0].mxu0
    %v1794 = vadd.f32 %v1706, %v1793
    %v1795 = vpop.f32.mrb[0].mxu0
    %v1796 = vpop.f32.mrb[0].mxu0
    %v1797 = vadd.f32 %v1709, %v1796
    %v1798 = vpop.f32.mrb[0].mxu0
    %1799 = vmatprep.mubr.bf16.mxu0 %v952
    %1800 = vmatmul.mubr.bf16.gmra.mrb[0].mxu0 %v951
    %v1801 = vpop.f32.mrb[0].mxu0
    %v1802 = vadd.f32 %v1714, %v1801
    %v1803 = vpop.f32.mrb[0].mxu0
    %v1804 = vpop.f32.mrb[0].mxu0
    %v1805 = vadd.f32 %v1717, %v1804
    %v1806 = vpop.f32.mrb[0].mxu0
    %1807 = vmatprep.mubr.bf16.mxu0 %v961
    %1808 = vmatmul.mubr.bf16.gmra.mrb[0].mxu0 %v960
    %v1809 = vpop.f32.mrb[0].mxu0
    %v1810 = vadd.f32 %v1722, %v1809
    %v1811 = vpop.f32.mrb[0].mxu0
    %v1812 = vpop.f32.mrb[0].mxu0
    %v1813 = vadd.f32 %v1725, %v1812
    %v1814 = vpop.f32.mrb[0].mxu0
    %1815 = vmatprep.mubr.bf16.mxu0 %v970
    %1816 = vmatmul.mubr.bf16.gmra.mrb[0].mxu0 %v969
    %v1817 = vpop.f32.mrb[0].mxu0
    %v1818 = vadd.f32 %v1730, %v1817
    %v1819 = vpop.f32.mrb[0].mxu0
    %v1820 = vpop.f32.mrb[0].mxu0
    %v1821 = vadd.f32 %v1733, %v1820
    %v1822 = vpop.f32.mrb[0].mxu0
    %1823 = vmatprep.mubr.bf16.mxu0 %v979
    %1824 = vmatmul.mubr.bf16.gmra.mrb[0].mxu0 %v978
    %v1825 = vpop.f32.mrb[0].mxu0
    %v1826 = vadd.f32 %v1738, %v1825
    %v1827 = vpop.f32.mrb[0].mxu0
    %v1828 = vpop.f32.mrb[0].mxu0
    %v1829 = vadd.f32 %v1741, %v1828
    %v1830 = vpop.f32.mrb[0].mxu0
    %1831 = vmatprep.mubr.bf16.mxu0 %v988
    %1832 = vmatmul.mubr.bf16.gmra.mrb[0].mxu0 %v987
    %v1833 = vpop.f32.mrb[0].mxu0
    %v1834 = vadd.f32 %v1746, %v1833
    %v1835 = vpop.f32.mrb[0].mxu0
    %v1836 = vpop.f32.mrb[0].mxu0
    %v1837 = vpop.f32.mrb[0].mxu0
    %1838 = vdwg.mxu0
    %1839 = vmatprep.subr.bf16.mxu0 0
    %1840 = vmatpush1.bf16.msra.mxu0 %v1479
    %1841 = vmatprep.subr.bf16.mxu0 0
    %1842 = vmatpush1.bf16.msra.mxu0 %v1480
    %1843 = vmatprep.subr.bf16.mxu0 0
    %1844 = vmatpush1.bf16.msra.mxu0 %v1481
    %1845 = vmatprep.subr.bf16.mxu0 0
    %1846 = vmatpush1.bf16.msra.mxu0 %v1482
    %1847 = vmatprep.subr.bf16.mxu0 0
    %1848 = vmatpush1.bf16.msra.mxu0 %v1483
    %1849 = vmatprep.subr.bf16.mxu0 0
    %1850 = vmatpush1.bf16.msra.mxu0 %v1484
    %1851 = vmatprep.subr.bf16.mxu0 0
    %1852 = vmatpush1.bf16.msra.mxu0 %v1485
    %1853 = vmatprep.subr.bf16.mxu0 0
    %1854 = vmatpush1.bf16.msra.mxu0 %v1486
    %1855 = vmatprep.subr.bf16.mxu0 0
    %1856 = vmatpush1.bf16.msra.mxu0 %v1487
    %1857 = vmatprep.subr.bf16.mxu0 0
    %1858 = vmatpush1.bf16.msra.mxu0 %v1488
    %1859 = vmatprep.subr.bf16.mxu0 0
    %1860 = vmatpush1.bf16.msra.mxu0 %v1489
    %1861 = vmatprep.subr.bf16.mxu0 0
    %1862 = vmatpush1.bf16.msra.mxu0 %v1490
    %1863 = vmatprep.subr.bf16.mxu0 0
    %1864 = vmatpush1.bf16.msra.mxu0 %v1491
    %1865 = vmatprep.subr.bf16.mxu0 0
    %1866 = vmatpush1.bf16.msra.mxu0 %v1492
    %1867 = vmatprep.subr.bf16.mxu0 0
    %1868 = vmatpush1.bf16.msra.mxu0 %v1493
    %1869 = vmatprep.subr.bf16.mxu0 0
    %1870 = vmatpush1.bf16.msra.mxu0 %v1494
    %1871 = vmatprep.mubr.bf16.mxu0 %v936
    %1872 = vmatmul.mubr.bf16.gmra.mrb[0].mxu0 %v935
    %v1873 = vpop.f32.mrb[0].mxu0
    %v1874 = vadd.f32 %v1786, %v1873
    %v1875 = vpop.f32.mrb[0].mxu0
    %v1876 = vpop.f32.mrb[0].mxu0
    %v1877 = vadd.f32 %v1789, %v1876
    %v1878 = vpop.f32.mrb[0].mxu0
    %1879 = vmatprep.mubr.bf16.mxu0 %v945
    %1880 = vmatmul.mubr.bf16.gmra.mrb[0].mxu0 %v944
    %v1881 = vpop.f32.mrb[0].mxu0
    %v1882 = vadd.f32 %v1794, %v1881
    %v1883 = vpop.f32.mrb[0].mxu0
    %v1884 = vpop.f32.mrb[0].mxu0
    %v1885 = vadd.f32 %v1797, %v1884
    %v1886 = vpop.f32.mrb[0].mxu0
    %1887 = vmatprep.mubr.bf16.mxu0 %v954
    %1888 = vmatmul.mubr.bf16.gmra.mrb[0].mxu0 %v953
    %v1889 = vpop.f32.mrb[0].mxu0
    %v1890 = vadd.f32 %v1802, %v1889
    %v1891 = vpop.f32.mrb[0].mxu0
    %v1892 = vpop.f32.mrb[0].mxu0
    %v1893 = vadd.f32 %v1805, %v1892
    %v1894 = vpop.f32.mrb[0].mxu0
    %1895 = vmatprep.mubr.bf16.mxu0 %v963
    %1896 = vmatmul.mubr.bf16.gmra.mrb[0].mxu0 %v962
    %v1897 = vpop.f32.mrb[0].mxu0
    %v1898 = vadd.f32 %v1810, %v1897
    %v1899 = vpop.f32.mrb[0].mxu0
    %v1900 = vpop.f32.mrb[0].mxu0
    %v1901 = vadd.f32 %v1813, %v1900
    %v1902 = vpop.f32.mrb[0].mxu0
    %1903 = vmatprep.mubr.bf16.mxu0 %v972
    %1904 = vmatmul.mubr.bf16.gmra.mrb[0].mxu0 %v971
    %v1905 = vpop.f32.mrb[0].mxu0
    %v1906 = vadd.f32 %v1818, %v1905
    %v1907 = vpop.f32.mrb[0].mxu0
    %v1908 = vpop.f32.mrb[0].mxu0
    %v1909 = vadd.f32 %v1821, %v1908
    %v1910 = vpop.f32.mrb[0].mxu0
    %1911 = vmatprep.mubr.bf16.mxu0 %v981
    %1912 = vmatmul.mubr.bf16.gmra.mrb[0].mxu0 %v980
    %v1913 = vpop.f32.mrb[0].mxu0
    %v1914 = vadd.f32 %v1826, %v1913
    %v1915 = vpop.f32.mrb[0].mxu0
    %v1916 = vpop.f32.mrb[0].mxu0
    %v1917 = vadd.f32 %v1829, %v1916
    %v1918 = vpop.f32.mrb[0].mxu0
    %1919 = vmatprep.mubr.bf16.mxu0 %v990
    %1920 = vmatmul.mubr.bf16.gmra.mrb[0].mxu0 %v989
    %v1921 = vpop.f32.mrb[0].mxu0
    %v1922 = vadd.f32 %v1834, %v1921
    %v1923 = vpop.f32.mrb[0].mxu0
    %v1924 = vpop.f32.mrb[0].mxu0
    %v1925 = vpop.f32.mrb[0].mxu0
    %1926 = vdwg.mxu0
    %1927 = vmatprep.subr.bf16.mxu0 0
    %1928 = vmatpush1.bf16.msra.mxu0 %v1495
    %1929 = vmatprep.subr.bf16.mxu0 0
    %1930 = vmatpush1.bf16.msra.mxu0 %v1496
    %1931 = vmatprep.subr.bf16.mxu0 0
    %1932 = vmatpush1.bf16.msra.mxu0 %v1497
    %1933 = vmatprep.subr.bf16.mxu0 0
    %1934 = vmatpush1.bf16.msra.mxu0 %v1498
    %1935 = vmatprep.subr.bf16.mxu0 0
    %1936 = vmatpush1.bf16.msra.mxu0 %v1499
    %1937 = vmatprep.subr.bf16.mxu0 0
    %1938 = vmatpush1.bf16.msra.mxu0 %v1500
    %1939 = vmatprep.subr.bf16.mxu0 0
    %1940 = vmatpush1.bf16.msra.mxu0 %v1501
    %1941 = vmatprep.subr.bf16.mxu0 0
    %1942 = vmatpush1.bf16.msra.mxu0 %v1502
    %1943 = vmatprep.subr.bf16.mxu0 0
    %1944 = vmatpush1.bf16.msra.mxu0 0
    %1945 = vmatprep.subr.bf16.mxu0 0
    %1946 = vmatpush1.bf16.msra.mxu0 0
    %1947 = vmatprep.subr.bf16.mxu0 0
    %1948 = vmatpush1.bf16.msra.mxu0 0
    %1949 = vmatprep.subr.bf16.mxu0 0
    %1950 = vmatpush1.bf16.msra.mxu0 0
    %1951 = vmatprep.subr.bf16.mxu0 0
    %1952 = vmatpush1.bf16.msra.mxu0 0
    %1953 = vmatprep.subr.bf16.mxu0 0
    %1954 = vmatpush1.bf16.msra.mxu0 0
    %1955 = vmatprep.subr.bf16.mxu0 0
    %1956 = vmatpush1.bf16.msra.mxu0 0
    %1957 = vmatprep.subr.bf16.mxu0 0
    %1958 = vmatpush1.bf16.msra.mxu0 0
    %1959 = vmatprep.mubr.bf16.mxu0 0
    %1960 = vmatmul.mubr.bf16.gmra.mrb[0].mxu0 %v937
    %v1961 = vpop.f32.mrb[0].mxu0
    %v1962 = vadd.f32 %v1874, %v1961
    %v1963 = vpop.f32.mrb[0].mxu0
    %v1964 = vpop.f32.mrb[0].mxu0
    %v1965 = vadd.f32 %v1877, %v1964
    %v1966 = vpop.f32.mrb[0].mxu0
    %1967 = vmatprep.mubr.bf16.mxu0 0
    %1968 = vmatmul.mubr.bf16.gmra.mrb[0].mxu0 %v946
    %v1969 = vpop.f32.mrb[0].mxu0
    %v1970 = vadd.f32 %v1882, %v1969
    %v1971 = vpop.f32.mrb[0].mxu0
    %v1972 = vpop.f32.mrb[0].mxu0
    %v1973 = vadd.f32 %v1885, %v1972
    %v1974 = vpop.f32.mrb[0].mxu0
    %1975 = vmatprep.mubr.bf16.mxu0 0
    %1976 = vmatmul.mubr.bf16.gmra.mrb[0].mxu0 %v955
    %v1977 = vpop.f32.mrb[0].mxu0
    %v1978 = vadd.f32 %v1890, %v1977
    %v1979 = vpop.f32.mrb[0].mxu0
    %v1980 = vpop.f32.mrb[0].mxu0
    %v1981 = vadd.f32 %v1893, %v1980
    %v1982 = vpop.f32.mrb[0].mxu0
    %1983 = vmatprep.mubr.bf16.mxu0 0
    %1984 = vmatmul.mubr.bf16.gmra.mrb[0].mxu0 %v964
    %v1985 = vpop.f32.mrb[0].mxu0
    %v1986 = vadd.f32 %v1898, %v1985
    %v1987 = vpop.f32.mrb[0].mxu0
    %v1988 = vpop.f32.mrb[0].mxu0
    %v1989 = vadd.f32 %v1901, %v1988
    %v1990 = vpop.f32.mrb[0].mxu0
    %1991 = vmatprep.mubr.bf16.mxu0 0
    %1992 = vmatmul.mubr.bf16.gmra.mrb[0].mxu0 %v973
    %v1993 = vpop.f32.mrb[0].mxu0
    %v1994 = vadd.f32 %v1906, %v1993
    %v1995 = vpop.f32.mrb[0].mxu0
    %v1996 = vpop.f32.mrb[0].mxu0
    %v1997 = vadd.f32 %v1909, %v1996
    %v1998 = vpop.f32.mrb[0].mxu0
    %1999 = vmatprep.mubr.bf16.mxu0 0
    %2000 = vmatmul.mubr.bf16.gmra.mrb[0].mxu0 %v982
    %v2001 = vpop.f32.mrb[0].mxu0
    %v2002 = vadd.f32 %v1914, %v2001
    %v2003 = vpop.f32.mrb[0].mxu0
    %v2004 = vpop.f32.mrb[0].mxu0
    %v2005 = vadd.f32 %v1917, %v2004
    %v2006 = vpop.f32.mrb[0].mxu0
    %2007 = vmatprep.mubr.bf16.mxu0 0
    %2008 = vmatmul.mubr.bf16.gmra.mrb[0].mxu0 %v991
    %v2009 = vpop.f32.mrb[0].mxu0
    %v2010 = vadd.f32 %v1922, %v2009
    %v2011 = vpop.f32.mrb[0].mxu0
    %v2012 = vpop.f32.mrb[0].mxu0
    %v2013 = vpop.f32.mrb[0].mxu0
    %2014 = vdwg.mxu0
    %v2015 = vmul.f32 %v1962, 0.5
    %v2016 = vmul.f32 %v1965, 0.5
    %v2017 = vmul.f32 %v1970, 0.5
    %v2018 = vmul.f32 %v1973, 0.5
    %v2019 = vmul.f32 %v1978, 0.5
    %v2020 = vmul.f32 %v1981, 0.5
    %v2021 = vmul.f32 %v1986, 0.5
    %v2022 = vmul.f32 %v1989, 0.5
    %v2023 = vmul.f32 %v1994, 0.5
    %v2024 = vmul.f32 %v1997, 0.5
    %v2025 = vmul.f32 %v2002, 0.5
    %v2026 = vmul.f32 %v2005, 0.5
    %v2027 = vmul.f32 %v2010, 0.5
    %v2028 = vmul.f32 %v1962, 0.70710677
    %v2029 = vmul.f32 %v1965, 0.70710677
    %v2030 = vmul.f32 %v1970, 0.70710677
    %v2031 = vmul.f32 %v1973, 0.70710677
    %v2032 = vmul.f32 %v1978, 0.70710677
    %v2033 = vmul.f32 %v1981, 0.70710677
    %v2034 = vmul.f32 %v1986, 0.70710677
    %v2035 = vmul.f32 %v1989, 0.70710677
    %v2036 = vmul.f32 %v1994, 0.70710677
    %v2037 = vmul.f32 %v1997, 0.70710677
    %v2038 = vmul.f32 %v2002, 0.70710677
    %v2039 = vmul.f32 %v2005, 0.70710677
    %v2040 = vmul.f32 %v2010, 0.70710677
    %vm2041 = vcmp.ge.f32.partialorder %v2028, 0.0
    %vm2042 = vcmp.ge.f32.partialorder %v2029, 0.0
    %vm2043 = vcmp.ge.f32.partialorder %v2030, 0.0
    %vm2044 = vcmp.ge.f32.partialorder %v2031, 0.0
    %vm2045 = vcmp.ge.f32.partialorder %v2032, 0.0
    %vm2046 = vcmp.ge.f32.partialorder %v2033, 0.0
    %vm2047 = vcmp.ge.f32.partialorder %v2034, 0.0
    %vm2048 = vcmp.ge.f32.partialorder %v2035, 0.0
    %vm2049 = vcmp.ge.f32.partialorder %v2036, 0.0
    %vm2050 = vcmp.ge.f32.partialorder %v2037, 0.0
    %vm2051 = vcmp.ge.f32.partialorder %v2038, 0.0
    %vm2052 = vcmp.ge.f32.partialorder %v2039, 0.0
    %vm2053 = vcmp.ge.f32.partialorder %v2040, 0.0
    %v2054 = vsel %vm2041, 1.0, -1.0
    %v2055 = vsel %vm2042, 1.0, -1.0
    %v2056 = vsel %vm2043, 1.0, -1.0
    %v2057 = vsel %vm2044, 1.0, -1.0
    %v2058 = vsel %vm2045, 1.0, -1.0
    %v2059 = vsel %vm2046, 1.0, -1.0
    %v2060 = vsel %vm2047, 1.0, -1.0
    %v2061 = vsel %vm2048, 1.0, -1.0
    %v2062 = vsel %vm2049, 1.0, -1.0
    %v2063 = vsel %vm2050, 1.0, -1.0
    %v2064 = vsel %vm2051, 1.0, -1.0
    %v2065 = vsel %vm2052, 1.0, -1.0
    %v2066 = vsel %vm2053, 1.0, -1.0
    %v2067 = vand.u32 2147483647, %v2028
    %v2068 = vand.u32 2147483647, %v2029
    %v2069 = vand.u32 2147483647, %v2030
    %v2070 = vand.u32 2147483647, %v2031
    %v2071 = vand.u32 2147483647, %v2032
    %v2072 = vand.u32 2147483647, %v2033
    %v2073 = vand.u32 2147483647, %v2034
    %v2074 = vand.u32 2147483647, %v2035
    %v2075 = vand.u32 2147483647, %v2036
    %v2076 = vand.u32 2147483647, %v2037
    %v2077 = vand.u32 2147483647, %v2038
    %v2078 = vand.u32 2147483647, %v2039
    %v2079 = vand.u32 2147483647, %v2040
    %v2080 = vmul.f32 %v2067, 0.3275911
    %v2081 = vmul.f32 %v2068, 0.3275911
    %v2082 = vmul.f32 %v2069, 0.3275911
    %v2083 = vmul.f32 %v2070, 0.3275911
    %v2084 = vmul.f32 %v2071, 0.3275911
    %v2085 = vmul.f32 %v2072, 0.3275911
    %v2086 = vmul.f32 %v2073, 0.3275911
    %v2087 = vmul.f32 %v2074, 0.3275911
    %v2088 = vmul.f32 %v2075, 0.3275911
    %v2089 = vmul.f32 %v2076, 0.3275911
    %v2090 = vmul.f32 %v2077, 0.3275911
    %v2091 = vmul.f32 %v2078, 0.3275911
    %v2092 = vmul.f32 %v2079, 0.3275911
    %v2093 = vadd.f32 %v2080, 1.0
    %v2094 = vadd.f32 %v2081, 1.0
    %v2095 = vadd.f32 %v2082, 1.0
    %v2096 = vadd.f32 %v2083, 1.0
    %v2097 = vadd.f32 %v2084, 1.0
    %v2098 = vadd.f32 %v2085, 1.0
    %v2099 = vadd.f32 %v2086, 1.0
    %v2100 = vadd.f32 %v2087, 1.0
    %v2101 = vadd.f32 %v2088, 1.0
    %v2102 = vadd.f32 %v2089, 1.0
    %v2103 = vadd.f32 %v2090, 1.0
    %v2104 = vadd.f32 %v2091, 1.0
    %v2105 = vadd.f32 %v2092, 1.0
    %v2106 = vrcp.pop %v2093
    %v2107 = vrcp.pop %v2094
    %v2108 = vrcp.pop %v2095
    %v2109 = vrcp.pop %v2096
    %v2110 = vrcp.pop %v2097
    %v2111 = vrcp.pop %v2098
    %v2112 = vrcp.pop %v2099
    %v2113 = vrcp.pop %v2100
    %v2114 = vrcp.pop %v2101
    %v2115 = vrcp.pop %v2102
    %v2116 = vrcp.pop %v2103
    %v2117 = vrcp.pop %v2104
    %v2118 = vrcp.pop %v2105
    %v2119 = vmul.f32 %v2106, 1.0614054
    %v2120 = vmul.f32 %v2107, 1.0614054
    %v2121 = vmul.f32 %v2108, 1.0614054
    %v2122 = vmul.f32 %v2109, 1.0614054
    %v2123 = vmul.f32 %v2110, 1.0614054
    %v2124 = vmul.f32 %v2111, 1.0614054
    %v2125 = vmul.f32 %v2112, 1.0614054
    %v2126 = vmul.f32 %v2113, 1.0614054
    %v2127 = vmul.f32 %v2114, 1.0614054
    %v2128 = vmul.f32 %v2115, 1.0614054
    %v2129 = vmul.f32 %v2116, 1.0614054
    %v2130 = vmul.f32 %v2117, 1.0614054
    %v2131 = vmul.f32 %v2118, 1.0614054
    %v2132 = vadd.f32 %v2119, -1.4531521
    %v2133 = vadd.f32 %v2120, -1.4531521
    %v2134 = vadd.f32 %v2121, -1.4531521
    %v2135 = vadd.f32 %v2122, -1.4531521
    %v2136 = vadd.f32 %v2123, -1.4531521
    %v2137 = vadd.f32 %v2124, -1.4531521
    %v2138 = vadd.f32 %v2125, -1.4531521
    %v2139 = vadd.f32 %v2126, -1.4531521
    %v2140 = vadd.f32 %v2127, -1.4531521
    %v2141 = vadd.f32 %v2128, -1.4531521
    %v2142 = vadd.f32 %v2129, -1.4531521
    %v2143 = vadd.f32 %v2130, -1.4531521
    %v2144 = vadd.f32 %v2131, -1.4531521
    %v2145 = vmul.f32 %v2132, %v2106
    %v2146 = vmul.f32 %v2133, %v2107
    %v2147 = vmul.f32 %v2134, %v2108
    %v2148 = vmul.f32 %v2135, %v2109
    %v2149 = vmul.f32 %v2136, %v2110
    %v2150 = vmul.f32 %v2137, %v2111
    %v2151 = vmul.f32 %v2138, %v2112
    %v2152 = vmul.f32 %v2139, %v2113
    %v2153 = vmul.f32 %v2140, %v2114
    %v2154 = vmul.f32 %v2141, %v2115
    %v2155 = vmul.f32 %v2142, %v2116
    %v2156 = vmul.f32 %v2143, %v2117
    %v2157 = vmul.f32 %v2144, %v2118
    %v2158 = vadd.f32 %v2145, 1.4214138
    %v2159 = vadd.f32 %v2146, 1.4214138
    %v2160 = vadd.f32 %v2147, 1.4214138
    %v2161 = vadd.f32 %v2148, 1.4214138
    %v2162 = vadd.f32 %v2149, 1.4214138
    %v2163 = vadd.f32 %v2150, 1.4214138
    %v2164 = vadd.f32 %v2151, 1.4214138
    %v2165 = vadd.f32 %v2152, 1.4214138
    %v2166 = vadd.f32 %v2153, 1.4214138
    %v2167 = vadd.f32 %v2154, 1.4214138
    %v2168 = vadd.f32 %v2155, 1.4214138
    %v2169 = vadd.f32 %v2156, 1.4214138
    %v2170 = vadd.f32 %v2157, 1.4214138
    %v2171 = vmul.f32 %v2158, %v2106
    %v2172 = vmul.f32 %v2159, %v2107
    %v2173 = vmul.f32 %v2160, %v2108
    %v2174 = vmul.f32 %v2161, %v2109
    %v2175 = vmul.f32 %v2162, %v2110
    %v2176 = vmul.f32 %v2163, %v2111
    %v2177 = vmul.f32 %v2164, %v2112
    %v2178 = vmul.f32 %v2165, %v2113
    %v2179 = vmul.f32 %v2166, %v2114
    %v2180 = vmul.f32 %v2167, %v2115
    %v2181 = vmul.f32 %v2168, %v2116
    %v2182 = vmul.f32 %v2169, %v2117
    %v2183 = vmul.f32 %v2170, %v2118
    %v2184 = vadd.f32 %v2171, -0.28449672
    %v2185 = vadd.f32 %v2172, -0.28449672
    %v2186 = vadd.f32 %v2173, -0.28449672
    %v2187 = vadd.f32 %v2174, -0.28449672
    %v2188 = vadd.f32 %v2175, -0.28449672
    %v2189 = vadd.f32 %v2176, -0.28449672
    %v2190 = vadd.f32 %v2177, -0.28449672
    %v2191 = vadd.f32 %v2178, -0.28449672
    %v2192 = vadd.f32 %v2179, -0.28449672
    %v2193 = vadd.f32 %v2180, -0.28449672
    %v2194 = vadd.f32 %v2181, -0.28449672
    %v2195 = vadd.f32 %v2182, -0.28449672
    %v2196 = vadd.f32 %v2183, -0.28449672
    %v2197 = vmul.f32 %v2184, %v2106
    %v2198 = vmul.f32 %v2185, %v2107
    %v2199 = vmul.f32 %v2186, %v2108
    %v2200 = vmul.f32 %v2187, %v2109
    %v2201 = vmul.f32 %v2188, %v2110
    %v2202 = vmul.f32 %v2189, %v2111
    %v2203 = vmul.f32 %v2190, %v2112
    %v2204 = vmul.f32 %v2191, %v2113
    %v2205 = vmul.f32 %v2192, %v2114
    %v2206 = vmul.f32 %v2193, %v2115
    %v2207 = vmul.f32 %v2194, %v2116
    %v2208 = vmul.f32 %v2195, %v2117
    %v2209 = vmul.f32 %v2196, %v2118
    %v2210 = vadd.f32 %v2197, 0.2548296
    %v2211 = vadd.f32 %v2198, 0.2548296
    %v2212 = vadd.f32 %v2199, 0.2548296
    %v2213 = vadd.f32 %v2200, 0.2548296
    %v2214 = vadd.f32 %v2201, 0.2548296
    %v2215 = vadd.f32 %v2202, 0.2548296
    %v2216 = vadd.f32 %v2203, 0.2548296
    %v2217 = vadd.f32 %v2204, 0.2548296
    %v2218 = vadd.f32 %v2205, 0.2548296
    %v2219 = vadd.f32 %v2206, 0.2548296
    %v2220 = vadd.f32 %v2207, 0.2548296
    %v2221 = vadd.f32 %v2208, 0.2548296
    %v2222 = vadd.f32 %v2209, 0.2548296
    %v2223 = vmul.f32 %v2210, %v2106
    %v2224 = vmul.f32 %v2211, %v2107
    %v2225 = vmul.f32 %v2212, %v2108
    %v2226 = vmul.f32 %v2213, %v2109
    %v2227 = vmul.f32 %v2214, %v2110
    %v2228 = vmul.f32 %v2215, %v2111
    %v2229 = vmul.f32 %v2216, %v2112
    %v2230 = vmul.f32 %v2217, %v2113
    %v2231 = vmul.f32 %v2218, %v2114
    %v2232 = vmul.f32 %v2219, %v2115
    %v2233 = vmul.f32 %v2220, %v2116
    %v2234 = vmul.f32 %v2221, %v2117
    %v2235 = vmul.f32 %v2222, %v2118
    %v2236 = vsub.f32 0.0, %v2067
    %v2237 = vsub.f32 0.0, %v2068
    %v2238 = vsub.f32 0.0, %v2069
    %v2239 = vsub.f32 0.0, %v2070
    %v2240 = vsub.f32 0.0, %v2071
    %v2241 = vsub.f32 0.0, %v2072
    %v2242 = vsub.f32 0.0, %v2073
    %v2243 = vsub.f32 0.0, %v2074
    %v2244 = vsub.f32 0.0, %v2075
    %v2245 = vsub.f32 0.0, %v2076
    %v2246 = vsub.f32 0.0, %v2077
    %v2247 = vsub.f32 0.0, %v2078
    %v2248 = vsub.f32 0.0, %v2079
    %v2249 = vmul.f32 %v2236, %v2067
    %v2250 = vmul.f32 %v2237, %v2068
    %v2251 = vmul.f32 %v2238, %v2069
    %v2252 = vmul.f32 %v2239, %v2070
    %v2253 = vmul.f32 %v2240, %v2071
    %v2254 = vmul.f32 %v2241, %v2072
    %v2255 = vmul.f32 %v2242, %v2073
    %v2256 = vmul.f32 %v2243, %v2074
    %v2257 = vmul.f32 %v2244, %v2075
    %v2258 = vmul.f32 %v2245, %v2076
    %v2259 = vmul.f32 %v2246, %v2077
    %v2260 = vmul.f32 %v2247, %v2078
    %v2261 = vmul.f32 %v2248, %v2079
    %v2262 = vmul.f32 %v2249, 1.442695
    %v2263 = vpow.pop %v2262
    %v2264 = vmul.f32 %v2250, 1.442695
    %v2265 = vpow.pop %v2264
    %v2266 = vmul.f32 %v2251, 1.442695
    %v2267 = vpow.pop %v2266
    %v2268 = vmul.f32 %v2252, 1.442695
    %v2269 = vpow.pop %v2268
    %v2270 = vmul.f32 %v2253, 1.442695
    %v2271 = vpow.pop %v2270
    %v2272 = vmul.f32 %v2254, 1.442695
    %v2273 = vpow.pop %v2272
    %v2274 = vmul.f32 %v2255, 1.442695
    %v2275 = vpow.pop %v2274
    %v2276 = vmul.f32 %v2256, 1.442695
    %v2277 = vpow.pop %v2276
    %v2278 = vmul.f32 %v2257, 1.442695
    %v2279 = vpow.pop %v2278
    %v2280 = vmul.f32 %v2258, 1.442695
    %v2281 = vpow.pop %v2280
    %v2282 = vmul.f32 %v2259, 1.442695
    %v2283 = vpow.pop %v2282
    %v2284 = vmul.f32 %v2260, 1.442695
    %v2285 = vpow.pop %v2284
    %v2286 = vmul.f32 %v2261, 1.442695
    %v2287 = vpow.pop %v2286
    %v2288 = vmul.f32 %v2223, %v2263
    %v2289 = vmul.f32 %v2224, %v2265
    %v2290 = vmul.f32 %v2225, %v2267
    %v2291 = vmul.f32 %v2226, %v2269
    %v2292 = vmul.f32 %v2227, %v2271
    %v2293 = vmul.f32 %v2228, %v2273
    %v2294 = vmul.f32 %v2229, %v2275
    %v2295 = vmul.f32 %v2230, %v2277
    %v2296 = vmul.f32 %v2231, %v2279
    %v2297 = vmul.f32 %v2232, %v2281
    %v2298 = vmul.f32 %v2233, %v2283
    %v2299 = vmul.f32 %v2234, %v2285
    %v2300 = vmul.f32 %v2235, %v2287
    %v2301 = vsub.f32 1.0, %v2288
    %v2302 = vsub.f32 1.0, %v2289
    %v2303 = vsub.f32 1.0, %v2290
    %v2304 = vsub.f32 1.0, %v2291
    %v2305 = vsub.f32 1.0, %v2292
    %v2306 = vsub.f32 1.0, %v2293
    %v2307 = vsub.f32 1.0, %v2294
    %v2308 = vsub.f32 1.0, %v2295
    %v2309 = vsub.f32 1.0, %v2296
    %v2310 = vsub.f32 1.0, %v2297
    %v2311 = vsub.f32 1.0, %v2298
    %v2312 = vsub.f32 1.0, %v2299
    %v2313 = vsub.f32 1.0, %v2300
    %v2314 = vmul.f32 %v2054, %v2301
    %v2315 = vmul.f32 %v2055, %v2302
    %v2316 = vmul.f32 %v2056, %v2303
    %v2317 = vmul.f32 %v2057, %v2304
    %v2318 = vmul.f32 %v2058, %v2305
    %v2319 = vmul.f32 %v2059, %v2306
    %v2320 = vmul.f32 %v2060, %v2307
    %v2321 = vmul.f32 %v2061, %v2308
    %v2322 = vmul.f32 %v2062, %v2309
    %v2323 = vmul.f32 %v2063, %v2310
    %v2324 = vmul.f32 %v2064, %v2311
    %v2325 = vmul.f32 %v2065, %v2312
    %v2326 = vmul.f32 %v2066, %v2313
    %v2327 = vadd.f32 %v2314, 1.0
    %v2328 = vadd.f32 %v2315, 1.0
    %v2329 = vadd.f32 %v2316, 1.0
    %v2330 = vadd.f32 %v2317, 1.0
    %v2331 = vadd.f32 %v2318, 1.0
    %v2332 = vadd.f32 %v2319, 1.0
    %v2333 = vadd.f32 %v2320, 1.0
    %v2334 = vadd.f32 %v2321, 1.0
    %v2335 = vadd.f32 %v2322, 1.0
    %v2336 = vadd.f32 %v2323, 1.0
    %v2337 = vadd.f32 %v2324, 1.0
    %v2338 = vadd.f32 %v2325, 1.0
    %v2339 = vadd.f32 %v2326, 1.0
    %v2340 = vmul.f32 %v2015, %v2327
    %v2341 = vmul.f32 %v2016, %v2328
    %v2342 = vmul.f32 %v2017, %v2329
    %v2343 = vmul.f32 %v2018, %v2330
    %v2344 = vmul.f32 %v2019, %v2331
    %v2345 = vmul.f32 %v2020, %v2332
    %v2346 = vmul.f32 %v2021, %v2333
    %v2347 = vmul.f32 %v2022, %v2334
    %v2348 = vmul.f32 %v2023, %v2335
    %v2349 = vmul.f32 %v2024, %v2336
    %v2350 = vmul.f32 %v2025, %v2337
    %v2351 = vmul.f32 %v2026, %v2338
    %v2352 = vmul.f32 %v2027, %v2339
    %2353 = vst [vmem:[#allocation4] sm:$0xff] %v2340
    %2354 = vst [vmem:[#allocation4 + $0x8] sm:$0xff] %v2341
    %2355 = vst [vmem:[#allocation4 + $0x10] sm:$0xff] %v2342
    %2356 = vst [vmem:[#allocation4 + $0x18] sm:$0xff] %v2343
    %2357 = vst [vmem:[#allocation4 + $0x20] sm:$0xff] %v2344
    %2358 = vst [vmem:[#allocation4 + $0x28] sm:$0xff] %v2345
    %2359 = vst [vmem:[#allocation4 + $0x30] sm:$0xff] %v2346
    %2360 = vst [vmem:[#allocation4 + $0x38] sm:$0xff] %v2347
    %2361 = vst [vmem:[#allocation4 + $0x40] sm:$0xff] %v2348
    %2362 = vst [vmem:[#allocation4 + $0x48] sm:$0xff] %v2349
    %2363 = vst [vmem:[#allocation4 + $0x50] sm:$0xff] %v2350
    %2364 = vst [vmem:[#allocation4 + $0x58] sm:$0xff] %v2351
    %2365 = vst [vmem:[#allocation4 + $0x60] sm:$0x3] %v2352
    %v2366 = vld [vmem:[#allocation4] ss:$2 sm:$0x7]
    %2367 = vst [vmem:[#allocation3] sm:$0x7] %v2366
    %s2368 = scalar_lea.vmem [#allocation4], 1
    %v2369 = vld [vmem:[%s2368] ss:$2 sm:$0x7]
    %2370 = vst [vmem:[#allocation3 + $0x8] sm:$0x7] %v2369
    %s2371 = scalar_lea.vmem [#allocation4], 2
    %v2372 = vld [vmem:[%s2371] ss:$2 sm:$0x7]
    %2373 = vst [vmem:[#allocation3 + $0x10] sm:$0x7] %v2372
    %s2374 = scalar_lea.vmem [#allocation4], 7
    %v2375 = vld [vmem:[%s2374] ss:$2 sm:$0x7]
    %2376 = vst [vmem:[#allocation3 + $0x18] sm:$0x7] %v2375
    %s2377 = scalar_lea.vmem [#allocation4], 8
    %v2378 = vld [vmem:[%s2377] ss:$2 sm:$0x7]
    %2379 = vst [vmem:[#allocation3 + $0x20] sm:$0x7] %v2378
    %s2380 = scalar_lea.vmem [#allocation4], 9
    %v2381 = vld [vmem:[%s2380] ss:$2 sm:$0x7]
    %2382 = vst [vmem:[#allocation3 + $0x28] sm:$0x7] %v2381
    %s2383 = scalar_lea.vmem [#allocation4], 14
    %v2384 = vld [vmem:[%s2383] ss:$2 sm:$0x7]
    %2385 = vst [vmem:[#allocation3 + $0x30] sm:$0x7] %v2384
    %s2386 = scalar_lea.vmem [#allocation4], 15
    %v2387 = vld [vmem:[%s2386] ss:$2 sm:$0x7]
    %2388 = vst [vmem:[#allocation3 + $0x38] sm:$0x7] %v2387
    %s2389 = scalar_lea.vmem [#allocation4], 16
    %v2390 = vld [vmem:[%s2389] ss:$2 sm:$0x7]
    %2391 = vst [vmem:[#allocation3 + $0x40] sm:$0x7] %v2390
    %v2392 = vld [vmem:[%s2383] ss:$2 sm:$0x7]
    %v2394 = vrot.slane %v2392, 5
    %2396 = vst [vmem:[#allocation3] sm:$0x38] %v2394
    %v2397 = vld [vmem:[%s2386] ss:$2 sm:$0x7]
    %v2399 = vrot.slane %v2397, 5
    %2401 = vst [vmem:[#allocation3 + $0x8] sm:$0x38] %v2399
    %v2402 = vld [vmem:[%s2389] ss:$2 sm:$0x7]
    %v2404 = vrot.slane %v2402, 5
    %2406 = vst [vmem:[#allocation3 + $0x10] sm:$0x38] %v2404
    %s2407 = scalar_lea.vmem [#allocation4], 21
    %v2408 = vld [vmem:[%s2407] ss:$2 sm:$0x7]
    %v2410 = vrot.slane %v2408, 5
    %2412 = vst [vmem:[#allocation3 + $0x18] sm:$0x38] %v2410
    %s2413 = scalar_lea.vmem [#allocation4], 22
    %v2414 = vld [vmem:[%s2413] ss:$2 sm:$0x7]
    %v2416 = vrot.slane %v2414, 5
    %2418 = vst [vmem:[#allocation3 + $0x20] sm:$0x38] %v2416
    %s2419 = scalar_lea.vmem [#allocation4], 23
    %v2420 = vld [vmem:[%s2419] ss:$2 sm:$0x7]
    %v2422 = vrot.slane %v2420, 5
    %2424 = vst [vmem:[#allocation3 + $0x28] sm:$0x38] %v2422
    %s2425 = scalar_lea.vmem [#allocation4], 28
    %v2426 = vld [vmem:[%s2425] ss:$2 sm:$0x7]
    %v2428 = vrot.slane %v2426, 5
    %2430 = vst [vmem:[#allocation3 + $0x30] sm:$0x38] %v2428
    %s2431 = scalar_lea.vmem [#allocation4], 29
    %v2432 = vld [vmem:[%s2431] ss:$2 sm:$0x7]
    %v2434 = vrot.slane %v2432, 5
    %2436 = vst [vmem:[#allocation3 + $0x38] sm:$0x38] %v2434
    %s2437 = scalar_lea.vmem [#allocation4], 30
    %v2438 = vld [vmem:[%s2437] ss:$2 sm:$0x7]
    %v2440 = vrot.slane %v2438, 5
    %2442 = vst [vmem:[#allocation3 + $0x40] sm:$0x38] %v2440
    %v2443 = vld [vmem:[%s2425] ss:$2 sm:$0x7]
    %v2445 = vrot.slane %v2443, 2
    %2447 = vst [vmem:[#allocation3] sm:$0xc0] %v2445
    %2448 = vst [vmem:[#allocation3 + $0x48] sm:$0x1] %v2445
    %v2449 = vld [vmem:[%s2431] ss:$2 sm:$0x7]
    %v2451 = vrot.slane %v2449, 2
    %2453 = vst [vmem:[#allocation3 + $0x8] sm:$0xc0] %v2451
    %2454 = vst [vmem:[#allocation3 + $0x50] sm:$0x1] %v2451
    %v2455 = vld [vmem:[%s2437] ss:$2 sm:$0x7]
    %v2457 = vrot.slane %v2455, 2
    %2459 = vst [vmem:[#allocation3 + $0x10] sm:$0xc0] %v2457
    %2460 = vst [vmem:[#allocation3 + $0x58] sm:$0x1] %v2457
    %s2461 = scalar_lea.vmem [#allocation4], 35
    %v2462 = vld [vmem:[%s2461] ss:$2 sm:$0x7]
    %v2464 = vrot.slane %v2462, 2
    %2466 = vst [vmem:[#allocation3 + $0x18] sm:$0xc0] %v2464
    %2467 = vst [vmem:[#allocation3 + $0x60] sm:$0x1] %v2464
    %s2468 = scalar_lea.vmem [#allocation4], 36
    %v2469 = vld [vmem:[%s2468] ss:$2 sm:$0x7]
    %v2471 = vrot.slane %v2469, 2
    %2473 = vst [vmem:[#allocation3 + $0x20] sm:$0xc0] %v2471
    %2474 = vst [vmem:[#allocation3 + $0x68] sm:$0x1] %v2471
    %s2475 = scalar_lea.vmem [#allocation4], 37
    %v2476 = vld [vmem:[%s2475] ss:$2 sm:$0x7]
    %v2478 = vrot.slane %v2476, 2
    %2480 = vst [vmem:[#allocation3 + $0x28] sm:$0xc0] %v2478
    %2481 = vst [vmem:[#allocation3 + $0x70] sm:$0x1] %v2478
    %s2482 = scalar_lea.vmem [#allocation4], 42
    %v2483 = vld [vmem:[%s2482] ss:$2 sm:$0x7]
    %v2485 = vrot.slane %v2483, 2
    %2487 = vst [vmem:[#allocation3 + $0x30] sm:$0xc0] %v2485
    %2488 = vst [vmem:[#allocation3 + $0x78] sm:$0x1] %v2485
    %s2489 = scalar_lea.vmem [#allocation4], 43
    %v2490 = vld [vmem:[%s2489] ss:$2 sm:$0x7]
    %v2492 = vrot.slane %v2490, 2
    %2494 = vst [vmem:[#allocation3 + $0x38] sm:$0xc0] %v2492
    %2495 = vst [vmem:[#allocation3 + $0x80] sm:$0x1] %v2492
    %s2496 = scalar_lea.vmem [#allocation4], 44
    %v2497 = vld [vmem:[%s2496] ss:$2 sm:$0x7]
    %v2499 = vrot.slane %v2497, 2
    %2501 = vst [vmem:[#allocation3 + $0x40] sm:$0xc0] %v2499
    %2502 = vst [vmem:[#allocation3 + $0x88] sm:$0x1] %v2499
    %s2503 = scalar_lea.vmem [#allocation4], 49
    %v2504 = vld [vmem:[%s2503] ss:$2 sm:$0x7]
    %v2506 = vrot.slane %v2504, 7
    %2508 = vst [vmem:[#allocation3 + $0x48] sm:$0xe] %v2506
    %s2509 = scalar_lea.vmem [#allocation4], 50
    %v2510 = vld [vmem:[%s2509] ss:$2 sm:$0x7]
    %v2512 = vrot.slane %v2510, 7
    %2514 = vst [vmem:[#allocation3 + $0x50] sm:$0xe] %v2512
    %s2515 = scalar_lea.vmem [#allocation4], 51
    %v2516 = vld [vmem:[%s2515] ss:$2 sm:$0x7]
    %v2518 = vrot.slane %v2516, 7
    %2520 = vst [vmem:[#allocation3 + $0x58] sm:$0xe] %v2518
    %s2521 = scalar_lea.vmem [#allocation4], 56
    %v2522 = vld [vmem:[%s2521] ss:$2 sm:$0x7]
    %v2524 = vrot.slane %v2522, 7
    %2526 = vst [vmem:[#allocation3 + $0x60] sm:$0xe] %v2524
    %s2527 = scalar_lea.vmem [#allocation4], 57
    %v2528 = vld [vmem:[%s2527] ss:$2 sm:$0x7]
    %v2530 = vrot.slane %v2528, 7
    %2532 = vst [vmem:[#allocation3 + $0x68] sm:$0xe] %v2530
    %s2533 = scalar_lea.vmem [#allocation4], 58
    %v2534 = vld [vmem:[%s2533] ss:$2 sm:$0x7]
    %v2536 = vrot.slane %v2534, 7
    %2538 = vst [vmem:[#allocation3 + $0x70] sm:$0xe] %v2536
    %s2539 = scalar_lea.vmem [#allocation4], 63
    %v2540 = vld [vmem:[%s2539] ss:$2 sm:$0x7]
    %v2542 = vrot.slane %v2540, 7
    %2544 = vst [vmem:[#allocation3 + $0x78] sm:$0xe] %v2542
    %s2545 = scalar_lea.vmem [#allocation4], 64
    %v2546 = vld [vmem:[%s2545] ss:$2 sm:$0x7]
    %v2548 = vrot.slane %v2546, 7
    %2550 = vst [vmem:[#allocation3 + $0x80] sm:$0xe] %v2548
    %s2551 = scalar_lea.vmem [#allocation4], 65
    %v2552 = vld [vmem:[%s2551] ss:$2 sm:$0x7]
    %v2554 = vrot.slane %v2552, 7
    %2556 = vst [vmem:[#allocation3 + $0x88] sm:$0xe] %v2554
    %v2557 = vld [vmem:[%s2539] ss:$2 sm:$0x7]
    %v2559 = vrot.slane %v2557, 4
    %2561 = vst [vmem:[#allocation3 + $0x48] sm:$0x70] %v2559
    %v2562 = vld [vmem:[%s2545] ss:$2 sm:$0x7]
    %v2564 = vrot.slane %v2562, 4
    %2566 = vst [vmem:[#allocation3 + $0x50] sm:$0x70] %v2564
    %v2567 = vld [vmem:[%s2551] ss:$2 sm:$0x7]
    %v2569 = vrot.slane %v2567, 4
    %2571 = vst [vmem:[#allocation3 + $0x58] sm:$0x70] %v2569
    %s2572 = scalar_lea.vmem [#allocation4], 70
    %v2573 = vld [vmem:[%s2572] ss:$2 sm:$0x7]
    %v2575 = vrot.slane %v2573, 4
    %2577 = vst [vmem:[#allocation3 + $0x60] sm:$0x70] %v2575
    %s2578 = scalar_lea.vmem [#allocation4], 71
    %v2579 = vld [vmem:[%s2578] ss:$2 sm:$0x7]
    %v2581 = vrot.slane %v2579, 4
    %2583 = vst [vmem:[#allocation3 + $0x68] sm:$0x70] %v2581
    %s2584 = scalar_lea.vmem [#allocation4], 72
    %v2585 = vld [vmem:[%s2584] ss:$2 sm:$0x7]
    %v2587 = vrot.slane %v2585, 4
    %2589 = vst [vmem:[#allocation3 + $0x70] sm:$0x70] %v2587
    %s2590 = scalar_lea.vmem [#allocation4], 77
    %v2591 = vld [vmem:[%s2590] ss:$2 sm:$0x7]
    %v2593 = vrot.slane %v2591, 4
    %2595 = vst [vmem:[#allocation3 + $0x78] sm:$0x70] %v2593
    %s2596 = scalar_lea.vmem [#allocation4], 78
    %v2597 = vld [vmem:[%s2596] ss:$2 sm:$0x7]
    %v2599 = vrot.slane %v2597, 4
    %2601 = vst [vmem:[#allocation3 + $0x80] sm:$0x70] %v2599
    %s2602 = scalar_lea.vmem [#allocation4], 79
    %v2603 = vld [vmem:[%s2602] ss:$2 sm:$0x7]
    %v2605 = vrot.slane %v2603, 4
    %2607 = vst [vmem:[#allocation3 + $0x88] sm:$0x70] %v2605
    %v2608 = vld [vmem:[%s2590] ss:$2 sm:$0x7]
    %v2610 = vrot.slane %v2608, 1
    %2612 = vst [vmem:[#allocation3 + $0x48] sm:$0x80] %v2610
    %2613 = vst [vmem:[#allocation3 + $0x90] sm:$0x3] %v2610
    %v2614 = vld [vmem:[%s2596] ss:$2 sm:$0x7]
    %v2616 = vrot.slane %v2614, 1
    %2618 = vst [vmem:[#allocation3 + $0x50] sm:$0x80] %v2616
    %2619 = vst [vmem:[#allocation3 + $0x98] sm:$0x3] %v2616
    %v2620 = vld [vmem:[%s2602] ss:$2 sm:$0x7]
    %v2622 = vrot.slane %v2620, 1
    %2624 = vst [vmem:[#allocation3 + $0x58] sm:$0x80] %v2622
    %2625 = vst [vmem:[#allocation3 + $0xa0] sm:$0x3] %v2622
    %s2626 = scalar_lea.vmem [#allocation4], 84
    %v2627 = vld [vmem:[%s2626] ss:$2 sm:$0x7]
    %v2629 = vrot.slane %v2627, 1
    %2631 = vst [vmem:[#allocation3 + $0x60] sm:$0x80] %v2629
    %2632 = vst [vmem:[#allocation3 + $0xa8] sm:$0x3] %v2629
    %s2633 = scalar_lea.vmem [#allocation4], 85
    %v2634 = vld [vmem:[%s2633] ss:$2 sm:$0x7]
    %v2636 = vrot.slane %v2634, 1
    %2638 = vst [vmem:[#allocation3 + $0x68] sm:$0x80] %v2636
    %2639 = vst [vmem:[#allocation3 + $0xb0] sm:$0x3] %v2636
    %s2640 = scalar_lea.vmem [#allocation4], 86
    %v2641 = vld [vmem:[%s2640] ss:$2 sm:$0x7]
    %v2643 = vrot.slane %v2641, 1
    %2645 = vst [vmem:[#allocation3 + $0x70] sm:$0x80] %v2643
    %2646 = vst [vmem:[#allocation3 + $0xb8] sm:$0x3] %v2643
    %s2647 = scalar_lea.vmem [#allocation4], 91
    %v2648 = vld [vmem:[%s2647] ss:$2 sm:$0x7]
    %v2650 = vrot.slane %v2648, 1
    %2652 = vst [vmem:[#allocation3 + $0x78] sm:$0x80] %v2650
    %2653 = vst [vmem:[#allocation3 + $0xc0] sm:$0x3] %v2650
    %s2654 = scalar_lea.vmem [#allocation4], 92
    %v2655 = vld [vmem:[%s2654] ss:$2 sm:$0x7]
    %v2657 = vrot.slane %v2655, 1
    %2659 = vst [vmem:[#allocation3 + $0x80] sm:$0x80] %v2657
    %2660 = vst [vmem:[#allocation3 + $0xc8] sm:$0x3] %v2657
    %s2661 = scalar_lea.vmem [#allocation4], 93
    %v2662 = vld [vmem:[%s2661] ss:$2 sm:$0x7]
    %v2664 = vrot.slane %v2662, 1
    %2666 = vst [vmem:[#allocation3 + $0x88] sm:$0x80] %v2664
    %2667 = vst [vmem:[#allocation3 + $0xd0] sm:$0x3] %v2664
    %v2668 = vld [vmem:[#allocation3] sm:$0xff]
    %v2669 = vld [vmem:[#allocation3 + $0x8] sm:$0xff]
    %v2670 = vld [vmem:[#allocation3 + $0x10] sm:$0xff]
    %v2671 = vld [vmem:[#allocation3 + $0x18] sm:$0xff]
    %v2672 = vld [vmem:[#allocation3 + $0x20] sm:$0xff]
    %v2673 = vld [vmem:[#allocation3 + $0x28] sm:$0xff]
    %v2674 = vld [vmem:[#allocation3 + $0x30] sm:$0xff]
    %v2675 = vld [vmem:[#allocation3 + $0x38] sm:$0xff]
    %v2676 = vld [vmem:[#allocation3 + $0x40] sm:$0xff]
    %v2677 = vld [vmem:[#allocation3 + $0x48] sm:$0xff]
    %v2678 = vld [vmem:[#allocation3 + $0x50] sm:$0xff]
    %v2679 = vld [vmem:[#allocation3 + $0x58] sm:$0xff]
    %v2680 = vld [vmem:[#allocation3 + $0x60] sm:$0xff]
    %v2681 = vld [vmem:[#allocation3 + $0x68] sm:$0xff]
    %v2682 = vld [vmem:[#allocation3 + $0x70] sm:$0xff]
    %v2683 = vld [vmem:[#allocation3 + $0x78] sm:$0xff]
    %v2684 = vld [vmem:[#allocation3 + $0x80] sm:$0xff]
    %v2685 = vld [vmem:[#allocation3 + $0x88] sm:$0xff]
    %v2686 = vld [vmem:[#allocation3 + $0x90] sm:$0x3]
    %v2687 = vld [vmem:[#allocation3 + $0x98] sm:$0x3]
    %v2688 = vld [vmem:[#allocation3 + $0xa0] sm:$0x3]
    %v2689 = vld [vmem:[#allocation3 + $0xa8] sm:$0x3]
    %v2690 = vld [vmem:[#allocation3 + $0xb0] sm:$0x3]
    %v2691 = vld [vmem:[#allocation3 + $0xb8] sm:$0x3]
    %v2692 = vld [vmem:[#allocation3 + $0xc0] sm:$0x3]
    %v2693 = vld [vmem:[#allocation3 + $0xc8] sm:$0x3]
    %v2694 = vld [vmem:[#allocation3 + $0xd0] sm:$0x3]
    %v2695 = vpack.c.bf16 %v2677, %v2668
    %v2696 = vpack.c.bf16 %v2678, %v2669
    %v2697 = vpack.c.bf16 %v2679, %v2670
    %v2698 = vpack.c.bf16 %v2680, %v2671
    %v2699 = vpack.c.bf16 %v2681, %v2672
    %v2700 = vpack.c.bf16 %v2682, %v2673
    %v2701 = vpack.c.bf16 %v2683, %v2674
    %v2702 = vpack.c.bf16 %v2684, %v2675
    %v2703 = vpack.c.bf16 %v2685, %v2676
    %v2704 = vpack.c.bf16 %v2686, %v2686
    %v2705 = vpack.c.bf16 %v2687, %v2687
    %v2706 = vpack.c.bf16 %v2688, %v2688
    %v2707 = vpack.c.bf16 %v2689, %v2689
    %v2708 = vpack.c.bf16 %v2690, %v2690
    %v2709 = vpack.c.bf16 %v2691, %v2691
    %v2710 = vpack.c.bf16 %v2692, %v2692
    %v2711 = vpack.c.bf16 %v2693, %v2693
    %v2712 = vpack.c.bf16 %v2694, %v2694
    %v2713 = vld [vmem:[%s3] sm:$0xf]
    %v2714 = vld [vmem:[%s3 + $0x4] sm:$0xf]
    %v2715 = vld [vmem:[%s3 + $0x8] sm:$0xf]
    %v2716 = vld [vmem:[%s3 + $0xc] sm:$0xf]
    %v2717 = vld [vmem:[%s3 + $0x10] sm:$0xf]
    %v2718 = vld [vmem:[%s3 + $0x14] sm:$0xf]
    %v2719 = vld [vmem:[%s3 + $0x18] sm:$0xf]
    %v2720 = vld [vmem:[%s3 + $0x1c] sm:$0xf]
    %v2721 = vld [vmem:[%s3 + $0x20] sm:$0xf]
    %v2722 = vld [vmem:[%s3 + $0x24] sm:$0xf]
    %v2723 = vld [vmem:[%s3 + $0x28] sm:$0xf]
    %v2724 = vld [vmem:[%s3 + $0x2c] sm:$0xf]
    %v2725 = vld [vmem:[%s3 + $0x30] sm:$0xf]
    %v2726 = vld [vmem:[%s3 + $0x34] sm:$0xf]
    %v2727 = vld [vmem:[%s3 + $0x38] sm:$0xf]
    %v2728 = vld [vmem:[%s3 + $0x3c] sm:$0xf]
    %v2729 = vld [vmem:[%s3 + $0x40] sm:$0xf]
    %v2730 = vld [vmem:[%s3 + $0x44] sm:$0xf]
    %v2731 = vld [vmem:[%s3 + $0x48] sm:$0xf]
    %v2732 = vld [vmem:[%s3 + $0x4c] sm:$0xf]
    %v2733 = vld [vmem:[%s3 + $0x50] sm:$0xf]
    %v2734 = vld [vmem:[%s3 + $0x54] sm:$0xf]
    %v2735 = vld [vmem:[%s3 + $0x58] sm:$0xf]
    %v2736 = vld [vmem:[%s3 + $0x5c] sm:$0xf]
    %v2737 = vld [vmem:[%s3 + $0x60] sm:$0xf]
    %v2738 = vld [vmem:[%s3 + $0x64] sm:$0xf]
    %v2739 = vld [vmem:[%s3 + $0x68] sm:$0xf]
    %v2740 = vld [vmem:[%s3 + $0x6c] sm:$0xf]
    %v2741 = vld [vmem:[%s3 + $0x70] sm:$0xf]
    %v2742 = vld [vmem:[%s3 + $0x74] sm:$0xf]
    %v2743 = vld [vmem:[%s3 + $0x78] sm:$0xf]
    %v2744 = vld [vmem:[%s3 + $0x7c] sm:$0xf]
    %v2745 = vld [vmem:[%s3 + $0x80] sm:$0xf]
    %v2746 = vld [vmem:[%s3 + $0x84] sm:$0xf]
    %v2747 = vld [vmem:[%s3 + $0x88] sm:$0xf]
    %v2748 = vld [vmem:[%s3 + $0x8c] sm:$0xf]
    %v2749 = vld [vmem:[%s3 + $0x90] sm:$0xf]
    %v2750 = vld [vmem:[%s3 + $0x94] sm:$0xf]
    %v2751 = vld [vmem:[%s3 + $0x98] sm:$0xf]
    %v2752 = vld [vmem:[%s3 + $0x9c] sm:$0xf]
    %v2753 = vld [vmem:[%s3 + $0xa0] sm:$0xf]
    %v2754 = vld [vmem:[%s3 + $0xa4] sm:$0xf]
    %v2755 = vld [vmem:[%s3 + $0xa8] sm:$0xf]
    %v2756 = vld [vmem:[%s3 + $0xac] sm:$0xf]
    %v2757 = vld [vmem:[%s3 + $0xb0] sm:$0xf]
    %v2758 = vld [vmem:[%s3 + $0xb4] sm:$0xf]
    %v2759 = vld [vmem:[%s3 + $0xb8] sm:$0xf]
    %v2760 = vld [vmem:[%s3 + $0xbc] sm:$0xf]
    %v2761 = vld [vmem:[%s3 + $0xc0] sm:$0xf]
    %v2762 = vld [vmem:[%s3 + $0xc4] sm:$0xf]
    %v2763 = vld [vmem:[%s3 + $0xc8] sm:$0xf]
    %v2764 = vld [vmem:[%s3 + $0xcc] sm:$0xf]
    %v2765 = vld [vmem:[%s3 + $0xd0] sm:$0xf]
    %v2766 = vld [vmem:[%s3 + $0xd4] sm:$0xf]
    %v2767 = vld [vmem:[%s3 + $0xd8] sm:$0xf]
    %v2768 = vld [vmem:[%s3 + $0xdc] sm:$0xf]
    %v2769 = vld [vmem:[%s3 + $0xe0] sm:$0xf]
    %v2770 = vld [vmem:[%s3 + $0xe4] sm:$0xf]
    %v2771 = vld [vmem:[%s3 + $0xe8] sm:$0xf]
    %v2772 = vld [vmem:[%s3 + $0xec] sm:$0xf]
    %v2773 = vld [vmem:[%s3 + $0xf0] sm:$0xf]
    %v2774 = vld [vmem:[%s3 + $0xf4] sm:$0xf]
    %v2775 = vld [vmem:[%s3 + $0xf8] sm:$0xf]
    %v2776 = vld [vmem:[%s3 + $0xfc] sm:$0xf]
    %v2777 = vld [vmem:[%s3 + $0x100] sm:$0xf]
    %v2778 = vld [vmem:[%s3 + $0x104] sm:$0xf]
    %v2779 = vld [vmem:[%s3 + $0x108] sm:$0xf]
    %v2780 = vld [vmem:[%s3 + $0x10c] sm:$0xf]
    %v2781 = vld [vmem:[%s3 + $0x110] sm:$0xf]
    %v2782 = vld [vmem:[%s3 + $0x114] sm:$0xf]
    %v2783 = vld [vmem:[%s3 + $0x118] sm:$0xf]
    %v2784 = vld [vmem:[%s3 + $0x11c] sm:$0xf]
    %v2785 = vld [vmem:[%s3 + $0x120] sm:$0xf]
    %v2786 = vld [vmem:[%s3 + $0x124] sm:$0xf]
    %v2787 = vld [vmem:[%s3 + $0x128] sm:$0xf]
    %v2788 = vld [vmem:[%s3 + $0x12c] sm:$0xf]
    %v2789 = vld [vmem:[%s3 + $0x130] sm:$0xf]
    %v2790 = vld [vmem:[%s3 + $0x134] sm:$0xf]
    %v2791 = vld [vmem:[%s3 + $0x138] sm:$0xf]
    %v2792 = vld [vmem:[%s3 + $0x13c] sm:$0xf]
    %v2793 = vld [vmem:[%s3 + $0x140] sm:$0xf]
    %v2794 = vld [vmem:[%s3 + $0x144] sm:$0xf]
    %v2795 = vld [vmem:[%s3 + $0x148] sm:$0xf]
    %v2796 = vld [vmem:[%s3 + $0x14c] sm:$0xf]
    %v2797 = vld [vmem:[%s3 + $0x150] sm:$0xf]
    %v2798 = vld [vmem:[%s3 + $0x154] sm:$0xf]
    %v2799 = vld [vmem:[%s3 + $0x158] sm:$0xf]
    %v2800 = vld [vmem:[%s3 + $0x15c] sm:$0xf]
    %v2801 = vld [vmem:[%s3 + $0x160] sm:$0xf]
    %v2802 = vld [vmem:[%s3 + $0x164] sm:$0xf]
    %v2803 = vld [vmem:[%s3 + $0x168] sm:$0xf]
    %v2804 = vld [vmem:[%s3 + $0x16c] sm:$0xf]
    %v2805 = vld [vmem:[%s3 + $0x170] sm:$0xf]
    %v2806 = vld [vmem:[%s3 + $0x174] sm:$0xf]
    %v2807 = vld [vmem:[%s3 + $0x178] sm:$0xf]
    %v2808 = vld [vmem:[%s3 + $0x17c] sm:$0xf]
    %v2809 = vld [vmem:[%s3 + $0x180] sm:$0xf]
    %v2810 = vld [vmem:[%s3 + $0x184] sm:$0xf]
    %v2811 = vld [vmem:[%s3 + $0x188] sm:$0xf]
    %v2812 = vld [vmem:[%s3 + $0x18c] sm:$0xf]
    %v2813 = vld [vmem:[%s3 + $0x190] sm:$0xf]
    %v2814 = vld [vmem:[%s3 + $0x194] sm:$0xf]
    %v2815 = vld [vmem:[%s3 + $0x198] sm:$0xf]
    %v2816 = vld [vmem:[%s3 + $0x19c] sm:$0xf]
    %v2817 = vld [vmem:[%s3 + $0x1a0] sm:$0xf]
    %v2818 = vld [vmem:[%s3 + $0x1a4] sm:$0xf]
    %v2819 = vld [vmem:[%s3 + $0x1a8] sm:$0xf]
    %v2820 = vld [vmem:[%s3 + $0x1ac] sm:$0xf]
    %v2821 = vld [vmem:[%s3 + $0x1b0] sm:$0xf]
    %v2822 = vld [vmem:[%s3 + $0x1b4] sm:$0xf]
    %v2823 = vld [vmem:[%s3 + $0x1b8] sm:$0xf]
    %v2824 = vld [vmem:[%s3 + $0x1bc] sm:$0xf]
    %v2825 = vld [vmem:[%s3 + $0x1c0] sm:$0xf]
    %v2826 = vld [vmem:[%s3 + $0x1c4] sm:$0xf]
    %v2827 = vld [vmem:[%s3 + $0x1c8] sm:$0xf]
    %v2828 = vld [vmem:[%s3 + $0x1cc] sm:$0xf]
    %v2829 = vld [vmem:[%s3 + $0x1d0] sm:$0xf]
    %v2830 = vld [vmem:[%s3 + $0x1d4] sm:$0xf]
    %v2831 = vld [vmem:[%s3 + $0x1d8] sm:$0xf]
    %v2832 = vld [vmem:[%s3 + $0x1dc] sm:$0xf]
    %v2833 = vld [vmem:[%s3 + $0x1e0] sm:$0xf]
    %v2834 = vld [vmem:[%s3 + $0x1e4] sm:$0xf]
    %v2835 = vld [vmem:[%s3 + $0x1e8] sm:$0xf]
    %v2836 = vld [vmem:[%s3 + $0x1ec] sm:$0xf]
    %v2837 = vld [vmem:[%s3 + $0x1f0] sm:$0xf]
    %v2838 = vld [vmem:[%s3 + $0x1f4] sm:$0xf]
    %v2839 = vld [vmem:[%s3 + $0x1f8] sm:$0xf]
    %v2840 = vld [vmem:[%s3 + $0x1fc] sm:$0xf]
    %v2841 = vld [vmem:[%s3 + $0x200] sm:$0xf]
    %v2842 = vld [vmem:[%s3 + $0x204] sm:$0xf]
    %v2843 = vld [vmem:[%s3 + $0x208] sm:$0xf]
    %v2844 = vld [vmem:[%s3 + $0x20c] sm:$0xf]
    %v2845 = vld [vmem:[%s3 + $0x210] sm:$0xf]
    %v2846 = vld [vmem:[%s3 + $0x214] sm:$0xf]
    %v2847 = vld [vmem:[%s3 + $0x218] sm:$0xf]
    %v2848 = vld [vmem:[%s3 + $0x21c] sm:$0xf]
    %v2849 = vld [vmem:[%s3 + $0x220] sm:$0xf]
    %v2850 = vld [vmem:[%s3 + $0x224] sm:$0xf]
    %v2851 = vld [vmem:[%s3 + $0x228] sm:$0xf]
    %v2852 = vld [vmem:[%s3 + $0x22c] sm:$0xf]
    %v2853 = vld [vmem:[%s3 + $0x230] sm:$0xf]
    %v2854 = vld [vmem:[%s3 + $0x234] sm:$0xf]
    %v2855 = vld [vmem:[%s3 + $0x238] sm:$0xf]
    %v2856 = vld [vmem:[%s3 + $0x23c] sm:$0xf]
    %v2857 = vld [vmem:[%s4] sm:$0x1]
    %v2859 = vlaneseq
    %v2860 = vshrl.u32 %v2859, 7
    %v2861 = vsub.s32 0, %v2860
    %v2862 = vrot.slane %v2857, %v2861
    %v3008 = vunpack.c.l.b16 %v2713
    %v3009 = vunpack.c.l.b16 %v2714
    %v3010 = vunpack.c.l.b16 %v2715
    %v3011 = vunpack.c.l.b16 %v2716
    %v3012 = vunpack.c.l.b16 %v2717
    %v3013 = vunpack.c.l.b16 %v2718
    %v3014 = vunpack.c.l.b16 %v2719
    %v3015 = vunpack.c.l.b16 %v2720
    %v3016 = vunpack.c.l.b16 %v2721
    %v3017 = vunpack.c.l.b16 %v2722
    %v3018 = vunpack.c.l.b16 %v2723
    %v3019 = vunpack.c.l.b16 %v2724
    %v3020 = vunpack.c.l.b16 %v2725
    %v3021 = vunpack.c.l.b16 %v2726
    %v3022 = vunpack.c.l.b16 %v2727
    %v3023 = vunpack.c.l.b16 %v2728
    %v3024 = vunpack.c.l.b16 %v2729
    %v3025 = vunpack.c.l.b16 %v2730
    %v3026 = vunpack.c.l.b16 %v2731
    %v3027 = vunpack.c.l.b16 %v2732
    %v3028 = vunpack.c.l.b16 %v2733
    %v3029 = vunpack.c.l.b16 %v2734
    %v3030 = vunpack.c.l.b16 %v2735
    %v3031 = vunpack.c.l.b16 %v2736
    %v3032 = vunpack.c.l.b16 %v2737
    %v3033 = vunpack.c.l.b16 %v2738
    %v3034 = vunpack.c.l.b16 %v2739
    %v3035 = vunpack.c.l.b16 %v2740
    %v3036 = vunpack.c.l.b16 %v2741
    %v3037 = vunpack.c.l.b16 %v2742
    %v3038 = vunpack.c.l.b16 %v2743
    %v3039 = vunpack.c.l.b16 %v2744
    %v3040 = vunpack.c.l.b16 %v2745
    %v3041 = vunpack.c.l.b16 %v2746
    %v3042 = vunpack.c.l.b16 %v2747
    %v3043 = vunpack.c.l.b16 %v2748
    %v3044 = vunpack.c.l.b16 %v2749
    %v3045 = vunpack.c.l.b16 %v2750
    %v3046 = vunpack.c.l.b16 %v2751
    %v3047 = vunpack.c.l.b16 %v2752
    %v3048 = vunpack.c.l.b16 %v2753
    %v3049 = vunpack.c.l.b16 %v2754
    %v3050 = vunpack.c.l.b16 %v2755
    %v3051 = vunpack.c.l.b16 %v2756
    %v3052 = vunpack.c.l.b16 %v2757
    %v3053 = vunpack.c.l.b16 %v2758
    %v3054 = vunpack.c.l.b16 %v2759
    %v3055 = vunpack.c.l.b16 %v2760
    %v3056 = vunpack.c.l.b16 %v2761
    %v3057 = vunpack.c.l.b16 %v2762
    %v3058 = vunpack.c.l.b16 %v2763
    %v3059 = vunpack.c.l.b16 %v2764
    %v3060 = vunpack.c.l.b16 %v2765
    %v3061 = vunpack.c.l.b16 %v2766
    %v3062 = vunpack.c.l.b16 %v2767
    %v3063 = vunpack.c.l.b16 %v2768
    %v3064 = vunpack.c.l.b16 %v2769
    %v3065 = vunpack.c.l.b16 %v2770
    %v3066 = vunpack.c.l.b16 %v2771
    %v3067 = vunpack.c.l.b16 %v2772
    %v3068 = vunpack.c.l.b16 %v2773
    %v3069 = vunpack.c.l.b16 %v2774
    %v3070 = vunpack.c.l.b16 %v2775
    %v3071 = vunpack.c.l.b16 %v2776
    %v3072 = vunpack.c.l.b16 %v2777
    %v3073 = vunpack.c.l.b16 %v2778
    %v3074 = vunpack.c.l.b16 %v2779
    %v3075 = vunpack.c.l.b16 %v2780
    %v3076 = vunpack.c.l.b16 %v2781
    %v3077 = vunpack.c.l.b16 %v2782
    %v3078 = vunpack.c.l.b16 %v2783
    %v3079 = vunpack.c.l.b16 %v2784
    %v3080 = vunpack.c.l.b16 %v2785
    %v3081 = vunpack.c.l.b16 %v2786
    %v3082 = vunpack.c.l.b16 %v2787
    %v3083 = vunpack.c.l.b16 %v2788
    %v3084 = vunpack.c.l.b16 %v2789
    %v3085 = vunpack.c.l.b16 %v2790
    %v3086 = vunpack.c.l.b16 %v2791
    %v3087 = vunpack.c.l.b16 %v2792
    %v3088 = vunpack.c.l.b16 %v2793
    %v3089 = vunpack.c.l.b16 %v2794
    %v3090 = vunpack.c.l.b16 %v2795
    %v3091 = vunpack.c.l.b16 %v2796
    %v3092 = vunpack.c.l.b16 %v2797
    %v3093 = vunpack.c.l.b16 %v2798
    %v3094 = vunpack.c.l.b16 %v2799
    %v3095 = vunpack.c.l.b16 %v2800
    %v3096 = vunpack.c.l.b16 %v2801
    %v3097 = vunpack.c.l.b16 %v2802
    %v3098 = vunpack.c.l.b16 %v2803
    %v3099 = vunpack.c.l.b16 %v2804
    %v3100 = vunpack.c.l.b16 %v2805
    %v3101 = vunpack.c.l.b16 %v2806
    %v3102 = vunpack.c.l.b16 %v2807
    %v3103 = vunpack.c.l.b16 %v2808
    %v3104 = vunpack.c.l.b16 %v2809
    %v3105 = vunpack.c.l.b16 %v2810
    %v3106 = vunpack.c.l.b16 %v2811
    %v3107 = vunpack.c.l.b16 %v2812
    %v3108 = vunpack.c.l.b16 %v2813
    %v3109 = vunpack.c.l.b16 %v2814
    %v3110 = vunpack.c.l.b16 %v2815
    %v3111 = vunpack.c.l.b16 %v2816
    %v3112 = vunpack.c.l.b16 %v2817
    %v3113 = vunpack.c.l.b16 %v2818
    %v3114 = vunpack.c.l.b16 %v2819
    %v3115 = vunpack.c.l.b16 %v2820
    %v3116 = vunpack.c.l.b16 %v2821
    %v3117 = vunpack.c.l.b16 %v2822
    %v3118 = vunpack.c.l.b16 %v2823
    %v3119 = vunpack.c.l.b16 %v2824
    %v3120 = vunpack.c.l.b16 %v2825
    %v3121 = vunpack.c.l.b16 %v2826
    %v3122 = vunpack.c.l.b16 %v2827
    %v3123 = vunpack.c.l.b16 %v2828
    %v3124 = vunpack.c.l.b16 %v2829
    %v3125 = vunpack.c.l.b16 %v2830
    %v3126 = vunpack.c.l.b16 %v2831
    %v3127 = vunpack.c.l.b16 %v2832
    %v3128 = vunpack.c.l.b16 %v2833
    %v3129 = vunpack.c.l.b16 %v2834
    %v3130 = vunpack.c.l.b16 %v2835
    %v3131 = vunpack.c.l.b16 %v2836
    %v3132 = vunpack.c.l.b16 %v2837
    %v3133 = vunpack.c.l.b16 %v2838
    %v3134 = vunpack.c.l.b16 %v2839
    %v3135 = vunpack.c.l.b16 %v2840
    %v3136 = vunpack.c.l.b16 %v2841
    %v3137 = vunpack.c.l.b16 %v2842
    %v3138 = vunpack.c.l.b16 %v2843
    %v3139 = vunpack.c.l.b16 %v2844
    %v3140 = vunpack.c.l.b16 %v2845
    %v3141 = vunpack.c.l.b16 %v2846
    %v3142 = vunpack.c.l.b16 %v2847
    %v3143 = vunpack.c.l.b16 %v2848
    %v3144 = vunpack.c.l.b16 %v2849
    %v3145 = vunpack.c.l.b16 %v2850
    %v3146 = vunpack.c.l.b16 %v2851
    %v3147 = vunpack.c.l.b16 %v2852
    %v3148 = vunpack.c.l.b16 %v2853
    %v3149 = vunpack.c.l.b16 %v2854
    %v3150 = vunpack.c.l.b16 %v2855
    %v3151 = vunpack.c.l.b16 %v2856
    %v3152 = vpack.c.b16 %v3009, %v3008
    %v3153 = vpack.c.b16 %v3011, %v3010
    %v3154 = vpack.c.b16 %v3013, %v3012
    %v3155 = vpack.c.b16 %v3015, %v3014
    %v3156 = vpack.c.b16 %v3017, %v3016
    %v3157 = vpack.c.b16 %v3019, %v3018
    %v3158 = vpack.c.b16 %v3021, %v3020
    %v3159 = vpack.c.b16 %v3023, %v3022
    %v3160 = vpack.c.b16 %v3025, %v3024
    %v3161 = vpack.c.b16 %v3027, %v3026
    %v3162 = vpack.c.b16 %v3029, %v3028
    %v3163 = vpack.c.b16 %v3031, %v3030
    %v3164 = vpack.c.b16 %v3033, %v3032
    %v3165 = vpack.c.b16 %v3035, %v3034
    %v3166 = vpack.c.b16 %v3037, %v3036
    %v3167 = vpack.c.b16 %v3039, %v3038
    %v3168 = vpack.c.b16 %v3041, %v3040
    %v3169 = vpack.c.b16 %v3043, %v3042
    %v3170 = vpack.c.b16 %v3045, %v3044
    %v3171 = vpack.c.b16 %v3047, %v3046
    %v3172 = vpack.c.b16 %v3049, %v3048
    %v3173 = vpack.c.b16 %v3051, %v3050
    %v3174 = vpack.c.b16 %v3053, %v3052
    %v3175 = vpack.c.b16 %v3055, %v3054
    %v3176 = vpack.c.b16 %v3057, %v3056
    %v3177 = vpack.c.b16 %v3059, %v3058
    %v3178 = vpack.c.b16 %v3061, %v3060
    %v3179 = vpack.c.b16 %v3063, %v3062
    %v3180 = vpack.c.b16 %v3065, %v3064
    %v3181 = vpack.c.b16 %v3067, %v3066
    %v3182 = vpack.c.b16 %v3069, %v3068
    %v3183 = vpack.c.b16 %v3071, %v3070
    %v3184 = vpack.c.b16 %v3073, %v3072
    %v3185 = vpack.c.b16 %v3075, %v3074
    %v3186 = vpack.c.b16 %v3077, %v3076
    %v3187 = vpack.c.b16 %v3079, %v3078
    %v3188 = vpack.c.b16 %v3081, %v3080
    %v3189 = vpack.c.b16 %v3083, %v3082
    %v3190 = vpack.c.b16 %v3085, %v3084
    %v3191 = vpack.c.b16 %v3087, %v3086
    %v3192 = vpack.c.b16 %v3089, %v3088
    %v3193 = vpack.c.b16 %v3091, %v3090
    %v3194 = vpack.c.b16 %v3093, %v3092
    %v3195 = vpack.c.b16 %v3095, %v3094
    %v3196 = vpack.c.b16 %v3097, %v3096
    %v3197 = vpack.c.b16 %v3099, %v3098
    %v3198 = vpack.c.b16 %v3101, %v3100
    %v3199 = vpack.c.b16 %v3103, %v3102
    %v3200 = vpack.c.b16 %v3105, %v3104
    %v3201 = vpack.c.b16 %v3107, %v3106
    %v3202 = vpack.c.b16 %v3109, %v3108
    %v3203 = vpack.c.b16 %v3111, %v3110
    %v3204 = vpack.c.b16 %v3113, %v3112
    %v3205 = vpack.c.b16 %v3115, %v3114
    %v3206 = vpack.c.b16 %v3117, %v3116
    %v3207 = vpack.c.b16 %v3119, %v3118
    %v3208 = vpack.c.b16 %v3121, %v3120
    %v3209 = vpack.c.b16 %v3123, %v3122
    %v3210 = vpack.c.b16 %v3125, %v3124
    %v3211 = vpack.c.b16 %v3127, %v3126
    %v3212 = vpack.c.b16 %v3129, %v3128
    %v3213 = vpack.c.b16 %v3131, %v3130
    %v3214 = vpack.c.b16 %v3133, %v3132
    %v3215 = vpack.c.b16 %v3135, %v3134
    %v3216 = vpack.c.b16 %v3137, %v3136
    %v3217 = vpack.c.b16 %v3139, %v3138
    %v3218 = vpack.c.b16 %v3141, %v3140
    %v3219 = vpack.c.b16 %v3143, %v3142
    %v3220 = vpack.c.b16 %v3145, %v3144
    %v3221 = vpack.c.b16 %v3147, %v3146
    %v3222 = vpack.c.b16 %v3149, %v3148
    %v3223 = vpack.c.b16 %v3151, %v3150
    %3296 = vmatprep.subr.bf16.mxu0 0
    %3297 = vmatpush1.bf16.msra.mxu0 %v3152
    %3298 = vmatprep.subr.bf16.mxu0 0
    %3299 = vmatpush1.bf16.msra.mxu0 %v3153
    %3300 = vmatprep.subr.bf16.mxu0 0
    %3301 = vmatpush1.bf16.msra.mxu0 %v3154
    %3302 = vmatprep.subr.bf16.mxu0 0
    %3303 = vmatpush1.bf16.msra.mxu0 %v3155
    %3304 = vmatprep.subr.bf16.mxu0 0
    %3305 = vmatpush1.bf16.msra.mxu0 %v3156
    %3306 = vmatprep.subr.bf16.mxu0 0
    %3307 = vmatpush1.bf16.msra.mxu0 %v3157
    %3308 = vmatprep.subr.bf16.mxu0 0
    %3309 = vmatpush1.bf16.msra.mxu0 %v3158
    %3310 = vmatprep.subr.bf16.mxu0 0
    %3311 = vmatpush1.bf16.msra.mxu0 %v3159
    %3312 = vmatprep.subr.bf16.mxu0 0
    %3313 = vmatpush1.bf16.msra.mxu0 %v3160
    %3314 = vmatprep.subr.bf16.mxu0 0
    %3315 = vmatpush1.bf16.msra.mxu0 %v3161
    %3316 = vmatprep.subr.bf16.mxu0 0
    %3317 = vmatpush1.bf16.msra.mxu0 %v3162
    %3318 = vmatprep.subr.bf16.mxu0 0
    %3319 = vmatpush1.bf16.msra.mxu0 %v3163
    %3320 = vmatprep.subr.bf16.mxu0 0
    %3321 = vmatpush1.bf16.msra.mxu0 %v3164
    %3322 = vmatprep.subr.bf16.mxu0 0
    %3323 = vmatpush1.bf16.msra.mxu0 %v3165
    %3324 = vmatprep.subr.bf16.mxu0 0
    %3325 = vmatpush1.bf16.msra.mxu0 %v3166
    %3326 = vmatprep.subr.bf16.mxu0 0
    %3327 = vmatpush1.bf16.msra.mxu0 %v3167
    %3328 = vmatprep.mubr.bf16.mxu0 %v2696
    %3329 = vmatmul.mubr.bf16.gmra.mrb[0].mxu0 %v2695
    %v3330 = vpop.f32.mrb[0].mxu0
    %v3331 = vadd.f32 %v2862, %v3330
    %v3332 = vpop.f32.mrb[0].mxu0
    %v3333 = vpop.f32.mrb[0].mxu0
    %v3334 = vadd.f32 %v2862, %v3333
    %v3335 = vpop.f32.mrb[0].mxu0
    %3336 = vmatprep.mubr.bf16.mxu0 %v2705
    %3337 = vmatmul.mubr.bf16.gmra.mrb[0].mxu0 %v2704
    %v3338 = vpop.f32.mrb[0].mxu0
    %v3339 = vadd.f32 %v2862, %v3338
    %v3340 = vpop.f32.mrb[0].mxu0
    %v3341 = vpop.f32.mrb[0].mxu0
    %v3342 = vpop.f32.mrb[0].mxu0
    %3343 = vdwg.mxu0
    %3344 = vmatprep.subr.bf16.mxu0 0
    %3345 = vmatpush1.bf16.msra.mxu0 %v3168
    %3346 = vmatprep.subr.bf16.mxu0 0
    %3347 = vmatpush1.bf16.msra.mxu0 %v3169
    %3348 = vmatprep.subr.bf16.mxu0 0
    %3349 = vmatpush1.bf16.msra.mxu0 %v3170
    %3350 = vmatprep.subr.bf16.mxu0 0
    %3351 = vmatpush1.bf16.msra.mxu0 %v3171
    %3352 = vmatprep.subr.bf16.mxu0 0
    %3353 = vmatpush1.bf16.msra.mxu0 %v3172
    %3354 = vmatprep.subr.bf16.mxu0 0
    %3355 = vmatpush1.bf16.msra.mxu0 %v3173
    %3356 = vmatprep.subr.bf16.mxu0 0
    %3357 = vmatpush1.bf16.msra.mxu0 %v3174
    %3358 = vmatprep.subr.bf16.mxu0 0
    %3359 = vmatpush1.bf16.msra.mxu0 %v3175
    %3360 = vmatprep.subr.bf16.mxu0 0
    %3361 = vmatpush1.bf16.msra.mxu0 %v3176
    %3362 = vmatprep.subr.bf16.mxu0 0
    %3363 = vmatpush1.bf16.msra.mxu0 %v3177
    %3364 = vmatprep.subr.bf16.mxu0 0
    %3365 = vmatpush1.bf16.msra.mxu0 %v3178
    %3366 = vmatprep.subr.bf16.mxu0 0
    %3367 = vmatpush1.bf16.msra.mxu0 %v3179
    %3368 = vmatprep.subr.bf16.mxu0 0
    %3369 = vmatpush1.bf16.msra.mxu0 %v3180
    %3370 = vmatprep.subr.bf16.mxu0 0
    %3371 = vmatpush1.bf16.msra.mxu0 %v3181
    %3372 = vmatprep.subr.bf16.mxu0 0
    %3373 = vmatpush1.bf16.msra.mxu0 %v3182
    %3374 = vmatprep.subr.bf16.mxu0 0
    %3375 = vmatpush1.bf16.msra.mxu0 %v3183
    %3376 = vmatprep.mubr.bf16.mxu0 %v2698
    %3377 = vmatmul.mubr.bf16.gmra.mrb[0].mxu0 %v2697
    %v3378 = vpop.f32.mrb[0].mxu0
    %v3379 = vadd.f32 %v3331, %v3378
    %v3380 = vpop.f32.mrb[0].mxu0
    %v3381 = vpop.f32.mrb[0].mxu0
    %v3382 = vadd.f32 %v3334, %v3381
    %v3383 = vpop.f32.mrb[0].mxu0
    %3384 = vmatprep.mubr.bf16.mxu0 %v2707
    %3385 = vmatmul.mubr.bf16.gmra.mrb[0].mxu0 %v2706
    %v3386 = vpop.f32.mrb[0].mxu0
    %v3387 = vadd.f32 %v3339, %v3386
    %v3388 = vpop.f32.mrb[0].mxu0
    %v3389 = vpop.f32.mrb[0].mxu0
    %v3390 = vpop.f32.mrb[0].mxu0
    %3391 = vdwg.mxu0
    %3392 = vmatprep.subr.bf16.mxu0 0
    %3393 = vmatpush1.bf16.msra.mxu0 %v3184
    %3394 = vmatprep.subr.bf16.mxu0 0
    %3395 = vmatpush1.bf16.msra.mxu0 %v3185
    %3396 = vmatprep.subr.bf16.mxu0 0
    %3397 = vmatpush1.bf16.msra.mxu0 %v3186
    %3398 = vmatprep.subr.bf16.mxu0 0
    %3399 = vmatpush1.bf16.msra.mxu0 %v3187
    %3400 = vmatprep.subr.bf16.mxu0 0
    %3401 = vmatpush1.bf16.msra.mxu0 %v3188
    %3402 = vmatprep.subr.bf16.mxu0 0
    %3403 = vmatpush1.bf16.msra.mxu0 %v3189
    %3404 = vmatprep.subr.bf16.mxu0 0
    %3405 = vmatpush1.bf16.msra.mxu0 %v3190
    %3406 = vmatprep.subr.bf16.mxu0 0
    %3407 = vmatpush1.bf16.msra.mxu0 %v3191
    %3408 = vmatprep.subr.bf16.mxu0 0
    %3409 = vmatpush1.bf16.msra.mxu0 %v3192
    %3410 = vmatprep.subr.bf16.mxu0 0
    %3411 = vmatpush1.bf16.msra.mxu0 %v3193
    %3412 = vmatprep.subr.bf16.mxu0 0
    %3413 = vmatpush1.bf16.msra.mxu0 %v3194
    %3414 = vmatprep.subr.bf16.mxu0 0
    %3415 = vmatpush1.bf16.msra.mxu0 %v3195
    %3416 = vmatprep.subr.bf16.mxu0 0
    %3417 = vmatpush1.bf16.msra.mxu0 %v3196
    %3418 = vmatprep.subr.bf16.mxu0 0
    %3419 = vmatpush1.bf16.msra.mxu0 %v3197
    %3420 = vmatprep.subr.bf16.mxu0 0
    %3421 = vmatpush1.bf16.msra.mxu0 %v3198
    %3422 = vmatprep.subr.bf16.mxu0 0
    %3423 = vmatpush1.bf16.msra.mxu0 %v3199
    %3424 = vmatprep.mubr.bf16.mxu0 %v2700
    %3425 = vmatmul.mubr.bf16.gmra.mrb[0].mxu0 %v2699
    %v3426 = vpop.f32.mrb[0].mxu0
    %v3427 = vadd.f32 %v3379, %v3426
    %v3428 = vpop.f32.mrb[0].mxu0
    %v3429 = vpop.f32.mrb[0].mxu0
    %v3430 = vadd.f32 %v3382, %v3429
    %v3431 = vpop.f32.mrb[0].mxu0
    %3432 = vmatprep.mubr.bf16.mxu0 %v2709
    %3433 = vmatmul.mubr.bf16.gmra.mrb[0].mxu0 %v2708
    %v3434 = vpop.f32.mrb[0].mxu0
    %v3435 = vadd.f32 %v3387, %v3434
    %v3436 = vpop.f32.mrb[0].mxu0
    %v3437 = vpop.f32.mrb[0].mxu0
    %v3438 = vpop.f32.mrb[0].mxu0
    %3439 = vdwg.mxu0
    %3440 = vmatprep.subr.bf16.mxu0 0
    %3441 = vmatpush1.bf16.msra.mxu0 %v3200
    %3442 = vmatprep.subr.bf16.mxu0 0
    %3443 = vmatpush1.bf16.msra.mxu0 %v3201
    %3444 = vmatprep.subr.bf16.mxu0 0
    %3445 = vmatpush1.bf16.msra.mxu0 %v3202
    %3446 = vmatprep.subr.bf16.mxu0 0
    %3447 = vmatpush1.bf16.msra.mxu0 %v3203
    %3448 = vmatprep.subr.bf16.mxu0 0
    %3449 = vmatpush1.bf16.msra.mxu0 %v3204
    %3450 = vmatprep.subr.bf16.mxu0 0
    %3451 = vmatpush1.bf16.msra.mxu0 %v3205
    %3452 = vmatprep.subr.bf16.mxu0 0
    %3453 = vmatpush1.bf16.msra.mxu0 %v3206
    %3454 = vmatprep.subr.bf16.mxu0 0
    %3455 = vmatpush1.bf16.msra.mxu0 %v3207
    %3456 = vmatprep.subr.bf16.mxu0 0
    %3457 = vmatpush1.bf16.msra.mxu0 %v3208
    %3458 = vmatprep.subr.bf16.mxu0 0
    %3459 = vmatpush1.bf16.msra.mxu0 %v3209
    %3460 = vmatprep.subr.bf16.mxu0 0
    %3461 = vmatpush1.bf16.msra.mxu0 %v3210
    %3462 = vmatprep.subr.bf16.mxu0 0
    %3463 = vmatpush1.bf16.msra.mxu0 %v3211
    %3464 = vmatprep.subr.bf16.mxu0 0
    %3465 = vmatpush1.bf16.msra.mxu0 %v3212
    %3466 = vmatprep.subr.bf16.mxu0 0
    %3467 = vmatpush1.bf16.msra.mxu0 %v3213
    %3468 = vmatprep.subr.bf16.mxu0 0
    %3469 = vmatpush1.bf16.msra.mxu0 %v3214
    %3470 = vmatprep.subr.bf16.mxu0 0
    %3471 = vmatpush1.bf16.msra.mxu0 %v3215
    %3472 = vmatprep.mubr.bf16.mxu0 %v2702
    %3473 = vmatmul.mubr.bf16.gmra.mrb[0].mxu0 %v2701
    %v3474 = vpop.f32.mrb[0].mxu0
    %v3475 = vadd.f32 %v3427, %v3474
    %v3476 = vpop.f32.mrb[0].mxu0
    %v3477 = vpop.f32.mrb[0].mxu0
    %v3478 = vadd.f32 %v3430, %v3477
    %v3479 = vpop.f32.mrb[0].mxu0
    %3480 = vmatprep.mubr.bf16.mxu0 %v2711
    %3481 = vmatmul.mubr.bf16.gmra.mrb[0].mxu0 %v2710
    %v3482 = vpop.f32.mrb[0].mxu0
    %v3483 = vadd.f32 %v3435, %v3482
    %v3484 = vpop.f32.mrb[0].mxu0
    %v3485 = vpop.f32.mrb[0].mxu0
    %v3486 = vpop.f32.mrb[0].mxu0
    %3487 = vdwg.mxu0
    %3488 = vmatprep.subr.bf16.mxu0 0
    %3489 = vmatpush1.bf16.msra.mxu0 %v3216
    %3490 = vmatprep.subr.bf16.mxu0 0
    %3491 = vmatpush1.bf16.msra.mxu0 %v3217
    %3492 = vmatprep.subr.bf16.mxu0 0
    %3493 = vmatpush1.bf16.msra.mxu0 %v3218
    %3494 = vmatprep.subr.bf16.mxu0 0
    %3495 = vmatpush1.bf16.msra.mxu0 %v3219
    %3496 = vmatprep.subr.bf16.mxu0 0
    %3497 = vmatpush1.bf16.msra.mxu0 %v3220
    %3498 = vmatprep.subr.bf16.mxu0 0
    %3499 = vmatpush1.bf16.msra.mxu0 %v3221
    %3500 = vmatprep.subr.bf16.mxu0 0
    %3501 = vmatpush1.bf16.msra.mxu0 %v3222
    %3502 = vmatprep.subr.bf16.mxu0 0
    %3503 = vmatpush1.bf16.msra.mxu0 %v3223
    %3504 = vmatprep.subr.bf16.mxu0 0
    %3505 = vmatpush1.bf16.msra.mxu0 0
    %3506 = vmatprep.subr.bf16.mxu0 0
    %3507 = vmatpush1.bf16.msra.mxu0 0
    %3508 = vmatprep.subr.bf16.mxu0 0
    %3509 = vmatpush1.bf16.msra.mxu0 0
    %3510 = vmatprep.subr.bf16.mxu0 0
    %3511 = vmatpush1.bf16.msra.mxu0 0
    %3512 = vmatprep.subr.bf16.mxu0 0
    %3513 = vmatpush1.bf16.msra.mxu0 0
    %3514 = vmatprep.subr.bf16.mxu0 0
    %3515 = vmatpush1.bf16.msra.mxu0 0
    %3516 = vmatprep.subr.bf16.mxu0 0
    %3517 = vmatpush1.bf16.msra.mxu0 0
    %3518 = vmatprep.subr.bf16.mxu0 0
    %3519 = vmatpush1.bf16.msra.mxu0 0
    %3520 = vmatprep.mubr.bf16.mxu0 0
    %3521 = vmatmul.mubr.bf16.gmra.mrb[0].mxu0 %v2703
    %v3522 = vpop.f32.mrb[0].mxu0
    %v3523 = vadd.f32 %v3475, %v3522
    %v3524 = vpop.f32.mrb[0].mxu0
    %v3525 = vpop.f32.mrb[0].mxu0
    %v3526 = vadd.f32 %v3478, %v3525
    %v3527 = vpop.f32.mrb[0].mxu0
    %3528 = vmatprep.mubr.bf16.mxu0 0
    %3529 = vmatmul.mubr.bf16.gmra.mrb[0].mxu0 %v2712
    %v3530 = vpop.f32.mrb[0].mxu0
    %v3531 = vadd.f32 %v3483, %v3530
    %v3532 = vpop.f32.mrb[0].mxu0
    %v3533 = vpop.f32.mrb[0].mxu0
    %v3534 = vpop.f32.mrb[0].mxu0
    %3535 = vdwg.mxu0
    %v3536 = vmul.f32 %v3523, 0.5
    %v3537 = vmul.f32 %v3526, 0.5
    %v3538 = vmul.f32 %v3531, 0.5
    %v3539 = vmul.f32 %v3523, 0.70710677
    %v3540 = vmul.f32 %v3526, 0.70710677
    %v3541 = vmul.f32 %v3531, 0.70710677
    %vm3542 = vcmp.ge.f32.partialorder %v3539, 0.0
    %vm3543 = vcmp.ge.f32.partialorder %v3540, 0.0
    %vm3544 = vcmp.ge.f32.partialorder %v3541, 0.0
    %v3545 = vsel %vm3542, 1.0, -1.0
    %v3546 = vsel %vm3543, 1.0, -1.0
    %v3547 = vsel %vm3544, 1.0, -1.0
    %v3548 = vand.u32 2147483647, %v3539
    %v3549 = vand.u32 2147483647, %v3540
    %v3550 = vand.u32 2147483647, %v3541
    %v3551 = vmul.f32 %v3548, 0.3275911
    %v3552 = vmul.f32 %v3549, 0.3275911
    %v3553 = vmul.f32 %v3550, 0.3275911
    %v3554 = vadd.f32 %v3551, 1.0
    %v3555 = vadd.f32 %v3552, 1.0
    %v3556 = vadd.f32 %v3553, 1.0
    %v3557 = vrcp.pop %v3554
    %v3558 = vrcp.pop %v3555
    %v3559 = vrcp.pop %v3556
    %v3560 = vmul.f32 %v3557, 1.0614054
    %v3561 = vmul.f32 %v3558, 1.0614054
    %v3562 = vmul.f32 %v3559, 1.0614054
    %v3563 = vadd.f32 %v3560, -1.4531521
    %v3564 = vadd.f32 %v3561, -1.4531521
    %v3565 = vadd.f32 %v3562, -1.4531521
    %v3566 = vmul.f32 %v3563, %v3557
    %v3567 = vmul.f32 %v3564, %v3558
    %v3568 = vmul.f32 %v3565, %v3559
    %v3569 = vadd.f32 %v3566, 1.4214138
    %v3570 = vadd.f32 %v3567, 1.4214138
    %v3571 = vadd.f32 %v3568, 1.4214138
    %v3572 = vmul.f32 %v3569, %v3557
    %v3573 = vmul.f32 %v3570, %v3558
    %v3574 = vmul.f32 %v3571, %v3559
    %v3575 = vadd.f32 %v3572, -0.28449672
    %v3576 = vadd.f32 %v3573, -0.28449672
    %v3577 = vadd.f32 %v3574, -0.28449672
    %v3578 = vmul.f32 %v3575, %v3557
    %v3579 = vmul.f32 %v3576, %v3558
    %v3580 = vmul.f32 %v3577, %v3559
    %v3581 = vadd.f32 %v3578, 0.2548296
    %v3582 = vadd.f32 %v3579, 0.2548296
    %v3583 = vadd.f32 %v3580, 0.2548296
    %v3584 = vmul.f32 %v3581, %v3557
    %v3585 = vmul.f32 %v3582, %v3558
    %v3586 = vmul.f32 %v3583, %v3559
    %v3587 = vsub.f32 0.0, %v3548
    %v3588 = vsub.f32 0.0, %v3549
    %v3589 = vsub.f32 0.0, %v3550
    %v3590 = vmul.f32 %v3587, %v3548
    %v3591 = vmul.f32 %v3588, %v3549
    %v3592 = vmul.f32 %v3589, %v3550
    %v3593 = vmul.f32 %v3590, 1.442695
    %v3594 = vpow.pop %v3593
    %v3595 = vmul.f32 %v3591, 1.442695
    %v3596 = vpow.pop %v3595
    %v3597 = vmul.f32 %v3592, 1.442695
    %v3598 = vpow.pop %v3597
    %v3599 = vmul.f32 %v3584, %v3594
    %v3600 = vmul.f32 %v3585, %v3596
    %v3601 = vmul.f32 %v3586, %v3598
    %v3602 = vsub.f32 1.0, %v3599
    %v3603 = vsub.f32 1.0, %v3600
    %v3604 = vsub.f32 1.0, %v3601
    %v3605 = vmul.f32 %v3545, %v3602
    %v3606 = vmul.f32 %v3546, %v3603
    %v3607 = vmul.f32 %v3547, %v3604
    %v3608 = vadd.f32 %v3605, 1.0
    %v3609 = vadd.f32 %v3606, 1.0
    %v3610 = vadd.f32 %v3607, 1.0
    %v3611 = vmul.f32 %v3536, %v3608
    %v3612 = vmul.f32 %v3537, %v3609
    %v3613 = vmul.f32 %v3538, %v3610
    %v3614 = vld [vmem:[%s5] sm:$0xff]
    %v3615 = vld [vmem:[%s5 + $0x8] sm:$0xff]
    %v3616 = vld [vmem:[%s5 + $0x10] sm:$0x3]
    %v3617 = vmul.f32 %v3611, %v3614
    %v3618 = vmul.f32 %v3612, %v3615
    %v3619 = vmul.f32 %v3613, %v3616
    %v3620 = vld [vmem:[%s6] sm:$0xff]
    %v3621 = vld [vmem:[%s6 + $0x8] sm:$0xff]
    %v3622 = vld [vmem:[%s6 + $0x10] sm:$0x3]
    %v3623 = vadd.f32 %v3617, %v3620
    %v3624 = vadd.f32 %v3618, %v3621
    %v3625 = vadd.f32 %v3619, %v3622
    %v3626 = vmax.f32 %v3623, 0.0
    %v3627 = vmax.f32 %v3624, 0.0
    %v3628 = vmax.f32 %v3625, 0.0
    %3629 = vst [vmem:[#allocation5] sm:$0x1] %v3626
    %v3632 = vunpack.c.l.s4 1983009808
    %v3633 = vunpack.c.0.s8 %v3632
    %v3634 = vlaneseq
    %v3635 = vshrl.u32 %v3634, 7
    %v3636 = vsub.s32 %v3633, %v3635
    %v3637 = vrot.slane %v3626, %v3636
    %v3638 = vrot.slane %v3637, 7
    %v3639 = vrot.slane %v3638, 2
    %3641 = vst [vmem:[#allocation5 + $0x2] sm:$0x1] %v3639
    %v3642 = vcombine.high %v3637, %v3637
    %3644 = vst [vmem:[#allocation5 + $0x4] sm:$0x1] %v3642
    %v3645 = vrot.slane %v3642, 7
    %v3646 = vrot.slane %v3645, 2
    %3648 = vst [vmem:[#allocation5 + $0x6] sm:$0x1] %v3646
    %v3649 = vcombine.high %v3626, %v3626
    %v3651 = vunpack.c.l.s4 1983009808
    %v3652 = vunpack.c.0.s8 %v3651
    %v3653 = vlaneseq
    %v3654 = vshrl.u32 %v3653, 7
    %v3655 = vsub.s32 %v3652, %v3654
    %v3656 = vrot.slane %v3649, %v3655
    %3658 = vst [vmem:[#allocation5 + $0x8] sm:$0x1] %v3656
    %v3659 = vrot.slane %v3656, 7
    %v3660 = vrot.slane %v3659, 2
    %3662 = vst [vmem:[#allocation5 + $0xa] sm:$0x1] %v3660
    %v3663 = vcombine.high %v3656, %v3656
    %3665 = vst [vmem:[#allocation5 + $0xc] sm:$0x1] %v3663
    %v3666 = vrot.slane %v3663, 7
    %v3667 = vrot.slane %v3666, 2
    %3669 = vst [vmem:[#allocation5 + $0xe] sm:$0x1] %v3667
    %3670 = vst [vmem:[#allocation5 + $0x10] sm:$0x1] %v3627
    %v3673 = vunpack.c.l.s4 1983009808
    %v3674 = vunpack.c.0.s8 %v3673
    %v3675 = vlaneseq
    %v3676 = vshrl.u32 %v3675, 7
    %v3677 = vsub.s32 %v3674, %v3676
    %v3678 = vrot.slane %v3627, %v3677
    %v3679 = vrot.slane %v3678, 7
    %v3680 = vrot.slane %v3679, 2
    %3682 = vst [vmem:[#allocation5 + $0x1] sm:$0x1] %v3680
    %v3683 = vcombine.high %v3678, %v3678
    %3685 = vst [vmem:[#allocation5 + $0x3] sm:$0x1] %v3683
    %v3686 = vrot.slane %v3683, 7
    %v3687 = vrot.slane %v3686, 2
    %3689 = vst [vmem:[#allocation5 + $0x5] sm:$0x1] %v3687
    %v3690 = vcombine.high %v3627, %v3627
    %v3692 = vunpack.c.l.s4 1983009808
    %v3693 = vunpack.c.0.s8 %v3692
    %v3694 = vlaneseq
    %v3695 = vshrl.u32 %v3694, 7
    %v3696 = vsub.s32 %v3693, %v3695
    %v3697 = vrot.slane %v3690, %v3696
    %3699 = vst [vmem:[#allocation5 + $0x7] sm:$0x1] %v3697
    %v3700 = vrot.slane %v3697, 7
    %v3701 = vrot.slane %v3700, 2
    %3703 = vst [vmem:[#allocation5 + $0x9] sm:$0x1] %v3701
    %v3704 = vcombine.high %v3697, %v3697
    %3706 = vst [vmem:[#allocation5 + $0xb] sm:$0x1] %v3704
    %v3707 = vrot.slane %v3704, 7
    %v3708 = vrot.slane %v3707, 2
    %3710 = vst [vmem:[#allocation5 + $0xd] sm:$0x1] %v3708
    %3711 = vst [vmem:[#allocation5 + $0xf] sm:$0x1] %v3628
    %v3714 = vunpack.c.l.s4 1983009808
    %v3715 = vunpack.c.0.s8 %v3714
    %v3716 = vlaneseq
    %v3717 = vshrl.u32 %v3716, 7
    %v3718 = vsub.s32 %v3715, %v3717
    %v3719 = vrot.slane %v3628, %v3718
    %v3720 = vrot.slane %v3719, 7
    %v3721 = vrot.slane %v3720, 2
    %3723 = vst [vmem:[#allocation5 + $0x11] sm:$0x1] %v3721
    %v3724 = vld [vmem:[#allocation5] sm:$0xff]
    %v3725 = vld [vmem:[#allocation5 + $0x8] sm:$0xff]
    %v3726 = vld [vmem:[#allocation5 + $0x10] sm:$0x3]
    %v3730 = vcombine.high %v3724, %v3724
    %v3732 = vunpack.c.l.s4 1983009808
    %v3733 = vunpack.c.0.s8 %v3732
    %v3734 = vlaneseq
    %v3735 = vshrl.u32 %v3734, 7
    %v3736 = vsub.s32 %v3733, %v3735
    %v3737 = vrot.slane %v3724, %v3736
    %v3739 = vunpack.c.l.s4 1983009808
    %v3740 = vunpack.c.0.s8 %v3739
    %v3741 = vlaneseq
    %v3742 = vshrl.u32 %v3741, 7
    %v3743 = vsub.s32 %v3740, %v3742
    %v3744 = vrot.slane %v3730, %v3743
    %v3745 = vcombine.high %v3737, %v3737
    %v3746 = vcombine.high %v3744, %v3744
    %v3747 = vcombine.high %v3725, %v3725
    %v3749 = vunpack.c.l.s4 1983009808
    %v3750 = vunpack.c.0.s8 %v3749
    %v3751 = vlaneseq
    %v3752 = vshrl.u32 %v3751, 7
    %v3753 = vsub.s32 %v3750, %v3752
    %v3754 = vrot.slane %v3725, %v3753
    %v3756 = vunpack.c.l.s4 1983009808
    %v3757 = vunpack.c.0.s8 %v3756
    %v3758 = vlaneseq
    %v3759 = vshrl.u32 %v3758, 7
    %v3760 = vsub.s32 %v3757, %v3759
    %v3761 = vrot.slane %v3747, %v3760
    %v3762 = vcombine.high %v3754, %v3754
    %v3763 = vcombine.high %v3761, %v3761
    %v3765 = vunpack.c.l.s4 1983009808
    %v3766 = vunpack.c.0.s8 %v3765
    %v3767 = vlaneseq
    %v3768 = vshrl.u32 %v3767, 7
    %v3769 = vsub.s32 %v3766, %v3768
    %v3770 = vrot.slane %v3726, %v3769
    %v3780 = vpack.c.bf16 %v3737, %v3737
    %v3781 = vpack.c.bf16 %v3745, %v3745
    %v3782 = vpack.c.bf16 %v3744, %v3744
    %v3783 = vpack.c.bf16 %v3746, %v3746
    %v3784 = vpack.c.bf16 %v3754, %v3754
    %v3785 = vpack.c.bf16 %v3762, %v3762
    %v3786 = vpack.c.bf16 %v3761, %v3761
    %v3787 = vpack.c.bf16 %v3763, %v3763
    %v3788 = vpack.c.bf16 %v3770, %v3770
    %v3789 = vld [vmem:[%s7] sm:$0xf]
    %v3790 = vld [vmem:[%s7 + $0x4] sm:$0xf]
    %v3791 = vld [vmem:[%s7 + $0x8] sm:$0xf]
    %v3792 = vld [vmem:[%s7 + $0xc] sm:$0xf]
    %v3793 = vld [vmem:[%s7 + $0x10] sm:$0xf]
    %v3794 = vld [vmem:[%s7 + $0x14] sm:$0xf]
    %v3795 = vld [vmem:[%s7 + $0x18] sm:$0xf]
    %v3796 = vld [vmem:[%s7 + $0x1c] sm:$0xf]
    %v3797 = vld [vmem:[%s7 + $0x20] sm:$0xf]
    %v3798 = vld [vmem:[%s7 + $0x24] sm:$0xf]
    %v3799 = vld [vmem:[%s7 + $0x28] sm:$0xf]
    %v3800 = vld [vmem:[%s7 + $0x2c] sm:$0xf]
    %v3801 = vld [vmem:[%s7 + $0x30] sm:$0xf]
    %v3802 = vld [vmem:[%s7 + $0x34] sm:$0xf]
    %v3803 = vld [vmem:[%s7 + $0x38] sm:$0xf]
    %v3804 = vld [vmem:[%s7 + $0x3c] sm:$0xf]
    %v3805 = vld [vmem:[%s7 + $0x40] sm:$0xf]
    %v3806 = vld [vmem:[%s7 + $0x44] sm:$0xf]
    %v3807 = vld [vmem:[%s7 + $0x48] sm:$0xf]
    %v3808 = vld [vmem:[%s7 + $0x4c] sm:$0xf]
    %v3809 = vld [vmem:[%s7 + $0x50] sm:$0xf]
    %v3810 = vld [vmem:[%s7 + $0x54] sm:$0xf]
    %v3811 = vld [vmem:[%s7 + $0x58] sm:$0xf]
    %v3812 = vld [vmem:[%s7 + $0x5c] sm:$0xf]
    %v3813 = vld [vmem:[%s7 + $0x60] sm:$0xf]
    %v3814 = vld [vmem:[%s7 + $0x64] sm:$0xf]
    %v3815 = vld [vmem:[%s7 + $0x68] sm:$0xf]
    %v3816 = vld [vmem:[%s7 + $0x6c] sm:$0xf]
    %v3817 = vld [vmem:[%s7 + $0x70] sm:$0xf]
    %v3818 = vld [vmem:[%s7 + $0x74] sm:$0xf]
    %v3819 = vld [vmem:[%s7 + $0x78] sm:$0xf]
    %v3820 = vld [vmem:[%s7 + $0x7c] sm:$0xf]
    %v3821 = vld [vmem:[%s7 + $0x80] sm:$0xf]
    %v3822 = vld [vmem:[%s7 + $0x84] sm:$0xf]
    %v3823 = vld [vmem:[%s7 + $0x88] sm:$0xf]
    %v3824 = vld [vmem:[%s7 + $0x8c] sm:$0xf]
    %v3825 = vld [vmem:[%s7 + $0x90] sm:$0xf]
    %v3826 = vld [vmem:[%s7 + $0x94] sm:$0xf]
    %v3827 = vld [vmem:[%s7 + $0x98] sm:$0xf]
    %v3828 = vld [vmem:[%s7 + $0x9c] sm:$0xf]
    %v3829 = vld [vmem:[%s7 + $0xa0] sm:$0xf]
    %v3830 = vld [vmem:[%s7 + $0xa4] sm:$0xf]
    %v3831 = vld [vmem:[%s7 + $0xa8] sm:$0xf]
    %v3832 = vld [vmem:[%s7 + $0xac] sm:$0xf]
    %v3833 = vld [vmem:[%s7 + $0xb0] sm:$0xf]
    %v3834 = vld [vmem:[%s7 + $0xb4] sm:$0xf]
    %v3835 = vld [vmem:[%s7 + $0xb8] sm:$0xf]
    %v3836 = vld [vmem:[%s7 + $0xbc] sm:$0xf]
    %v3837 = vld [vmem:[%s7 + $0xc0] sm:$0xf]
    %v3838 = vld [vmem:[%s7 + $0xc4] sm:$0xf]
    %v3839 = vld [vmem:[%s7 + $0xc8] sm:$0xf]
    %v3840 = vld [vmem:[%s7 + $0xcc] sm:$0xf]
    %v3841 = vld [vmem:[%s7 + $0xd0] sm:$0xf]
    %v3842 = vld [vmem:[%s7 + $0xd4] sm:$0xf]
    %v3843 = vld [vmem:[%s7 + $0xd8] sm:$0xf]
    %v3844 = vld [vmem:[%s7 + $0xdc] sm:$0xf]
    %v3845 = vld [vmem:[%s7 + $0xe0] sm:$0xf]
    %v3846 = vld [vmem:[%s7 + $0xe4] sm:$0xf]
    %v3847 = vld [vmem:[%s7 + $0xe8] sm:$0xf]
    %v3848 = vld [vmem:[%s7 + $0xec] sm:$0xf]
    %v3849 = vld [vmem:[%s7 + $0xf0] sm:$0xf]
    %v3850 = vld [vmem:[%s7 + $0xf4] sm:$0xf]
    %v3851 = vld [vmem:[%s7 + $0xf8] sm:$0xf]
    %v3852 = vld [vmem:[%s7 + $0xfc] sm:$0xf]
    %v3853 = vld [vmem:[%s7 + $0x100] sm:$0xf]
    %v3854 = vld [vmem:[%s7 + $0x104] sm:$0xf]
    %v3855 = vld [vmem:[%s7 + $0x108] sm:$0xf]
    %v3856 = vld [vmem:[%s7 + $0x10c] sm:$0xf]
    %v3857 = vld [vmem:[%s7 + $0x110] sm:$0xf]
    %v3858 = vld [vmem:[%s7 + $0x114] sm:$0xf]
    %v3859 = vld [vmem:[%s7 + $0x118] sm:$0xf]
    %v3860 = vld [vmem:[%s7 + $0x11c] sm:$0xf]
    %v3861 = vld [vmem:[%s7 + $0x120] sm:$0xf]
    %v3862 = vld [vmem:[%s7 + $0x124] sm:$0xf]
    %v3863 = vld [vmem:[%s7 + $0x128] sm:$0xf]
    %v3864 = vld [vmem:[%s7 + $0x12c] sm:$0xf]
    %v3865 = vld [vmem:[%s7 + $0x130] sm:$0xf]
    %v3866 = vld [vmem:[%s7 + $0x134] sm:$0xf]
    %v3867 = vld [vmem:[%s7 + $0x138] sm:$0xf]
    %v3868 = vld [vmem:[%s7 + $0x13c] sm:$0xf]
    %v3869 = vld [vmem:[%s7 + $0x140] sm:$0xf]
    %v3870 = vld [vmem:[%s7 + $0x144] sm:$0xf]
    %v3871 = vld [vmem:[%s7 + $0x148] sm:$0xf]
    %v3872 = vld [vmem:[%s7 + $0x14c] sm:$0xf]
    %v3873 = vld [vmem:[%s7 + $0x150] sm:$0xf]
    %v3874 = vld [vmem:[%s7 + $0x154] sm:$0xf]
    %v3875 = vld [vmem:[%s7 + $0x158] sm:$0xf]
    %v3876 = vld [vmem:[%s7 + $0x15c] sm:$0xf]
    %v3877 = vld [vmem:[%s7 + $0x160] sm:$0xf]
    %v3878 = vld [vmem:[%s7 + $0x164] sm:$0xf]
    %v3879 = vld [vmem:[%s7 + $0x168] sm:$0xf]
    %v3880 = vld [vmem:[%s7 + $0x16c] sm:$0xf]
    %v3881 = vld [vmem:[%s7 + $0x170] sm:$0xf]
    %v3882 = vld [vmem:[%s7 + $0x174] sm:$0xf]
    %v3883 = vld [vmem:[%s7 + $0x178] sm:$0xf]
    %v3884 = vld [vmem:[%s7 + $0x17c] sm:$0xf]
    %v3885 = vld [vmem:[%s7 + $0x180] sm:$0xf]
    %v3886 = vld [vmem:[%s7 + $0x184] sm:$0xf]
    %v3887 = vld [vmem:[%s7 + $0x188] sm:$0xf]
    %v3888 = vld [vmem:[%s7 + $0x18c] sm:$0xf]
    %v3889 = vld [vmem:[%s7 + $0x190] sm:$0xf]
    %v3890 = vld [vmem:[%s7 + $0x194] sm:$0xf]
    %v3891 = vld [vmem:[%s7 + $0x198] sm:$0xf]
    %v3892 = vld [vmem:[%s7 + $0x19c] sm:$0xf]
    %v3893 = vld [vmem:[%s7 + $0x1a0] sm:$0xf]
    %v3894 = vld [vmem:[%s7 + $0x1a4] sm:$0xf]
    %v3895 = vld [vmem:[%s7 + $0x1a8] sm:$0xf]
    %v3896 = vld [vmem:[%s7 + $0x1ac] sm:$0xf]
    %v3897 = vld [vmem:[%s7 + $0x1b0] sm:$0xf]
    %v3898 = vld [vmem:[%s7 + $0x1b4] sm:$0xf]
    %v3899 = vld [vmem:[%s7 + $0x1b8] sm:$0xf]
    %v3900 = vld [vmem:[%s7 + $0x1bc] sm:$0xf]
    %v3901 = vld [vmem:[%s7 + $0x1c0] sm:$0xf]
    %v3902 = vld [vmem:[%s7 + $0x1c4] sm:$0xf]
    %v3903 = vld [vmem:[%s7 + $0x1c8] sm:$0xf]
    %v3904 = vld [vmem:[%s7 + $0x1cc] sm:$0xf]
    %v3905 = vld [vmem:[%s7 + $0x1d0] sm:$0xf]
    %v3906 = vld [vmem:[%s7 + $0x1d4] sm:$0xf]
    %v3907 = vld [vmem:[%s7 + $0x1d8] sm:$0xf]
    %v3908 = vld [vmem:[%s7 + $0x1dc] sm:$0xf]
    %v3909 = vld [vmem:[%s7 + $0x1e0] sm:$0xf]
    %v3910 = vld [vmem:[%s7 + $0x1e4] sm:$0xf]
    %v3911 = vld [vmem:[%s7 + $0x1e8] sm:$0xf]
    %v3912 = vld [vmem:[%s7 + $0x1ec] sm:$0xf]
    %v3913 = vld [vmem:[%s7 + $0x1f0] sm:$0xf]
    %v3914 = vld [vmem:[%s7 + $0x1f4] sm:$0xf]
    %v3915 = vld [vmem:[%s7 + $0x1f8] sm:$0xf]
    %v3916 = vld [vmem:[%s7 + $0x1fc] sm:$0xf]
    %v3917 = vld [vmem:[%s7 + $0x200] sm:$0xf]
    %v3918 = vld [vmem:[%s7 + $0x204] sm:$0xf]
    %v3919 = vld [vmem:[%s7 + $0x208] sm:$0xf]
    %v3920 = vld [vmem:[%s7 + $0x20c] sm:$0xf]
    %v3921 = vld [vmem:[%s7 + $0x210] sm:$0xf]
    %v3922 = vld [vmem:[%s7 + $0x214] sm:$0xf]
    %v3923 = vld [vmem:[%s7 + $0x218] sm:$0xf]
    %v3924 = vld [vmem:[%s7 + $0x21c] sm:$0xf]
    %v3925 = vld [vmem:[%s7 + $0x220] sm:$0xf]
    %v3926 = vld [vmem:[%s7 + $0x224] sm:$0xf]
    %v3927 = vld [vmem:[%s7 + $0x228] sm:$0xf]
    %v3928 = vld [vmem:[%s7 + $0x22c] sm:$0xf]
    %v3929 = vld [vmem:[%s7 + $0x230] sm:$0xf]
    %v3930 = vld [vmem:[%s7 + $0x234] sm:$0xf]
    %v3931 = vld [vmem:[%s7 + $0x238] sm:$0xf]
    %v3932 = vld [vmem:[%s7 + $0x23c] sm:$0xf]
    %v3933 = vld [vmem:[%s8] sm:$0x1]
    %v3935 = vlaneseq
    %v3936 = vshrl.u32 %v3935, 7
    %v3937 = vsub.s32 0, %v3936
    %v3938 = vrot.slane %v3933, %v3937
    %v4084 = vunpack.c.l.b16 %v3789
    %v4085 = vunpack.c.l.b16 %v3790
    %v4086 = vunpack.c.l.b16 %v3791
    %v4087 = vunpack.c.l.b16 %v3792
    %v4088 = vunpack.c.l.b16 %v3793
    %v4089 = vunpack.c.l.b16 %v3794
    %v4090 = vunpack.c.l.b16 %v3795
    %v4091 = vunpack.c.l.b16 %v3796
    %v4092 = vunpack.c.l.b16 %v3797
    %v4093 = vunpack.c.l.b16 %v3798
    %v4094 = vunpack.c.l.b16 %v3799
    %v4095 = vunpack.c.l.b16 %v3800
    %v4096 = vunpack.c.l.b16 %v3801
    %v4097 = vunpack.c.l.b16 %v3802
    %v4098 = vunpack.c.l.b16 %v3803
    %v4099 = vunpack.c.l.b16 %v3804
    %v4100 = vunpack.c.l.b16 %v3805
    %v4101 = vunpack.c.l.b16 %v3806
    %v4102 = vunpack.c.l.b16 %v3807
    %v4103 = vunpack.c.l.b16 %v3808
    %v4104 = vunpack.c.l.b16 %v3809
    %v4105 = vunpack.c.l.b16 %v3810
    %v4106 = vunpack.c.l.b16 %v3811
    %v4107 = vunpack.c.l.b16 %v3812
    %v4108 = vunpack.c.l.b16 %v3813
    %v4109 = vunpack.c.l.b16 %v3814
    %v4110 = vunpack.c.l.b16 %v3815
    %v4111 = vunpack.c.l.b16 %v3816
    %v4112 = vunpack.c.l.b16 %v3817
    %v4113 = vunpack.c.l.b16 %v3818
    %v4114 = vunpack.c.l.b16 %v3819
    %v4115 = vunpack.c.l.b16 %v3820
    %v4116 = vunpack.c.l.b16 %v3821
    %v4117 = vunpack.c.l.b16 %v3822
    %v4118 = vunpack.c.l.b16 %v3823
    %v4119 = vunpack.c.l.b16 %v3824
    %v4120 = vunpack.c.l.b16 %v3825
    %v4121 = vunpack.c.l.b16 %v3826
    %v4122 = vunpack.c.l.b16 %v3827
    %v4123 = vunpack.c.l.b16 %v3828
    %v4124 = vunpack.c.l.b16 %v3829
    %v4125 = vunpack.c.l.b16 %v3830
    %v4126 = vunpack.c.l.b16 %v3831
    %v4127 = vunpack.c.l.b16 %v3832
    %v4128 = vunpack.c.l.b16 %v3833
    %v4129 = vunpack.c.l.b16 %v3834
    %v4130 = vunpack.c.l.b16 %v3835
    %v4131 = vunpack.c.l.b16 %v3836
    %v4132 = vunpack.c.l.b16 %v3837
    %v4133 = vunpack.c.l.b16 %v3838
    %v4134 = vunpack.c.l.b16 %v3839
    %v4135 = vunpack.c.l.b16 %v3840
    %v4136 = vunpack.c.l.b16 %v3841
    %v4137 = vunpack.c.l.b16 %v3842
    %v4138 = vunpack.c.l.b16 %v3843
    %v4139 = vunpack.c.l.b16 %v3844
    %v4140 = vunpack.c.l.b16 %v3845
    %v4141 = vunpack.c.l.b16 %v3846
    %v4142 = vunpack.c.l.b16 %v3847
    %v4143 = vunpack.c.l.b16 %v3848
    %v4144 = vunpack.c.l.b16 %v3849
    %v4145 = vunpack.c.l.b16 %v3850
    %v4146 = vunpack.c.l.b16 %v3851
    %v4147 = vunpack.c.l.b16 %v3852
    %v4148 = vunpack.c.l.b16 %v3853
    %v4149 = vunpack.c.l.b16 %v3854
    %v4150 = vunpack.c.l.b16 %v3855
    %v4151 = vunpack.c.l.b16 %v3856
    %v4152 = vunpack.c.l.b16 %v3857
    %v4153 = vunpack.c.l.b16 %v3858
    %v4154 = vunpack.c.l.b16 %v3859
    %v4155 = vunpack.c.l.b16 %v3860
    %v4156 = vunpack.c.l.b16 %v3861
    %v4157 = vunpack.c.l.b16 %v3862
    %v4158 = vunpack.c.l.b16 %v3863
    %v4159 = vunpack.c.l.b16 %v3864
    %v4160 = vunpack.c.l.b16 %v3865
    %v4161 = vunpack.c.l.b16 %v3866
    %v4162 = vunpack.c.l.b16 %v3867
    %v4163 = vunpack.c.l.b16 %v3868
    %v4164 = vunpack.c.l.b16 %v3869
    %v4165 = vunpack.c.l.b16 %v3870
    %v4166 = vunpack.c.l.b16 %v3871
    %v4167 = vunpack.c.l.b16 %v3872
    %v4168 = vunpack.c.l.b16 %v3873
    %v4169 = vunpack.c.l.b16 %v3874
    %v4170 = vunpack.c.l.b16 %v3875
    %v4171 = vunpack.c.l.b16 %v3876
    %v4172 = vunpack.c.l.b16 %v3877
    %v4173 = vunpack.c.l.b16 %v3878
    %v4174 = vunpack.c.l.b16 %v3879
    %v4175 = vunpack.c.l.b16 %v3880
    %v4176 = vunpack.c.l.b16 %v3881
    %v4177 = vunpack.c.l.b16 %v3882
    %v4178 = vunpack.c.l.b16 %v3883
    %v4179 = vunpack.c.l.b16 %v3884
    %v4180 = vunpack.c.l.b16 %v3885
    %v4181 = vunpack.c.l.b16 %v3886
    %v4182 = vunpack.c.l.b16 %v3887
    %v4183 = vunpack.c.l.b16 %v3888
    %v4184 = vunpack.c.l.b16 %v3889
    %v4185 = vunpack.c.l.b16 %v3890
    %v4186 = vunpack.c.l.b16 %v3891
    %v4187 = vunpack.c.l.b16 %v3892
    %v4188 = vunpack.c.l.b16 %v3893
    %v4189 = vunpack.c.l.b16 %v3894
    %v4190 = vunpack.c.l.b16 %v3895
    %v4191 = vunpack.c.l.b16 %v3896
    %v4192 = vunpack.c.l.b16 %v3897
    %v4193 = vunpack.c.l.b16 %v3898
    %v4194 = vunpack.c.l.b16 %v3899
    %v4195 = vunpack.c.l.b16 %v3900
    %v4196 = vunpack.c.l.b16 %v3901
    %v4197 = vunpack.c.l.b16 %v3902
    %v4198 = vunpack.c.l.b16 %v3903
    %v4199 = vunpack.c.l.b16 %v3904
    %v4200 = vunpack.c.l.b16 %v3905
    %v4201 = vunpack.c.l.b16 %v3906
    %v4202 = vunpack.c.l.b16 %v3907
    %v4203 = vunpack.c.l.b16 %v3908
    %v4204 = vunpack.c.l.b16 %v3909
    %v4205 = vunpack.c.l.b16 %v3910
    %v4206 = vunpack.c.l.b16 %v3911
    %v4207 = vunpack.c.l.b16 %v3912
    %v4208 = vunpack.c.l.b16 %v3913
    %v4209 = vunpack.c.l.b16 %v3914
    %v4210 = vunpack.c.l.b16 %v3915
    %v4211 = vunpack.c.l.b16 %v3916
    %v4212 = vunpack.c.l.b16 %v3917
    %v4213 = vunpack.c.l.b16 %v3918
    %v4214 = vunpack.c.l.b16 %v3919
    %v4215 = vunpack.c.l.b16 %v3920
    %v4216 = vunpack.c.l.b16 %v3921
    %v4217 = vunpack.c.l.b16 %v3922
    %v4218 = vunpack.c.l.b16 %v3923
    %v4219 = vunpack.c.l.b16 %v3924
    %v4220 = vunpack.c.l.b16 %v3925
    %v4221 = vunpack.c.l.b16 %v3926
    %v4222 = vunpack.c.l.b16 %v3927
    %v4223 = vunpack.c.l.b16 %v3928
    %v4224 = vunpack.c.l.b16 %v3929
    %v4225 = vunpack.c.l.b16 %v3930
    %v4226 = vunpack.c.l.b16 %v3931
    %v4227 = vunpack.c.l.b16 %v3932
    %v4228 = vpack.c.b16 %v4085, %v4084
    %v4229 = vpack.c.b16 %v4087, %v4086
    %v4230 = vpack.c.b16 %v4089, %v4088
    %v4231 = vpack.c.b16 %v4091, %v4090
    %v4232 = vpack.c.b16 %v4093, %v4092
    %v4233 = vpack.c.b16 %v4095, %v4094
    %v4234 = vpack.c.b16 %v4097, %v4096
    %v4235 = vpack.c.b16 %v4099, %v4098
    %v4236 = vpack.c.b16 %v4101, %v4100
    %v4237 = vpack.c.b16 %v4103, %v4102
    %v4238 = vpack.c.b16 %v4105, %v4104
    %v4239 = vpack.c.b16 %v4107, %v4106
    %v4240 = vpack.c.b16 %v4109, %v4108
    %v4241 = vpack.c.b16 %v4111, %v4110
    %v4242 = vpack.c.b16 %v4113, %v4112
    %v4243 = vpack.c.b16 %v4115, %v4114
    %v4244 = vpack.c.b16 %v4117, %v4116
    %v4245 = vpack.c.b16 %v4119, %v4118
    %v4246 = vpack.c.b16 %v4121, %v4120
    %v4247 = vpack.c.b16 %v4123, %v4122
    %v4248 = vpack.c.b16 %v4125, %v4124
    %v4249 = vpack.c.b16 %v4127, %v4126
    %v4250 = vpack.c.b16 %v4129, %v4128
    %v4251 = vpack.c.b16 %v4131, %v4130
    %v4252 = vpack.c.b16 %v4133, %v4132
    %v4253 = vpack.c.b16 %v4135, %v4134
    %v4254 = vpack.c.b16 %v4137, %v4136
    %v4255 = vpack.c.b16 %v4139, %v4138
    %v4256 = vpack.c.b16 %v4141, %v4140
    %v4257 = vpack.c.b16 %v4143, %v4142
    %v4258 = vpack.c.b16 %v4145, %v4144
    %v4259 = vpack.c.b16 %v4147, %v4146
    %v4260 = vpack.c.b16 %v4149, %v4148
    %v4261 = vpack.c.b16 %v4151, %v4150
    %v4262 = vpack.c.b16 %v4153, %v4152
    %v4263 = vpack.c.b16 %v4155, %v4154
    %v4264 = vpack.c.b16 %v4157, %v4156
    %v4265 = vpack.c.b16 %v4159, %v4158
    %v4266 = vpack.c.b16 %v4161, %v4160
    %v4267 = vpack.c.b16 %v4163, %v4162
    %v4268 = vpack.c.b16 %v4165, %v4164
    %v4269 = vpack.c.b16 %v4167, %v4166
    %v4270 = vpack.c.b16 %v4169, %v4168
    %v4271 = vpack.c.b16 %v4171, %v4170
    %v4272 = vpack.c.b16 %v4173, %v4172
    %v4273 = vpack.c.b16 %v4175, %v4174
    %v4274 = vpack.c.b16 %v4177, %v4176
    %v4275 = vpack.c.b16 %v4179, %v4178
    %v4276 = vpack.c.b16 %v4181, %v4180
    %v4277 = vpack.c.b16 %v4183, %v4182
    %v4278 = vpack.c.b16 %v4185, %v4184
    %v4279 = vpack.c.b16 %v4187, %v4186
    %v4280 = vpack.c.b16 %v4189, %v4188
    %v4281 = vpack.c.b16 %v4191, %v4190
    %v4282 = vpack.c.b16 %v4193, %v4192
    %v4283 = vpack.c.b16 %v4195, %v4194
    %v4284 = vpack.c.b16 %v4197, %v4196
    %v4285 = vpack.c.b16 %v4199, %v4198
    %v4286 = vpack.c.b16 %v4201, %v4200
    %v4287 = vpack.c.b16 %v4203, %v4202
    %v4288 = vpack.c.b16 %v4205, %v4204
    %v4289 = vpack.c.b16 %v4207, %v4206
    %v4290 = vpack.c.b16 %v4209, %v4208
    %v4291 = vpack.c.b16 %v4211, %v4210
    %v4292 = vpack.c.b16 %v4213, %v4212
    %v4293 = vpack.c.b16 %v4215, %v4214
    %v4294 = vpack.c.b16 %v4217, %v4216
    %v4295 = vpack.c.b16 %v4219, %v4218
    %v4296 = vpack.c.b16 %v4221, %v4220
    %v4297 = vpack.c.b16 %v4223, %v4222
    %v4298 = vpack.c.b16 %v4225, %v4224
    %v4299 = vpack.c.b16 %v4227, %v4226
    %4372 = vmatprep.subr.bf16.mxu0 0
    %4373 = vmatpush1.bf16.msra.mxu0 %v4228
    %4374 = vmatprep.subr.bf16.mxu0 0
    %4375 = vmatpush1.bf16.msra.mxu0 %v4229
    %4376 = vmatprep.subr.bf16.mxu0 0
    %4377 = vmatpush1.bf16.msra.mxu0 %v4230
    %4378 = vmatprep.subr.bf16.mxu0 0
    %4379 = vmatpush1.bf16.msra.mxu0 %v4231
    %4380 = vmatprep.subr.bf16.mxu0 0
    %4381 = vmatpush1.bf16.msra.mxu0 %v4232
    %4382 = vmatprep.subr.bf16.mxu0 0
    %4383 = vmatpush1.bf16.msra.mxu0 %v4233
    %4384 = vmatprep.subr.bf16.mxu0 0
    %4385 = vmatpush1.bf16.msra.mxu0 %v4234
    %4386 = vmatprep.subr.bf16.mxu0 0
    %4387 = vmatpush1.bf16.msra.mxu0 %v4235
    %4388 = vmatprep.subr.bf16.mxu0 0
    %4389 = vmatpush1.bf16.msra.mxu0 %v4236
    %4390 = vmatprep.subr.bf16.mxu0 0
    %4391 = vmatpush1.bf16.msra.mxu0 %v4237
    %4392 = vmatprep.subr.bf16.mxu0 0
    %4393 = vmatpush1.bf16.msra.mxu0 %v4238
    %4394 = vmatprep.subr.bf16.mxu0 0
    %4395 = vmatpush1.bf16.msra.mxu0 %v4239
    %4396 = vmatprep.subr.bf16.mxu0 0
    %4397 = vmatpush1.bf16.msra.mxu0 %v4240
    %4398 = vmatprep.subr.bf16.mxu0 0
    %4399 = vmatpush1.bf16.msra.mxu0 %v4241
    %4400 = vmatprep.subr.bf16.mxu0 0
    %4401 = vmatpush1.bf16.msra.mxu0 %v4242
    %4402 = vmatprep.subr.bf16.mxu0 0
    %4403 = vmatpush1.bf16.msra.mxu0 %v4243
    %4404 = vmatprep.mubr.bf16.mxu0 %v3781
    %4405 = vmatmul.mubr.bf16.gmra.mrb[0].mxu0 %v3780
    %v4406 = vpop.f32.mrb[0].mxu0
    %v4407 = vadd.f32 %v3938, %v4406
    %v4408 = vpop.f32.mrb[0].mxu0
    %v4409 = vpop.f32.mrb[0].mxu0
    %v4410 = vpop.f32.mrb[0].mxu0
    %4411 = vdwg.mxu0
    %4412 = vmatprep.subr.bf16.mxu0 0
    %4413 = vmatpush1.bf16.msra.mxu0 %v4244
    %4414 = vmatprep.subr.bf16.mxu0 0
    %4415 = vmatpush1.bf16.msra.mxu0 %v4245
    %4416 = vmatprep.subr.bf16.mxu0 0
    %4417 = vmatpush1.bf16.msra.mxu0 %v4246
    %4418 = vmatprep.subr.bf16.mxu0 0
    %4419 = vmatpush1.bf16.msra.mxu0 %v4247
    %4420 = vmatprep.subr.bf16.mxu0 0
    %4421 = vmatpush1.bf16.msra.mxu0 %v4248
    %4422 = vmatprep.subr.bf16.mxu0 0
    %4423 = vmatpush1.bf16.msra.mxu0 %v4249
    %4424 = vmatprep.subr.bf16.mxu0 0
    %4425 = vmatpush1.bf16.msra.mxu0 %v4250
    %4426 = vmatprep.subr.bf16.mxu0 0
    %4427 = vmatpush1.bf16.msra.mxu0 %v4251
    %4428 = vmatprep.subr.bf16.mxu0 0
    %4429 = vmatpush1.bf16.msra.mxu0 %v4252
    %4430 = vmatprep.subr.bf16.mxu0 0
    %4431 = vmatpush1.bf16.msra.mxu0 %v4253
    %4432 = vmatprep.subr.bf16.mxu0 0
    %4433 = vmatpush1.bf16.msra.mxu0 %v4254
    %4434 = vmatprep.subr.bf16.mxu0 0
    %4435 = vmatpush1.bf16.msra.mxu0 %v4255
    %4436 = vmatprep.subr.bf16.mxu0 0
    %4437 = vmatpush1.bf16.msra.mxu0 %v4256
    %4438 = vmatprep.subr.bf16.mxu0 0
    %4439 = vmatpush1.bf16.msra.mxu0 %v4257
    %4440 = vmatprep.subr.bf16.mxu0 0
    %4441 = vmatpush1.bf16.msra.mxu0 %v4258
    %4442 = vmatprep.subr.bf16.mxu0 0
    %4443 = vmatpush1.bf16.msra.mxu0 %v4259
    %4444 = vmatprep.mubr.bf16.mxu0 %v3783
    %4445 = vmatmul.mubr.bf16.gmra.mrb[0].mxu0 %v3782
    %v4446 = vpop.f32.mrb[0].mxu0
    %v4447 = vadd.f32 %v4407, %v4446
    %v4448 = vpop.f32.mrb[0].mxu0
    %v4449 = vpop.f32.mrb[0].mxu0
    %v4450 = vpop.f32.mrb[0].mxu0
    %4451 = vdwg.mxu0
    %4452 = vmatprep.subr.bf16.mxu0 0
    %4453 = vmatpush1.bf16.msra.mxu0 %v4260
    %4454 = vmatprep.subr.bf16.mxu0 0
    %4455 = vmatpush1.bf16.msra.mxu0 %v4261
    %4456 = vmatprep.subr.bf16.mxu0 0
    %4457 = vmatpush1.bf16.msra.mxu0 %v4262
    %4458 = vmatprep.subr.bf16.mxu0 0
    %4459 = vmatpush1.bf16.msra.mxu0 %v4263
    %4460 = vmatprep.subr.bf16.mxu0 0
    %4461 = vmatpush1.bf16.msra.mxu0 %v4264
    %4462 = vmatprep.subr.bf16.mxu0 0
    %4463 = vmatpush1.bf16.msra.mxu0 %v4265
    %4464 = vmatprep.subr.bf16.mxu0 0
    %4465 = vmatpush1.bf16.msra.mxu0 %v4266
    %4466 = vmatprep.subr.bf16.mxu0 0
    %4467 = vmatpush1.bf16.msra.mxu0 %v4267
    %4468 = vmatprep.subr.bf16.mxu0 0
    %4469 = vmatpush1.bf16.msra.mxu0 %v4268
    %4470 = vmatprep.subr.bf16.mxu0 0
    %4471 = vmatpush1.bf16.msra.mxu0 %v4269
    %4472 = vmatprep.subr.bf16.mxu0 0
    %4473 = vmatpush1.bf16.msra.mxu0 %v4270
    %4474 = vmatprep.subr.bf16.mxu0 0
    %4475 = vmatpush1.bf16.msra.mxu0 %v4271
    %4476 = vmatprep.subr.bf16.mxu0 0
    %4477 = vmatpush1.bf16.msra.mxu0 %v4272
    %4478 = vmatprep.subr.bf16.mxu0 0
    %4479 = vmatpush1.bf16.msra.mxu0 %v4273
    %4480 = vmatprep.subr.bf16.mxu0 0
    %4481 = vmatpush1.bf16.msra.mxu0 %v4274
    %4482 = vmatprep.subr.bf16.mxu0 0
    %4483 = vmatpush1.bf16.msra.mxu0 %v4275
    %4484 = vmatprep.mubr.bf16.mxu0 %v3785
    %4485 = vmatmul.mubr.bf16.gmra.mrb[0].mxu0 %v3784
    %v4486 = vpop.f32.mrb[0].mxu0
    %v4487 = vadd.f32 %v4447, %v4486
    %v4488 = vpop.f32.mrb[0].mxu0
    %v4489 = vpop.f32.mrb[0].mxu0
    %v4490 = vpop.f32.mrb[0].mxu0
    %4491 = vdwg.mxu0
    %4492 = vmatprep.subr.bf16.mxu0 0
    %4493 = vmatpush1.bf16.msra.mxu0 %v4276
    %4494 = vmatprep.subr.bf16.mxu0 0
    %4495 = vmatpush1.bf16.msra.mxu0 %v4277
    %4496 = vmatprep.subr.bf16.mxu0 0
    %4497 = vmatpush1.bf16.msra.mxu0 %v4278
    %4498 = vmatprep.subr.bf16.mxu0 0
    %4499 = vmatpush1.bf16.msra.mxu0 %v4279
    %4500 = vmatprep.subr.bf16.mxu0 0
    %4501 = vmatpush1.bf16.msra.mxu0 %v4280
    %4502 = vmatprep.subr.bf16.mxu0 0
    %4503 = vmatpush1.bf16.msra.mxu0 %v4281
    %4504 = vmatprep.subr.bf16.mxu0 0
    %4505 = vmatpush1.bf16.msra.mxu0 %v4282
    %4506 = vmatprep.subr.bf16.mxu0 0
    %4507 = vmatpush1.bf16.msra.mxu0 %v4283
    %4508 = vmatprep.subr.bf16.mxu0 0
    %4509 = vmatpush1.bf16.msra.mxu0 %v4284
    %4510 = vmatprep.subr.bf16.mxu0 0
    %4511 = vmatpush1.bf16.msra.mxu0 %v4285
    %4512 = vmatprep.subr.bf16.mxu0 0
    %4513 = vmatpush1.bf16.msra.mxu0 %v4286
    %4514 = vmatprep.subr.bf16.mxu0 0
    %4515 = vmatpush1.bf16.msra.mxu0 %v4287
    %4516 = vmatprep.subr.bf16.mxu0 0
    %4517 = vmatpush1.bf16.msra.mxu0 %v4288
    %4518 = vmatprep.subr.bf16.mxu0 0
    %4519 = vmatpush1.bf16.msra.mxu0 %v4289
    %4520 = vmatprep.subr.bf16.mxu0 0
    %4521 = vmatpush1.bf16.msra.mxu0 %v4290
    %4522 = vmatprep.subr.bf16.mxu0 0
    %4523 = vmatpush1.bf16.msra.mxu0 %v4291
    %4524 = vmatprep.mubr.bf16.mxu0 %v3787
    %4525 = vmatmul.mubr.bf16.gmra.mrb[0].mxu0 %v3786
    %v4526 = vpop.f32.mrb[0].mxu0
    %v4527 = vadd.f32 %v4487, %v4526
    %v4528 = vpop.f32.mrb[0].mxu0
    %v4529 = vpop.f32.mrb[0].mxu0
    %v4530 = vpop.f32.mrb[0].mxu0
    %4531 = vdwg.mxu0
    %4532 = vmatprep.subr.bf16.mxu0 0
    %4533 = vmatpush1.bf16.msra.mxu0 %v4292
    %4534 = vmatprep.subr.bf16.mxu0 0
    %4535 = vmatpush1.bf16.msra.mxu0 %v4293
    %4536 = vmatprep.subr.bf16.mxu0 0
    %4537 = vmatpush1.bf16.msra.mxu0 %v4294
    %4538 = vmatprep.subr.bf16.mxu0 0
    %4539 = vmatpush1.bf16.msra.mxu0 %v4295
    %4540 = vmatprep.subr.bf16.mxu0 0
    %4541 = vmatpush1.bf16.msra.mxu0 %v4296
    %4542 = vmatprep.subr.bf16.mxu0 0
    %4543 = vmatpush1.bf16.msra.mxu0 %v4297
    %4544 = vmatprep.subr.bf16.mxu0 0
    %4545 = vmatpush1.bf16.msra.mxu0 %v4298
    %4546 = vmatprep.subr.bf16.mxu0 0
    %4547 = vmatpush1.bf16.msra.mxu0 %v4299
    %4548 = vmatprep.subr.bf16.mxu0 0
    %4549 = vmatpush1.bf16.msra.mxu0 0
    %4550 = vmatprep.subr.bf16.mxu0 0
    %4551 = vmatpush1.bf16.msra.mxu0 0
    %4552 = vmatprep.subr.bf16.mxu0 0
    %4553 = vmatpush1.bf16.msra.mxu0 0
    %4554 = vmatprep.subr.bf16.mxu0 0
    %4555 = vmatpush1.bf16.msra.mxu0 0
    %4556 = vmatprep.subr.bf16.mxu0 0
    %4557 = vmatpush1.bf16.msra.mxu0 0
    %4558 = vmatprep.subr.bf16.mxu0 0
    %4559 = vmatpush1.bf16.msra.mxu0 0
    %4560 = vmatprep.subr.bf16.mxu0 0
    %4561 = vmatpush1.bf16.msra.mxu0 0
    %4562 = vmatprep.subr.bf16.mxu0 0
    %4563 = vmatpush1.bf16.msra.mxu0 0
    %4564 = vmatprep.mubr.bf16.mxu0 0
    %4565 = vmatmul.mubr.bf16.gmra.mrb[0].mxu0 %v3788
    %v4566 = vpop.f32.mrb[0].mxu0
    %v4567 = vadd.f32 %v4527, %v4566
    %v4568 = vpop.f32.mrb[0].mxu0
    %v4569 = vpop.f32.mrb[0].mxu0
    %v4570 = vpop.f32.mrb[0].mxu0
    %4571 = vdwg.mxu0
    %4572 = vst [vmem:[#allocation9] sm:$0x3] %v4567
    // Predicated region
    $region42: #{forward.1} parent=1 // pred_check
      _
    $region43: #{forward.1} parent=1 // pred_check_branch
      %4574 = sbr.rel (0) target = $region45
    $region44: #{forward.1} parent=1 // pred_region
      %s4576 = ssub.s32 32, 32
      %4577 = vsyncadd [#allocation8], %s4576
      %s4579 = sshll.u32 [#allocation9], 4
      %s4580 = int_to_ptr.vmem [resolvable:$true] %s4579
      %4582 = dma.vmem_to_hbm [thread:$0]  %s4580, 32, %s9, [#allocation8]
    $region45: #{forward.1} parent=1 // pred_fallthru
      _
    // Predicated region
    $region46: #{forward.1} parent=1 // pred_check
      _
    $region47: #{forward.1} parent=1 // pred_check_branch
      %4584 = sbr.rel (0) target = $region49
    $region48: #{forward.1} parent=1 // pred_region
      %4585 = dma.done [#allocation8], 32
    $region49: #{forward.1} parent=1 // pred_fallthru
      _
    %4586 = vsyncpa [#allocation7], 1
    %4587 = vsyncpa [#allocation8], 1

</llo_original>
